<compile_context>
chip_gen: v7x
topology: tpu7x:2x2x1
jax: 0.10.0
libtpu: 0.0.40
codegen_flags: <defaults>
</compile_context>

<pallas_src>
import functools
import math

import jax
import jax.numpy as jnp
from jax import lax
from jax.experimental import pallas as pl
from jax.experimental.pallas import tpu as pltpu

_BN_EPS = 1e-5
_NEG = -1e30   # effectively -inf halo for max pooling (post-SiLU values > -0.3)


def _round_up(x, m):
    return (x + m - 1) // m * m


# ----------------------------------------------------------------------------
# Kernel 1: multi-branch 1x1-conv matmul (bf16 z out) + per-tile partial BN stats
# ----------------------------------------------------------------------------
def _matmul_stats_kernel(*refs, n_branches, m_real, tm):
    x_refs = refs[:n_branches]
    w_ref = refs[n_branches]
    z_ref, s_ref, ss_ref = refs[n_branches + 1:]

    # Accumulate per-branch K-chunks (bf16 operands, f32 accumulation on MXU).
    acc = jnp.dot(x_refs[0][...], w_ref[0], preferred_element_type=jnp.float32)
    for b in range(1, n_branches):
        acc = acc + jnp.dot(x_refs[b][...], w_ref[b],
                            preferred_element_type=jnp.float32)
    # bf16 z: halves the dominant intermediate HBM traffic (stats stay f32).
    z_ref[...] = acc.astype(z_ref.dtype)

    # Partial BN statistics for this M tile, masking rows past the real M
    # (the ragged last tile's extra rows contain unspecified data).
    row = pl.program_id(0) * tm + lax.broadcasted_iota(jnp.int32, (tm, 1), 0)
    acc_m = jnp.where(row < m_real, acc, 0.0)
    s = jnp.sum(acc_m, axis=0, keepdims=True)            # (1, tn)
    ss = jnp.sum(acc_m * acc_m, axis=0, keepdims=True)   # (1, tn)
    # Only sublane 0 carries data (no 8-way broadcast); rest zero-filled.
    s_ref[...] = jnp.zeros(s_ref.shape, s_ref.dtype)
    ss_ref[...] = jnp.zeros(ss_ref.shape, ss_ref.dtype)
    s_ref[0:1, 0:1, :] = s.reshape(1, 1, -1)
    ss_ref[0:1, 0:1, :] = ss.reshape(1, 1, -1)


def _matmul_stats(branches, w, *, tm, tn=128):
    nb = len(branches)
    m_rows, kp = branches[0].shape
    n_out = w.shape[-1]
    nm, nn = pl.cdiv(m_rows, tm), n_out // tn

    kernel = functools.partial(_matmul_stats_kernel,
                               n_branches=nb, m_real=m_rows, tm=tm)
    in_specs = [pl.BlockSpec((tm, kp), lambda m, n: (m, 0)) for _ in range(nb)]
    in_specs.append(pl.BlockSpec((nb, kp, tn), lambda m, n: (0, 0, n)))
    out_shape = (jax.ShapeDtypeStruct((m_rows, n_out), jnp.bfloat16),
                 jax.ShapeDtypeStruct((nm, 8, n_out), jnp.float32),
                 jax.ShapeDtypeStruct((nm, 8, n_out), jnp.float32))
    out_specs = (pl.BlockSpec((tm, tn), lambda m, n: (m, n)),
                 pl.BlockSpec((1, 8, tn), lambda m, n: (m, 0, n)),
                 pl.BlockSpec((1, 8, tn), lambda m, n: (m, 0, n)))
    return pl.pallas_call(
        kernel,
        grid=(nm, nn),
        in_specs=in_specs,
        out_specs=out_specs,
        out_shape=out_shape,
        compiler_params=pltpu.CompilerParams(
            dimension_semantics=("parallel", "parallel")),
    )(*branches, w)


def _bn_scale_shift(ps, pss, gamma, beta, m_real):
    """Reduce per-tile partial sums to training-mode BN scale/shift (tiny XLA)."""
    mean = ps[:, 0, :].sum(axis=0) / m_real
    ex2 = pss[:, 0, :].sum(axis=0) / m_real
    # TODO(synk): E[z^2]-E[z]^2 can cancel for very large M with large channel
    # means; fine at these scales with f32 partials.
    var = jnp.maximum(ex2 - mean * mean, 0.0)
    scale = gamma * lax.rsqrt(var + _BN_EPS)
    shift = beta - mean * scale
    return scale, shift


# ----------------------------------------------------------------------------
# Kernel 2: apply BatchNorm scale/shift + SiLU (used for cv2's output)
# ----------------------------------------------------------------------------
def _bn_silu_kernel(z_ref, scale_ref, shift_ref, o_ref):
    y = z_ref[...].astype(jnp.float32) * scale_ref[...] + shift_ref[...]
    o_ref[...] = (y * jax.nn.sigmoid(y)).astype(o_ref.dtype)


def _bn_silu_apply(z, scale, shift, out_dtype, *, tm, tn=128):
    m_rows, n_out = z.shape
    nm, nn = pl.cdiv(m_rows, tm), n_out // tn
    return pl.pallas_call(
        _bn_silu_kernel,
        grid=(nm, nn),
        in_specs=[pl.BlockSpec((tm, tn), lambda m, n: (m, n)),
                  pl.BlockSpec((1, tn), lambda m, n: (0, n)),
                  pl.BlockSpec((1, tn), lambda m, n: (0, n))],
        out_specs=pl.BlockSpec((tm, tn), lambda m, n: (m, n)),
        out_shape=jax.ShapeDtypeStruct((m_rows, n_out), out_dtype),
        compiler_params=pltpu.CompilerParams(
            dimension_semantics=("parallel", "parallel")),
    )(z, scale.reshape(1, n_out).astype(jnp.float32),
      shift.reshape(1, n_out).astype(jnp.float32))


# ----------------------------------------------------------------------------
# Kernel 3: fused cv1 BN+SiLU + three cascaded 5x5 / stride-1 / pad-2 max pools
# ----------------------------------------------------------------------------
def _sppf_pool_kernel(z_ref, sc_ref, sh_ref, a_ref, y1_ref, y2_ref, y3_ref,
                      pad_ref, *, H, W, C):
    # cv1 BN + SiLU fused here: saves a full HBM write+read of the activation.
    y = z_ref[0].astype(jnp.float32) * sc_ref[...] + sh_ref[...]
    a = (y * jax.nn.sigmoid(y)).astype(a_ref.dtype)
    a_ref[0] = a

    # Build the -inf super-halo directly in VMEM (no XLA padded-image copy).
    # Three cascaded SAME 5x5 pools == three VALID 5x5 pools on a 6-halo input.
    pad_ref[...] = jnp.full_like(pad_ref, _NEG)
    pad_ref[6:6 + H, 6 * C:(6 + W) * C] = a

    def vpool5(arr, h_in, w_in):
        h_out, w_out = h_in - 4, w_in - 4
        # Lane-axis (width) maxes first: offsets are multiples of C=128 (free).
        c = arr[:, 0:w_out * C]
        for dx in range(1, 5):
            c = jnp.maximum(c, arr[:, dx * C:(dx + w_out) * C])
        # Sublane-axis (height) maxes second, on the width-reduced result.
        # Note (v5e): bf16 maxima are widened per op on v5e's VPU; acceptable here.
        r = c[0:h_out, :]
        for dy in range(1, 5):
            r = jnp.maximum(r, c[dy:dy + h_out, :])
        return r

    ap = pad_ref[...]
    p1 = vpool5(ap, H + 12, W + 12)                 # == pad4(SAME pool #1)
    p2 = vpool5(p1, H + 8, W + 8)                   # == pad2(SAME pool #2)
    p3 = vpool5(p2, H + 4, W + 4)                   # == SAME pool #3
    y1_ref[0] = p1[4:4 + H, 4 * C:(4 + W) * C]
    y2_ref[0] = p2[2:2 + H, 2 * C:(2 + W) * C]
    y3_ref[0] = p3


def _sppf_pools(z1, scale, shift, *, B, H, W, C):
    """cv1 BN+SiLU + 3 cascaded SAME 5x5 max pools, one Pallas kernel per image."""
    dtype = z1.dtype
    z1_img = z1.reshape(B, H, W * C)                 # lane-dense (W*C) layout
    sc_row = jnp.tile(scale.astype(jnp.float32), W).reshape(1, W * C)
    sh_row = jnp.tile(shift.astype(jnp.float32), W).reshape(1, W * C)
    kernel = functools.partial(_sppf_pool_kernel, H=H, W=W, C=C)
    out_sd = jax.ShapeDtypeStruct((B, H, W * C), dtype)
    # TODO(synk): for large H*W*C on v7x (64 MiB VMEM, 2 TCs), tile this grid
    # over row bands (12-row halo) and/or 128-channel chunks instead of (B,).
    a0, y1, y2, y3 = pl.pallas_call(
        kernel,
        grid=(B,),
        in_specs=[pl.BlockSpec((1, H, W * C), lambda b: (b, 0, 0)),
                  pl.BlockSpec((1, W * C), lambda b: (0, 0)),
                  pl.BlockSpec((1, W * C), lambda b: (0, 0))],
        out_specs=(pl.BlockSpec((1, H, W * C), lambda b: (b, 0, 0)),) * 4,
        out_shape=(out_sd,) * 4,
        scratch_shapes=[pltpu.VMEM((H + 12, (W + 12) * C), dtype)],
        compiler_params=pltpu.CompilerParams(dimension_semantics=("parallel",)),
    )(z1_img, sc_row, sh_row)
    M = B * H * W
    return (a0.reshape(M, C), y1.reshape(M, C),
            y2.reshape(M, C), y3.reshape(M, C))


# ----------------------------------------------------------------------------
# SPPF forward
# ----------------------------------------------------------------------------
@functools.partial(jax.jit, static_argnames=("c2", "tm"))
def sppf_forward(x_nchw, w1, g1, b1, w2, g2, b2, *, c2, tm=512):
    B, c1, H, W = x_nchw.shape
    kp1, np1 = w1.shape[1], w1.shape[2]
    M = B * H * W
    tm_eff = tm if M >= tm else M      # full-extent M block when M is small

    # NCHW -> NHWC, bf16 MXU operands.  Only the channel (lane) axis may need
    # padding; rows are handled by the ragged-tile grid (no XLA row-pad copies).
    x = jnp.transpose(x_nchw, (0, 2, 3, 1)).astype(jnp.bfloat16)
    x2d = x.reshape(M, c1)
    if kp1 != c1:
        x2d = jnp.pad(x2d, ((0, 0), (0, kp1 - c1)))

    # cv1: 1x1 conv matmul (bf16 z) + partial BN stats; tiny XLA reduce -> scale/shift.
    z1, ps1, pss1 = _matmul_stats([x2d], w1, tm=tm_eff)
    sc1, sh1 = _bn_scale_shift(ps1, pss1, g1, b1, M)

    # cv1 BN+SiLU fused with the three cascaded 5x5 max pools.
    a0, y1, y2, y3 = _sppf_pools(z1, sc1, sh1, B=B, H=H, W=W, C=np1)

    # cv2 over the 4 branches; per-branch K-chunks accumulated in-kernel
    # (the channel concat is never materialized in HBM).
    z2, ps2, pss2 = _matmul_stats([a0, y1, y2, y3], w2, tm=tm_eff)
    sc2, sh2 = _bn_scale_shift(ps2, pss2, g2, b2, M)
    out = _bn_silu_apply(z2, sc2, sh2, jnp.float32, tm=tm_eff)

    # TODO(synk): keeping NHWC (or bf16) downstream would remove this final XLA
    # slice/reshape/transpose pass; kept f32 NCHW for parity with the PyTorch module.
    out = out[:, :c2].reshape(B, H, W, c2)
    return jnp.transpose(out, (0, 3, 1, 2))


# ----------------------------------------------------------------------------
# Parameters (PyTorch-style init; BN gamma=1, beta=0) + pure-JAX reference
# ----------------------------------------------------------------------------
def init_sppf_params(seed, c1, c2):
    c_ = c1 // 2
    kp1 = _round_up(c1, 128)
    np1 = _round_up(c_, 128)
    np2 = _round_up(c2, 128)
    k1, k2 = jax.random.split(jax.random.PRNGKey(seed))
    w1 = jax.random.normal(k1, (c1, c_), jnp.float32) / math.sqrt(c1)
    w2 = jax.random.normal(k2, (4 * c_, c2), jnp.float32) / math.sqrt(4 * c_)

    w1_p = jnp.pad(w1, ((0, kp1 - c1), (0, np1 - c_))).astype(jnp.bfloat16)[None]
    w2_p = jnp.pad(w2.reshape(4, c_, c2),
                   ((0, 0), (0, np1 - c_), (0, np2 - c2))).astype(jnp.bfloat16)
    kernel_params = dict(
        w1=w1_p, g1=jnp.ones((np1,), jnp.float32), b1=jnp.zeros((np1,), jnp.float32),
        w2=w2_p, g2=jnp.ones((np2,), jnp.float32), b2=jnp.zeros((np2,), jnp.float32))
    ref_params = dict(w1=w1, w2=w2)
    return kernel_params, ref_params


@jax.jit
def sppf_reference(x_nchw, w1, w2):
    def conv_bn_silu(x_nhwc, w):
        b, h, ww, c = x_nhwc.shape
        z = x_nhwc.reshape(-1, c) @ w
        mean = z.mean(0)
        var = ((z - mean) ** 2).mean(0)              # biased (training-mode BN)
        zn = (z - mean) * lax.rsqrt(var + _BN_EPS)   # gamma=1, beta=0
        return (zn * jax.nn.sigmoid(zn)).reshape(b, h, ww, -1)

    x = jnp.transpose(x_nchw, (0, 2, 3, 1))
    a = conv_bn_silu(x, w1)
    pool = lambda t: lax.reduce_window(t, -jnp.inf, lax.max,
                                       (1, 5, 5, 1), (1, 1, 1, 1), "SAME")
    y1 = pool(a); y2 = pool(y1); y3 = pool(y2)
    out = conv_bn_silu(jnp.concatenate([a, y1, y2, y3], axis=-1), w2)
    return jnp.transpose(out, (0, 3, 1, 2))


# ----------------------------------------------------------------------------
if __name__ == "__main__":
    B, C1, H, W = 2, 128, 16, 16
    C2 = 128
    kparams, rparams = init_sppf_params(0, C1, C2)
    x = jax.random.normal(jax.random.PRNGKey(0), (B, C1, H, W), jnp.float32)

    out = sppf_forward(x, kparams["w1"], kparams["g1"], kparams["b1"],
                       kparams["w2"], kparams["g2"], kparams["b2"], c2=C2)
    out = jax.block_until_ready(out)

    assert out.shape == (B, C2, H, W), out.shape
    assert bool(jnp.all(jnp.isfinite(out)))

    ref = jax.block_until_ready(sppf_reference(x, rparams["w1"], rparams["w2"]))
    max_err = float(jnp.max(jnp.abs(out - ref)))
    mean_err = float(jnp.mean(jnp.abs(out - ref)))
    # bf16 matmul operands + bf16 intermediates vs f32 reference -> small drift.
    assert max_err < 0.5 and mean_err < 0.05, (max_err, mean_err)

    print("KERNEL_OK")
</pallas_src>

<mosaic_0001>
module attributes {stable_mosaic.version = 11 : i64} {
  func.func @_matmul_stats_kernel(%arg0: i32, %arg1: i32, %arg2: memref<512x128xbf16, #tpu.memory_space<vmem>>, %arg3: memref<1x128x128xbf16, #tpu.memory_space<vmem>>, %arg4: memref<512x128xbf16, #tpu.memory_space<vmem>>, %arg5: memref<1x8x128xf32, #tpu.memory_space<vmem>>, %arg6: memref<1x8x128xf32, #tpu.memory_space<vmem>>) attributes {dimension_semantics = [#tpu.dimension_semantics<parallel>, #tpu.dimension_semantics<parallel>], iteration_bounds = array<i64: 1, 1>, scalar_prefetch = 0 : i64, scratch_operands = 0 : i64, tpu.core_type = #tpu.core_type<tc>, window_params = [{transform_indices = @transform_0, window_bounds = array<i64: 512, 128>}, {transform_indices = @transform_1, window_bounds = array<i64: 1, 128, 128>}, {transform_indices = @transform_2, window_bounds = array<i64: 512, 128>}, {transform_indices = @transform_3, window_bounds = array<i64: 1, 8, 128>}, {transform_indices = @transform_4, window_bounds = array<i64: 1, 8, 128>}]} {
    %c0 = arith.constant 0 : index
    %c0_0 = arith.constant 0 : index
    %0 = vector.load %arg2[%c0, %c0_0] : memref<512x128xbf16, #tpu.memory_space<vmem>>, vector<512x128xbf16>
    %c0_1 = arith.constant 0 : index
    %c0_2 = arith.constant 0 : index
    %c0_3 = arith.constant 0 : index
    %1 = vector.load %arg3[%c0_1, %c0_2, %c0_3] : memref<1x128x128xbf16, #tpu.memory_space<vmem>>, vector<1x128x128xbf16>
    %2 = vector.shape_cast %1 : vector<1x128x128xbf16> to vector<128x128xbf16>
    %cst = arith.constant dense<0.000000e+00> : vector<512x128xf32>
    %3 = tpu.matmul %0, %2, %cst {dimension_numbers = #tpu.dot_dimension_numbers<[1], [0], [0], [1], [0, 0, 1, 1], [], []>} : vector<512x128xbf16>, vector<128x128xbf16>, vector<512x128xf32> -> vector<512x128xf32>
    %4 = arith.truncf %3 : vector<512x128xf32> to vector<512x128xbf16>
    %c0_4 = arith.constant 0 : index
    %c0_5 = arith.constant 0 : index
    %5 = vector.load %arg4[%c0_4, %c0_5] : memref<512x128xbf16, #tpu.memory_space<vmem>>, vector<512x128xbf16>
    tpu.vector_store %arg4[%c0_4, %c0_5], %4 {strides = array<i32>} : memref<512x128xbf16, #tpu.memory_space<vmem>>, vector<512x128xbf16>,
    %c512_i32 = arith.constant 512 : i32
    %6 = arith.muli %arg0, %c512_i32 : i32
    %7 = tpu.iota {dimensions = array<i32: 0>} : vector<512x1xi32>
    %8 = vector.broadcast %6 : i32 to vector<512x1xi32>
    %9 = arith.addi %8, %7 : vector<512x1xi32>
    %c512_i32_6 = arith.constant 512 : i32
    %10 = vector.broadcast %c512_i32_6 : i32 to vector<512x1xi32>
    %11 = arith.cmpi slt, %9, %10 : vector<512x1xi32>
    %cst_7 = arith.constant 0.000000e+00 : f32
    %12 = vector.shape_cast %11 : vector<512x1xi1> to vector<512x1xi1>
    %13 = vector.broadcast %12 : vector<512x1xi1> to vector<512x128xi1>
    %14 = vector.broadcast %cst_7 : f32 to vector<512x128xf32>
    %15 = arith.select %13, %3, %14 : vector<512x128xi1>, vector<512x128xf32>
    %cst_8 = arith.constant dense<0.000000e+00> : vector<128xf32>
    %16 = vector.multi_reduction <add>, %15, %cst_8 [0] : vector<512x128xf32> to vector<128xf32>
    %17 = vector.shape_cast %16 : vector<128xf32> to vector<1x128xf32>
    %18 = arith.mulf %15, %15 : vector<512x128xf32>
    %cst_9 = arith.constant dense<0.000000e+00> : vector<128xf32>
    %19 = vector.multi_reduction <add>, %18, %cst_9 [0] : vector<512x128xf32> to vector<128xf32>
    %20 = vector.shape_cast %19 : vector<128xf32> to vector<1x128xf32>
    %cst_10 = arith.constant 0.000000e+00 : f32
    %21 = vector.broadcast %cst_10 : f32 to vector<1x8x128xf32>
    %c0_11 = arith.constant 0 : index
    %c0_12 = arith.constant 0 : index
    %c0_13 = arith.constant 0 : index
    %22 = vector.load %arg5[%c0_11, %c0_12, %c0_13] : memref<1x8x128xf32, #tpu.memory_space<vmem>>, vector<1x8x128xf32>
    tpu.vector_store %arg5[%c0_11, %c0_12, %c0_13], %21 {strides = array<i32>} : memref<1x8x128xf32, #tpu.memory_space<vmem>>, vector<1x8x128xf32>,
    %cst_14 = arith.constant 0.000000e+00 : f32
    %23 = vector.broadcast %cst_14 : f32 to vector<1x8x128xf32>
    %c0_15 = arith.constant 0 : index
    %c0_16 = arith.constant 0 : index
    %c0_17 = arith.constant 0 : index
    %24 = vector.load %arg6[%c0_15, %c0_16, %c0_17] : memref<1x8x128xf32, #tpu.memory_space<vmem>>, vector<1x8x128xf32>
    tpu.vector_store %arg6[%c0_15, %c0_16, %c0_17], %23 {strides = array<i32>} : memref<1x8x128xf32, #tpu.memory_space<vmem>>, vector<1x8x128xf32>,
    %25 = vector.shape_cast %17 : vector<1x128xf32> to vector<1x1x128xf32>
    %c0_18 = arith.constant 0 : index
    %c0_19 = arith.constant 0 : index
    %c0_20 = arith.constant 0 : index
    %26 = vector.load %arg5[%c0_18, %c0_19, %c0_20] : memref<1x8x128xf32, #tpu.memory_space<vmem>>, vector<1x1x128xf32>
    tpu.vector_store %arg5[%c0_18, %c0_19, %c0_20], %25 {strides = array<i32>} : memref<1x8x128xf32, #tpu.memory_space<vmem>>, vector<1x1x128xf32>,
    %27 = vector.shape_cast %20 : vector<1x128xf32> to vector<1x1x128xf32>
    %c0_21 = arith.constant 0 : index
    %c0_22 = arith.constant 0 : index
    %c0_23 = arith.constant 0 : index
    %28 = vector.load %arg6[%c0_21, %c0_22, %c0_23] : memref<1x8x128xf32, #tpu.memory_space<vmem>>, vector<1x1x128xf32>
    tpu.vector_store %arg6[%c0_21, %c0_22, %c0_23], %27 {strides = array<i32>} : memref<1x8x128xf32, #tpu.memory_space<vmem>>, vector<1x1x128xf32>,
    return
  }
  func.func @transform_0(%arg0: i32, %arg1: i32) -> (i32, i32) {
    %c0_i32 = arith.constant 0 : i32
    %c0_i32_0 = arith.constant 0 : i32
    return %arg0, %c0_i32 : i32, i32
  }
  func.func @transform_1(%arg0: i32, %arg1: i32) -> (i32, i32, i32) {
    %c0_i32 = arith.constant 0 : i32
    %c0_i32_0 = arith.constant 0 : i32
    %c0_i32_1 = arith.constant 0 : i32
    return %c0_i32, %c0_i32_0, %arg1 : i32, i32, i32
  }
  func.func @transform_2(%arg0: i32, %arg1: i32) -> (i32, i32) {
    %c0_i32 = arith.constant 0 : i32
    return %arg0, %arg1 : i32, i32
  }
  func.func @transform_3(%arg0: i32, %arg1: i32) -> (i32, i32, i32) {
    %c0_i32 = arith.constant 0 : i32
    %c0_i32_0 = arith.constant 0 : i32
    return %arg0, %c0_i32, %arg1 : i32, i32, i32
  }
  func.func @transform_4(%arg0: i32, %arg1: i32) -> (i32, i32, i32) {
    %c0_i32 = arith.constant 0 : i32
    %c0_i32_0 = arith.constant 0 : i32
    return %arg0, %c0_i32, %arg1 : i32, i32, i32
  }
}

module attributes {stable_mosaic.version = 11 : i64} {
  func.func @_sppf_pool_kernel(%arg0: i32, %arg1: memref<1x16x2048xbf16, #tpu.memory_space<vmem>>, %arg2: memref<1x2048xf32, #tpu.memory_space<vmem>>, %arg3: memref<1x2048xf32, #tpu.memory_space<vmem>>, %arg4: memref<1x16x2048xbf16, #tpu.memory_space<vmem>>, %arg5: memref<1x16x2048xbf16, #tpu.memory_space<vmem>>, %arg6: memref<1x16x2048xbf16, #tpu.memory_space<vmem>>, %arg7: memref<1x16x2048xbf16, #tpu.memory_space<vmem>>, %arg8: memref<28x3584xbf16, #tpu.memory_space<vmem>>) attributes {dimension_semantics = [#tpu.dimension_semantics<parallel>], iteration_bounds = array<i64: 2>, scalar_prefetch = 0 : i64, scratch_operands = 1 : i64, tpu.core_type = #tpu.core_type<tc>, window_params = [{transform_indices = @transform_0, window_bounds = array<i64: 1, 16, 2048>}, {pipeline_mode = #tpu.pipeline_mode<synchronous>, transform_indices = @transform_1, window_bounds = array<i64: 1, 2048>}, {pipeline_mode = #tpu.pipeline_mode<synchronous>, transform_indices = @transform_2, window_bounds = array<i64: 1, 2048>}, {transform_indices = @transform_3, window_bounds = array<i64: 1, 16, 2048>}, {transform_indices = @transform_4, window_bounds = array<i64: 1, 16, 2048>}, {transform_indices = @transform_5, window_bounds = array<i64: 1, 16, 2048>}, {transform_indices = @transform_6, window_bounds = array<i64: 1, 16, 2048>}]} {
    %c0 = arith.constant 0 : index
    %c0_0 = arith.constant 0 : index
    %c0_1 = arith.constant 0 : index
    %0 = vector.load %arg1[%c0, %c0_0, %c0_1] : memref<1x16x2048xbf16, #tpu.memory_space<vmem>>, vector<1x16x2048xbf16>
    %1 = vector.shape_cast %0 : vector<1x16x2048xbf16> to vector<16x2048xbf16>
    %2 = arith.extf %1 : vector<16x2048xbf16> to vector<16x2048xf32>
    %c0_2 = arith.constant 0 : index
    %c0_3 = arith.constant 0 : index
    %3 = vector.load %arg2[%c0_2, %c0_3] : memref<1x2048xf32, #tpu.memory_space<vmem>>, vector<1x2048xf32>
    %4 = vector.broadcast %3 : vector<1x2048xf32> to vector<16x2048xf32>
    %5 = arith.mulf %2, %4 : vector<16x2048xf32>
    %c0_4 = arith.constant 0 : index
    %c0_5 = arith.constant 0 : index
    %6 = vector.load %arg3[%c0_4, %c0_5] : memref<1x2048xf32, #tpu.memory_space<vmem>>, vector<1x2048xf32>
    %7 = vector.broadcast %6 : vector<1x2048xf32> to vector<16x2048xf32>
    %8 = arith.addf %5, %7 : vector<16x2048xf32>
    %9 = arith.negf %8 : vector<16x2048xf32>
    %10 = math.exp %9 : vector<16x2048xf32>
    %cst = arith.constant 1.000000e+00 : f32
    %11 = vector.broadcast %cst : f32 to vector<16x2048xf32>
    %12 = arith.addf %11, %10 : vector<16x2048xf32>
    %13 = arith.divf %11, %12 : vector<16x2048xf32>
    %14 = arith.mulf %8, %13 : vector<16x2048xf32>
    %15 = arith.truncf %14 : vector<16x2048xf32> to vector<16x2048xbf16>
    %c0_6 = arith.constant 0 : index
    %c0_7 = arith.constant 0 : index
    %c0_8 = arith.constant 0 : index
    %16 = vector.load %arg4[%c0_6, %c0_7, %c0_8] : memref<1x16x2048xbf16, #tpu.memory_space<vmem>>, vector<1x16x2048xbf16>
    %17 = vector.shape_cast %16 : vector<1x16x2048xbf16> to vector<16x2048xbf16>
    %18 = vector.shape_cast %15 : vector<16x2048xbf16> to vector<1x16x2048xbf16>
    tpu.vector_store %arg4[%c0_6, %c0_7, %c0_8], %18 {strides = array<i32>} : memref<1x16x2048xbf16, #tpu.memory_space<vmem>>, vector<1x16x2048xbf16>,
    %cst_9 = arith.constant -1.000260e+30 : bf16
    %19 = vector.broadcast %cst_9 : bf16 to vector<28x3584xbf16>
    %c0_10 = arith.constant 0 : index
    %c0_11 = arith.constant 0 : index
    %20 = vector.load %arg8[%c0_10, %c0_11] : memref<28x3584xbf16, #tpu.memory_space<vmem>>, vector<28x3584xbf16>
    tpu.vector_store %arg8[%c0_10, %c0_11], %19 {strides = array<i32>} : memref<28x3584xbf16, #tpu.memory_space<vmem>>, vector<28x3584xbf16>,
    %c6 = arith.constant 6 : index
    %c768 = arith.constant 768 : index
    %21 = vector.load %arg8[%c6, %c768] : memref<28x3584xbf16, #tpu.memory_space<vmem>>, vector<16x2048xbf16>
    tpu.vector_store %arg8[%c6, %c768], %15 {strides = array<i32>} : memref<28x3584xbf16, #tpu.memory_space<vmem>>, vector<16x2048xbf16>,
    %c0_12 = arith.constant 0 : index
    %c0_13 = arith.constant 0 : index
    %22 = vector.load %arg8[%c0_12, %c0_13] : memref<28x3584xbf16, #tpu.memory_space<vmem>>, vector<28x3584xbf16>
    %23 = vector.extract_strided_slice %22 {offsets = [0, 0], sizes = [28, 3072], strides = [1, 1]} : vector<28x3584xbf16> to vector<28x3072xbf16>
    %24 = vector.extract_strided_slice %22 {offsets = [0, 128], sizes = [28, 3072], strides = [1, 1]} : vector<28x3584xbf16> to vector<28x3072xbf16>
    %25 = arith.maximumf %23, %24 : vector<28x3072xbf16>
    %26 = vector.extract_strided_slice %22 {offsets = [0, 256], sizes = [28, 3072], strides = [1, 1]} : vector<28x3584xbf16> to vector<28x3072xbf16>
    %27 = arith.maximumf %25, %26 : vector<28x3072xbf16>
    %28 = vector.extract_strided_slice %22 {offsets = [0, 384], sizes = [28, 3072], strides = [1, 1]} : vector<28x3584xbf16> to vector<28x3072xbf16>
    %29 = arith.maximumf %27, %28 : vector<28x3072xbf16>
    %30 = vector.extract_strided_slice %22 {offsets = [0, 512], sizes = [28, 3072], strides = [1, 1]} : vector<28x3584xbf16> to vector<28x3072xbf16>
    %31 = arith.maximumf %29, %30 : vector<28x3072xbf16>
    %32 = vector.extract_strided_slice %31 {offsets = [0, 0], sizes = [24, 3072], strides = [1, 1]} : vector<28x3072xbf16> to vector<24x3072xbf16>
    %33 = vector.extract_strided_slice %31 {offsets = [1, 0], sizes = [24, 3072], strides = [1, 1]} : vector<28x3072xbf16> to vector<24x3072xbf16>
    %34 = arith.maximumf %32, %33 : vector<24x3072xbf16>
    %35 = vector.extract_strided_slice %31 {offsets = [2, 0], sizes = [24, 3072], strides = [1, 1]} : vector<28x3072xbf16> to vector<24x3072xbf16>
    %36 = arith.maximumf %34, %35 : vector<24x3072xbf16>
    %37 = vector.extract_strided_slice %31 {offsets = [3, 0], sizes = [24, 3072], strides = [1, 1]} : vector<28x3072xbf16> to vector<24x3072xbf16>
    %38 = arith.maximumf %36, %37 : vector<24x3072xbf16>
    %39 = vector.extract_strided_slice %31 {offsets = [4, 0], sizes = [24, 3072], strides = [1, 1]} : vector<28x3072xbf16> to vector<24x3072xbf16>
    %40 = arith.maximumf %38, %39 : vector<24x3072xbf16>
    %41 = vector.extract_strided_slice %40 {offsets = [0, 0], sizes = [24, 2560], strides = [1, 1]} : vector<24x3072xbf16> to vector<24x2560xbf16>
    %42 = vector.extract_strided_slice %40 {offsets = [0, 128], sizes = [24, 2560], strides = [1, 1]} : vector<24x3072xbf16> to vector<24x2560xbf16>
    %43 = arith.maximumf %41, %42 : vector<24x2560xbf16>
    %44 = vector.extract_strided_slice %40 {offsets = [0, 256], sizes = [24, 2560], strides = [1, 1]} : vector<24x3072xbf16> to vector<24x2560xbf16>
    %45 = arith.maximumf %43, %44 : vector<24x2560xbf16>
    %46 = vector.extract_strided_slice %40 {offsets = [0, 384], sizes = [24, 2560], strides = [1, 1]} : vector<24x3072xbf16> to vector<24x2560xbf16>
    %47 = arith.maximumf %45, %46 : vector<24x2560xbf16>
    %48 = vector.extract_strided_slice %40 {offsets = [0, 512], sizes = [24, 2560], strides = [1, 1]} : vector<24x3072xbf16> to vector<24x2560xbf16>
    %49 = arith.maximumf %47, %48 : vector<24x2560xbf16>
    %50 = vector.extract_strided_slice %49 {offsets = [0, 0], sizes = [20, 2560], strides = [1, 1]} : vector<24x2560xbf16> to vector<20x2560xbf16>
    %51 = vector.extract_strided_slice %49 {offsets = [1, 0], sizes = [20, 2560], strides = [1, 1]} : vector<24x2560xbf16> to vector<20x2560xbf16>
    %52 = arith.maximumf %50, %51 : vector<20x2560xbf16>
    %53 = vector.extract_strided_slice %49 {offsets = [2, 0], sizes = [20, 2560], strides = [1, 1]} : vector<24x2560xbf16> to vector<20x2560xbf16>
    %54 = arith.maximumf %52, %53 : vector<20x2560xbf16>
    %55 = vector.extract_strided_slice %49 {offsets = [3, 0], sizes = [20, 2560], strides = [1, 1]} : vector<24x2560xbf16> to vector<20x2560xbf16>
    %56 = arith.maximumf %54, %55 : vector<20x2560xbf16>
    %57 = vector.extract_strided_slice %49 {offsets = [4, 0], sizes = [20, 2560], strides = [1, 1]} : vector<24x2560xbf16> to vector<20x2560xbf16>
    %58 = arith.maximumf %56, %57 : vector<20x2560xbf16>
    %59 = vector.extract_strided_slice %58 {offsets = [0, 0], sizes = [20, 2048], strides = [1, 1]} : vector<20x2560xbf16> to vector<20x2048xbf16>
    %60 = vector.extract_strided_slice %58 {offsets = [0, 128], sizes = [20, 2048], strides = [1, 1]} : vector<20x2560xbf16> to vector<20x2048xbf16>
    %61 = arith.maximumf %59, %60 : vector<20x2048xbf16>
    %62 = vector.extract_strided_slice %58 {offsets = [0, 256], sizes = [20, 2048], strides = [1, 1]} : vector<20x2560xbf16> to vector<20x2048xbf16>
    %63 = arith.maximumf %61, %62 : vector<20x2048xbf16>
    %64 = vector.extract_strided_slice %58 {offsets = [0, 384], sizes = [20, 2048], strides = [1, 1]} : vector<20x2560xbf16> to vector<20x2048xbf16>
    %65 = arith.maximumf %63, %64 : vector<20x2048xbf16>
    %66 = vector.extract_strided_slice %58 {offsets = [0, 512], sizes = [20, 2048], strides = [1, 1]} : vector<20x2560xbf16> to vector<20x2048xbf16>
    %67 = arith.maximumf %65, %66 : vector<20x2048xbf16>
    %68 = vector.extract_strided_slice %67 {offsets = [0, 0], sizes = [16, 2048], strides = [1, 1]} : vector<20x2048xbf16> to vector<16x2048xbf16>
    %69 = vector.extract_strided_slice %67 {offsets = [1, 0], sizes = [16, 2048], strides = [1, 1]} : vector<20x2048xbf16> to vector<16x2048xbf16>
    %70 = arith.maximumf %68, %69 : vector<16x2048xbf16>
    %71 = vector.extract_strided_slice %67 {offsets = [2, 0], sizes = [16, 2048], strides = [1, 1]} : vector<20x2048xbf16> to vector<16x2048xbf16>
    %72 = arith.maximumf %70, %71 : vector<16x2048xbf16>
    %73 = vector.extract_strided_slice %67 {offsets = [3, 0], sizes = [16, 2048], strides = [1, 1]} : vector<20x2048xbf16> to vector<16x2048xbf16>
    %74 = arith.maximumf %72, %73 : vector<16x2048xbf16>
    %75 = vector.extract_strided_slice %67 {offsets = [4, 0], sizes = [16, 2048], strides = [1, 1]} : vector<20x2048xbf16> to vector<16x2048xbf16>
    %76 = arith.maximumf %74, %75 : vector<16x2048xbf16>
    %77 = vector.extract_strided_slice %40 {offsets = [4, 512], sizes = [16, 2048], strides = [1, 1]} : vector<24x3072xbf16> to vector<16x2048xbf16>
    %c0_14 = arith.constant 0 : index
    %c0_15 = arith.constant 0 : index
    %c0_16 = arith.constant 0 : index
    %78 = vector.load %arg5[%c0_14, %c0_15, %c0_16] : memref<1x16x2048xbf16, #tpu.memory_space<vmem>>, vector<1x16x2048xbf16>
    %79 = vector.shape_cast %78 : vector<1x16x2048xbf16> to vector<16x2048xbf16>
    %80 = vector.shape_cast %77 : vector<16x2048xbf16> to vector<1x16x2048xbf16>
    tpu.vector_store %arg5[%c0_14, %c0_15, %c0_16], %80 {strides = array<i32>} : memref<1x16x2048xbf16, #tpu.memory_space<vmem>>, vector<1x16x2048xbf16>,
    %81 = vector.extract_strided_slice %58 {offsets = [2, 256], sizes = [16, 2048], strides = [1, 1]} : vector<20x2560xbf16> to vector<16x2048xbf16>
    %c0_17 = arith.constant 0 : index
    %c0_18 = arith.constant 0 : index
    %c0_19 = arith.constant 0 : index
    %82 = vector.load %arg6[%c0_17, %c0_18, %c0_19] : memref<1x16x2048xbf16, #tpu.memory_space<vmem>>, vector<1x16x2048xbf16>
    %83 = vector.shape_cast %82 : vector<1x16x2048xbf16> to vector<16x2048xbf16>
    %84 = vector.shape_cast %81 : vector<16x2048xbf16> to vector<1x16x2048xbf16>
    tpu.vector_store %arg6[%c0_17, %c0_18, %c0_19], %84 {strides = array<i32>} : memref<1x16x2048xbf16, #tpu.memory_space<vmem>>, vector<1x16x2048xbf16>,
    %c0_20 = arith.constant 0 : index
    %c0_21 = arith.constant 0 : index
    %c0_22 = arith.constant 0 : index
    %85 = vector.load %arg7[%c0_20, %c0_21, %c0_22] : memref<1x16x2048xbf16, #tpu.memory_space<vmem>>, vector<1x16x2048xbf16>
    %86 = vector.shape_cast %85 : vector<1x16x2048xbf16> to vector<16x2048xbf16>
    %87 = vector.shape_cast %76 : vector<16x2048xbf16> to vector<1x16x2048xbf16>
    tpu.vector_store %arg7[%c0_20, %c0_21, %c0_22], %87 {strides = array<i32>} : memref<1x16x2048xbf16, #tpu.memory_space<vmem>>, vector<1x16x2048xbf16>,
    return
  }
  func.func @transform_0(%arg0: i32) -> (i32, i32, i32) {
    %c0_i32 = arith.constant 0 : i32
    %c0_i32_0 = arith.constant 0 : i32
    %c0_i32_1 = arith.constant 0 : i32
    return %arg0, %c0_i32, %c0_i32_0 : i32, i32, i32
  }
  func.func @transform_1(%arg0: i32) -> (i32, i32) {
    %c0_i32 = arith.constant 0 : i32
    %c0_i32_0 = arith.constant 0 : i32
    %c0_i32_1 = arith.constant 0 : i32
    return %c0_i32, %c0_i32_0 : i32, i32
  }
  func.func @transform_2(%arg0: i32) -> (i32, i32) {
    %c0_i32 = arith.constant 0 : i32
    %c0_i32_0 = arith.constant 0 : i32
    %c0_i32_1 = arith.constant 0 : i32
    return %c0_i32, %c0_i32_0 : i32, i32
  }
  func.func @transform_3(%arg0: i32) -> (i32, i32, i32) {
    %c0_i32 = arith.constant 0 : i32
    %c0_i32_0 = arith.constant 0 : i32
    %c0_i32_1 = arith.constant 0 : i32
    return %arg0, %c0_i32, %c0_i32_0 : i32, i32, i32
  }
  func.func @transform_4(%arg0: i32) -> (i32, i32, i32) {
    %c0_i32 = arith.constant 0 : i32
    %c0_i32_0 = arith.constant 0 : i32
    %c0_i32_1 = arith.constant 0 : i32
    return %arg0, %c0_i32, %c0_i32_0 : i32, i32, i32
  }
  func.func @transform_5(%arg0: i32) -> (i32, i32, i32) {
    %c0_i32 = arith.constant 0 : i32
    %c0_i32_0 = arith.constant 0 : i32
    %c0_i32_1 = arith.constant 0 : i32
    return %arg0, %c0_i32, %c0_i32_0 : i32, i32, i32
  }
  func.func @transform_6(%arg0: i32) -> (i32, i32, i32) {
    %c0_i32 = arith.constant 0 : i32
    %c0_i32_0 = arith.constant 0 : i32
    %c0_i32_1 = arith.constant 0 : i32
    return %arg0, %c0_i32, %c0_i32_0 : i32, i32, i32
  }
}

module attributes {stable_mosaic.version = 11 : i64} {
  func.func @_matmul_stats_kernel(%arg0: i32, %arg1: i32, %arg2: memref<512x128xbf16, #tpu.memory_space<vmem>>, %arg3: memref<512x128xbf16, #tpu.memory_space<vmem>>, %arg4: memref<512x128xbf16, #tpu.memory_space<vmem>>, %arg5: memref<512x128xbf16, #tpu.memory_space<vmem>>, %arg6: memref<4x128x128xbf16, #tpu.memory_space<vmem>>, %arg7: memref<512x128xbf16, #tpu.memory_space<vmem>>, %arg8: memref<1x8x128xf32, #tpu.memory_space<vmem>>, %arg9: memref<1x8x128xf32, #tpu.memory_space<vmem>>) attributes {dimension_semantics = [#tpu.dimension_semantics<parallel>, #tpu.dimension_semantics<parallel>], iteration_bounds = array<i64: 1, 1>, scalar_prefetch = 0 : i64, scratch_operands = 0 : i64, tpu.core_type = #tpu.core_type<tc>, window_params = [{transform_indices = @transform_0, window_bounds = array<i64: 512, 128>}, {transform_indices = @transform_1, window_bounds = array<i64: 512, 128>}, {transform_indices = @transform_2, window_bounds = array<i64: 512, 128>}, {transform_indices = @transform_3, window_bounds = array<i64: 512, 128>}, {transform_indices = @transform_4, window_bounds = array<i64: 4, 128, 128>}, {transform_indices = @transform_5, window_bounds = array<i64: 512, 128>}, {transform_indices = @transform_6, window_bounds = array<i64: 1, 8, 128>}, {transform_indices = @transform_7, window_bounds = array<i64: 1, 8, 128>}]} {
    %c0 = arith.constant 0 : index
    %c0_0 = arith.constant 0 : index
    %0 = vector.load %arg2[%c0, %c0_0] : memref<512x128xbf16, #tpu.memory_space<vmem>>, vector<512x128xbf16>
    %c0_1 = arith.constant 0 : index
    %c0_2 = arith.constant 0 : index
    %c0_3 = arith.constant 0 : index
    %1 = vector.load %arg6[%c0_1, %c0_2, %c0_3] : memref<4x128x128xbf16, #tpu.memory_space<vmem>>, vector<1x128x128xbf16>
    %2 = vector.shape_cast %1 : vector<1x128x128xbf16> to vector<128x128xbf16>
    %cst = arith.constant dense<0.000000e+00> : vector<512x128xf32>
    %3 = tpu.matmul %0, %2, %cst {dimension_numbers = #tpu.dot_dimension_numbers<[1], [0], [0], [1], [0, 0, 1, 1], [], []>} : vector<512x128xbf16>, vector<128x128xbf16>, vector<512x128xf32> -> vector<512x128xf32>
    %c0_4 = arith.constant 0 : index
    %c0_5 = arith.constant 0 : index
    %4 = vector.load %arg3[%c0_4, %c0_5] : memref<512x128xbf16, #tpu.memory_space<vmem>>, vector<512x128xbf16>
    %c1 = arith.constant 1 : index
    %c0_6 = arith.constant 0 : index
    %c0_7 = arith.constant 0 : index
    %5 = vector.load %arg6[%c1, %c0_6, %c0_7] : memref<4x128x128xbf16, #tpu.memory_space<vmem>>, vector<1x128x128xbf16>
    %6 = vector.shape_cast %5 : vector<1x128x128xbf16> to vector<128x128xbf16>
    %cst_8 = arith.constant dense<0.000000e+00> : vector<512x128xf32>
    %7 = tpu.matmul %4, %6, %cst_8 {dimension_numbers = #tpu.dot_dimension_numbers<[1], [0], [0], [1], [0, 0, 1, 1], [], []>} : vector<512x128xbf16>, vector<128x128xbf16>, vector<512x128xf32> -> vector<512x128xf32>
    %8 = arith.addf %3, %7 : vector<512x128xf32>
    %c0_9 = arith.constant 0 : index
    %c0_10 = arith.constant 0 : index
    %9 = vector.load %arg4[%c0_9, %c0_10] : memref<512x128xbf16, #tpu.memory_space<vmem>>, vector<512x128xbf16>
    %c2 = arith.constant 2 : index
    %c0_11 = arith.constant 0 : index
    %c0_12 = arith.constant 0 : index
    %10 = vector.load %arg6[%c2, %c0_11, %c0_12] : memref<4x128x128xbf16, #tpu.memory_space<vmem>>, vector<1x128x128xbf16>
    %11 = vector.shape_cast %10 : vector<1x128x128xbf16> to vector<128x128xbf16>
    %cst_13 = arith.constant dense<0.000000e+00> : vector<512x128xf32>
    %12 = tpu.matmul %9, %11, %cst_13 {dimension_numbers = #tpu.dot_dimension_numbers<[1], [0], [0], [1], [0, 0, 1, 1], [], []>} : vector<512x128xbf16>, vector<128x128xbf16>, vector<512x128xf32> -> vector<512x128xf32>
    %13 = arith.addf %8, %12 : vector<512x128xf32>
    %c0_14 = arith.constant 0 : index
    %c0_15 = arith.constant 0 : index
    %14 = vector.load %arg5[%c0_14, %c0_15] : memref<512x128xbf16, #tpu.memory_space<vmem>>, vector<512x128xbf16>
    %c3 = arith.constant 3 : index
    %c0_16 = arith.constant 0 : index
    %c0_17 = arith.constant 0 : index
    %15 = vector.load %arg6[%c3, %c0_16, %c0_17] : memref<4x128x128xbf16, #tpu.memory_space<vmem>>, vector<1x128x128xbf16>
    %16 = vector.shape_cast %15 : vector<1x128x128xbf16> to vector<128x128xbf16>
    %cst_18 = arith.constant dense<0.000000e+00> : vector<512x128xf32>
    %17 = tpu.matmul %14, %16, %cst_18 {dimension_numbers = #tpu.dot_dimension_numbers<[1], [0], [0], [1], [0, 0, 1, 1], [], []>} : vector<512x128xbf16>, vector<128x128xbf16>, vector<512x128xf32> -> vector<512x128xf32>
    %18 = arith.addf %13, %17 : vector<512x128xf32>
    %19 = arith.truncf %18 : vector<512x128xf32> to vector<512x128xbf16>
    %c0_19 = arith.constant 0 : index
    %c0_20 = arith.constant 0 : index
    %20 = vector.load %arg7[%c0_19, %c0_20] : memref<512x128xbf16, #tpu.memory_space<vmem>>, vector<512x128xbf16>
    tpu.vector_store %arg7[%c0_19, %c0_20], %19 {strides = array<i32>} : memref<512x128xbf16, #tpu.memory_space<vmem>>, vector<512x128xbf16>,
    %c512_i32 = arith.constant 512 : i32
    %21 = arith.muli %arg0, %c512_i32 : i32
    %22 = tpu.iota {dimensions = array<i32: 0>} : vector<512x1xi32>
    %23 = vector.broadcast %21 : i32 to vector<512x1xi32>
    %24 = arith.addi %23, %22 : vector<512x1xi32>
    %c512_i32_21 = arith.constant 512 : i32
    %25 = vector.broadcast %c512_i32_21 : i32 to vector<512x1xi32>
    %26 = arith.cmpi slt, %24, %25 : vector<512x1xi32>
    %cst_22 = arith.constant 0.000000e+00 : f32
    %27 = vector.shape_cast %26 : vector<512x1xi1> to vector<512x1xi1>
    %28 = vector.broadcast %27 : vector<512x1xi1> to vector<512x128xi1>
    %29 = vector.broadcast %cst_22 : f32 to vector<512x128xf32>
    %30 = arith.select %28, %18, %29 : vector<512x128xi1>, vector<512x128xf32>
    %cst_23 = arith.constant dense<0.000000e+00> : vector<128xf32>
    %31 = vector.multi_reduction <add>, %30, %cst_23 [0] : vector<512x128xf32> to vector<128xf32>
    %32 = vector.shape_cast %31 : vector<128xf32> to vector<1x128xf32>
    %33 = arith.mulf %30, %30 : vector<512x128xf32>
    %cst_24 = arith.constant dense<0.000000e+00> : vector<128xf32>
    %34 = vector.multi_reduction <add>, %33, %cst_24 [0] : vector<512x128xf32> to vector<128xf32>
    %35 = vector.shape_cast %34 : vector<128xf32> to vector<1x128xf32>
    %cst_25 = arith.constant 0.000000e+00 : f32
    %36 = vector.broadcast %cst_25 : f32 to vector<1x8x128xf32>
    %c0_26 = arith.constant 0 : index
    %c0_27 = arith.constant 0 : index
    %c0_28 = arith.constant 0 : index
    %37 = vector.load %arg8[%c0_26, %c0_27, %c0_28] : memref<1x8x128xf32, #tpu.memory_space<vmem>>, vector<1x8x128xf32>
    tpu.vector_store %arg8[%c0_26, %c0_27, %c0_28], %36 {strides = array<i32>} : memref<1x8x128xf32, #tpu.memory_space<vmem>>, vector<1x8x128xf32>,
    %cst_29 = arith.constant 0.000000e+00 : f32
    %38 = vector.broadcast %cst_29 : f32 to vector<1x8x128xf32>
    %c0_30 = arith.constant 0 : index
    %c0_31 = arith.constant 0 : index
    %c0_32 = arith.constant 0 : index
    %39 = vector.load %arg9[%c0_30, %c0_31, %c0_32] : memref<1x8x128xf32, #tpu.memory_space<vmem>>, vector<1x8x128xf32>
    tpu.vector_store %arg9[%c0_30, %c0_31, %c0_32], %38 {strides = array<i32>} : memref<1x8x128xf32, #tpu.memory_space<vmem>>, vector<1x8x128xf32>,
    %40 = vector.shape_cast %32 : vector<1x128xf32> to vector<1x1x128xf32>
    %c0_33 = arith.constant 0 : index
    %c0_34 = arith.constant 0 : index
    %c0_35 = arith.constant 0 : index
    %41 = vector.load %arg8[%c0_33, %c0_34, %c0_35] : memref<1x8x128xf32, #tpu.memory_space<vmem>>, vector<1x1x128xf32>
    tpu.vector_store %arg8[%c0_33, %c0_34, %c0_35], %40 {strides = array<i32>} : memref<1x8x128xf32, #tpu.memory_space<vmem>>, vector<1x1x128xf32>,
    %42 = vector.shape_cast %35 : vector<1x128xf32> to vector<1x1x128xf32>
    %c0_36 = arith.constant 0 : index
    %c0_37 = arith.constant 0 : index
    %c0_38 = arith.constant 0 : index
    %43 = vector.load %arg9[%c0_36, %c0_37, %c0_38] : memref<1x8x128xf32, #tpu.memory_space<vmem>>, vector<1x1x128xf32>
    tpu.vector_store %arg9[%c0_36, %c0_37, %c0_38], %42 {strides = array<i32>} : memref<1x8x128xf32, #tpu.memory_space<vmem>>, vector<1x1x128xf32>,
    return
  }
  func.func @transform_0(%arg0: i32, %arg1: i32) -> (i32, i32) {
    %c0_i32 = arith.constant 0 : i32
    %c0_i32_0 = arith.constant 0 : i32
    return %arg0, %c0_i32 : i32, i32
  }
  func.func @transform_1(%arg0: i32, %arg1: i32) -> (i32, i32) {
    %c0_i32 = arith.constant 0 : i32
    %c0_i32_0 = arith.constant 0 : i32
    return %arg0, %c0_i32 : i32, i32
  }
  func.func @transform_2(%arg0: i32, %arg1: i32) -> (i32, i32) {
    %c0_i32 = arith.constant 0 : i32
    %c0_i32_0 = arith.constant 0 : i32
    return %arg0, %c0_i32 : i32, i32
  }
  func.func @transform_3(%arg0: i32, %arg1: i32) -> (i32, i32) {
    %c0_i32 = arith.constant 0 : i32
    %c0_i32_0 = arith.constant 0 : i32
    return %arg0, %c0_i32 : i32, i32
  }
  func.func @transform_4(%arg0: i32, %arg1: i32) -> (i32, i32, i32) {
    %c0_i32 = arith.constant 0 : i32
    %c0_i32_0 = arith.constant 0 : i32
    %c0_i32_1 = arith.constant 0 : i32
    return %c0_i32, %c0_i32_0, %arg1 : i32, i32, i32
  }
  func.func @transform_5(%arg0: i32, %arg1: i32) -> (i32, i32) {
    %c0_i32 = arith.constant 0 : i32
    return %arg0, %arg1 : i32, i32
  }
  func.func @transform_6(%arg0: i32, %arg1: i32) -> (i32, i32, i32) {
    %c0_i32 = arith.constant 0 : i32
    %c0_i32_0 = arith.constant 0 : i32
    return %arg0, %c0_i32, %arg1 : i32, i32, i32
  }
  func.func @transform_7(%arg0: i32, %arg1: i32) -> (i32, i32, i32) {
    %c0_i32 = arith.constant 0 : i32
    %c0_i32_0 = arith.constant 0 : i32
    return %arg0, %c0_i32, %arg1 : i32, i32, i32
  }
}

module attributes {stable_mosaic.version = 11 : i64} {
  func.func @_bn_silu_kernel(%arg0: i32, %arg1: i32, %arg2: memref<512x128xbf16, #tpu.memory_space<vmem>>, %arg3: memref<1x128xf32, #tpu.memory_space<vmem>>, %arg4: memref<1x128xf32, #tpu.memory_space<vmem>>, %arg5: memref<512x128xf32, #tpu.memory_space<vmem>>) attributes {dimension_semantics = [#tpu.dimension_semantics<parallel>, #tpu.dimension_semantics<parallel>], iteration_bounds = array<i64: 1, 1>, scalar_prefetch = 0 : i64, scratch_operands = 0 : i64, tpu.core_type = #tpu.core_type<tc>, window_params = [{transform_indices = @transform_0, window_bounds = array<i64: 512, 128>}, {transform_indices = @transform_1, window_bounds = array<i64: 1, 128>}, {transform_indices = @transform_2, window_bounds = array<i64: 1, 128>}, {transform_indices = @transform_3, window_bounds = array<i64: 512, 128>}]} {
    %c0 = arith.constant 0 : index
    %c0_0 = arith.constant 0 : index
    %0 = vector.load %arg2[%c0, %c0_0] : memref<512x128xbf16, #tpu.memory_space<vmem>>, vector<512x128xbf16>
    %1 = arith.extf %0 : vector<512x128xbf16> to vector<512x128xf32>
    %c0_1 = arith.constant 0 : index
    %c0_2 = arith.constant 0 : index
    %2 = vector.load %arg3[%c0_1, %c0_2] : memref<1x128xf32, #tpu.memory_space<vmem>>, vector<1x128xf32>
    %3 = vector.broadcast %2 : vector<1x128xf32> to vector<512x128xf32>
    %4 = arith.mulf %1, %3 : vector<512x128xf32>
    %c0_3 = arith.constant 0 : index
    %c0_4 = arith.constant 0 : index
    %5 = vector.load %arg4[%c0_3, %c0_4] : memref<1x128xf32, #tpu.memory_space<vmem>>, vector<1x128xf32>
    %6 = vector.broadcast %5 : vector<1x128xf32> to vector<512x128xf32>
    %7 = arith.addf %4, %6 : vector<512x128xf32>
    %8 = arith.negf %7 : vector<512x128xf32>
    %9 = math.exp %8 : vector<512x128xf32>
    %cst = arith.constant 1.000000e+00 : f32
    %10 = vector.broadcast %cst : f32 to vector<512x128xf32>
    %11 = arith.addf %10, %9 : vector<512x128xf32>
    %12 = arith.divf %10, %11 : vector<512x128xf32>
    %13 = arith.mulf %7, %12 : vector<512x128xf32>
    %c0_5 = arith.constant 0 : index
    %c0_6 = arith.constant 0 : index
    %14 = vector.load %arg5[%c0_5, %c0_6] : memref<512x128xf32, #tpu.memory_space<vmem>>, vector<512x128xf32>
    tpu.vector_store %arg5[%c0_5, %c0_6], %13 {strides = array<i32>} : memref<512x128xf32, #tpu.memory_space<vmem>>, vector<512x128xf32>,
    return
  }
  func.func @transform_0(%arg0: i32, %arg1: i32) -> (i32, i32) {
    %c0_i32 = arith.constant 0 : i32
    return %arg0, %arg1 : i32, i32
  }
  func.func @transform_1(%arg0: i32, %arg1: i32) -> (i32, i32) {
    %c0_i32 = arith.constant 0 : i32
    %c0_i32_0 = arith.constant 0 : i32
    return %c0_i32, %arg1 : i32, i32
  }
  func.func @transform_2(%arg0: i32, %arg1: i32) -> (i32, i32) {
    %c0_i32 = arith.constant 0 : i32
    %c0_i32_0 = arith.constant 0 : i32
    return %c0_i32, %arg1 : i32, i32
  }
  func.func @transform_3(%arg0: i32, %arg1: i32) -> (i32, i32) {
    %c0_i32 = arith.constant 0 : i32
    return %arg0, %arg1 : i32, i32
  }
}

</mosaic_0001>

<llo_original>
// kernel: tile.18
$region0: #{tile.18}
  #allocation0 [shape = 's32[1]{0}', space=sflag, size = 0x4, scoped, tag = 'scoped memory for tile.18']
  %s0 = inlined_call_operand.vmem [shape: f32[128], index: 0, kind: input, shape index: {}]
  %s1 = inlined_call_operand.vmem [shape: f32[16,128], index: 1, kind: output, shape index: {}]
  // Predicated region
  $region2: #{tile.18} parent=0 // pred_check
    _
  $region3: #{tile.18} parent=0 // pred_check_branch
    %3 = sbr.rel (0) target = $region5
  $region4: #{tile.18} parent=0 // pred_region
    _
  $region5: #{tile.18} parent=0 // pred_fallthru
    _
  %v4 = vld [vmem:[%s0] ss:$0 sm:$0xff]
  %5 = vst [vmem:[%s1] sm:$0xff] %v4
  %s6 = scalar_lea.vmem %s1, 8
  %7 = vst [vmem:[%s6] sm:$0xff] %v4

// kernel: sppf_forward.4
$region0: #{sppf_forward.4}
  #allocation0 [shape = 'u32[]', space=smem, size = 0x4, offset = 0x4, fixed_abs, tag = 'smem constant byte address 0x4 - core index']
  #allocation1 [shape = 'u32[144,128]{1,0:T(1,128)}', space=vmem, size = 0x12000, scoped, tag = 'internal scratch']
  %s0 = inlined_call_operand.vmem [shape: bf16[512,128], index: 0, kind: input, shape index: {}]
  %s1 = inlined_call_operand.vmem [shape: bf16[1,128,128], index: 1, kind: input, shape index: {}]
  %s2 = inlined_call_operand.vmem [shape: bf16[512,128], index: 2, kind: output, shape index: {0}]
  %s3 = inlined_call_operand.vmem [shape: f32[1,8,128], index: 3, kind: output, shape index: {1}]
  %s4 = inlined_call_operand.vmem [shape: f32[1,8,128], index: 4, kind: output, shape index: {2}]
  %5 = xla_tuple %s2, %s3, %s4
  %s6 = sld [smem:[#allocation0]]
  $region34: #{sppf_forward.4} parent=0
    _
  %s8 = ssub.s32 1, %s6
  %s9 = scalar_select 0, %s8, %s6
  // Predicated region
  $region2: #{sppf_forward.4} parent=0 // pred_check
    _
  $region3: #{sppf_forward.4} parent=0 // pred_check_branch
    %11 = sbr.rel (0) target = $region5
  $region4: #{sppf_forward.4} parent=0 // pred_region
    _
  $region5: #{sppf_forward.4} parent=0 // pred_fallthru
    _
  // Predicated region
  $region6: #{sppf_forward.4} parent=0 // pred_check
    _
  $region7: #{sppf_forward.4} parent=0 // pred_check_branch
    %13 = sbr.rel (0) target = $region9
  $region8: #{sppf_forward.4} parent=0 // pred_region
    _
  $region9: #{sppf_forward.4} parent=0 // pred_fallthru
    _
  %v15 = vld [vmem:[%s0] sm:$0xf]
  %v16 = vld [vmem:[%s0 + $0x4] sm:$0xf]
  %v17 = vld [vmem:[%s0 + $0x8] sm:$0xf]
  %v18 = vld [vmem:[%s0 + $0xc] sm:$0xf]
  %v19 = vld [vmem:[%s0 + $0x10] sm:$0xf]
  %v20 = vld [vmem:[%s0 + $0x14] sm:$0xf]
  %v21 = vld [vmem:[%s0 + $0x18] sm:$0xf]
  %v22 = vld [vmem:[%s0 + $0x1c] sm:$0xf]
  %v23 = vld [vmem:[%s0 + $0x20] sm:$0xf]
  %v24 = vld [vmem:[%s0 + $0x24] sm:$0xf]
  %v25 = vld [vmem:[%s0 + $0x28] sm:$0xf]
  %v26 = vld [vmem:[%s0 + $0x2c] sm:$0xf]
  %v27 = vld [vmem:[%s0 + $0x30] sm:$0xf]
  %v28 = vld [vmem:[%s0 + $0x34] sm:$0xf]
  %v29 = vld [vmem:[%s0 + $0x38] sm:$0xf]
  %v30 = vld [vmem:[%s0 + $0x3c] sm:$0xf]
  %v31 = vld [vmem:[%s0 + $0x40] sm:$0xf]
  %v32 = vld [vmem:[%s0 + $0x44] sm:$0xf]
  %v33 = vld [vmem:[%s0 + $0x48] sm:$0xf]
  %v34 = vld [vmem:[%s0 + $0x4c] sm:$0xf]
  %v35 = vld [vmem:[%s0 + $0x50] sm:$0xf]
  %v36 = vld [vmem:[%s0 + $0x54] sm:$0xf]
  %v37 = vld [vmem:[%s0 + $0x58] sm:$0xf]
  %v38 = vld [vmem:[%s0 + $0x5c] sm:$0xf]
  %v39 = vld [vmem:[%s0 + $0x60] sm:$0xf]
  %v40 = vld [vmem:[%s0 + $0x64] sm:$0xf]
  %v41 = vld [vmem:[%s0 + $0x68] sm:$0xf]
  %v42 = vld [vmem:[%s0 + $0x6c] sm:$0xf]
  %v43 = vld [vmem:[%s0 + $0x70] sm:$0xf]
  %v44 = vld [vmem:[%s0 + $0x74] sm:$0xf]
  %v45 = vld [vmem:[%s0 + $0x78] sm:$0xf]
  %v46 = vld [vmem:[%s0 + $0x7c] sm:$0xf]
  %v47 = vld [vmem:[%s0 + $0x80] sm:$0xf]
  %v48 = vld [vmem:[%s0 + $0x84] sm:$0xf]
  %v49 = vld [vmem:[%s0 + $0x88] sm:$0xf]
  %v50 = vld [vmem:[%s0 + $0x8c] sm:$0xf]
  %v51 = vld [vmem:[%s0 + $0x90] sm:$0xf]
  %v52 = vld [vmem:[%s0 + $0x94] sm:$0xf]
  %v53 = vld [vmem:[%s0 + $0x98] sm:$0xf]
  %v54 = vld [vmem:[%s0 + $0x9c] sm:$0xf]
  %v55 = vld [vmem:[%s0 + $0xa0] sm:$0xf]
  %v56 = vld [vmem:[%s0 + $0xa4] sm:$0xf]
  %v57 = vld [vmem:[%s0 + $0xa8] sm:$0xf]
  %v58 = vld [vmem:[%s0 + $0xac] sm:$0xf]
  %v59 = vld [vmem:[%s0 + $0xb0] sm:$0xf]
  %v60 = vld [vmem:[%s0 + $0xb4] sm:$0xf]
  %v61 = vld [vmem:[%s0 + $0xb8] sm:$0xf]
  %v62 = vld [vmem:[%s0 + $0xbc] sm:$0xf]
  %v63 = vld [vmem:[%s0 + $0xc0] sm:$0xf]
  %v64 = vld [vmem:[%s0 + $0xc4] sm:$0xf]
  %v65 = vld [vmem:[%s0 + $0xc8] sm:$0xf]
  %v66 = vld [vmem:[%s0 + $0xcc] sm:$0xf]
  %v67 = vld [vmem:[%s0 + $0xd0] sm:$0xf]
  %v68 = vld [vmem:[%s0 + $0xd4] sm:$0xf]
  %v69 = vld [vmem:[%s0 + $0xd8] sm:$0xf]
  %v70 = vld [vmem:[%s0 + $0xdc] sm:$0xf]
  %v71 = vld [vmem:[%s0 + $0xe0] sm:$0xf]
  %v72 = vld [vmem:[%s0 + $0xe4] sm:$0xf]
  %v73 = vld [vmem:[%s0 + $0xe8] sm:$0xf]
  %v74 = vld [vmem:[%s0 + $0xec] sm:$0xf]
  %v75 = vld [vmem:[%s0 + $0xf0] sm:$0xf]
  %v76 = vld [vmem:[%s0 + $0xf4] sm:$0xf]
  %v77 = vld [vmem:[%s0 + $0xf8] sm:$0xf]
  %v78 = vld [vmem:[%s0 + $0xfc] sm:$0xf]
  %v79 = vld [vmem:[%s1] sm:$0xf]
  %v80 = vld [vmem:[%s1 + $0x4] sm:$0xf]
  %v81 = vld [vmem:[%s1 + $0x8] sm:$0xf]
  %v82 = vld [vmem:[%s1 + $0xc] sm:$0xf]
  %v83 = vld [vmem:[%s1 + $0x10] sm:$0xf]
  %v84 = vld [vmem:[%s1 + $0x14] sm:$0xf]
  %v85 = vld [vmem:[%s1 + $0x18] sm:$0xf]
  %v86 = vld [vmem:[%s1 + $0x1c] sm:$0xf]
  %v87 = vld [vmem:[%s1 + $0x20] sm:$0xf]
  %v88 = vld [vmem:[%s1 + $0x24] sm:$0xf]
  %v89 = vld [vmem:[%s1 + $0x28] sm:$0xf]
  %v90 = vld [vmem:[%s1 + $0x2c] sm:$0xf]
  %v91 = vld [vmem:[%s1 + $0x30] sm:$0xf]
  %v92 = vld [vmem:[%s1 + $0x34] sm:$0xf]
  %v93 = vld [vmem:[%s1 + $0x38] sm:$0xf]
  %v94 = vld [vmem:[%s1 + $0x3c] sm:$0xf]
  %v159 = vunpack.c.l.b16 %v15
  %v160 = vunpack.c.l.b16 %v16
  %v161 = vunpack.c.l.b16 %v17
  %v162 = vunpack.c.l.b16 %v18
  %v163 = vunpack.c.l.b16 %v19
  %v164 = vunpack.c.l.b16 %v20
  %v165 = vunpack.c.l.b16 %v21
  %v166 = vunpack.c.l.b16 %v22
  %v167 = vunpack.c.l.b16 %v23
  %v168 = vunpack.c.l.b16 %v24
  %v169 = vunpack.c.l.b16 %v25
  %v170 = vunpack.c.l.b16 %v26
  %v171 = vunpack.c.l.b16 %v27
  %v172 = vunpack.c.l.b16 %v28
  %v173 = vunpack.c.l.b16 %v29
  %v174 = vunpack.c.l.b16 %v30
  %v175 = vunpack.c.l.b16 %v31
  %v176 = vunpack.c.l.b16 %v32
  %v177 = vunpack.c.l.b16 %v33
  %v178 = vunpack.c.l.b16 %v34
  %v179 = vunpack.c.l.b16 %v35
  %v180 = vunpack.c.l.b16 %v36
  %v181 = vunpack.c.l.b16 %v37
  %v182 = vunpack.c.l.b16 %v38
  %v183 = vunpack.c.l.b16 %v39
  %v184 = vunpack.c.l.b16 %v40
  %v185 = vunpack.c.l.b16 %v41
  %v186 = vunpack.c.l.b16 %v42
  %v187 = vunpack.c.l.b16 %v43
  %v188 = vunpack.c.l.b16 %v44
  %v189 = vunpack.c.l.b16 %v45
  %v190 = vunpack.c.l.b16 %v46
  %v191 = vunpack.c.l.b16 %v47
  %v192 = vunpack.c.l.b16 %v48
  %v193 = vunpack.c.l.b16 %v49
  %v194 = vunpack.c.l.b16 %v50
  %v195 = vunpack.c.l.b16 %v51
  %v196 = vunpack.c.l.b16 %v52
  %v197 = vunpack.c.l.b16 %v53
  %v198 = vunpack.c.l.b16 %v54
  %v199 = vunpack.c.l.b16 %v55
  %v200 = vunpack.c.l.b16 %v56
  %v201 = vunpack.c.l.b16 %v57
  %v202 = vunpack.c.l.b16 %v58
  %v203 = vunpack.c.l.b16 %v59
  %v204 = vunpack.c.l.b16 %v60
  %v205 = vunpack.c.l.b16 %v61
  %v206 = vunpack.c.l.b16 %v62
  %v207 = vunpack.c.l.b16 %v63
  %v208 = vunpack.c.l.b16 %v64
  %v209 = vunpack.c.l.b16 %v65
  %v210 = vunpack.c.l.b16 %v66
  %v211 = vunpack.c.l.b16 %v67
  %v212 = vunpack.c.l.b16 %v68
  %v213 = vunpack.c.l.b16 %v69
  %v214 = vunpack.c.l.b16 %v70
  %v215 = vunpack.c.l.b16 %v71
  %v216 = vunpack.c.l.b16 %v72
  %v217 = vunpack.c.l.b16 %v73
  %v218 = vunpack.c.l.b16 %v74
  %v219 = vunpack.c.l.b16 %v75
  %v220 = vunpack.c.l.b16 %v76
  %v221 = vunpack.c.l.b16 %v77
  %v222 = vunpack.c.l.b16 %v78
  %v223 = vpack.c.b16 %v160, %v159
  %v224 = vpack.c.b16 %v162, %v161
  %v225 = vpack.c.b16 %v164, %v163
  %v226 = vpack.c.b16 %v166, %v165
  %v227 = vpack.c.b16 %v168, %v167
  %v228 = vpack.c.b16 %v170, %v169
  %v229 = vpack.c.b16 %v172, %v171
  %v230 = vpack.c.b16 %v174, %v173
  %v231 = vpack.c.b16 %v176, %v175
  %v232 = vpack.c.b16 %v178, %v177
  %v233 = vpack.c.b16 %v180, %v179
  %v234 = vpack.c.b16 %v182, %v181
  %v235 = vpack.c.b16 %v184, %v183
  %v236 = vpack.c.b16 %v186, %v185
  %v237 = vpack.c.b16 %v188, %v187
  %v238 = vpack.c.b16 %v190, %v189
  %v239 = vpack.c.b16 %v192, %v191
  %v240 = vpack.c.b16 %v194, %v193
  %v241 = vpack.c.b16 %v196, %v195
  %v242 = vpack.c.b16 %v198, %v197
  %v243 = vpack.c.b16 %v200, %v199
  %v244 = vpack.c.b16 %v202, %v201
  %v245 = vpack.c.b16 %v204, %v203
  %v246 = vpack.c.b16 %v206, %v205
  %v247 = vpack.c.b16 %v208, %v207
  %v248 = vpack.c.b16 %v210, %v209
  %v249 = vpack.c.b16 %v212, %v211
  %v250 = vpack.c.b16 %v214, %v213
  %v251 = vpack.c.b16 %v216, %v215
  %v252 = vpack.c.b16 %v218, %v217
  %v253 = vpack.c.b16 %v220, %v219
  %v254 = vpack.c.b16 %v222, %v221
  %v303 = vunpack.c.l.b16 %v79
  %v304 = vunpack.c.l.b16 %v80
  %v305 = vunpack.c.l.b16 %v81
  %v306 = vunpack.c.l.b16 %v82
  %v307 = vunpack.c.l.b16 %v83
  %v308 = vunpack.c.l.b16 %v84
  %v309 = vunpack.c.l.b16 %v85
  %v310 = vunpack.c.l.b16 %v86
  %v311 = vunpack.c.l.b16 %v87
  %v312 = vunpack.c.l.b16 %v88
  %v313 = vunpack.c.l.b16 %v89
  %v314 = vunpack.c.l.b16 %v90
  %v315 = vunpack.c.l.b16 %v91
  %v316 = vunpack.c.l.b16 %v92
  %v317 = vunpack.c.l.b16 %v93
  %v318 = vunpack.c.l.b16 %v94
  %v319 = vpack.c.b16 %v304, %v303
  %v320 = vpack.c.b16 %v306, %v305
  %v321 = vpack.c.b16 %v308, %v307
  %v322 = vpack.c.b16 %v310, %v309
  %v323 = vpack.c.b16 %v312, %v311
  %v324 = vpack.c.b16 %v314, %v313
  %v325 = vpack.c.b16 %v316, %v315
  %v326 = vpack.c.b16 %v318, %v317
  %335 = vmatprep.subr.bf16.mxu0 0
  %336 = vmatpush1.bf16.msra.mxu0 %v319
  %337 = vmatprep.subr.bf16.mxu0 0
  %338 = vmatpush1.bf16.msra.mxu0 %v320
  %339 = vmatprep.subr.bf16.mxu0 0
  %340 = vmatpush1.bf16.msra.mxu0 %v321
  %341 = vmatprep.subr.bf16.mxu0 0
  %342 = vmatpush1.bf16.msra.mxu0 %v322
  %343 = vmatprep.subr.bf16.mxu0 0
  %344 = vmatpush1.bf16.msra.mxu0 %v323
  %345 = vmatprep.subr.bf16.mxu0 0
  %346 = vmatpush1.bf16.msra.mxu0 %v324
  %347 = vmatprep.subr.bf16.mxu0 0
  %348 = vmatpush1.bf16.msra.mxu0 %v325
  %349 = vmatprep.subr.bf16.mxu0 0
  %350 = vmatpush1.bf16.msra.mxu0 %v326
  %351 = vmatprep.subr.bf16.mxu0 0
  %352 = vmatpush1.bf16.msra.mxu0 0
  %353 = vmatprep.subr.bf16.mxu0 0
  %354 = vmatpush1.bf16.msra.mxu0 0
  %355 = vmatprep.subr.bf16.mxu0 0
  %356 = vmatpush1.bf16.msra.mxu0 0
  %357 = vmatprep.subr.bf16.mxu0 0
  %358 = vmatpush1.bf16.msra.mxu0 0
  %359 = vmatprep.subr.bf16.mxu0 0
  %360 = vmatpush1.bf16.msra.mxu0 0
  %361 = vmatprep.subr.bf16.mxu0 0
  %362 = vmatpush1.bf16.msra.mxu0 0
  %363 = vmatprep.subr.bf16.mxu0 0
  %364 = vmatpush1.bf16.msra.mxu0 0
  %365 = vmatprep.subr.bf16.mxu0 0
  %366 = vmatpush1.bf16.msra.mxu0 0
  %367 = vmatprep.mubr.bf16.mxu0 0
  %368 = vmatmul.mubr.bf16.gmra.mrb[0].mxu0 %v223
  %v369 = vpop.f32.mrb[0].mxu0
  %v370 = vadd.f32 0.0, %v369
  %v371 = vpop.f32.mrb[0].mxu0
  %v372 = vpop.f32.mrb[0].mxu0
  %v373 = vadd.f32 0.0, %v372
  %v374 = vpop.f32.mrb[0].mxu0
  %375 = vmatprep.mubr.bf16.mxu0 0
  %376 = vmatmul.mubr.bf16.gmra.mrb[0].mxu0 %v224
  %v377 = vpop.f32.mrb[0].mxu0
  %v378 = vadd.f32 0.0, %v377
  %v379 = vpop.f32.mrb[0].mxu0
  %v380 = vpop.f32.mrb[0].mxu0
  %v381 = vadd.f32 0.0, %v380
  %v382 = vpop.f32.mrb[0].mxu0
  %383 = vmatprep.mubr.bf16.mxu0 0
  %384 = vmatmul.mubr.bf16.gmra.mrb[0].mxu0 %v225
  %v385 = vpop.f32.mrb[0].mxu0
  %v386 = vadd.f32 0.0, %v385
  %v387 = vpop.f32.mrb[0].mxu0
  %v388 = vpop.f32.mrb[0].mxu0
  %v389 = vadd.f32 0.0, %v388
  %v390 = vpop.f32.mrb[0].mxu0
  %391 = vmatprep.mubr.bf16.mxu0 0
  %392 = vmatmul.mubr.bf16.gmra.mrb[0].mxu0 %v226
  %v393 = vpop.f32.mrb[0].mxu0
  %v394 = vadd.f32 0.0, %v393
  %v395 = vpop.f32.mrb[0].mxu0
  %v396 = vpop.f32.mrb[0].mxu0
  %v397 = vadd.f32 0.0, %v396
  %v398 = vpop.f32.mrb[0].mxu0
  %399 = vmatprep.mubr.bf16.mxu0 0
  %400 = vmatmul.mubr.bf16.gmra.mrb[0].mxu0 %v227
  %v401 = vpop.f32.mrb[0].mxu0
  %v402 = vadd.f32 0.0, %v401
  %v403 = vpop.f32.mrb[0].mxu0
  %v404 = vpop.f32.mrb[0].mxu0
  %v405 = vadd.f32 0.0, %v404
  %v406 = vpop.f32.mrb[0].mxu0
  %407 = vmatprep.mubr.bf16.mxu0 0
  %408 = vmatmul.mubr.bf16.gmra.mrb[0].mxu0 %v228
  %v409 = vpop.f32.mrb[0].mxu0
  %v410 = vadd.f32 0.0, %v409
  %v411 = vpop.f32.mrb[0].mxu0
  %v412 = vpop.f32.mrb[0].mxu0
  %v413 = vadd.f32 0.0, %v412
  %v414 = vpop.f32.mrb[0].mxu0
  %415 = vmatprep.mubr.bf16.mxu0 0
  %416 = vmatmul.mubr.bf16.gmra.mrb[0].mxu0 %v229
  %v417 = vpop.f32.mrb[0].mxu0
  %v418 = vadd.f32 0.0, %v417
  %v419 = vpop.f32.mrb[0].mxu0
  %v420 = vpop.f32.mrb[0].mxu0
  %v421 = vadd.f32 0.0, %v420
  %v422 = vpop.f32.mrb[0].mxu0
  %423 = vmatprep.mubr.bf16.mxu0 0
  %424 = vmatmul.mubr.bf16.gmra.mrb[0].mxu0 %v230
  %v425 = vpop.f32.mrb[0].mxu0
  %v426 = vadd.f32 0.0, %v425
  %v427 = vpop.f32.mrb[0].mxu0
  %v428 = vpop.f32.mrb[0].mxu0
  %v429 = vadd.f32 0.0, %v428
  %v430 = vpop.f32.mrb[0].mxu0
  %431 = vmatprep.mubr.bf16.mxu0 0
  %432 = vmatmul.mubr.bf16.gmra.mrb[0].mxu0 %v231
  %v433 = vpop.f32.mrb[0].mxu0
  %v434 = vadd.f32 0.0, %v433
  %v435 = vpop.f32.mrb[0].mxu0
  %v436 = vpop.f32.mrb[0].mxu0
  %v437 = vadd.f32 0.0, %v436
  %v438 = vpop.f32.mrb[0].mxu0
  %439 = vmatprep.mubr.bf16.mxu0 0
  %440 = vmatmul.mubr.bf16.gmra.mrb[0].mxu0 %v232
  %v441 = vpop.f32.mrb[0].mxu0
  %v442 = vadd.f32 0.0, %v441
  %v443 = vpop.f32.mrb[0].mxu0
  %v444 = vpop.f32.mrb[0].mxu0
  %v445 = vadd.f32 0.0, %v444
  %v446 = vpop.f32.mrb[0].mxu0
  %447 = vmatprep.mubr.bf16.mxu0 0
  %448 = vmatmul.mubr.bf16.gmra.mrb[0].mxu0 %v233
  %v449 = vpop.f32.mrb[0].mxu0
  %v450 = vadd.f32 0.0, %v449
  %v451 = vpop.f32.mrb[0].mxu0
  %v452 = vpop.f32.mrb[0].mxu0
  %v453 = vadd.f32 0.0, %v452
  %v454 = vpop.f32.mrb[0].mxu0
  %455 = vmatprep.mubr.bf16.mxu0 0
  %456 = vmatmul.mubr.bf16.gmra.mrb[0].mxu0 %v234
  %v457 = vpop.f32.mrb[0].mxu0
  %v458 = vadd.f32 0.0, %v457
  %v459 = vpop.f32.mrb[0].mxu0
  %v460 = vpop.f32.mrb[0].mxu0
  %v461 = vadd.f32 0.0, %v460
  %v462 = vpop.f32.mrb[0].mxu0
  %463 = vmatprep.mubr.bf16.mxu0 0
  %464 = vmatmul.mubr.bf16.gmra.mrb[0].mxu0 %v235
  %v465 = vpop.f32.mrb[0].mxu0
  %v466 = vadd.f32 0.0, %v465
  %v467 = vpop.f32.mrb[0].mxu0
  %v468 = vpop.f32.mrb[0].mxu0
  %v469 = vadd.f32 0.0, %v468
  %v470 = vpop.f32.mrb[0].mxu0
  %471 = vmatprep.mubr.bf16.mxu0 0
  %472 = vmatmul.mubr.bf16.gmra.mrb[0].mxu0 %v236
  %v473 = vpop.f32.mrb[0].mxu0
  %v474 = vadd.f32 0.0, %v473
  %v475 = vpop.f32.mrb[0].mxu0
  %v476 = vpop.f32.mrb[0].mxu0
  %v477 = vadd.f32 0.0, %v476
  %v478 = vpop.f32.mrb[0].mxu0
  %479 = vmatprep.mubr.bf16.mxu0 0
  %480 = vmatmul.mubr.bf16.gmra.mrb[0].mxu0 %v237
  %v481 = vpop.f32.mrb[0].mxu0
  %v482 = vadd.f32 0.0, %v481
  %v483 = vpop.f32.mrb[0].mxu0
  %v484 = vpop.f32.mrb[0].mxu0
  %v485 = vadd.f32 0.0, %v484
  %v486 = vpop.f32.mrb[0].mxu0
  %487 = vmatprep.mubr.bf16.mxu0 0
  %488 = vmatmul.mubr.bf16.gmra.mrb[0].mxu0 %v238
  %v489 = vpop.f32.mrb[0].mxu0
  %v490 = vadd.f32 0.0, %v489
  %v491 = vpop.f32.mrb[0].mxu0
  %v492 = vpop.f32.mrb[0].mxu0
  %v493 = vadd.f32 0.0, %v492
  %v494 = vpop.f32.mrb[0].mxu0
  %495 = vmatprep.mubr.bf16.mxu0 0
  %496 = vmatmul.mubr.bf16.gmra.mrb[0].mxu0 %v239
  %v497 = vpop.f32.mrb[0].mxu0
  %v498 = vadd.f32 0.0, %v497
  %v499 = vpop.f32.mrb[0].mxu0
  %v500 = vpop.f32.mrb[0].mxu0
  %v501 = vadd.f32 0.0, %v500
  %v502 = vpop.f32.mrb[0].mxu0
  %503 = vmatprep.mubr.bf16.mxu0 0
  %504 = vmatmul.mubr.bf16.gmra.mrb[0].mxu0 %v240
  %v505 = vpop.f32.mrb[0].mxu0
  %v506 = vadd.f32 0.0, %v505
  %v507 = vpop.f32.mrb[0].mxu0
  %v508 = vpop.f32.mrb[0].mxu0
  %v509 = vadd.f32 0.0, %v508
  %v510 = vpop.f32.mrb[0].mxu0
  %511 = vmatprep.mubr.bf16.mxu0 0
  %512 = vmatmul.mubr.bf16.gmra.mrb[0].mxu0 %v241
  %v513 = vpop.f32.mrb[0].mxu0
  %v514 = vadd.f32 0.0, %v513
  %v515 = vpop.f32.mrb[0].mxu0
  %v516 = vpop.f32.mrb[0].mxu0
  %v517 = vadd.f32 0.0, %v516
  %v518 = vpop.f32.mrb[0].mxu0
  %519 = vmatprep.mubr.bf16.mxu0 0
  %520 = vmatmul.mubr.bf16.gmra.mrb[0].mxu0 %v242
  %v521 = vpop.f32.mrb[0].mxu0
  %v522 = vadd.f32 0.0, %v521
  %v523 = vpop.f32.mrb[0].mxu0
  %v524 = vpop.f32.mrb[0].mxu0
  %v525 = vadd.f32 0.0, %v524
  %v526 = vpop.f32.mrb[0].mxu0
  %527 = vmatprep.mubr.bf16.mxu0 0
  %528 = vmatmul.mubr.bf16.gmra.mrb[0].mxu0 %v243
  %v529 = vpop.f32.mrb[0].mxu0
  %v530 = vadd.f32 0.0, %v529
  %v531 = vpop.f32.mrb[0].mxu0
  %v532 = vpop.f32.mrb[0].mxu0
  %v533 = vadd.f32 0.0, %v532
  %v534 = vpop.f32.mrb[0].mxu0
  %535 = vmatprep.mubr.bf16.mxu0 0
  %536 = vmatmul.mubr.bf16.gmra.mrb[0].mxu0 %v244
  %v537 = vpop.f32.mrb[0].mxu0
  %v538 = vadd.f32 0.0, %v537
  %v539 = vpop.f32.mrb[0].mxu0
  %v540 = vpop.f32.mrb[0].mxu0
  %v541 = vadd.f32 0.0, %v540
  %v542 = vpop.f32.mrb[0].mxu0
  %543 = vmatprep.mubr.bf16.mxu0 0
  %544 = vmatmul.mubr.bf16.gmra.mrb[0].mxu0 %v245
  %v545 = vpop.f32.mrb[0].mxu0
  %v546 = vadd.f32 0.0, %v545
  %v547 = vpop.f32.mrb[0].mxu0
  %v548 = vpop.f32.mrb[0].mxu0
  %v549 = vadd.f32 0.0, %v548
  %v550 = vpop.f32.mrb[0].mxu0
  %551 = vmatprep.mubr.bf16.mxu0 0
  %552 = vmatmul.mubr.bf16.gmra.mrb[0].mxu0 %v246
  %v553 = vpop.f32.mrb[0].mxu0
  %v554 = vadd.f32 0.0, %v553
  %v555 = vpop.f32.mrb[0].mxu0
  %v556 = vpop.f32.mrb[0].mxu0
  %v557 = vadd.f32 0.0, %v556
  %v558 = vpop.f32.mrb[0].mxu0
  %559 = vmatprep.mubr.bf16.mxu0 0
  %560 = vmatmul.mubr.bf16.gmra.mrb[0].mxu0 %v247
  %v561 = vpop.f32.mrb[0].mxu0
  %v562 = vadd.f32 0.0, %v561
  %v563 = vpop.f32.mrb[0].mxu0
  %v564 = vpop.f32.mrb[0].mxu0
  %v565 = vadd.f32 0.0, %v564
  %v566 = vpop.f32.mrb[0].mxu0
  %567 = vmatprep.mubr.bf16.mxu0 0
  %568 = vmatmul.mubr.bf16.gmra.mrb[0].mxu0 %v248
  %v569 = vpop.f32.mrb[0].mxu0
  %v570 = vadd.f32 0.0, %v569
  %v571 = vpop.f32.mrb[0].mxu0
  %v572 = vpop.f32.mrb[0].mxu0
  %v573 = vadd.f32 0.0, %v572
  %v574 = vpop.f32.mrb[0].mxu0
  %575 = vmatprep.mubr.bf16.mxu0 0
  %576 = vmatmul.mubr.bf16.gmra.mrb[0].mxu0 %v249
  %v577 = vpop.f32.mrb[0].mxu0
  %v578 = vadd.f32 0.0, %v577
  %v579 = vpop.f32.mrb[0].mxu0
  %v580 = vpop.f32.mrb[0].mxu0
  %v581 = vadd.f32 0.0, %v580
  %v582 = vpop.f32.mrb[0].mxu0
  %583 = vmatprep.mubr.bf16.mxu0 0
  %584 = vmatmul.mubr.bf16.gmra.mrb[0].mxu0 %v250
  %v585 = vpop.f32.mrb[0].mxu0
  %v586 = vadd.f32 0.0, %v585
  %v587 = vpop.f32.mrb[0].mxu0
  %v588 = vpop.f32.mrb[0].mxu0
  %v589 = vadd.f32 0.0, %v588
  %v590 = vpop.f32.mrb[0].mxu0
  %591 = vmatprep.mubr.bf16.mxu0 0
  %592 = vmatmul.mubr.bf16.gmra.mrb[0].mxu0 %v251
  %v593 = vpop.f32.mrb[0].mxu0
  %v594 = vadd.f32 0.0, %v593
  %v595 = vpop.f32.mrb[0].mxu0
  %v596 = vpop.f32.mrb[0].mxu0
  %v597 = vadd.f32 0.0, %v596
  %v598 = vpop.f32.mrb[0].mxu0
  %599 = vmatprep.mubr.bf16.mxu0 0
  %600 = vmatmul.mubr.bf16.gmra.mrb[0].mxu0 %v252
  %v601 = vpop.f32.mrb[0].mxu0
  %v602 = vadd.f32 0.0, %v601
  %v603 = vpop.f32.mrb[0].mxu0
  %v604 = vpop.f32.mrb[0].mxu0
  %v605 = vadd.f32 0.0, %v604
  %v606 = vpop.f32.mrb[0].mxu0
  %607 = vmatprep.mubr.bf16.mxu0 0
  %608 = vmatmul.mubr.bf16.gmra.mrb[0].mxu0 %v253
  %v609 = vpop.f32.mrb[0].mxu0
  %v610 = vadd.f32 0.0, %v609
  %v611 = vpop.f32.mrb[0].mxu0
  %v612 = vpop.f32.mrb[0].mxu0
  %v613 = vadd.f32 0.0, %v612
  %v614 = vpop.f32.mrb[0].mxu0
  %615 = vmatprep.mubr.bf16.mxu0 0
  %616 = vmatmul.mubr.bf16.gmra.mrb[0].mxu0 %v254
  %v617 = vpop.f32.mrb[0].mxu0
  %v618 = vadd.f32 0.0, %v617
  %v619 = vpop.f32.mrb[0].mxu0
  %v620 = vpop.f32.mrb[0].mxu0
  %v621 = vadd.f32 0.0, %v620
  %v622 = vpop.f32.mrb[0].mxu0
  %623 = vdwg.mxu0
  %v624 = vpack.c.bf16 %v373, %v370
  %v625 = vpack.c.bf16 %v381, %v378
  %v626 = vpack.c.bf16 %v389, %v386
  %v627 = vpack.c.bf16 %v397, %v394
  %v628 = vpack.c.bf16 %v405, %v402
  %v629 = vpack.c.bf16 %v413, %v410
  %v630 = vpack.c.bf16 %v421, %v418
  %v631 = vpack.c.bf16 %v429, %v426
  %v632 = vpack.c.bf16 %v437, %v434
  %v633 = vpack.c.bf16 %v445, %v442
  %v634 = vpack.c.bf16 %v453, %v450
  %v635 = vpack.c.bf16 %v461, %v458
  %v636 = vpack.c.bf16 %v469, %v466
  %v637 = vpack.c.bf16 %v477, %v474
  %v638 = vpack.c.bf16 %v485, %v482
  %v639 = vpack.c.bf16 %v493, %v490
  %v640 = vpack.c.bf16 %v501, %v498
  %v641 = vpack.c.bf16 %v509, %v506
  %v642 = vpack.c.bf16 %v517, %v514
  %v643 = vpack.c.bf16 %v525, %v522
  %v644 = vpack.c.bf16 %v533, %v530
  %v645 = vpack.c.bf16 %v541, %v538
  %v646 = vpack.c.bf16 %v549, %v546
  %v647 = vpack.c.bf16 %v557, %v554
  %v648 = vpack.c.bf16 %v565, %v562
  %v649 = vpack.c.bf16 %v573, %v570
  %v650 = vpack.c.bf16 %v581, %v578
  %v651 = vpack.c.bf16 %v589, %v586
  %v652 = vpack.c.bf16 %v597, %v594
  %v653 = vpack.c.bf16 %v605, %v602
  %v654 = vpack.c.bf16 %v613, %v610
  %v655 = vpack.c.bf16 %v621, %v618
  %v688 = vunpack.c.l.b16 %v624
  %v689 = vunpack.c.h.b16 %v624
  %v690 = vunpack.c.l.b16 %v625
  %v691 = vunpack.c.h.b16 %v625
  %v692 = vunpack.c.l.b16 %v626
  %v693 = vunpack.c.h.b16 %v626
  %v694 = vunpack.c.l.b16 %v627
  %v695 = vunpack.c.h.b16 %v627
  %v696 = vunpack.c.l.b16 %v628
  %v697 = vunpack.c.h.b16 %v628
  %v698 = vunpack.c.l.b16 %v629
  %v699 = vunpack.c.h.b16 %v629
  %v700 = vunpack.c.l.b16 %v630
  %v701 = vunpack.c.h.b16 %v630
  %v702 = vunpack.c.l.b16 %v631
  %v703 = vunpack.c.h.b16 %v631
  %v704 = vunpack.c.l.b16 %v632
  %v705 = vunpack.c.h.b16 %v632
  %v706 = vunpack.c.l.b16 %v633
  %v707 = vunpack.c.h.b16 %v633
  %v708 = vunpack.c.l.b16 %v634
  %v709 = vunpack.c.h.b16 %v634
  %v710 = vunpack.c.l.b16 %v635
  %v711 = vunpack.c.h.b16 %v635
  %v712 = vunpack.c.l.b16 %v636
  %v713 = vunpack.c.h.b16 %v636
  %v714 = vunpack.c.l.b16 %v637
  %v715 = vunpack.c.h.b16 %v637
  %v716 = vunpack.c.l.b16 %v638
  %v717 = vunpack.c.h.b16 %v638
  %v718 = vunpack.c.l.b16 %v639
  %v719 = vunpack.c.h.b16 %v639
  %v720 = vunpack.c.l.b16 %v640
  %v721 = vunpack.c.h.b16 %v640
  %v722 = vunpack.c.l.b16 %v641
  %v723 = vunpack.c.h.b16 %v641
  %v724 = vunpack.c.l.b16 %v642
  %v725 = vunpack.c.h.b16 %v642
  %v726 = vunpack.c.l.b16 %v643
  %v727 = vunpack.c.h.b16 %v643
  %v728 = vunpack.c.l.b16 %v644
  %v729 = vunpack.c.h.b16 %v644
  %v730 = vunpack.c.l.b16 %v645
  %v731 = vunpack.c.h.b16 %v645
  %v732 = vunpack.c.l.b16 %v646
  %v733 = vunpack.c.h.b16 %v646
  %v734 = vunpack.c.l.b16 %v647
  %v735 = vunpack.c.h.b16 %v647
  %v736 = vunpack.c.l.b16 %v648
  %v737 = vunpack.c.h.b16 %v648
  %v738 = vunpack.c.l.b16 %v649
  %v739 = vunpack.c.h.b16 %v649
  %v740 = vunpack.c.l.b16 %v650
  %v741 = vunpack.c.h.b16 %v650
  %v742 = vunpack.c.l.b16 %v651
  %v743 = vunpack.c.h.b16 %v651
  %v744 = vunpack.c.l.b16 %v652
  %v745 = vunpack.c.h.b16 %v652
  %v746 = vunpack.c.l.b16 %v653
  %v747 = vunpack.c.h.b16 %v653
  %v748 = vunpack.c.l.b16 %v654
  %v749 = vunpack.c.h.b16 %v654
  %v750 = vunpack.c.l.b16 %v655
  %v751 = vunpack.c.h.b16 %v655
  %v752 = vpack.c.b16 %v688, %v688
  %v753 = vpack.c.b16 %v689, %v689
  %v754 = vpack.c.b16 %v690, %v690
  %v755 = vpack.c.b16 %v691, %v691
  %v756 = vpack.c.b16 %v692, %v692
  %v757 = vpack.c.b16 %v693, %v693
  %v758 = vpack.c.b16 %v694, %v694
  %v759 = vpack.c.b16 %v695, %v695
  %v760 = vpack.c.b16 %v696, %v696
  %v761 = vpack.c.b16 %v697, %v697
  %v762 = vpack.c.b16 %v698, %v698
  %v763 = vpack.c.b16 %v699, %v699
  %v764 = vpack.c.b16 %v700, %v700
  %v765 = vpack.c.b16 %v701, %v701
  %v766 = vpack.c.b16 %v702, %v702
  %v767 = vpack.c.b16 %v703, %v703
  %v768 = vpack.c.b16 %v704, %v704
  %v769 = vpack.c.b16 %v705, %v705
  %v770 = vpack.c.b16 %v706, %v706
  %v771 = vpack.c.b16 %v707, %v707
  %v772 = vpack.c.b16 %v708, %v708
  %v773 = vpack.c.b16 %v709, %v709
  %v774 = vpack.c.b16 %v710, %v710
  %v775 = vpack.c.b16 %v711, %v711
  %v776 = vpack.c.b16 %v712, %v712
  %v777 = vpack.c.b16 %v713, %v713
  %v778 = vpack.c.b16 %v714, %v714
  %v779 = vpack.c.b16 %v715, %v715
  %v780 = vpack.c.b16 %v716, %v716
  %v781 = vpack.c.b16 %v717, %v717
  %v782 = vpack.c.b16 %v718, %v718
  %v783 = vpack.c.b16 %v719, %v719
  %v784 = vpack.c.b16 %v720, %v720
  %v785 = vpack.c.b16 %v721, %v721
  %v786 = vpack.c.b16 %v722, %v722
  %v787 = vpack.c.b16 %v723, %v723
  %v788 = vpack.c.b16 %v724, %v724
  %v789 = vpack.c.b16 %v725, %v725
  %v790 = vpack.c.b16 %v726, %v726
  %v791 = vpack.c.b16 %v727, %v727
  %v792 = vpack.c.b16 %v728, %v728
  %v793 = vpack.c.b16 %v729, %v729
  %v794 = vpack.c.b16 %v730, %v730
  %v795 = vpack.c.b16 %v731, %v731
  %v796 = vpack.c.b16 %v732, %v732
  %v797 = vpack.c.b16 %v733, %v733
  %v798 = vpack.c.b16 %v734, %v734
  %v799 = vpack.c.b16 %v735, %v735
  %v800 = vpack.c.b16 %v736, %v736
  %v801 = vpack.c.b16 %v737, %v737
  %v802 = vpack.c.b16 %v738, %v738
  %v803 = vpack.c.b16 %v739, %v739
  %v804 = vpack.c.b16 %v740, %v740
  %v805 = vpack.c.b16 %v741, %v741
  %v806 = vpack.c.b16 %v742, %v742
  %v807 = vpack.c.b16 %v743, %v743
  %v808 = vpack.c.b16 %v744, %v744
  %v809 = vpack.c.b16 %v745, %v745
  %v810 = vpack.c.b16 %v746, %v746
  %v811 = vpack.c.b16 %v747, %v747
  %v812 = vpack.c.b16 %v748, %v748
  %v813 = vpack.c.b16 %v749, %v749
  %v814 = vpack.c.b16 %v750, %v750
  %v815 = vpack.c.b16 %v751, %v751
  %880 = vst [vmem:[%s2] sm:$0xf] %v752
  %881 = vst [vmem:[%s2 + $0x4] sm:$0xf] %v753
  %882 = vst [vmem:[%s2 + $0x8] sm:$0xf] %v754
  %883 = vst [vmem:[%s2 + $0xc] sm:$0xf] %v755
  %884 = vst [vmem:[%s2 + $0x10] sm:$0xf] %v756
  %885 = vst [vmem:[%s2 + $0x14] sm:$0xf] %v757
  %886 = vst [vmem:[%s2 + $0x18] sm:$0xf] %v758
  %887 = vst [vmem:[%s2 + $0x1c] sm:$0xf] %v759
  %888 = vst [vmem:[%s2 + $0x20] sm:$0xf] %v760
  %889 = vst [vmem:[%s2 + $0x24] sm:$0xf] %v761
  %890 = vst [vmem:[%s2 + $0x28] sm:$0xf] %v762
  %891 = vst [vmem:[%s2 + $0x2c] sm:$0xf] %v763
  %892 = vst [vmem:[%s2 + $0x30] sm:$0xf] %v764
  %893 = vst [vmem:[%s2 + $0x34] sm:$0xf] %v765
  %894 = vst [vmem:[%s2 + $0x38] sm:$0xf] %v766
  %895 = vst [vmem:[%s2 + $0x3c] sm:$0xf] %v767
  %896 = vst [vmem:[%s2 + $0x40] sm:$0xf] %v768
  %897 = vst [vmem:[%s2 + $0x44] sm:$0xf] %v769
  %898 = vst [vmem:[%s2 + $0x48] sm:$0xf] %v770
  %899 = vst [vmem:[%s2 + $0x4c] sm:$0xf] %v771
  %900 = vst [vmem:[%s2 + $0x50] sm:$0xf] %v772
  %901 = vst [vmem:[%s2 + $0x54] sm:$0xf] %v773
  %902 = vst [vmem:[%s2 + $0x58] sm:$0xf] %v774
  %903 = vst [vmem:[%s2 + $0x5c] sm:$0xf] %v775
  %904 = vst [vmem:[%s2 + $0x60] sm:$0xf] %v776
  %905 = vst [vmem:[%s2 + $0x64] sm:$0xf] %v777
  %906 = vst [vmem:[%s2 + $0x68] sm:$0xf] %v778
  %907 = vst [vmem:[%s2 + $0x6c] sm:$0xf] %v779
  %908 = vst [vmem:[%s2 + $0x70] sm:$0xf] %v780
  %909 = vst [vmem:[%s2 + $0x74] sm:$0xf] %v781
  %910 = vst [vmem:[%s2 + $0x78] sm:$0xf] %v782
  %911 = vst [vmem:[%s2 + $0x7c] sm:$0xf] %v783
  %912 = vst [vmem:[%s2 + $0x80] sm:$0xf] %v784
  %913 = vst [vmem:[%s2 + $0x84] sm:$0xf] %v785
  %914 = vst [vmem:[%s2 + $0x88] sm:$0xf] %v786
  %915 = vst [vmem:[%s2 + $0x8c] sm:$0xf] %v787
  %916 = vst [vmem:[%s2 + $0x90] sm:$0xf] %v788
  %917 = vst [vmem:[%s2 + $0x94] sm:$0xf] %v789
  %918 = vst [vmem:[%s2 + $0x98] sm:$0xf] %v790
  %919 = vst [vmem:[%s2 + $0x9c] sm:$0xf] %v791
  %920 = vst [vmem:[%s2 + $0xa0] sm:$0xf] %v792
  %921 = vst [vmem:[%s2 + $0xa4] sm:$0xf] %v793
  %922 = vst [vmem:[%s2 + $0xa8] sm:$0xf] %v794
  %923 = vst [vmem:[%s2 + $0xac] sm:$0xf] %v795
  %924 = vst [vmem:[%s2 + $0xb0] sm:$0xf] %v796
  %925 = vst [vmem:[%s2 + $0xb4] sm:$0xf] %v797
  %926 = vst [vmem:[%s2 + $0xb8] sm:$0xf] %v798
  %927 = vst [vmem:[%s2 + $0xbc] sm:$0xf] %v799
  %928 = vst [vmem:[%s2 + $0xc0] sm:$0xf] %v800
  %929 = vst [vmem:[%s2 + $0xc4] sm:$0xf] %v801
  %930 = vst [vmem:[%s2 + $0xc8] sm:$0xf] %v802
  %931 = vst [vmem:[%s2 + $0xcc] sm:$0xf] %v803
  %932 = vst [vmem:[%s2 + $0xd0] sm:$0xf] %v804
  %933 = vst [vmem:[%s2 + $0xd4] sm:$0xf] %v805
  %934 = vst [vmem:[%s2 + $0xd8] sm:$0xf] %v806
  %935 = vst [vmem:[%s2 + $0xdc] sm:$0xf] %v807
  %936 = vst [vmem:[%s2 + $0xe0] sm:$0xf] %v808
  %937 = vst [vmem:[%s2 + $0xe4] sm:$0xf] %v809
  %938 = vst [vmem:[%s2 + $0xe8] sm:$0xf] %v810
  %939 = vst [vmem:[%s2 + $0xec] sm:$0xf] %v811
  %940 = vst [vmem:[%s2 + $0xf0] sm:$0xf] %v812
  %941 = vst [vmem:[%s2 + $0xf4] sm:$0xf] %v813
  %942 = vst [vmem:[%s2 + $0xf8] sm:$0xf] %v814
  %943 = vst [vmem:[%s2 + $0xfc] sm:$0xf] %v815
  %s944 = smul.u32 0, 512
  %v945 = vlaneseq
  %v946 = vshrl.u32 %v945, 7
  %v947 = vadd.s32 %v946, 8
  %v948 = vadd.s32 %v946, 16
  %v949 = vadd.s32 %v946, 24
  %v950 = vadd.s32 %v946, 32
  %v951 = vadd.s32 %v946, 40
  %v952 = vadd.s32 %v946, 48
  %v953 = vadd.s32 %v946, 56
  %v954 = vadd.s32 %v946, 64
  %v955 = vadd.s32 %v946, 72
  %v956 = vadd.s32 %v946, 80
  %v957 = vadd.s32 %v946, 88
  %v958 = vadd.s32 %v946, 96
  %v959 = vadd.s32 %v946, 104
  %v960 = vadd.s32 %v946, 112
  %v961 = vadd.s32 %v946, 120
  %v962 = vadd.s32 %v946, 128
  %v963 = vadd.s32 %v946, 136
  %v964 = vadd.s32 %v946, 144
  %v965 = vadd.s32 %v946, 152
  %v966 = vadd.s32 %v946, 160
  %v967 = vadd.s32 %v946, 168
  %v968 = vadd.s32 %v946, 176
  %v969 = vadd.s32 %v946, 184
  %v970 = vadd.s32 %v946, 192
  %v971 = vadd.s32 %v946, 200
  %v972 = vadd.s32 %v946, 208
  %v973 = vadd.s32 %v946, 216
  %v974 = vadd.s32 %v946, 224
  %v975 = vadd.s32 %v946, 232
  %v976 = vadd.s32 %v946, 240
  %v977 = vadd.s32 %v946, 248
  %v978 = vadd.s32 %v946, 256
  %v979 = vadd.s32 %v946, 264
  %v980 = vadd.s32 %v946, 272
  %v981 = vadd.s32 %v946, 280
  %v982 = vadd.s32 %v946, 288
  %v983 = vadd.s32 %v946, 296
  %v984 = vadd.s32 %v946, 304
  %v985 = vadd.s32 %v946, 312
  %v986 = vadd.s32 %v946, 320
  %v987 = vadd.s32 %v946, 328
  %v988 = vadd.s32 %v946, 336
  %v989 = vadd.s32 %v946, 344
  %v990 = vadd.s32 %v946, 352
  %v991 = vadd.s32 %v946, 360
  %v992 = vadd.s32 %v946, 368
  %v993 = vadd.s32 %v946, 376
  %v994 = vadd.s32 %v946, 384
  %v995 = vadd.s32 %v946, 392
  %v996 = vadd.s32 %v946, 400
  %v997 = vadd.s32 %v946, 408
  %v998 = vadd.s32 %v946, 416
  %v999 = vadd.s32 %v946, 424
  %v1000 = vadd.s32 %v946, 432
  %v1001 = vadd.s32 %v946, 440
  %v1002 = vadd.s32 %v946, 448
  %v1003 = vadd.s32 %v946, 456
  %v1004 = vadd.s32 %v946, 464
  %v1005 = vadd.s32 %v946, 472
  %v1006 = vadd.s32 %v946, 480
  %v1007 = vadd.s32 %v946, 488
  %v1008 = vadd.s32 %v946, 496
  %v1009 = vadd.s32 %v946, 504
  %v1010 = vstv %s944
  %v1011 = vadd.s32 %v1010, %v946
  %v1012 = vadd.s32 %v1010, %v947
  %v1013 = vadd.s32 %v1010, %v948
  %v1014 = vadd.s32 %v1010, %v949
  %v1015 = vadd.s32 %v1010, %v950
  %v1016 = vadd.s32 %v1010, %v951
  %v1017 = vadd.s32 %v1010, %v952
  %v1018 = vadd.s32 %v1010, %v953
  %v1019 = vadd.s32 %v1010, %v954
  %v1020 = vadd.s32 %v1010, %v955
  %v1021 = vadd.s32 %v1010, %v956
  %v1022 = vadd.s32 %v1010, %v957
  %v1023 = vadd.s32 %v1010, %v958
  %v1024 = vadd.s32 %v1010, %v959
  %v1025 = vadd.s32 %v1010, %v960
  %v1026 = vadd.s32 %v1010, %v961
  %v1027 = vadd.s32 %v1010, %v962
  %v1028 = vadd.s32 %v1010, %v963
  %v1029 = vadd.s32 %v1010, %v964
  %v1030 = vadd.s32 %v1010, %v965
  %v1031 = vadd.s32 %v1010, %v966
  %v1032 = vadd.s32 %v1010, %v967
  %v1033 = vadd.s32 %v1010, %v968
  %v1034 = vadd.s32 %v1010, %v969
  %v1035 = vadd.s32 %v1010, %v970
  %v1036 = vadd.s32 %v1010, %v971
  %v1037 = vadd.s32 %v1010, %v972
  %v1038 = vadd.s32 %v1010, %v973
  %v1039 = vadd.s32 %v1010, %v974
  %v1040 = vadd.s32 %v1010, %v975
  %v1041 = vadd.s32 %v1010, %v976
  %v1042 = vadd.s32 %v1010, %v977
  %v1043 = vadd.s32 %v1010, %v978
  %v1044 = vadd.s32 %v1010, %v979
  %v1045 = vadd.s32 %v1010, %v980
  %v1046 = vadd.s32 %v1010, %v981
  %v1047 = vadd.s32 %v1010, %v982
  %v1048 = vadd.s32 %v1010, %v983
  %v1049 = vadd.s32 %v1010, %v984
  %v1050 = vadd.s32 %v1010, %v985
  %v1051 = vadd.s32 %v1010, %v986
  %v1052 = vadd.s32 %v1010, %v987
  %v1053 = vadd.s32 %v1010, %v988
  %v1054 = vadd.s32 %v1010, %v989
  %v1055 = vadd.s32 %v1010, %v990
  %v1056 = vadd.s32 %v1010, %v991
  %v1057 = vadd.s32 %v1010, %v992
  %v1058 = vadd.s32 %v1010, %v993
  %v1059 = vadd.s32 %v1010, %v994
  %v1060 = vadd.s32 %v1010, %v995
  %v1061 = vadd.s32 %v1010, %v996
  %v1062 = vadd.s32 %v1010, %v997
  %v1063 = vadd.s32 %v1010, %v998
  %v1064 = vadd.s32 %v1010, %v999
  %v1065 = vadd.s32 %v1010, %v1000
  %v1066 = vadd.s32 %v1010, %v1001
  %v1067 = vadd.s32 %v1010, %v1002
  %v1068 = vadd.s32 %v1010, %v1003
  %v1069 = vadd.s32 %v1010, %v1004
  %v1070 = vadd.s32 %v1010, %v1005
  %v1071 = vadd.s32 %v1010, %v1006
  %v1072 = vadd.s32 %v1010, %v1007
  %v1073 = vadd.s32 %v1010, %v1008
  %v1074 = vadd.s32 %v1010, %v1009
  %vm1075 = vcmp.lt.s32.totalorder %v1011, 512
  %vm1076 = vcmp.lt.s32.totalorder %v1012, 512
  %vm1077 = vcmp.lt.s32.totalorder %v1013, 512
  %vm1078 = vcmp.lt.s32.totalorder %v1014, 512
  %vm1079 = vcmp.lt.s32.totalorder %v1015, 512
  %vm1080 = vcmp.lt.s32.totalorder %v1016, 512
  %vm1081 = vcmp.lt.s32.totalorder %v1017, 512
  %vm1082 = vcmp.lt.s32.totalorder %v1018, 512
  %vm1083 = vcmp.lt.s32.totalorder %v1019, 512
  %vm1084 = vcmp.lt.s32.totalorder %v1020, 512
  %vm1085 = vcmp.lt.s32.totalorder %v1021, 512
  %vm1086 = vcmp.lt.s32.totalorder %v1022, 512
  %vm1087 = vcmp.lt.s32.totalorder %v1023, 512
  %vm1088 = vcmp.lt.s32.totalorder %v1024, 512
  %vm1089 = vcmp.lt.s32.totalorder %v1025, 512
  %vm1090 = vcmp.lt.s32.totalorder %v1026, 512
  %vm1091 = vcmp.lt.s32.totalorder %v1027, 512
  %vm1092 = vcmp.lt.s32.totalorder %v1028, 512
  %vm1093 = vcmp.lt.s32.totalorder %v1029, 512
  %vm1094 = vcmp.lt.s32.totalorder %v1030, 512
  %vm1095 = vcmp.lt.s32.totalorder %v1031, 512
  %vm1096 = vcmp.lt.s32.totalorder %v1032, 512
  %vm1097 = vcmp.lt.s32.totalorder %v1033, 512
  %vm1098 = vcmp.lt.s32.totalorder %v1034, 512
  %vm1099 = vcmp.lt.s32.totalorder %v1035, 512
  %vm1100 = vcmp.lt.s32.totalorder %v1036, 512
  %vm1101 = vcmp.lt.s32.totalorder %v1037, 512
  %vm1102 = vcmp.lt.s32.totalorder %v1038, 512
  %vm1103 = vcmp.lt.s32.totalorder %v1039, 512
  %vm1104 = vcmp.lt.s32.totalorder %v1040, 512
  %vm1105 = vcmp.lt.s32.totalorder %v1041, 512
  %vm1106 = vcmp.lt.s32.totalorder %v1042, 512
  %vm1107 = vcmp.lt.s32.totalorder %v1043, 512
  %vm1108 = vcmp.lt.s32.totalorder %v1044, 512
  %vm1109 = vcmp.lt.s32.totalorder %v1045, 512
  %vm1110 = vcmp.lt.s32.totalorder %v1046, 512
  %vm1111 = vcmp.lt.s32.totalorder %v1047, 512
  %vm1112 = vcmp.lt.s32.totalorder %v1048, 512
  %vm1113 = vcmp.lt.s32.totalorder %v1049, 512
  %vm1114 = vcmp.lt.s32.totalorder %v1050, 512
  %vm1115 = vcmp.lt.s32.totalorder %v1051, 512
  %vm1116 = vcmp.lt.s32.totalorder %v1052, 512
  %vm1117 = vcmp.lt.s32.totalorder %v1053, 512
  %vm1118 = vcmp.lt.s32.totalorder %v1054, 512
  %vm1119 = vcmp.lt.s32.totalorder %v1055, 512
  %vm1120 = vcmp.lt.s32.totalorder %v1056, 512
  %vm1121 = vcmp.lt.s32.totalorder %v1057, 512
  %vm1122 = vcmp.lt.s32.totalorder %v1058, 512
  %vm1123 = vcmp.lt.s32.totalorder %v1059, 512
  %vm1124 = vcmp.lt.s32.totalorder %v1060, 512
  %vm1125 = vcmp.lt.s32.totalorder %v1061, 512
  %vm1126 = vcmp.lt.s32.totalorder %v1062, 512
  %vm1127 = vcmp.lt.s32.totalorder %v1063, 512
  %vm1128 = vcmp.lt.s32.totalorder %v1064, 512
  %vm1129 = vcmp.lt.s32.totalorder %v1065, 512
  %vm1130 = vcmp.lt.s32.totalorder %v1066, 512
  %vm1131 = vcmp.lt.s32.totalorder %v1067, 512
  %vm1132 = vcmp.lt.s32.totalorder %v1068, 512
  %vm1133 = vcmp.lt.s32.totalorder %v1069, 512
  %vm1134 = vcmp.lt.s32.totalorder %v1070, 512
  %vm1135 = vcmp.lt.s32.totalorder %v1071, 512
  %vm1136 = vcmp.lt.s32.totalorder %v1072, 512
  %vm1137 = vcmp.lt.s32.totalorder %v1073, 512
  %vm1138 = vcmp.lt.s32.totalorder %v1074, 512
  %v1139 = vsel %vm1075, 1, 0
  %v1140 = vsel %vm1076, 1, 0
  %v1141 = vsel %vm1077, 1, 0
  %v1142 = vsel %vm1078, 1, 0
  %v1143 = vsel %vm1079, 1, 0
  %v1144 = vsel %vm1080, 1, 0
  %v1145 = vsel %vm1081, 1, 0
  %v1146 = vsel %vm1082, 1, 0
  %v1147 = vsel %vm1083, 1, 0
  %v1148 = vsel %vm1084, 1, 0
  %v1149 = vsel %vm1085, 1, 0
  %v1150 = vsel %vm1086, 1, 0
  %v1151 = vsel %vm1087, 1, 0
  %v1152 = vsel %vm1088, 1, 0
  %v1153 = vsel %vm1089, 1, 0
  %v1154 = vsel %vm1090, 1, 0
  %v1155 = vsel %vm1091, 1, 0
  %v1156 = vsel %vm1092, 1, 0
  %v1157 = vsel %vm1093, 1, 0
  %v1158 = vsel %vm1094, 1, 0
  %v1159 = vsel %vm1095, 1, 0
  %v1160 = vsel %vm1096, 1, 0
  %v1161 = vsel %vm1097, 1, 0
  %v1162 = vsel %vm1098, 1, 0
  %v1163 = vsel %vm1099, 1, 0
  %v1164 = vsel %vm1100, 1, 0
  %v1165 = vsel %vm1101, 1, 0
  %v1166 = vsel %vm1102, 1, 0
  %v1167 = vsel %vm1103, 1, 0
  %v1168 = vsel %vm1104, 1, 0
  %v1169 = vsel %vm1105, 1, 0
  %v1170 = vsel %vm1106, 1, 0
  %v1171 = vsel %vm1107, 1, 0
  %v1172 = vsel %vm1108, 1, 0
  %v1173 = vsel %vm1109, 1, 0
  %v1174 = vsel %vm1110, 1, 0
  %v1175 = vsel %vm1111, 1, 0
  %v1176 = vsel %vm1112, 1, 0
  %v1177 = vsel %vm1113, 1, 0
  %v1178 = vsel %vm1114, 1, 0
  %v1179 = vsel %vm1115, 1, 0
  %v1180 = vsel %vm1116, 1, 0
  %v1181 = vsel %vm1117, 1, 0
  %v1182 = vsel %vm1118, 1, 0
  %v1183 = vsel %vm1119, 1, 0
  %v1184 = vsel %vm1120, 1, 0
  %v1185 = vsel %vm1121, 1, 0
  %v1186 = vsel %vm1122, 1, 0
  %v1187 = vsel %vm1123, 1, 0
  %v1188 = vsel %vm1124, 1, 0
  %v1189 = vsel %vm1125, 1, 0
  %v1190 = vsel %vm1126, 1, 0
  %v1191 = vsel %vm1127, 1, 0
  %v1192 = vsel %vm1128, 1, 0
  %v1193 = vsel %vm1129, 1, 0
  %v1194 = vsel %vm1130, 1, 0
  %v1195 = vsel %vm1131, 1, 0
  %v1196 = vsel %vm1132, 1, 0
  %v1197 = vsel %vm1133, 1, 0
  %v1198 = vsel %vm1134, 1, 0
  %v1199 = vsel %vm1135, 1, 0
  %v1200 = vsel %vm1136, 1, 0
  %v1201 = vsel %vm1137, 1, 0
  %v1202 = vsel %vm1138, 1, 0
  %vm1203 = vcmp.eq.s32.totalorder %v1139, 1
  %vm1204 = vcmp.eq.s32.totalorder %v1140, 1
  %vm1205 = vcmp.eq.s32.totalorder %v1141, 1
  %vm1206 = vcmp.eq.s32.totalorder %v1142, 1
  %vm1207 = vcmp.eq.s32.totalorder %v1143, 1
  %vm1208 = vcmp.eq.s32.totalorder %v1144, 1
  %vm1209 = vcmp.eq.s32.totalorder %v1145, 1
  %vm1210 = vcmp.eq.s32.totalorder %v1146, 1
  %vm1211 = vcmp.eq.s32.totalorder %v1147, 1
  %vm1212 = vcmp.eq.s32.totalorder %v1148, 1
  %vm1213 = vcmp.eq.s32.totalorder %v1149, 1
  %vm1214 = vcmp.eq.s32.totalorder %v1150, 1
  %vm1215 = vcmp.eq.s32.totalorder %v1151, 1
  %vm1216 = vcmp.eq.s32.totalorder %v1152, 1
  %vm1217 = vcmp.eq.s32.totalorder %v1153, 1
  %vm1218 = vcmp.eq.s32.totalorder %v1154, 1
  %vm1219 = vcmp.eq.s32.totalorder %v1155, 1
  %vm1220 = vcmp.eq.s32.totalorder %v1156, 1
  %vm1221 = vcmp.eq.s32.totalorder %v1157, 1
  %vm1222 = vcmp.eq.s32.totalorder %v1158, 1
  %vm1223 = vcmp.eq.s32.totalorder %v1159, 1
  %vm1224 = vcmp.eq.s32.totalorder %v1160, 1
  %vm1225 = vcmp.eq.s32.totalorder %v1161, 1
  %vm1226 = vcmp.eq.s32.totalorder %v1162, 1
  %vm1227 = vcmp.eq.s32.totalorder %v1163, 1
  %vm1228 = vcmp.eq.s32.totalorder %v1164, 1
  %vm1229 = vcmp.eq.s32.totalorder %v1165, 1
  %vm1230 = vcmp.eq.s32.totalorder %v1166, 1
  %vm1231 = vcmp.eq.s32.totalorder %v1167, 1
  %vm1232 = vcmp.eq.s32.totalorder %v1168, 1
  %vm1233 = vcmp.eq.s32.totalorder %v1169, 1
  %vm1234 = vcmp.eq.s32.totalorder %v1170, 1
  %vm1235 = vcmp.eq.s32.totalorder %v1171, 1
  %vm1236 = vcmp.eq.s32.totalorder %v1172, 1
  %vm1237 = vcmp.eq.s32.totalorder %v1173, 1
  %vm1238 = vcmp.eq.s32.totalorder %v1174, 1
  %vm1239 = vcmp.eq.s32.totalorder %v1175, 1
  %vm1240 = vcmp.eq.s32.totalorder %v1176, 1
  %vm1241 = vcmp.eq.s32.totalorder %v1177, 1
  %vm1242 = vcmp.eq.s32.totalorder %v1178, 1
  %vm1243 = vcmp.eq.s32.totalorder %v1179, 1
  %vm1244 = vcmp.eq.s32.totalorder %v1180, 1
  %vm1245 = vcmp.eq.s32.totalorder %v1181, 1
  %vm1246 = vcmp.eq.s32.totalorder %v1182, 1
  %vm1247 = vcmp.eq.s32.totalorder %v1183, 1
  %vm1248 = vcmp.eq.s32.totalorder %v1184, 1
  %vm1249 = vcmp.eq.s32.totalorder %v1185, 1
  %vm1250 = vcmp.eq.s32.totalorder %v1186, 1
  %vm1251 = vcmp.eq.s32.totalorder %v1187, 1
  %vm1252 = vcmp.eq.s32.totalorder %v1188, 1
  %vm1253 = vcmp.eq.s32.totalorder %v1189, 1
  %vm1254 = vcmp.eq.s32.totalorder %v1190, 1
  %vm1255 = vcmp.eq.s32.totalorder %v1191, 1
  %vm1256 = vcmp.eq.s32.totalorder %v1192, 1
  %vm1257 = vcmp.eq.s32.totalorder %v1193, 1
  %vm1258 = vcmp.eq.s32.totalorder %v1194, 1
  %vm1259 = vcmp.eq.s32.totalorder %v1195, 1
  %vm1260 = vcmp.eq.s32.totalorder %v1196, 1
  %vm1261 = vcmp.eq.s32.totalorder %v1197, 1
  %vm1262 = vcmp.eq.s32.totalorder %v1198, 1
  %vm1263 = vcmp.eq.s32.totalorder %v1199, 1
  %vm1264 = vcmp.eq.s32.totalorder %v1200, 1
  %vm1265 = vcmp.eq.s32.totalorder %v1201, 1
  %vm1266 = vcmp.eq.s32.totalorder %v1202, 1
  %v1267 = vsel %vm1203, %v370, 0.0
  %v1268 = vsel %vm1204, %v373, 0.0
  %v1269 = vsel %vm1205, %v378, 0.0
  %v1270 = vsel %vm1206, %v381, 0.0
  %v1271 = vsel %vm1207, %v386, 0.0
  %v1272 = vsel %vm1208, %v389, 0.0
  %v1273 = vsel %vm1209, %v394, 0.0
  %v1274 = vsel %vm1210, %v397, 0.0
  %v1275 = vsel %vm1211, %v402, 0.0
  %v1276 = vsel %vm1212, %v405, 0.0
  %v1277 = vsel %vm1213, %v410, 0.0
  %v1278 = vsel %vm1214, %v413, 0.0
  %v1279 = vsel %vm1215, %v418, 0.0
  %v1280 = vsel %vm1216, %v421, 0.0
  %v1281 = vsel %vm1217, %v426, 0.0
  %v1282 = vsel %vm1218, %v429, 0.0
  %v1283 = vsel %vm1219, %v434, 0.0
  %v1284 = vsel %vm1220, %v437, 0.0
  %v1285 = vsel %vm1221, %v442, 0.0
  %v1286 = vsel %vm1222, %v445, 0.0
  %v1287 = vsel %vm1223, %v450, 0.0
  %v1288 = vsel %vm1224, %v453, 0.0
  %v1289 = vsel %vm1225, %v458, 0.0
  %v1290 = vsel %vm1226, %v461, 0.0
  %v1291 = vsel %vm1227, %v466, 0.0
  %v1292 = vsel %vm1228, %v469, 0.0
  %v1293 = vsel %vm1229, %v474, 0.0
  %v1294 = vsel %vm1230, %v477, 0.0
  %v1295 = vsel %vm1231, %v482, 0.0
  %v1296 = vsel %vm1232, %v485, 0.0
  %v1297 = vsel %vm1233, %v490, 0.0
  %v1298 = vsel %vm1234, %v493, 0.0
  %v1299 = vsel %vm1235, %v498, 0.0
  %v1300 = vsel %vm1236, %v501, 0.0
  %v1301 = vsel %vm1237, %v506, 0.0
  %v1302 = vsel %vm1238, %v509, 0.0
  %v1303 = vsel %vm1239, %v514, 0.0
  %v1304 = vsel %vm1240, %v517, 0.0
  %v1305 = vsel %vm1241, %v522, 0.0
  %v1306 = vsel %vm1242, %v525, 0.0
  %v1307 = vsel %vm1243, %v530, 0.0
  %v1308 = vsel %vm1244, %v533, 0.0
  %v1309 = vsel %vm1245, %v538, 0.0
  %v1310 = vsel %vm1246, %v541, 0.0
  %v1311 = vsel %vm1247, %v546, 0.0
  %v1312 = vsel %vm1248, %v549, 0.0
  %v1313 = vsel %vm1249, %v554, 0.0
  %v1314 = vsel %vm1250, %v557, 0.0
  %v1315 = vsel %vm1251, %v562, 0.0
  %v1316 = vsel %vm1252, %v565, 0.0
  %v1317 = vsel %vm1253, %v570, 0.0
  %v1318 = vsel %vm1254, %v573, 0.0
  %v1319 = vsel %vm1255, %v578, 0.0
  %v1320 = vsel %vm1256, %v581, 0.0
  %v1321 = vsel %vm1257, %v586, 0.0
  %v1322 = vsel %vm1258, %v589, 0.0
  %v1323 = vsel %vm1259, %v594, 0.0
  %v1324 = vsel %vm1260, %v597, 0.0
  %v1325 = vsel %vm1261, %v602, 0.0
  %v1326 = vsel %vm1262, %v605, 0.0
  %v1327 = vsel %vm1263, %v610, 0.0
  %v1328 = vsel %vm1264, %v613, 0.0
  %v1329 = vsel %vm1265, %v618, 0.0
  %v1330 = vsel %vm1266, %v621, 0.0
  %v1331 = vadd.f32 %v1267, %v1268
  %v1332 = vadd.f32 %v1331, %v1269
  %v1333 = vadd.f32 %v1332, %v1270
  %v1334 = vadd.f32 %v1333, %v1271
  %v1335 = vadd.f32 %v1334, %v1272
  %v1336 = vadd.f32 %v1335, %v1273
  %v1337 = vadd.f32 %v1336, %v1274
  %v1338 = vadd.f32 %v1337, %v1275
  %v1339 = vadd.f32 %v1338, %v1276
  %v1340 = vadd.f32 %v1339, %v1277
  %v1341 = vadd.f32 %v1340, %v1278
  %v1342 = vadd.f32 %v1341, %v1279
  %v1343 = vadd.f32 %v1342, %v1280
  %v1344 = vadd.f32 %v1343, %v1281
  %v1345 = vadd.f32 %v1344, %v1282
  %v1346 = vadd.f32 %v1345, %v1283
  %v1347 = vadd.f32 %v1346, %v1284
  %v1348 = vadd.f32 %v1347, %v1285
  %v1349 = vadd.f32 %v1348, %v1286
  %v1350 = vadd.f32 %v1349, %v1287
  %v1351 = vadd.f32 %v1350, %v1288
  %v1352 = vadd.f32 %v1351, %v1289
  %v1353 = vadd.f32 %v1352, %v1290
  %v1354 = vadd.f32 %v1353, %v1291
  %v1355 = vadd.f32 %v1354, %v1292
  %v1356 = vadd.f32 %v1355, %v1293
  %v1357 = vadd.f32 %v1356, %v1294
  %v1358 = vadd.f32 %v1357, %v1295
  %v1359 = vadd.f32 %v1358, %v1296
  %v1360 = vadd.f32 %v1359, %v1297
  %v1361 = vadd.f32 %v1360, %v1298
  %v1362 = vadd.f32 %v1361, %v1299
  %v1363 = vadd.f32 %v1362, %v1300
  %v1364 = vadd.f32 %v1363, %v1301
  %v1365 = vadd.f32 %v1364, %v1302
  %v1366 = vadd.f32 %v1365, %v1303
  %v1367 = vadd.f32 %v1366, %v1304
  %v1368 = vadd.f32 %v1367, %v1305
  %v1369 = vadd.f32 %v1368, %v1306
  %v1370 = vadd.f32 %v1369, %v1307
  %v1371 = vadd.f32 %v1370, %v1308
  %v1372 = vadd.f32 %v1371, %v1309
  %v1373 = vadd.f32 %v1372, %v1310
  %v1374 = vadd.f32 %v1373, %v1311
  %v1375 = vadd.f32 %v1374, %v1312
  %v1376 = vadd.f32 %v1375, %v1313
  %v1377 = vadd.f32 %v1376, %v1314
  %v1378 = vadd.f32 %v1377, %v1315
  %v1379 = vadd.f32 %v1378, %v1316
  %v1380 = vadd.f32 %v1379, %v1317
  %v1381 = vadd.f32 %v1380, %v1318
  %v1382 = vadd.f32 %v1381, %v1319
  %v1383 = vadd.f32 %v1382, %v1320
  %v1384 = vadd.f32 %v1383, %v1321
  %v1385 = vadd.f32 %v1384, %v1322
  %v1386 = vadd.f32 %v1385, %v1323
  %v1387 = vadd.f32 %v1386, %v1324
  %v1388 = vadd.f32 %v1387, %v1325
  %v1389 = vadd.f32 %v1388, %v1326
  %v1390 = vadd.f32 %v1389, %v1327
  %v1391 = vadd.f32 %v1390, %v1328
  %v1392 = vadd.f32 %v1391, %v1329
  %v1393 = vadd.f32 %v1392, %v1330
  %v1394 = vrot.slane %v1393, 4
  %v1395 = vadd.f32 %v1393, %v1394
  %v1396 = vrot.slane %v1395, 2
  %v1397 = vadd.f32 %v1395, %v1396
  %v1398 = vrot.slane %v1397, 1
  %v1399 = vadd.f32 %v1397, %v1398
  %v1400 = vmul.f32 %v1267, %v1267
  %v1401 = vmul.f32 %v1268, %v1268
  %v1402 = vmul.f32 %v1269, %v1269
  %v1403 = vmul.f32 %v1270, %v1270
  %v1404 = vmul.f32 %v1271, %v1271
  %v1405 = vmul.f32 %v1272, %v1272
  %v1406 = vmul.f32 %v1273, %v1273
  %v1407 = vmul.f32 %v1274, %v1274
  %v1408 = vmul.f32 %v1275, %v1275
  %v1409 = vmul.f32 %v1276, %v1276
  %v1410 = vmul.f32 %v1277, %v1277
  %v1411 = vmul.f32 %v1278, %v1278
  %v1412 = vmul.f32 %v1279, %v1279
  %v1413 = vmul.f32 %v1280, %v1280
  %v1414 = vmul.f32 %v1281, %v1281
  %v1415 = vmul.f32 %v1282, %v1282
  %v1416 = vmul.f32 %v1283, %v1283
  %v1417 = vmul.f32 %v1284, %v1284
  %v1418 = vmul.f32 %v1285, %v1285
  %v1419 = vmul.f32 %v1286, %v1286
  %v1420 = vmul.f32 %v1287, %v1287
  %v1421 = vmul.f32 %v1288, %v1288
  %v1422 = vmul.f32 %v1289, %v1289
  %v1423 = vmul.f32 %v1290, %v1290
  %v1424 = vmul.f32 %v1291, %v1291
  %v1425 = vmul.f32 %v1292, %v1292
  %v1426 = vmul.f32 %v1293, %v1293
  %v1427 = vmul.f32 %v1294, %v1294
  %v1428 = vmul.f32 %v1295, %v1295
  %v1429 = vmul.f32 %v1296, %v1296
  %v1430 = vmul.f32 %v1297, %v1297
  %v1431 = vmul.f32 %v1298, %v1298
  %v1432 = vmul.f32 %v1299, %v1299
  %v1433 = vmul.f32 %v1300, %v1300
  %v1434 = vmul.f32 %v1301, %v1301
  %v1435 = vmul.f32 %v1302, %v1302
  %v1436 = vmul.f32 %v1303, %v1303
  %v1437 = vmul.f32 %v1304, %v1304
  %v1438 = vmul.f32 %v1305, %v1305
  %v1439 = vmul.f32 %v1306, %v1306
  %v1440 = vmul.f32 %v1307, %v1307
  %v1441 = vmul.f32 %v1308, %v1308
  %v1442 = vmul.f32 %v1309, %v1309
  %v1443 = vmul.f32 %v1310, %v1310
  %v1444 = vmul.f32 %v1311, %v1311
  %v1445 = vmul.f32 %v1312, %v1312
  %v1446 = vmul.f32 %v1313, %v1313
  %v1447 = vmul.f32 %v1314, %v1314
  %v1448 = vmul.f32 %v1315, %v1315
  %v1449 = vmul.f32 %v1316, %v1316
  %v1450 = vmul.f32 %v1317, %v1317
  %v1451 = vmul.f32 %v1318, %v1318
  %v1452 = vmul.f32 %v1319, %v1319
  %v1453 = vmul.f32 %v1320, %v1320
  %v1454 = vmul.f32 %v1321, %v1321
  %v1455 = vmul.f32 %v1322, %v1322
  %v1456 = vmul.f32 %v1323, %v1323
  %v1457 = vmul.f32 %v1324, %v1324
  %v1458 = vmul.f32 %v1325, %v1325
  %v1459 = vmul.f32 %v1326, %v1326
  %v1460 = vmul.f32 %v1327, %v1327
  %v1461 = vmul.f32 %v1328, %v1328
  %v1462 = vmul.f32 %v1329, %v1329
  %v1463 = vmul.f32 %v1330, %v1330
  %v1464 = vadd.f32 %v1400, %v1401
  %v1465 = vadd.f32 %v1464, %v1402
  %v1466 = vadd.f32 %v1465, %v1403
  %v1467 = vadd.f32 %v1466, %v1404
  %v1468 = vadd.f32 %v1467, %v1405
  %v1469 = vadd.f32 %v1468, %v1406
  %v1470 = vadd.f32 %v1469, %v1407
  %v1471 = vadd.f32 %v1470, %v1408
  %v1472 = vadd.f32 %v1471, %v1409
  %v1473 = vadd.f32 %v1472, %v1410
  %v1474 = vadd.f32 %v1473, %v1411
  %v1475 = vadd.f32 %v1474, %v1412
  %v1476 = vadd.f32 %v1475, %v1413
  %v1477 = vadd.f32 %v1476, %v1414
  %v1478 = vadd.f32 %v1477, %v1415
  %v1479 = vadd.f32 %v1478, %v1416
  %v1480 = vadd.f32 %v1479, %v1417
  %v1481 = vadd.f32 %v1480, %v1418
  %v1482 = vadd.f32 %v1481, %v1419
  %v1483 = vadd.f32 %v1482, %v1420
  %v1484 = vadd.f32 %v1483, %v1421
  %v1485 = vadd.f32 %v1484, %v1422
  %v1486 = vadd.f32 %v1485, %v1423
  %v1487 = vadd.f32 %v1486, %v1424
  %v1488 = vadd.f32 %v1487, %v1425
  %v1489 = vadd.f32 %v1488, %v1426
  %v1490 = vadd.f32 %v1489, %v1427
  %v1491 = vadd.f32 %v1490, %v1428
  %v1492 = vadd.f32 %v1491, %v1429
  %v1493 = vadd.f32 %v1492, %v1430
  %v1494 = vadd.f32 %v1493, %v1431
  %v1495 = vadd.f32 %v1494, %v1432
  %v1496 = vadd.f32 %v1495, %v1433
  %v1497 = vadd.f32 %v1496, %v1434
  %v1498 = vadd.f32 %v1497, %v1435
  %v1499 = vadd.f32 %v1498, %v1436
  %v1500 = vadd.f32 %v1499, %v1437
  %v1501 = vadd.f32 %v1500, %v1438
  %v1502 = vadd.f32 %v1501, %v1439
  %v1503 = vadd.f32 %v1502, %v1440
  %v1504 = vadd.f32 %v1503, %v1441
  %v1505 = vadd.f32 %v1504, %v1442
  %v1506 = vadd.f32 %v1505, %v1443
  %v1507 = vadd.f32 %v1506, %v1444
  %v1508 = vadd.f32 %v1507, %v1445
  %v1509 = vadd.f32 %v1508, %v1446
  %v1510 = vadd.f32 %v1509, %v1447
  %v1511 = vadd.f32 %v1510, %v1448
  %v1512 = vadd.f32 %v1511, %v1449
  %v1513 = vadd.f32 %v1512, %v1450
  %v1514 = vadd.f32 %v1513, %v1451
  %v1515 = vadd.f32 %v1514, %v1452
  %v1516 = vadd.f32 %v1515, %v1453
  %v1517 = vadd.f32 %v1516, %v1454
  %v1518 = vadd.f32 %v1517, %v1455
  %v1519 = vadd.f32 %v1518, %v1456
  %v1520 = vadd.f32 %v1519, %v1457
  %v1521 = vadd.f32 %v1520, %v1458
  %v1522 = vadd.f32 %v1521, %v1459
  %v1523 = vadd.f32 %v1522, %v1460
  %v1524 = vadd.f32 %v1523, %v1461
  %v1525 = vadd.f32 %v1524, %v1462
  %v1526 = vadd.f32 %v1525, %v1463
  %v1527 = vrot.slane %v1526, 4
  %v1528 = vadd.f32 %v1526, %v1527
  %v1529 = vrot.slane %v1528, 2
  %v1530 = vadd.f32 %v1528, %v1529
  %v1531 = vrot.slane %v1530, 1
  %v1532 = vadd.f32 %v1530, %v1531
  %1533 = vst [vmem:[%s3] sm:$0xff] 0.0
  %1534 = vst [vmem:[%s4] sm:$0xff] 0.0
  %1535 = vst [vmem:[%s3] sm:$0x1] %v1399
  %1536 = vst [vmem:[%s4] sm:$0x1] %v1532
  // Predicated region
  $region10: #{sppf_forward.4} parent=0 // pred_check
    _
  $region11: #{sppf_forward.4} parent=0 // pred_check_branch
    %1538 = sbr.rel (0) target = $region13
  $region12: #{sppf_forward.4} parent=0 // pred_region
    _
  $region13: #{sppf_forward.4} parent=0 // pred_fallthru
    _
  // Predicated region
  $region14: #{sppf_forward.4} parent=0 // pred_check
    _
  $region15: #{sppf_forward.4} parent=0 // pred_check_branch
    %1540 = sbr.rel (0) target = $region17
  $region16: #{sppf_forward.4} parent=0 // pred_region
    _
  $region17: #{sppf_forward.4} parent=0 // pred_fallthru
    _
  // Predicated region
  $region18: #{sppf_forward.4} parent=0 // pred_check
    _
  $region19: #{sppf_forward.4} parent=0 // pred_check_branch
    %1542 = sbr.rel (0) target = $region21
  $region20: #{sppf_forward.4} parent=0 // pred_region
    _
  $region21: #{sppf_forward.4} parent=0 // pred_fallthru
    _
  // Predicated region
  $region22: #{sppf_forward.4} parent=0 // pred_check
    _
  $region23: #{sppf_forward.4} parent=0 // pred_check_branch
    %1544 = sbr.rel (0) target = $region25
  $region24: #{sppf_forward.4} parent=0 // pred_region
    _
  $region25: #{sppf_forward.4} parent=0 // pred_fallthru
    _
  // Predicated region
  $region26: #{sppf_forward.4} parent=0 // pred_check
    _
  $region27: #{sppf_forward.4} parent=0 // pred_check_branch
    %1546 = sbr.rel (0) target = $region29
  $region28: #{sppf_forward.4} parent=0 // pred_region
    _
  $region29: #{sppf_forward.4} parent=0 // pred_fallthru
    _
  // Predicated region
  $region30: #{sppf_forward.4} parent=0 // pred_check
    _
  $region31: #{sppf_forward.4} parent=0 // pred_check_branch
    %1548 = sbr.rel (0) target = $region33
  $region32: #{sppf_forward.4} parent=0 // pred_region
    _
  $region33: #{sppf_forward.4} parent=0 // pred_fallthru
    _

// kernel: sppf_forward.7
$region0: #{sppf_forward.7}
  #allocation0 [shape = 'u32[]', space=smem, size = 0x4, offset = 0x4, fixed_abs, tag = 'smem constant byte address 0x4 - core index']
  #allocation1 [shape = 'u32[144,128]{1,0:T(1,128)}', space=vmem, size = 0x12000, scoped, tag = 'internal scratch']
  %s0 = inlined_call_operand.vmem [shape: bf16[512,128], index: 0, kind: input, shape index: {}]
  %s1 = inlined_call_operand.vmem [shape: f32[1,128], index: 1, kind: input, shape index: {}]
  %s2 = inlined_call_operand.vmem [shape: f32[1,128], index: 2, kind: input, shape index: {}]
  %s3 = inlined_call_operand.hbm [shape: f32[512,128], index: 3, kind: output, shape index: {}]
  %s4 = sld [smem:[#allocation0]]
  $region22: #{sppf_forward.7} parent=0
    _
  %s6 = ssub.s32 1, %s4
  %s7 = scalar_select 0, %s6, %s4
  $region1: #{sppf_forward.7} parent=0
    #allocation2 [shape = 'u8[262144]{0}', space=vmem, size = 0x40000, scoped, tag = 'output window, operand 0, single buffered']
    #allocation3 [shape = 's32[1]{0}', space=sflag, size = 0x4, scoped, tag = 'scoped memory for sppf_forward.7']
    %8 = vsyncpa [#allocation3], 0
    // Predicated region
    $region2: #{sppf_forward.7} parent=1 // pred_check
      _
    $region3: #{sppf_forward.7} parent=1 // pred_check_branch
      %10 = sbr.rel (0) target = $region5
    $region4: #{sppf_forward.7} parent=1 // pred_region
      _
    $region5: #{sppf_forward.7} parent=1 // pred_fallthru
      _
    // Predicated region
    $region6: #{sppf_forward.7} parent=1 // pred_check
      _
    $region7: #{sppf_forward.7} parent=1 // pred_check_branch
      %12 = sbr.rel (0) target = $region9
    $region8: #{sppf_forward.7} parent=1 // pred_region
      _
    $region9: #{sppf_forward.7} parent=1 // pred_fallthru
      _
    // Predicated region
    $region10: #{sppf_forward.7} parent=1 // pred_check
      _
    $region11: #{sppf_forward.7} parent=1 // pred_check_branch
      %14 = sbr.rel (0) target = $region13
    $region12: #{sppf_forward.7} parent=1 // pred_region
      _
    $region13: #{sppf_forward.7} parent=1 // pred_fallthru
      _
    %v15 = vld [vmem:[%s0] sm:$0xf]
    %v16 = vld [vmem:[%s0 + $0x4] sm:$0xf]
    %v17 = vld [vmem:[%s0 + $0x8] sm:$0xf]
    %v18 = vld [vmem:[%s0 + $0xc] sm:$0xf]
    %v19 = vld [vmem:[%s0 + $0x10] sm:$0xf]
    %v20 = vld [vmem:[%s0 + $0x14] sm:$0xf]
    %v21 = vld [vmem:[%s0 + $0x18] sm:$0xf]
    %v22 = vld [vmem:[%s0 + $0x1c] sm:$0xf]
    %v23 = vld [vmem:[%s0 + $0x20] sm:$0xf]
    %v24 = vld [vmem:[%s0 + $0x24] sm:$0xf]
    %v25 = vld [vmem:[%s0 + $0x28] sm:$0xf]
    %v26 = vld [vmem:[%s0 + $0x2c] sm:$0xf]
    %v27 = vld [vmem:[%s0 + $0x30] sm:$0xf]
    %v28 = vld [vmem:[%s0 + $0x34] sm:$0xf]
    %v29 = vld [vmem:[%s0 + $0x38] sm:$0xf]
    %v30 = vld [vmem:[%s0 + $0x3c] sm:$0xf]
    %v31 = vld [vmem:[%s0 + $0x40] sm:$0xf]
    %v32 = vld [vmem:[%s0 + $0x44] sm:$0xf]
    %v33 = vld [vmem:[%s0 + $0x48] sm:$0xf]
    %v34 = vld [vmem:[%s0 + $0x4c] sm:$0xf]
    %v35 = vld [vmem:[%s0 + $0x50] sm:$0xf]
    %v36 = vld [vmem:[%s0 + $0x54] sm:$0xf]
    %v37 = vld [vmem:[%s0 + $0x58] sm:$0xf]
    %v38 = vld [vmem:[%s0 + $0x5c] sm:$0xf]
    %v39 = vld [vmem:[%s0 + $0x60] sm:$0xf]
    %v40 = vld [vmem:[%s0 + $0x64] sm:$0xf]
    %v41 = vld [vmem:[%s0 + $0x68] sm:$0xf]
    %v42 = vld [vmem:[%s0 + $0x6c] sm:$0xf]
    %v43 = vld [vmem:[%s0 + $0x70] sm:$0xf]
    %v44 = vld [vmem:[%s0 + $0x74] sm:$0xf]
    %v45 = vld [vmem:[%s0 + $0x78] sm:$0xf]
    %v46 = vld [vmem:[%s0 + $0x7c] sm:$0xf]
    %v47 = vld [vmem:[%s0 + $0x80] sm:$0xf]
    %v48 = vld [vmem:[%s0 + $0x84] sm:$0xf]
    %v49 = vld [vmem:[%s0 + $0x88] sm:$0xf]
    %v50 = vld [vmem:[%s0 + $0x8c] sm:$0xf]
    %v51 = vld [vmem:[%s0 + $0x90] sm:$0xf]
    %v52 = vld [vmem:[%s0 + $0x94] sm:$0xf]
    %v53 = vld [vmem:[%s0 + $0x98] sm:$0xf]
    %v54 = vld [vmem:[%s0 + $0x9c] sm:$0xf]
    %v55 = vld [vmem:[%s0 + $0xa0] sm:$0xf]
    %v56 = vld [vmem:[%s0 + $0xa4] sm:$0xf]
    %v57 = vld [vmem:[%s0 + $0xa8] sm:$0xf]
    %v58 = vld [vmem:[%s0 + $0xac] sm:$0xf]
    %v59 = vld [vmem:[%s0 + $0xb0] sm:$0xf]
    %v60 = vld [vmem:[%s0 + $0xb4] sm:$0xf]
    %v61 = vld [vmem:[%s0 + $0xb8] sm:$0xf]
    %v62 = vld [vmem:[%s0 + $0xbc] sm:$0xf]
    %v63 = vld [vmem:[%s0 + $0xc0] sm:$0xf]
    %v64 = vld [vmem:[%s0 + $0xc4] sm:$0xf]
    %v65 = vld [vmem:[%s0 + $0xc8] sm:$0xf]
    %v66 = vld [vmem:[%s0 + $0xcc] sm:$0xf]
    %v67 = vld [vmem:[%s0 + $0xd0] sm:$0xf]
    %v68 = vld [vmem:[%s0 + $0xd4] sm:$0xf]
    %v69 = vld [vmem:[%s0 + $0xd8] sm:$0xf]
    %v70 = vld [vmem:[%s0 + $0xdc] sm:$0xf]
    %v71 = vld [vmem:[%s0 + $0xe0] sm:$0xf]
    %v72 = vld [vmem:[%s0 + $0xe4] sm:$0xf]
    %v73 = vld [vmem:[%s0 + $0xe8] sm:$0xf]
    %v74 = vld [vmem:[%s0 + $0xec] sm:$0xf]
    %v75 = vld [vmem:[%s0 + $0xf0] sm:$0xf]
    %v76 = vld [vmem:[%s0 + $0xf4] sm:$0xf]
    %v77 = vld [vmem:[%s0 + $0xf8] sm:$0xf]
    %v78 = vld [vmem:[%s0 + $0xfc] sm:$0xf]
    %v79 = vunpack.c.l.bf16 %v15
    %v80 = vunpack.c.l.bf16 %v16
    %v81 = vunpack.c.l.bf16 %v17
    %v82 = vunpack.c.l.bf16 %v18
    %v83 = vunpack.c.l.bf16 %v19
    %v84 = vunpack.c.l.bf16 %v20
    %v85 = vunpack.c.l.bf16 %v21
    %v86 = vunpack.c.l.bf16 %v22
    %v87 = vunpack.c.l.bf16 %v23
    %v88 = vunpack.c.l.bf16 %v24
    %v89 = vunpack.c.l.bf16 %v25
    %v90 = vunpack.c.l.bf16 %v26
    %v91 = vunpack.c.l.bf16 %v27
    %v92 = vunpack.c.l.bf16 %v28
    %v93 = vunpack.c.l.bf16 %v29
    %v94 = vunpack.c.l.bf16 %v30
    %v95 = vunpack.c.l.bf16 %v31
    %v96 = vunpack.c.l.bf16 %v32
    %v97 = vunpack.c.l.bf16 %v33
    %v98 = vunpack.c.l.bf16 %v34
    %v99 = vunpack.c.l.bf16 %v35
    %v100 = vunpack.c.l.bf16 %v36
    %v101 = vunpack.c.l.bf16 %v37
    %v102 = vunpack.c.l.bf16 %v38
    %v103 = vunpack.c.l.bf16 %v39
    %v104 = vunpack.c.l.bf16 %v40
    %v105 = vunpack.c.l.bf16 %v41
    %v106 = vunpack.c.l.bf16 %v42
    %v107 = vunpack.c.l.bf16 %v43
    %v108 = vunpack.c.l.bf16 %v44
    %v109 = vunpack.c.l.bf16 %v45
    %v110 = vunpack.c.l.bf16 %v46
    %v111 = vunpack.c.l.bf16 %v47
    %v112 = vunpack.c.l.bf16 %v48
    %v113 = vunpack.c.l.bf16 %v49
    %v114 = vunpack.c.l.bf16 %v50
    %v115 = vunpack.c.l.bf16 %v51
    %v116 = vunpack.c.l.bf16 %v52
    %v117 = vunpack.c.l.bf16 %v53
    %v118 = vunpack.c.l.bf16 %v54
    %v119 = vunpack.c.l.bf16 %v55
    %v120 = vunpack.c.l.bf16 %v56
    %v121 = vunpack.c.l.bf16 %v57
    %v122 = vunpack.c.l.bf16 %v58
    %v123 = vunpack.c.l.bf16 %v59
    %v124 = vunpack.c.l.bf16 %v60
    %v125 = vunpack.c.l.bf16 %v61
    %v126 = vunpack.c.l.bf16 %v62
    %v127 = vunpack.c.l.bf16 %v63
    %v128 = vunpack.c.l.bf16 %v64
    %v129 = vunpack.c.l.bf16 %v65
    %v130 = vunpack.c.l.bf16 %v66
    %v131 = vunpack.c.l.bf16 %v67
    %v132 = vunpack.c.l.bf16 %v68
    %v133 = vunpack.c.l.bf16 %v69
    %v134 = vunpack.c.l.bf16 %v70
    %v135 = vunpack.c.l.bf16 %v71
    %v136 = vunpack.c.l.bf16 %v72
    %v137 = vunpack.c.l.bf16 %v73
    %v138 = vunpack.c.l.bf16 %v74
    %v139 = vunpack.c.l.bf16 %v75
    %v140 = vunpack.c.l.bf16 %v76
    %v141 = vunpack.c.l.bf16 %v77
    %v142 = vunpack.c.l.bf16 %v78
    %v143 = vld [vmem:[%s1] sm:$0x1]
    %v145 = vlaneseq
    %v146 = vshrl.u32 %v145, 7
    %v147 = vsub.s32 0, %v146
    %v148 = vrot.slane %v143, %v147
    %v150 = vmul.f32 %v79, %v148
    %v151 = vmul.f32 %v80, %v148
    %v152 = vmul.f32 %v81, %v148
    %v153 = vmul.f32 %v82, %v148
    %v154 = vmul.f32 %v83, %v148
    %v155 = vmul.f32 %v84, %v148
    %v156 = vmul.f32 %v85, %v148
    %v157 = vmul.f32 %v86, %v148
    %v158 = vmul.f32 %v87, %v148
    %v159 = vmul.f32 %v88, %v148
    %v160 = vmul.f32 %v89, %v148
    %v161 = vmul.f32 %v90, %v148
    %v162 = vmul.f32 %v91, %v148
    %v163 = vmul.f32 %v92, %v148
    %v164 = vmul.f32 %v93, %v148
    %v165 = vmul.f32 %v94, %v148
    %v166 = vmul.f32 %v95, %v148
    %v167 = vmul.f32 %v96, %v148
    %v168 = vmul.f32 %v97, %v148
    %v169 = vmul.f32 %v98, %v148
    %v170 = vmul.f32 %v99, %v148
    %v171 = vmul.f32 %v100, %v148
    %v172 = vmul.f32 %v101, %v148
    %v173 = vmul.f32 %v102, %v148
    %v174 = vmul.f32 %v103, %v148
    %v175 = vmul.f32 %v104, %v148
    %v176 = vmul.f32 %v105, %v148
    %v177 = vmul.f32 %v106, %v148
    %v178 = vmul.f32 %v107, %v148
    %v179 = vmul.f32 %v108, %v148
    %v180 = vmul.f32 %v109, %v148
    %v181 = vmul.f32 %v110, %v148
    %v182 = vmul.f32 %v111, %v148
    %v183 = vmul.f32 %v112, %v148
    %v184 = vmul.f32 %v113, %v148
    %v185 = vmul.f32 %v114, %v148
    %v186 = vmul.f32 %v115, %v148
    %v187 = vmul.f32 %v116, %v148
    %v188 = vmul.f32 %v117, %v148
    %v189 = vmul.f32 %v118, %v148
    %v190 = vmul.f32 %v119, %v148
    %v191 = vmul.f32 %v120, %v148
    %v192 = vmul.f32 %v121, %v148
    %v193 = vmul.f32 %v122, %v148
    %v194 = vmul.f32 %v123, %v148
    %v195 = vmul.f32 %v124, %v148
    %v196 = vmul.f32 %v125, %v148
    %v197 = vmul.f32 %v126, %v148
    %v198 = vmul.f32 %v127, %v148
    %v199 = vmul.f32 %v128, %v148
    %v200 = vmul.f32 %v129, %v148
    %v201 = vmul.f32 %v130, %v148
    %v202 = vmul.f32 %v131, %v148
    %v203 = vmul.f32 %v132, %v148
    %v204 = vmul.f32 %v133, %v148
    %v205 = vmul.f32 %v134, %v148
    %v206 = vmul.f32 %v135, %v148
    %v207 = vmul.f32 %v136, %v148
    %v208 = vmul.f32 %v137, %v148
    %v209 = vmul.f32 %v138, %v148
    %v210 = vmul.f32 %v139, %v148
    %v211 = vmul.f32 %v140, %v148
    %v212 = vmul.f32 %v141, %v148
    %v213 = vmul.f32 %v142, %v148
    %v214 = vld [vmem:[%s2] sm:$0x1]
    %v216 = vlaneseq
    %v217 = vshrl.u32 %v216, 7
    %v218 = vsub.s32 0, %v217
    %v219 = vrot.slane %v214, %v218
    %v221 = vadd.f32 %v150, %v219
    %v222 = vadd.f32 %v151, %v219
    %v223 = vadd.f32 %v152, %v219
    %v224 = vadd.f32 %v153, %v219
    %v225 = vadd.f32 %v154, %v219
    %v226 = vadd.f32 %v155, %v219
    %v227 = vadd.f32 %v156, %v219
    %v228 = vadd.f32 %v157, %v219
    %v229 = vadd.f32 %v158, %v219
    %v230 = vadd.f32 %v159, %v219
    %v231 = vadd.f32 %v160, %v219
    %v232 = vadd.f32 %v161, %v219
    %v233 = vadd.f32 %v162, %v219
    %v234 = vadd.f32 %v163, %v219
    %v235 = vadd.f32 %v164, %v219
    %v236 = vadd.f32 %v165, %v219
    %v237 = vadd.f32 %v166, %v219
    %v238 = vadd.f32 %v167, %v219
    %v239 = vadd.f32 %v168, %v219
    %v240 = vadd.f32 %v169, %v219
    %v241 = vadd.f32 %v170, %v219
    %v242 = vadd.f32 %v171, %v219
    %v243 = vadd.f32 %v172, %v219
    %v244 = vadd.f32 %v173, %v219
    %v245 = vadd.f32 %v174, %v219
    %v246 = vadd.f32 %v175, %v219
    %v247 = vadd.f32 %v176, %v219
    %v248 = vadd.f32 %v177, %v219
    %v249 = vadd.f32 %v178, %v219
    %v250 = vadd.f32 %v179, %v219
    %v251 = vadd.f32 %v180, %v219
    %v252 = vadd.f32 %v181, %v219
    %v253 = vadd.f32 %v182, %v219
    %v254 = vadd.f32 %v183, %v219
    %v255 = vadd.f32 %v184, %v219
    %v256 = vadd.f32 %v185, %v219
    %v257 = vadd.f32 %v186, %v219
    %v258 = vadd.f32 %v187, %v219
    %v259 = vadd.f32 %v188, %v219
    %v260 = vadd.f32 %v189, %v219
    %v261 = vadd.f32 %v190, %v219
    %v262 = vadd.f32 %v191, %v219
    %v263 = vadd.f32 %v192, %v219
    %v264 = vadd.f32 %v193, %v219
    %v265 = vadd.f32 %v194, %v219
    %v266 = vadd.f32 %v195, %v219
    %v267 = vadd.f32 %v196, %v219
    %v268 = vadd.f32 %v197, %v219
    %v269 = vadd.f32 %v198, %v219
    %v270 = vadd.f32 %v199, %v219
    %v271 = vadd.f32 %v200, %v219
    %v272 = vadd.f32 %v201, %v219
    %v273 = vadd.f32 %v202, %v219
    %v274 = vadd.f32 %v203, %v219
    %v275 = vadd.f32 %v204, %v219
    %v276 = vadd.f32 %v205, %v219
    %v277 = vadd.f32 %v206, %v219
    %v278 = vadd.f32 %v207, %v219
    %v279 = vadd.f32 %v208, %v219
    %v280 = vadd.f32 %v209, %v219
    %v281 = vadd.f32 %v210, %v219
    %v282 = vadd.f32 %v211, %v219
    %v283 = vadd.f32 %v212, %v219
    %v284 = vadd.f32 %v213, %v219
    %v285 = vxor.u32 %v221, 2147483648
    %v286 = vxor.u32 %v222, 2147483648
    %v287 = vxor.u32 %v223, 2147483648
    %v288 = vxor.u32 %v224, 2147483648
    %v289 = vxor.u32 %v225, 2147483648
    %v290 = vxor.u32 %v226, 2147483648
    %v291 = vxor.u32 %v227, 2147483648
    %v292 = vxor.u32 %v228, 2147483648
    %v293 = vxor.u32 %v229, 2147483648
    %v294 = vxor.u32 %v230, 2147483648
    %v295 = vxor.u32 %v231, 2147483648
    %v296 = vxor.u32 %v232, 2147483648
    %v297 = vxor.u32 %v233, 2147483648
    %v298 = vxor.u32 %v234, 2147483648
    %v299 = vxor.u32 %v235, 2147483648
    %v300 = vxor.u32 %v236, 2147483648
    %v301 = vxor.u32 %v237, 2147483648
    %v302 = vxor.u32 %v238, 2147483648
    %v303 = vxor.u32 %v239, 2147483648
    %v304 = vxor.u32 %v240, 2147483648
    %v305 = vxor.u32 %v241, 2147483648
    %v306 = vxor.u32 %v242, 2147483648
    %v307 = vxor.u32 %v243, 2147483648
    %v308 = vxor.u32 %v244, 2147483648
    %v309 = vxor.u32 %v245, 2147483648
    %v310 = vxor.u32 %v246, 2147483648
    %v311 = vxor.u32 %v247, 2147483648
    %v312 = vxor.u32 %v248, 2147483648
    %v313 = vxor.u32 %v249, 2147483648
    %v314 = vxor.u32 %v250, 2147483648
    %v315 = vxor.u32 %v251, 2147483648
    %v316 = vxor.u32 %v252, 2147483648
    %v317 = vxor.u32 %v253, 2147483648
    %v318 = vxor.u32 %v254, 2147483648
    %v319 = vxor.u32 %v255, 2147483648
    %v320 = vxor.u32 %v256, 2147483648
    %v321 = vxor.u32 %v257, 2147483648
    %v322 = vxor.u32 %v258, 2147483648
    %v323 = vxor.u32 %v259, 2147483648
    %v324 = vxor.u32 %v260, 2147483648
    %v325 = vxor.u32 %v261, 2147483648
    %v326 = vxor.u32 %v262, 2147483648
    %v327 = vxor.u32 %v263, 2147483648
    %v328 = vxor.u32 %v264, 2147483648
    %v329 = vxor.u32 %v265, 2147483648
    %v330 = vxor.u32 %v266, 2147483648
    %v331 = vxor.u32 %v267, 2147483648
    %v332 = vxor.u32 %v268, 2147483648
    %v333 = vxor.u32 %v269, 2147483648
    %v334 = vxor.u32 %v270, 2147483648
    %v335 = vxor.u32 %v271, 2147483648
    %v336 = vxor.u32 %v272, 2147483648
    %v337 = vxor.u32 %v273, 2147483648
    %v338 = vxor.u32 %v274, 2147483648
    %v339 = vxor.u32 %v275, 2147483648
    %v340 = vxor.u32 %v276, 2147483648
    %v341 = vxor.u32 %v277, 2147483648
    %v342 = vxor.u32 %v278, 2147483648
    %v343 = vxor.u32 %v279, 2147483648
    %v344 = vxor.u32 %v280, 2147483648
    %v345 = vxor.u32 %v281, 2147483648
    %v346 = vxor.u32 %v282, 2147483648
    %v347 = vxor.u32 %v283, 2147483648
    %v348 = vxor.u32 %v284, 2147483648
    %v349 = vmul.f32 %v285, 1.442695
    %v350 = vpow.pop %v349
    %v351 = vmul.f32 %v286, 1.442695
    %v352 = vpow.pop %v351
    %v353 = vmul.f32 %v287, 1.442695
    %v354 = vpow.pop %v353
    %v355 = vmul.f32 %v288, 1.442695
    %v356 = vpow.pop %v355
    %v357 = vmul.f32 %v289, 1.442695
    %v358 = vpow.pop %v357
    %v359 = vmul.f32 %v290, 1.442695
    %v360 = vpow.pop %v359
    %v361 = vmul.f32 %v291, 1.442695
    %v362 = vpow.pop %v361
    %v363 = vmul.f32 %v292, 1.442695
    %v364 = vpow.pop %v363
    %v365 = vmul.f32 %v293, 1.442695
    %v366 = vpow.pop %v365
    %v367 = vmul.f32 %v294, 1.442695
    %v368 = vpow.pop %v367
    %v369 = vmul.f32 %v295, 1.442695
    %v370 = vpow.pop %v369
    %v371 = vmul.f32 %v296, 1.442695
    %v372 = vpow.pop %v371
    %v373 = vmul.f32 %v297, 1.442695
    %v374 = vpow.pop %v373
    %v375 = vmul.f32 %v298, 1.442695
    %v376 = vpow.pop %v375
    %v377 = vmul.f32 %v299, 1.442695
    %v378 = vpow.pop %v377
    %v379 = vmul.f32 %v300, 1.442695
    %v380 = vpow.pop %v379
    %v381 = vmul.f32 %v301, 1.442695
    %v382 = vpow.pop %v381
    %v383 = vmul.f32 %v302, 1.442695
    %v384 = vpow.pop %v383
    %v385 = vmul.f32 %v303, 1.442695
    %v386 = vpow.pop %v385
    %v387 = vmul.f32 %v304, 1.442695
    %v388 = vpow.pop %v387
    %v389 = vmul.f32 %v305, 1.442695
    %v390 = vpow.pop %v389
    %v391 = vmul.f32 %v306, 1.442695
    %v392 = vpow.pop %v391
    %v393 = vmul.f32 %v307, 1.442695
    %v394 = vpow.pop %v393
    %v395 = vmul.f32 %v308, 1.442695
    %v396 = vpow.pop %v395
    %v397 = vmul.f32 %v309, 1.442695
    %v398 = vpow.pop %v397
    %v399 = vmul.f32 %v310, 1.442695
    %v400 = vpow.pop %v399
    %v401 = vmul.f32 %v311, 1.442695
    %v402 = vpow.pop %v401
    %v403 = vmul.f32 %v312, 1.442695
    %v404 = vpow.pop %v403
    %v405 = vmul.f32 %v313, 1.442695
    %v406 = vpow.pop %v405
    %v407 = vmul.f32 %v314, 1.442695
    %v408 = vpow.pop %v407
    %v409 = vmul.f32 %v315, 1.442695
    %v410 = vpow.pop %v409
    %v411 = vmul.f32 %v316, 1.442695
    %v412 = vpow.pop %v411
    %v413 = vmul.f32 %v317, 1.442695
    %v414 = vpow.pop %v413
    %v415 = vmul.f32 %v318, 1.442695
    %v416 = vpow.pop %v415
    %v417 = vmul.f32 %v319, 1.442695
    %v418 = vpow.pop %v417
    %v419 = vmul.f32 %v320, 1.442695
    %v420 = vpow.pop %v419
    %v421 = vmul.f32 %v321, 1.442695
    %v422 = vpow.pop %v421
    %v423 = vmul.f32 %v322, 1.442695
    %v424 = vpow.pop %v423
    %v425 = vmul.f32 %v323, 1.442695
    %v426 = vpow.pop %v425
    %v427 = vmul.f32 %v324, 1.442695
    %v428 = vpow.pop %v427
    %v429 = vmul.f32 %v325, 1.442695
    %v430 = vpow.pop %v429
    %v431 = vmul.f32 %v326, 1.442695
    %v432 = vpow.pop %v431
    %v433 = vmul.f32 %v327, 1.442695
    %v434 = vpow.pop %v433
    %v435 = vmul.f32 %v328, 1.442695
    %v436 = vpow.pop %v435
    %v437 = vmul.f32 %v329, 1.442695
    %v438 = vpow.pop %v437
    %v439 = vmul.f32 %v330, 1.442695
    %v440 = vpow.pop %v439
    %v441 = vmul.f32 %v331, 1.442695
    %v442 = vpow.pop %v441
    %v443 = vmul.f32 %v332, 1.442695
    %v444 = vpow.pop %v443
    %v445 = vmul.f32 %v333, 1.442695
    %v446 = vpow.pop %v445
    %v447 = vmul.f32 %v334, 1.442695
    %v448 = vpow.pop %v447
    %v449 = vmul.f32 %v335, 1.442695
    %v450 = vpow.pop %v449
    %v451 = vmul.f32 %v336, 1.442695
    %v452 = vpow.pop %v451
    %v453 = vmul.f32 %v337, 1.442695
    %v454 = vpow.pop %v453
    %v455 = vmul.f32 %v338, 1.442695
    %v456 = vpow.pop %v455
    %v457 = vmul.f32 %v339, 1.442695
    %v458 = vpow.pop %v457
    %v459 = vmul.f32 %v340, 1.442695
    %v460 = vpow.pop %v459
    %v461 = vmul.f32 %v341, 1.442695
    %v462 = vpow.pop %v461
    %v463 = vmul.f32 %v342, 1.442695
    %v464 = vpow.pop %v463
    %v465 = vmul.f32 %v343, 1.442695
    %v466 = vpow.pop %v465
    %v467 = vmul.f32 %v344, 1.442695
    %v468 = vpow.pop %v467
    %v469 = vmul.f32 %v345, 1.442695
    %v470 = vpow.pop %v469
    %v471 = vmul.f32 %v346, 1.442695
    %v472 = vpow.pop %v471
    %v473 = vmul.f32 %v347, 1.442695
    %v474 = vpow.pop %v473
    %v475 = vmul.f32 %v348, 1.442695
    %v476 = vpow.pop %v475
    %v477 = vadd.f32 %v350, 1.0
    %v478 = vadd.f32 %v352, 1.0
    %v479 = vadd.f32 %v354, 1.0
    %v480 = vadd.f32 %v356, 1.0
    %v481 = vadd.f32 %v358, 1.0
    %v482 = vadd.f32 %v360, 1.0
    %v483 = vadd.f32 %v362, 1.0
    %v484 = vadd.f32 %v364, 1.0
    %v485 = vadd.f32 %v366, 1.0
    %v486 = vadd.f32 %v368, 1.0
    %v487 = vadd.f32 %v370, 1.0
    %v488 = vadd.f32 %v372, 1.0
    %v489 = vadd.f32 %v374, 1.0
    %v490 = vadd.f32 %v376, 1.0
    %v491 = vadd.f32 %v378, 1.0
    %v492 = vadd.f32 %v380, 1.0
    %v493 = vadd.f32 %v382, 1.0
    %v494 = vadd.f32 %v384, 1.0
    %v495 = vadd.f32 %v386, 1.0
    %v496 = vadd.f32 %v388, 1.0
    %v497 = vadd.f32 %v390, 1.0
    %v498 = vadd.f32 %v392, 1.0
    %v499 = vadd.f32 %v394, 1.0
    %v500 = vadd.f32 %v396, 1.0
    %v501 = vadd.f32 %v398, 1.0
    %v502 = vadd.f32 %v400, 1.0
    %v503 = vadd.f32 %v402, 1.0
    %v504 = vadd.f32 %v404, 1.0
    %v505 = vadd.f32 %v406, 1.0
    %v506 = vadd.f32 %v408, 1.0
    %v507 = vadd.f32 %v410, 1.0
    %v508 = vadd.f32 %v412, 1.0
    %v509 = vadd.f32 %v414, 1.0
    %v510 = vadd.f32 %v416, 1.0
    %v511 = vadd.f32 %v418, 1.0
    %v512 = vadd.f32 %v420, 1.0
    %v513 = vadd.f32 %v422, 1.0
    %v514 = vadd.f32 %v424, 1.0
    %v515 = vadd.f32 %v426, 1.0
    %v516 = vadd.f32 %v428, 1.0
    %v517 = vadd.f32 %v430, 1.0
    %v518 = vadd.f32 %v432, 1.0
    %v519 = vadd.f32 %v434, 1.0
    %v520 = vadd.f32 %v436, 1.0
    %v521 = vadd.f32 %v438, 1.0
    %v522 = vadd.f32 %v440, 1.0
    %v523 = vadd.f32 %v442, 1.0
    %v524 = vadd.f32 %v444, 1.0
    %v525 = vadd.f32 %v446, 1.0
    %v526 = vadd.f32 %v448, 1.0
    %v527 = vadd.f32 %v450, 1.0
    %v528 = vadd.f32 %v452, 1.0
    %v529 = vadd.f32 %v454, 1.0
    %v530 = vadd.f32 %v456, 1.0
    %v531 = vadd.f32 %v458, 1.0
    %v532 = vadd.f32 %v460, 1.0
    %v533 = vadd.f32 %v462, 1.0
    %v534 = vadd.f32 %v464, 1.0
    %v535 = vadd.f32 %v466, 1.0
    %v536 = vadd.f32 %v468, 1.0
    %v537 = vadd.f32 %v470, 1.0
    %v538 = vadd.f32 %v472, 1.0
    %v539 = vadd.f32 %v474, 1.0
    %v540 = vadd.f32 %v476, 1.0
    %v541 = vrcp.pop %v477
    %v542 = vmul.f32 1.0, %v541
    %v543 = vrcp.pop %v478
    %v544 = vmul.f32 1.0, %v543
    %v545 = vrcp.pop %v479
    %v546 = vmul.f32 1.0, %v545
    %v547 = vrcp.pop %v480
    %v548 = vmul.f32 1.0, %v547
    %v549 = vrcp.pop %v481
    %v550 = vmul.f32 1.0, %v549
    %v551 = vrcp.pop %v482
    %v552 = vmul.f32 1.0, %v551
    %v553 = vrcp.pop %v483
    %v554 = vmul.f32 1.0, %v553
    %v555 = vrcp.pop %v484
    %v556 = vmul.f32 1.0, %v555
    %v557 = vrcp.pop %v485
    %v558 = vmul.f32 1.0, %v557
    %v559 = vrcp.pop %v486
    %v560 = vmul.f32 1.0, %v559
    %v561 = vrcp.pop %v487
    %v562 = vmul.f32 1.0, %v561
    %v563 = vrcp.pop %v488
    %v564 = vmul.f32 1.0, %v563
    %v565 = vrcp.pop %v489
    %v566 = vmul.f32 1.0, %v565
    %v567 = vrcp.pop %v490
    %v568 = vmul.f32 1.0, %v567
    %v569 = vrcp.pop %v491
    %v570 = vmul.f32 1.0, %v569
    %v571 = vrcp.pop %v492
    %v572 = vmul.f32 1.0, %v571
    %v573 = vrcp.pop %v493
    %v574 = vmul.f32 1.0, %v573
    %v575 = vrcp.pop %v494
    %v576 = vmul.f32 1.0, %v575
    %v577 = vrcp.pop %v495
    %v578 = vmul.f32 1.0, %v577
    %v579 = vrcp.pop %v496
    %v580 = vmul.f32 1.0, %v579
    %v581 = vrcp.pop %v497
    %v582 = vmul.f32 1.0, %v581
    %v583 = vrcp.pop %v498
    %v584 = vmul.f32 1.0, %v583
    %v585 = vrcp.pop %v499
    %v586 = vmul.f32 1.0, %v585
    %v587 = vrcp.pop %v500
    %v588 = vmul.f32 1.0, %v587
    %v589 = vrcp.pop %v501
    %v590 = vmul.f32 1.0, %v589
    %v591 = vrcp.pop %v502
    %v592 = vmul.f32 1.0, %v591
    %v593 = vrcp.pop %v503
    %v594 = vmul.f32 1.0, %v593
    %v595 = vrcp.pop %v504
    %v596 = vmul.f32 1.0, %v595
    %v597 = vrcp.pop %v505
    %v598 = vmul.f32 1.0, %v597
    %v599 = vrcp.pop %v506
    %v600 = vmul.f32 1.0, %v599
    %v601 = vrcp.pop %v507
    %v602 = vmul.f32 1.0, %v601
    %v603 = vrcp.pop %v508
    %v604 = vmul.f32 1.0, %v603
    %v605 = vrcp.pop %v509
    %v606 = vmul.f32 1.0, %v605
    %v607 = vrcp.pop %v510
    %v608 = vmul.f32 1.0, %v607
    %v609 = vrcp.pop %v511
    %v610 = vmul.f32 1.0, %v609
    %v611 = vrcp.pop %v512
    %v612 = vmul.f32 1.0, %v611
    %v613 = vrcp.pop %v513
    %v614 = vmul.f32 1.0, %v613
    %v615 = vrcp.pop %v514
    %v616 = vmul.f32 1.0, %v615
    %v617 = vrcp.pop %v515
    %v618 = vmul.f32 1.0, %v617
    %v619 = vrcp.pop %v516
    %v620 = vmul.f32 1.0, %v619
    %v621 = vrcp.pop %v517
    %v622 = vmul.f32 1.0, %v621
    %v623 = vrcp.pop %v518
    %v624 = vmul.f32 1.0, %v623
    %v625 = vrcp.pop %v519
    %v626 = vmul.f32 1.0, %v625
    %v627 = vrcp.pop %v520
    %v628 = vmul.f32 1.0, %v627
    %v629 = vrcp.pop %v521
    %v630 = vmul.f32 1.0, %v629
    %v631 = vrcp.pop %v522
    %v632 = vmul.f32 1.0, %v631
    %v633 = vrcp.pop %v523
    %v634 = vmul.f32 1.0, %v633
    %v635 = vrcp.pop %v524
    %v636 = vmul.f32 1.0, %v635
    %v637 = vrcp.pop %v525
    %v638 = vmul.f32 1.0, %v637
    %v639 = vrcp.pop %v526
    %v640 = vmul.f32 1.0, %v639
    %v641 = vrcp.pop %v527
    %v642 = vmul.f32 1.0, %v641
    %v643 = vrcp.pop %v528
    %v644 = vmul.f32 1.0, %v643
    %v645 = vrcp.pop %v529
    %v646 = vmul.f32 1.0, %v645
    %v647 = vrcp.pop %v530
    %v648 = vmul.f32 1.0, %v647
    %v649 = vrcp.pop %v531
    %v650 = vmul.f32 1.0, %v649
    %v651 = vrcp.pop %v532
    %v652 = vmul.f32 1.0, %v651
    %v653 = vrcp.pop %v533
    %v654 = vmul.f32 1.0, %v653
    %v655 = vrcp.pop %v534
    %v656 = vmul.f32 1.0, %v655
    %v657 = vrcp.pop %v535
    %v658 = vmul.f32 1.0, %v657
    %v659 = vrcp.pop %v536
    %v660 = vmul.f32 1.0, %v659
    %v661 = vrcp.pop %v537
    %v662 = vmul.f32 1.0, %v661
    %v663 = vrcp.pop %v538
    %v664 = vmul.f32 1.0, %v663
    %v665 = vrcp.pop %v539
    %v666 = vmul.f32 1.0, %v665
    %v667 = vrcp.pop %v540
    %v668 = vmul.f32 1.0, %v667
    %v669 = vmul.f32 %v221, %v542
    %v670 = vmul.f32 %v222, %v544
    %v671 = vmul.f32 %v223, %v546
    %v672 = vmul.f32 %v224, %v548
    %v673 = vmul.f32 %v225, %v550
    %v674 = vmul.f32 %v226, %v552
    %v675 = vmul.f32 %v227, %v554
    %v676 = vmul.f32 %v228, %v556
    %v677 = vmul.f32 %v229, %v558
    %v678 = vmul.f32 %v230, %v560
    %v679 = vmul.f32 %v231, %v562
    %v680 = vmul.f32 %v232, %v564
    %v681 = vmul.f32 %v233, %v566
    %v682 = vmul.f32 %v234, %v568
    %v683 = vmul.f32 %v235, %v570
    %v684 = vmul.f32 %v236, %v572
    %v685 = vmul.f32 %v237, %v574
    %v686 = vmul.f32 %v238, %v576
    %v687 = vmul.f32 %v239, %v578
    %v688 = vmul.f32 %v240, %v580
    %v689 = vmul.f32 %v241, %v582
    %v690 = vmul.f32 %v242, %v584
    %v691 = vmul.f32 %v243, %v586
    %v692 = vmul.f32 %v244, %v588
    %v693 = vmul.f32 %v245, %v590
    %v694 = vmul.f32 %v246, %v592
    %v695 = vmul.f32 %v247, %v594
    %v696 = vmul.f32 %v248, %v596
    %v697 = vmul.f32 %v249, %v598
    %v698 = vmul.f32 %v250, %v600
    %v699 = vmul.f32 %v251, %v602
    %v700 = vmul.f32 %v252, %v604
    %v701 = vmul.f32 %v253, %v606
    %v702 = vmul.f32 %v254, %v608
    %v703 = vmul.f32 %v255, %v610
    %v704 = vmul.f32 %v256, %v612
    %v705 = vmul.f32 %v257, %v614
    %v706 = vmul.f32 %v258, %v616
    %v707 = vmul.f32 %v259, %v618
    %v708 = vmul.f32 %v260, %v620
    %v709 = vmul.f32 %v261, %v622
    %v710 = vmul.f32 %v262, %v624
    %v711 = vmul.f32 %v263, %v626
    %v712 = vmul.f32 %v264, %v628
    %v713 = vmul.f32 %v265, %v630
    %v714 = vmul.f32 %v266, %v632
    %v715 = vmul.f32 %v267, %v634
    %v716 = vmul.f32 %v268, %v636
    %v717 = vmul.f32 %v269, %v638
    %v718 = vmul.f32 %v270, %v640
    %v719 = vmul.f32 %v271, %v642
    %v720 = vmul.f32 %v272, %v644
    %v721 = vmul.f32 %v273, %v646
    %v722 = vmul.f32 %v274, %v648
    %v723 = vmul.f32 %v275, %v650
    %v724 = vmul.f32 %v276, %v652
    %v725 = vmul.f32 %v277, %v654
    %v726 = vmul.f32 %v278, %v656
    %v727 = vmul.f32 %v279, %v658
    %v728 = vmul.f32 %v280, %v660
    %v729 = vmul.f32 %v281, %v662
    %v730 = vmul.f32 %v282, %v664
    %v731 = vmul.f32 %v283, %v666
    %v732 = vmul.f32 %v284, %v668
    %733 = vst [vmem:[#allocation2] sm:$0xff] %v669
    %734 = vst [vmem:[#allocation2 + $0x8] sm:$0xff] %v670
    %735 = vst [vmem:[#allocation2 + $0x10] sm:$0xff] %v671
    %736 = vst [vmem:[#allocation2 + $0x18] sm:$0xff] %v672
    %737 = vst [vmem:[#allocation2 + $0x20] sm:$0xff] %v673
    %738 = vst [vmem:[#allocation2 + $0x28] sm:$0xff] %v674
    %739 = vst [vmem:[#allocation2 + $0x30] sm:$0xff] %v675
    %740 = vst [vmem:[#allocation2 + $0x38] sm:$0xff] %v676
    %741 = vst [vmem:[#allocation2 + $0x40] sm:$0xff] %v677
    %742 = vst [vmem:[#allocation2 + $0x48] sm:$0xff] %v678
    %743 = vst [vmem:[#allocation2 + $0x50] sm:$0xff] %v679
    %744 = vst [vmem:[#allocation2 + $0x58] sm:$0xff] %v680
    %745 = vst [vmem:[#allocation2 + $0x60] sm:$0xff] %v681
    %746 = vst [vmem:[#allocation2 + $0x68] sm:$0xff] %v682
    %747 = vst [vmem:[#allocation2 + $0x70] sm:$0xff] %v683
    %748 = vst [vmem:[#allocation2 + $0x78] sm:$0xff] %v684
    %749 = vst [vmem:[#allocation2 + $0x80] sm:$0xff] %v685
    %750 = vst [vmem:[#allocation2 + $0x88] sm:$0xff] %v686
    %751 = vst [vmem:[#allocation2 + $0x90] sm:$0xff] %v687
    %752 = vst [vmem:[#allocation2 + $0x98] sm:$0xff] %v688
    %753 = vst [vmem:[#allocation2 + $0xa0] sm:$0xff] %v689
    %754 = vst [vmem:[#allocation2 + $0xa8] sm:$0xff] %v690
    %755 = vst [vmem:[#allocation2 + $0xb0] sm:$0xff] %v691
    %756 = vst [vmem:[#allocation2 + $0xb8] sm:$0xff] %v692
    %757 = vst [vmem:[#allocation2 + $0xc0] sm:$0xff] %v693
    %758 = vst [vmem:[#allocation2 + $0xc8] sm:$0xff] %v694
    %759 = vst [vmem:[#allocation2 + $0xd0] sm:$0xff] %v695
    %760 = vst [vmem:[#allocation2 + $0xd8] sm:$0xff] %v696
    %761 = vst [vmem:[#allocation2 + $0xe0] sm:$0xff] %v697
    %762 = vst [vmem:[#allocation2 + $0xe8] sm:$0xff] %v698
    %763 = vst [vmem:[#allocation2 + $0xf0] sm:$0xff] %v699
    %764 = vst [vmem:[#allocation2 + $0xf8] sm:$0xff] %v700
    %765 = vst [vmem:[#allocation2 + $0x100] sm:$0xff] %v701
    %766 = vst [vmem:[#allocation2 + $0x108] sm:$0xff] %v702
    %767 = vst [vmem:[#allocation2 + $0x110] sm:$0xff] %v703
    %768 = vst [vmem:[#allocation2 + $0x118] sm:$0xff] %v704
    %769 = vst [vmem:[#allocation2 + $0x120] sm:$0xff] %v705
    %770 = vst [vmem:[#allocation2 + $0x128] sm:$0xff] %v706
    %771 = vst [vmem:[#allocation2 + $0x130] sm:$0xff] %v707
    %772 = vst [vmem:[#allocation2 + $0x138] sm:$0xff] %v708
    %773 = vst [vmem:[#allocation2 + $0x140] sm:$0xff] %v709
    %774 = vst [vmem:[#allocation2 + $0x148] sm:$0xff] %v710
    %775 = vst [vmem:[#allocation2 + $0x150] sm:$0xff] %v711
    %776 = vst [vmem:[#allocation2 + $0x158] sm:$0xff] %v712
    %777 = vst [vmem:[#allocation2 + $0x160] sm:$0xff] %v713
    %778 = vst [vmem:[#allocation2 + $0x168] sm:$0xff] %v714
    %779 = vst [vmem:[#allocation2 + $0x170] sm:$0xff] %v715
    %780 = vst [vmem:[#allocation2 + $0x178] sm:$0xff] %v716
    %781 = vst [vmem:[#allocation2 + $0x180] sm:$0xff] %v717
    %782 = vst [vmem:[#allocation2 + $0x188] sm:$0xff] %v718
    %783 = vst [vmem:[#allocation2 + $0x190] sm:$0xff] %v719
    %784 = vst [vmem:[#allocation2 + $0x198] sm:$0xff] %v720
    %785 = vst [vmem:[#allocation2 + $0x1a0] sm:$0xff] %v721
    %786 = vst [vmem:[#allocation2 + $0x1a8] sm:$0xff] %v722
    %787 = vst [vmem:[#allocation2 + $0x1b0] sm:$0xff] %v723
    %788 = vst [vmem:[#allocation2 + $0x1b8] sm:$0xff] %v724
    %789 = vst [vmem:[#allocation2 + $0x1c0] sm:$0xff] %v725
    %790 = vst [vmem:[#allocation2 + $0x1c8] sm:$0xff] %v726
    %791 = vst [vmem:[#allocation2 + $0x1d0] sm:$0xff] %v727
    %792 = vst [vmem:[#allocation2 + $0x1d8] sm:$0xff] %v728
    %793 = vst [vmem:[#allocation2 + $0x1e0] sm:$0xff] %v729
    %794 = vst [vmem:[#allocation2 + $0x1e8] sm:$0xff] %v730
    %795 = vst [vmem:[#allocation2 + $0x1f0] sm:$0xff] %v731
    %796 = vst [vmem:[#allocation2 + $0x1f8] sm:$0xff] %v732
    // Predicated region
    $region14: #{sppf_forward.7} parent=1 // pred_check
      _
    $region15: #{sppf_forward.7} parent=1 // pred_check_branch
      %798 = sbr.rel (0) target = $region17
    $region16: #{sppf_forward.7} parent=1 // pred_region
      %s800 = ssub.s32 8192, 8192
      %801 = vsyncadd [#allocation3], %s800
      %s802 = sshll.u32 [#allocation2], 4
      %s803 = int_to_ptr.vmem [resolvable:$true] %s802
      %808 = dma.vmem_to_hbm [thread:$0]  %s803, 8192, %s3, [#allocation3], 128, 128, 8
    $region17: #{sppf_forward.7} parent=1 // pred_fallthru
      _
    // Predicated region
    $region18: #{sppf_forward.7} parent=1 // pred_check
      _
    $region19: #{sppf_forward.7} parent=1 // pred_check_branch
      %810 = sbr.rel (0) target = $region21
    $region20: #{sppf_forward.7} parent=1 // pred_region
      %811 = dma.done [#allocation3], 8192
    $region21: #{sppf_forward.7} parent=1 // pred_fallthru
      _
    %812 = vsyncpa [#allocation3], 1

// kernel: sppf_forward.5
$region0: #{sppf_forward.5}
  #allocation0 [shape = 'u32[]', space=smem, size = 0x4, offset = 0x4, fixed_abs, tag = 'smem constant byte address 0x4 - core index']
  #allocation1 [shape = 'u32[144,128]{1,0:T(1,128)}', space=vmem, size = 0x12000, scoped, tag = 'internal scratch']
  #allocation2 [shape = 'bf16[28,3584]{1,0:T(8,128)(2,1)}', space=vmem, size = 0x38000, scoped, tag = 'scratch operand']
  %s0 = inlined_call_operand.vmem [shape: bf16[2,16,2048], index: 0, kind: input, shape index: {}]
  %s1 = inlined_call_operand.vmem [shape: f32[1,2048], index: 1, kind: input, shape index: {}]
  %s2 = inlined_call_operand.vmem [shape: f32[1,2048], index: 2, kind: input, shape index: {}]
  %s3 = inlined_call_operand.vmem [shape: bf16[2,16,2048], index: 3, kind: output, shape index: {0}]
  %s4 = inlined_call_operand.vmem [shape: bf16[2,16,2048], index: 4, kind: output, shape index: {1}]
  %s5 = inlined_call_operand.vmem [shape: bf16[2,16,2048], index: 5, kind: output, shape index: {2}]
  %s6 = inlined_call_operand.vmem [shape: bf16[2,16,2048], index: 6, kind: output, shape index: {3}]
  %7 = xla_tuple %s3, %s4, %s5, %s6
  %s8 = sld [smem:[#allocation0]]
  $region69: #{sppf_forward.5} parent=0
    _
  %s10 = ssub.s32 1, %s8
  %s11 = scalar_select 0, %s10, %s8
  loop: start=0, step=1, limit=4
  $region2: #{sppf_forward.5} parent=0 // loop_pre_header
    _
  $region3: #{sppf_forward.5} parent=0 // loop_header
    %s13 = sphi 0, %s17
    %p14 = scmp.ge.s32.totalorder %s13, 4
    %s23 = sphi 0, %s25
    %s26 = sphi 0, %s23
    %s27 = sphi 0, %s26
    %s43 = sphi 0, %s27
    %s47 = sphi 0, %s47
    %s49 = sphi 0, %s47
    %s50 = sphi 0, %s49
    %s64 = sphi 0, %s50
    %s68 = sphi 0, %s68
    %s70 = sphi 0, %s68
    %s71 = sphi 0, %s70
    %s85 = sphi 0, %s71
    %s91 = sphi 0, %s93
    %s94 = sphi 0, %s91
    %s95 = sphi 0, %s94
    %s111 = sphi 0, %s95
    %s117 = sphi 0, %s119
    %s120 = sphi 0, %s117
    %s121 = sphi 0, %s120
    %s137 = sphi 0, %s121
    %s143 = sphi 0, %s145
    %s146 = sphi 0, %s143
    %s147 = sphi 0, %s146
    %s163 = sphi 0, %s147
    %s169 = sphi 0, %s171
    %s172 = sphi 0, %s169
    %s173 = sphi 0, %s172
    %s189 = sphi 0, %s173
  $region4: #{sppf_forward.5} parent=0 // loop_header_branch
    %16 = sbr.rel (%p14) target = $region8
  $region5: #{sppf_forward.5} parent=0 // loop_body
    %s18 = ssub.s32 %s13, 1
    %s19 = ssub.s32 %s13, 2
    %s20 = sadd.s32 %s13, 1
    %s21 = ssub.s32 %s13, %s20
    %p22 = scmp.eq.s32.totalorder %s21, 0
    %s24 = sadd.s32 %s23, 1
    %s25 = scalar_select %p22, %s23, %s24
    %p28 = pneg %p22
    %p29 = scmp.eq.s32.totalorder %s13, 1
    %p30 = por %p28, %p29
    %p31 = scmp.ne.s32.totalorder %s23, %s26
    %p32 = scmp.eq.s32.totalorder %s13, 0
    %p33 = por %p31, %p32
    %p34 = scmp.ne.s32.totalorder %s23, %s26
    %p35 = scmp.eq.s32.totalorder %s18, 1
    %p36 = por %p34, %p35
    %p37 = scmp.ne.s32.totalorder %s26, %s27
    %p38 = scmp.eq.s32.totalorder %s18, 0
    %p39 = por %p37, %p38
    %p40 = scmp.ne.s32.totalorder %s26, %s27
    %p41 = scmp.eq.s32.totalorder %s19, 1
    %p42 = por %p40, %p41
    %p44 = scmp.ne.s32.totalorder %s27, %s43
    %p45 = scmp.eq.s32.totalorder %s19, 0
    %p46 = por %p44, %p45
    %s48 = sadd.s32 %s47, 1
    %p51 = scmp.eq.s32.totalorder %s13, 1
    %p52 = scmp.ne.s32.totalorder %s47, %s49
    %p53 = scmp.eq.s32.totalorder %s13, 0
    %p54 = por %p52, %p53
    %p55 = scmp.ne.s32.totalorder %s47, %s49
    %p56 = scmp.eq.s32.totalorder %s18, 1
    %p57 = por %p55, %p56
    %p58 = scmp.ne.s32.totalorder %s49, %s50
    %p59 = scmp.eq.s32.totalorder %s18, 0
    %p60 = por %p58, %p59
    %p61 = scmp.ne.s32.totalorder %s49, %s50
    %p62 = scmp.eq.s32.totalorder %s19, 1
    %p63 = por %p61, %p62
    %p65 = scmp.ne.s32.totalorder %s50, %s64
    %p66 = scmp.eq.s32.totalorder %s19, 0
    %p67 = por %p65, %p66
    %s69 = sadd.s32 %s68, 1
    %p72 = scmp.eq.s32.totalorder %s13, 1
    %p73 = scmp.ne.s32.totalorder %s68, %s70
    %p74 = scmp.eq.s32.totalorder %s13, 0
    %p75 = por %p73, %p74
    %p76 = scmp.ne.s32.totalorder %s68, %s70
    %p77 = scmp.eq.s32.totalorder %s18, 1
    %p78 = por %p76, %p77
    %p79 = scmp.ne.s32.totalorder %s70, %s71
    %p80 = scmp.eq.s32.totalorder %s18, 0
    %p81 = por %p79, %p80
    %p82 = scmp.ne.s32.totalorder %s70, %s71
    %p83 = scmp.eq.s32.totalorder %s19, 1
    %p84 = por %p82, %p83
    %p86 = scmp.ne.s32.totalorder %s71, %s85
    %p87 = scmp.eq.s32.totalorder %s19, 0
    %p88 = por %p86, %p87
    %s89 = ssub.s32 %s13, %s20
    %p90 = scmp.eq.s32.totalorder %s89, 0
    %s92 = sadd.s32 %s91, 1
    %s93 = scalar_select %p90, %s91, %s92
    %p96 = pneg %p90
    %p97 = scmp.eq.s32.totalorder %s13, 1
    %p98 = por %p96, %p97
    %p99 = scmp.ne.s32.totalorder %s91, %s94
    %p100 = scmp.eq.s32.totalorder %s13, 0
    %p101 = por %p99, %p100
    %p102 = scmp.ne.s32.totalorder %s91, %s94
    %p103 = scmp.eq.s32.totalorder %s18, 1
    %p104 = por %p102, %p103
    %p105 = scmp.ne.s32.totalorder %s94, %s95
    %p106 = scmp.eq.s32.totalorder %s18, 0
    %p107 = por %p105, %p106
    %p108 = scmp.ne.s32.totalorder %s94, %s95
    %p109 = scmp.eq.s32.totalorder %s19, 1
    %p110 = por %p108, %p109
    %p112 = scmp.ne.s32.totalorder %s95, %s111
    %p113 = scmp.eq.s32.totalorder %s19, 0
    %p114 = por %p112, %p113
    %s115 = ssub.s32 %s13, %s20
    %p116 = scmp.eq.s32.totalorder %s115, 0
    %s118 = sadd.s32 %s117, 1
    %s119 = scalar_select %p116, %s117, %s118
    %p122 = pneg %p116
    %p123 = scmp.eq.s32.totalorder %s13, 1
    %p124 = por %p122, %p123
    %p125 = scmp.ne.s32.totalorder %s117, %s120
    %p126 = scmp.eq.s32.totalorder %s13, 0
    %p127 = por %p125, %p126
    %p128 = scmp.ne.s32.totalorder %s117, %s120
    %p129 = scmp.eq.s32.totalorder %s18, 1
    %p130 = por %p128, %p129
    %p131 = scmp.ne.s32.totalorder %s120, %s121
    %p132 = scmp.eq.s32.totalorder %s18, 0
    %p133 = por %p131, %p132
    %p134 = scmp.ne.s32.totalorder %s120, %s121
    %p135 = scmp.eq.s32.totalorder %s19, 1
    %p136 = por %p134, %p135
    %p138 = scmp.ne.s32.totalorder %s121, %s137
    %p139 = scmp.eq.s32.totalorder %s19, 0
    %p140 = por %p138, %p139
    %s141 = ssub.s32 %s13, %s20
    %p142 = scmp.eq.s32.totalorder %s141, 0
    %s144 = sadd.s32 %s143, 1
    %s145 = scalar_select %p142, %s143, %s144
    %p148 = pneg %p142
    %p149 = scmp.eq.s32.totalorder %s13, 1
    %p150 = por %p148, %p149
    %p151 = scmp.ne.s32.totalorder %s143, %s146
    %p152 = scmp.eq.s32.totalorder %s13, 0
    %p153 = por %p151, %p152
    %p154 = scmp.ne.s32.totalorder %s143, %s146
    %p155 = scmp.eq.s32.totalorder %s18, 1
    %p156 = por %p154, %p155
    %p157 = scmp.ne.s32.totalorder %s146, %s147
    %p158 = scmp.eq.s32.totalorder %s18, 0
    %p159 = por %p157, %p158
    %p160 = scmp.ne.s32.totalorder %s146, %s147
    %p161 = scmp.eq.s32.totalorder %s19, 1
    %p162 = por %p160, %p161
    %p164 = scmp.ne.s32.totalorder %s147, %s163
    %p165 = scmp.eq.s32.totalorder %s19, 0
    %p166 = por %p164, %p165
    %s167 = ssub.s32 %s13, %s20
    %p168 = scmp.eq.s32.totalorder %s167, 0
    %s170 = sadd.s32 %s169, 1
    %s171 = scalar_select %p168, %s169, %s170
    %p174 = pneg %p168
    %p175 = scmp.eq.s32.totalorder %s13, 1
    %p176 = por %p174, %p175
    %p177 = scmp.ne.s32.totalorder %s169, %s172
    %p178 = scmp.eq.s32.totalorder %s13, 0
    %p179 = por %p177, %p178
    %p180 = scmp.ne.s32.totalorder %s169, %s172
    %p181 = scmp.eq.s32.totalorder %s18, 1
    %p182 = por %p180, %p181
    %p183 = scmp.ne.s32.totalorder %s172, %s173
    %p184 = scmp.eq.s32.totalorder %s18, 0
    %p185 = por %p183, %p184
    %p186 = scmp.ne.s32.totalorder %s172, %s173
    %p187 = scmp.eq.s32.totalorder %s19, 1
    %p188 = por %p186, %p187
    %p190 = scmp.ne.s32.totalorder %s173, %s189
    %p191 = scmp.eq.s32.totalorder %s19, 0
    %p192 = por %p190, %p191
    %p193 = scmp.le.s32.totalorder 1, %s13
    %p194 = scmp.lt.s32.totalorder %s13, 3
    %p195 = pnand %p193, %p194
    %p196 = pneg %p195
    // Predicated region
    $region9: #{sppf_forward.5} parent=5 // pred_check
      _
    $region10: #{sppf_forward.5} parent=5 // pred_check_branch
      %198 = sbr.rel (%p195) target = $region12
    $region11: #{sppf_forward.5} parent=5 // pred_region
      %s199 = ssub.s32 %s13, 1
      // Predicated region
      $region13: #{sppf_forward.5} parent=11 // pred_check
        %p200 = pneg %p60
      $region14: #{sppf_forward.5} parent=11 // pred_check_branch
        %202 = sbr.rel (%p200) target = $region16
      $region15: #{sppf_forward.5} parent=11 // pred_region
        _
      $region16: #{sppf_forward.5} parent=11 // pred_fallthru
        _
      // Predicated region
      $region17: #{sppf_forward.5} parent=11 // pred_check
        %p203 = pneg %p81
      $region18: #{sppf_forward.5} parent=11 // pred_check_branch
        %205 = sbr.rel (%p203) target = $region20
      $region19: #{sppf_forward.5} parent=11 // pred_region
        _
      $region20: #{sppf_forward.5} parent=11 // pred_fallthru
        _
    $region12: #{sppf_forward.5} parent=5 // pred_fallthru
      _
    %p206 = scmp.lt.s32.totalorder %s13, 2
    // Predicated region
    $region21: #{sppf_forward.5} parent=5 // pred_check
      %p207 = pneg %p206
    $region22: #{sppf_forward.5} parent=5 // pred_check_branch
      %209 = sbr.rel (%p207) target = $region24
    $region23: #{sppf_forward.5} parent=5 // pred_region
      // Predicated region
      $region25: #{sppf_forward.5} parent=23 // pred_check
        %p210 = pneg %p33
      $region26: #{sppf_forward.5} parent=23 // pred_check_branch
        %212 = sbr.rel (%p210) target = $region28
      $region27: #{sppf_forward.5} parent=23 // pred_region
        %p213 = scmp.lt.s32.totalorder %s13, 1
        %s214 = scalar_select %p213, %s13, 1
        %s215 = smul.addr %s214, 32
        %s216 = smul.addr %s215, 4
        %s217 = scalar_lea.vmem %s0, %s216
      $region28: #{sppf_forward.5} parent=23 // pred_fallthru
        _
    $region24: #{sppf_forward.5} parent=5 // pred_fallthru
      _
    %p218 = scmp.le.s32.totalorder 1, %s13
    %p219 = scmp.lt.s32.totalorder %s13, 3
    %p220 = pnand %p218, %p219
    %p221 = pneg %p220
    // Predicated region
    $region29: #{sppf_forward.5} parent=5 // pred_check
      _
    $region30: #{sppf_forward.5} parent=5 // pred_check_branch
      %223 = sbr.rel (%p220) target = $region32
    $region31: #{sppf_forward.5} parent=5 // pred_region
      %s224 = ssub.s32 %s13, 1
      %p225 = scmp.lt.s32.totalorder %s18, 1
      %s226 = scalar_select %p225, %s18, 1
      %s227 = smul.addr %s226, 32
      %s228 = smul.addr %s227, 4
      %s229 = scalar_lea.vmem %s0, %s228
      %p230 = pneg %p39
      %p231 = pneg %p36
      %p232 = pneg %p60
      %p233 = pneg %p57
      %p234 = pneg %p81
      %p235 = pneg %p78
      %p236 = pneg %p107
      %p237 = pneg %p104
      %p238 = scmp.lt.s32.totalorder %s18, 1
      %s239 = scalar_select %p238, %s18, 1
      %s240 = smul.addr %s239, 32
      %s241 = smul.addr %s240, 4
      %s242 = scalar_lea.vmem %s3, %s241
      %p243 = pneg %p133
      %p244 = pneg %p130
      %p245 = scmp.lt.s32.totalorder %s18, 1
      %s246 = scalar_select %p245, %s18, 1
      %s247 = smul.addr %s246, 32
      %s248 = smul.addr %s247, 4
      %s249 = scalar_lea.vmem %s4, %s248
      %p250 = pneg %p159
      %p251 = pneg %p156
      %p252 = scmp.lt.s32.totalorder %s18, 1
      %s253 = scalar_select %p252, %s18, 1
      %s254 = smul.addr %s253, 32
      %s255 = smul.addr %s254, 4
      %s256 = scalar_lea.vmem %s5, %s255
      %p257 = pneg %p185
      %p258 = pneg %p182
      %p259 = scmp.lt.s32.totalorder %s18, 1
      %s260 = scalar_select %p259, %s18, 1
      %s261 = smul.addr %s260, 32
      %s262 = smul.addr %s261, 4
      %s263 = scalar_lea.vmem %s6, %s262
      %p264 = scmp.lt.s32.totalorder %s18, 1
      %s265 = scalar_select %p264, %s18, 1
      %s266 = smul.addr %s265, 32
      %s267 = smul.addr %s266, 4
      %s268 = scalar_lea.vmem %s0, %s267
      %p269 = scmp.lt.s32.totalorder %s18, 1
      %s270 = scalar_select %p269, %s18, 1
      %s271 = smul.addr %s270, 32
      %s272 = smul.addr %s271, 4
      %s273 = scalar_lea.vmem %s3, %s272
      %p274 = scmp.lt.s32.totalorder %s18, 1
      %s275 = scalar_select %p274, %s18, 1
      %s276 = smul.addr %s275, 32
      %s277 = smul.addr %s276, 4
      %s278 = scalar_lea.vmem %s4, %s277
      %p279 = scmp.lt.s32.totalorder %s18, 1
      %s280 = scalar_select %p279, %s18, 1
      %s281 = smul.addr %s280, 32
      %s282 = smul.addr %s281, 4
      %s283 = scalar_lea.vmem %s5, %s282
      %p284 = scmp.lt.s32.totalorder %s18, 1
      %s285 = scalar_select %p284, %s18, 1
      %s286 = smul.addr %s285, 32
      %s287 = smul.addr %s286, 4
      %s288 = scalar_lea.vmem %s6, %s287
      %v290 = vld [vmem:[%s268] sm:$0xff]
      %v291 = vld [vmem:[%s268 + $0x8] sm:$0xff]
      %v292 = vld [vmem:[%s268 + $0x10] sm:$0xff]
      %v293 = vld [vmem:[%s268 + $0x18] sm:$0xff]
      %v294 = vld [vmem:[%s268 + $0x20] sm:$0xff]
      %v295 = vld [vmem:[%s268 + $0x28] sm:$0xff]
      %v296 = vld [vmem:[%s268 + $0x30] sm:$0xff]
      %v297 = vld [vmem:[%s268 + $0x38] sm:$0xff]
      %v298 = vld [vmem:[%s268 + $0x40] sm:$0xff]
      %v299 = vld [vmem:[%s268 + $0x48] sm:$0xff]
      %v300 = vld [vmem:[%s268 + $0x50] sm:$0xff]
      %v301 = vld [vmem:[%s268 + $0x58] sm:$0xff]
      %v302 = vld [vmem:[%s268 + $0x60] sm:$0xff]
      %v303 = vld [vmem:[%s268 + $0x68] sm:$0xff]
      %v304 = vld [vmem:[%s268 + $0x70] sm:$0xff]
      %v305 = vld [vmem:[%s268 + $0x78] sm:$0xff]
      %v306 = vunpack.c.l.bf16 %v290
      %v307 = vunpack.c.h.bf16 %v290
      %v308 = vunpack.c.l.bf16 %v291
      %v309 = vunpack.c.h.bf16 %v291
      %v310 = vunpack.c.l.bf16 %v292
      %v311 = vunpack.c.h.bf16 %v292
      %v312 = vunpack.c.l.bf16 %v293
      %v313 = vunpack.c.h.bf16 %v293
      %v314 = vunpack.c.l.bf16 %v294
      %v315 = vunpack.c.h.bf16 %v294
      %v316 = vunpack.c.l.bf16 %v295
      %v317 = vunpack.c.h.bf16 %v295
      %v318 = vunpack.c.l.bf16 %v296
      %v319 = vunpack.c.h.bf16 %v296
      %v320 = vunpack.c.l.bf16 %v297
      %v321 = vunpack.c.h.bf16 %v297
      %v322 = vunpack.c.l.bf16 %v298
      %v323 = vunpack.c.h.bf16 %v298
      %v324 = vunpack.c.l.bf16 %v299
      %v325 = vunpack.c.h.bf16 %v299
      %v326 = vunpack.c.l.bf16 %v300
      %v327 = vunpack.c.h.bf16 %v300
      %v328 = vunpack.c.l.bf16 %v301
      %v329 = vunpack.c.h.bf16 %v301
      %v330 = vunpack.c.l.bf16 %v302
      %v331 = vunpack.c.h.bf16 %v302
      %v332 = vunpack.c.l.bf16 %v303
      %v333 = vunpack.c.h.bf16 %v303
      %v334 = vunpack.c.l.bf16 %v304
      %v335 = vunpack.c.h.bf16 %v304
      %v336 = vunpack.c.l.bf16 %v305
      %v337 = vunpack.c.h.bf16 %v305
      %v338 = vld [vmem:[%s1] sm:$0xff]
      %v339 = vld [vmem:[%s1 + $0x8] sm:$0xff]
      %v342 = vlaneseq
      %v343 = vshrl.u32 %v342, 7
      %v344 = vsub.s32 0, %v343
      %v345 = vrot.slane %v338, %v344
      %v346 = vlaneseq
      %v347 = vshrl.u32 %v346, 7
      %v348 = vsub.s32 1, %v347
      %v349 = vrot.slane %v338, %v348
      %v350 = vlaneseq
      %v351 = vshrl.u32 %v350, 7
      %v352 = vsub.s32 2, %v351
      %v353 = vrot.slane %v338, %v352
      %v354 = vlaneseq
      %v355 = vshrl.u32 %v354, 7
      %v356 = vsub.s32 3, %v355
      %v357 = vrot.slane %v338, %v356
      %v358 = vlaneseq
      %v359 = vshrl.u32 %v358, 7
      %v360 = vsub.s32 4, %v359
      %v361 = vrot.slane %v338, %v360
      %v362 = vlaneseq
      %v363 = vshrl.u32 %v362, 7
      %v364 = vsub.s32 5, %v363
      %v365 = vrot.slane %v338, %v364
      %v366 = vlaneseq
      %v367 = vshrl.u32 %v366, 7
      %v368 = vsub.s32 6, %v367
      %v369 = vrot.slane %v338, %v368
      %v370 = vlaneseq
      %v371 = vshrl.u32 %v370, 7
      %v372 = vsub.s32 7, %v371
      %v373 = vrot.slane %v338, %v372
      %v374 = vlaneseq
      %v375 = vshrl.u32 %v374, 7
      %v376 = vsub.s32 0, %v375
      %v377 = vrot.slane %v339, %v376
      %v378 = vlaneseq
      %v379 = vshrl.u32 %v378, 7
      %v380 = vsub.s32 1, %v379
      %v381 = vrot.slane %v339, %v380
      %v382 = vlaneseq
      %v383 = vshrl.u32 %v382, 7
      %v384 = vsub.s32 2, %v383
      %v385 = vrot.slane %v339, %v384
      %v386 = vlaneseq
      %v387 = vshrl.u32 %v386, 7
      %v388 = vsub.s32 3, %v387
      %v389 = vrot.slane %v339, %v388
      %v390 = vlaneseq
      %v391 = vshrl.u32 %v390, 7
      %v392 = vsub.s32 4, %v391
      %v393 = vrot.slane %v339, %v392
      %v394 = vlaneseq
      %v395 = vshrl.u32 %v394, 7
      %v396 = vsub.s32 5, %v395
      %v397 = vrot.slane %v339, %v396
      %v398 = vlaneseq
      %v399 = vshrl.u32 %v398, 7
      %v400 = vsub.s32 6, %v399
      %v401 = vrot.slane %v339, %v400
      %v402 = vlaneseq
      %v403 = vshrl.u32 %v402, 7
      %v404 = vsub.s32 7, %v403
      %v405 = vrot.slane %v339, %v404
      %v422 = vmul.f32 %v306, %v345
      %v423 = vmul.f32 %v307, %v349
      %v424 = vmul.f32 %v308, %v353
      %v425 = vmul.f32 %v309, %v357
      %v426 = vmul.f32 %v310, %v361
      %v427 = vmul.f32 %v311, %v365
      %v428 = vmul.f32 %v312, %v369
      %v429 = vmul.f32 %v313, %v373
      %v430 = vmul.f32 %v314, %v377
      %v431 = vmul.f32 %v315, %v381
      %v432 = vmul.f32 %v316, %v385
      %v433 = vmul.f32 %v317, %v389
      %v434 = vmul.f32 %v318, %v393
      %v435 = vmul.f32 %v319, %v397
      %v436 = vmul.f32 %v320, %v401
      %v437 = vmul.f32 %v321, %v405
      %v438 = vmul.f32 %v322, %v345
      %v439 = vmul.f32 %v323, %v349
      %v440 = vmul.f32 %v324, %v353
      %v441 = vmul.f32 %v325, %v357
      %v442 = vmul.f32 %v326, %v361
      %v443 = vmul.f32 %v327, %v365
      %v444 = vmul.f32 %v328, %v369
      %v445 = vmul.f32 %v329, %v373
      %v446 = vmul.f32 %v330, %v377
      %v447 = vmul.f32 %v331, %v381
      %v448 = vmul.f32 %v332, %v385
      %v449 = vmul.f32 %v333, %v389
      %v450 = vmul.f32 %v334, %v393
      %v451 = vmul.f32 %v335, %v397
      %v452 = vmul.f32 %v336, %v401
      %v453 = vmul.f32 %v337, %v405
      %v454 = vld [vmem:[%s2] sm:$0xff]
      %v455 = vld [vmem:[%s2 + $0x8] sm:$0xff]
      %v458 = vlaneseq
      %v459 = vshrl.u32 %v458, 7
      %v460 = vsub.s32 0, %v459
      %v461 = vrot.slane %v454, %v460
      %v462 = vlaneseq
      %v463 = vshrl.u32 %v462, 7
      %v464 = vsub.s32 1, %v463
      %v465 = vrot.slane %v454, %v464
      %v466 = vlaneseq
      %v467 = vshrl.u32 %v466, 7
      %v468 = vsub.s32 2, %v467
      %v469 = vrot.slane %v454, %v468
      %v470 = vlaneseq
      %v471 = vshrl.u32 %v470, 7
      %v472 = vsub.s32 3, %v471
      %v473 = vrot.slane %v454, %v472
      %v474 = vlaneseq
      %v475 = vshrl.u32 %v474, 7
      %v476 = vsub.s32 4, %v475
      %v477 = vrot.slane %v454, %v476
      %v478 = vlaneseq
      %v479 = vshrl.u32 %v478, 7
      %v480 = vsub.s32 5, %v479
      %v481 = vrot.slane %v454, %v480
      %v482 = vlaneseq
      %v483 = vshrl.u32 %v482, 7
      %v484 = vsub.s32 6, %v483
      %v485 = vrot.slane %v454, %v484
      %v486 = vlaneseq
      %v487 = vshrl.u32 %v486, 7
      %v488 = vsub.s32 7, %v487
      %v489 = vrot.slane %v454, %v488
      %v490 = vlaneseq
      %v491 = vshrl.u32 %v490, 7
      %v492 = vsub.s32 0, %v491
      %v493 = vrot.slane %v455, %v492
      %v494 = vlaneseq
      %v495 = vshrl.u32 %v494, 7
      %v496 = vsub.s32 1, %v495
      %v497 = vrot.slane %v455, %v496
      %v498 = vlaneseq
      %v499 = vshrl.u32 %v498, 7
      %v500 = vsub.s32 2, %v499
      %v501 = vrot.slane %v455, %v500
      %v502 = vlaneseq
      %v503 = vshrl.u32 %v502, 7
      %v504 = vsub.s32 3, %v503
      %v505 = vrot.slane %v455, %v504
      %v506 = vlaneseq
      %v507 = vshrl.u32 %v506, 7
      %v508 = vsub.s32 4, %v507
      %v509 = vrot.slane %v455, %v508
      %v510 = vlaneseq
      %v511 = vshrl.u32 %v510, 7
      %v512 = vsub.s32 5, %v511
      %v513 = vrot.slane %v455, %v512
      %v514 = vlaneseq
      %v515 = vshrl.u32 %v514, 7
      %v516 = vsub.s32 6, %v515
      %v517 = vrot.slane %v455, %v516
      %v518 = vlaneseq
      %v519 = vshrl.u32 %v518, 7
      %v520 = vsub.s32 7, %v519
      %v521 = vrot.slane %v455, %v520
      %v538 = vadd.f32 %v422, %v461
      %v539 = vadd.f32 %v423, %v465
      %v540 = vadd.f32 %v424, %v469
      %v541 = vadd.f32 %v425, %v473
      %v542 = vadd.f32 %v426, %v477
      %v543 = vadd.f32 %v427, %v481
      %v544 = vadd.f32 %v428, %v485
      %v545 = vadd.f32 %v429, %v489
      %v546 = vadd.f32 %v430, %v493
      %v547 = vadd.f32 %v431, %v497
      %v548 = vadd.f32 %v432, %v501
      %v549 = vadd.f32 %v433, %v505
      %v550 = vadd.f32 %v434, %v509
      %v551 = vadd.f32 %v435, %v513
      %v552 = vadd.f32 %v436, %v517
      %v553 = vadd.f32 %v437, %v521
      %v554 = vadd.f32 %v438, %v461
      %v555 = vadd.f32 %v439, %v465
      %v556 = vadd.f32 %v440, %v469
      %v557 = vadd.f32 %v441, %v473
      %v558 = vadd.f32 %v442, %v477
      %v559 = vadd.f32 %v443, %v481
      %v560 = vadd.f32 %v444, %v485
      %v561 = vadd.f32 %v445, %v489
      %v562 = vadd.f32 %v446, %v493
      %v563 = vadd.f32 %v447, %v497
      %v564 = vadd.f32 %v448, %v501
      %v565 = vadd.f32 %v449, %v505
      %v566 = vadd.f32 %v450, %v509
      %v567 = vadd.f32 %v451, %v513
      %v568 = vadd.f32 %v452, %v517
      %v569 = vadd.f32 %v453, %v521
      %v570 = vxor.u32 %v538, 2147483648
      %v571 = vxor.u32 %v539, 2147483648
      %v572 = vxor.u32 %v540, 2147483648
      %v573 = vxor.u32 %v541, 2147483648
      %v574 = vxor.u32 %v542, 2147483648
      %v575 = vxor.u32 %v543, 2147483648
      %v576 = vxor.u32 %v544, 2147483648
      %v577 = vxor.u32 %v545, 2147483648
      %v578 = vxor.u32 %v546, 2147483648
      %v579 = vxor.u32 %v547, 2147483648
      %v580 = vxor.u32 %v548, 2147483648
      %v581 = vxor.u32 %v549, 2147483648
      %v582 = vxor.u32 %v550, 2147483648
      %v583 = vxor.u32 %v551, 2147483648
      %v584 = vxor.u32 %v552, 2147483648
      %v585 = vxor.u32 %v553, 2147483648
      %v586 = vxor.u32 %v554, 2147483648
      %v587 = vxor.u32 %v555, 2147483648
      %v588 = vxor.u32 %v556, 2147483648
      %v589 = vxor.u32 %v557, 2147483648
      %v590 = vxor.u32 %v558, 2147483648
      %v591 = vxor.u32 %v559, 2147483648
      %v592 = vxor.u32 %v560, 2147483648
      %v593 = vxor.u32 %v561, 2147483648
      %v594 = vxor.u32 %v562, 2147483648
      %v595 = vxor.u32 %v563, 2147483648
      %v596 = vxor.u32 %v564, 2147483648
      %v597 = vxor.u32 %v565, 2147483648
      %v598 = vxor.u32 %v566, 2147483648
      %v599 = vxor.u32 %v567, 2147483648
      %v600 = vxor.u32 %v568, 2147483648
      %v601 = vxor.u32 %v569, 2147483648
      %v602 = vmul.f32 %v570, 1.442695
      %v603 = vpow.pop %v602
      %v604 = vmul.f32 %v571, 1.442695
      %v605 = vpow.pop %v604
      %v606 = vmul.f32 %v572, 1.442695
      %v607 = vpow.pop %v606
      %v608 = vmul.f32 %v573, 1.442695
      %v609 = vpow.pop %v608
      %v610 = vmul.f32 %v574, 1.442695
      %v611 = vpow.pop %v610
      %v612 = vmul.f32 %v575, 1.442695
      %v613 = vpow.pop %v612
      %v614 = vmul.f32 %v576, 1.442695
      %v615 = vpow.pop %v614
      %v616 = vmul.f32 %v577, 1.442695
      %v617 = vpow.pop %v616
      %v618 = vmul.f32 %v578, 1.442695
      %v619 = vpow.pop %v618
      %v620 = vmul.f32 %v579, 1.442695
      %v621 = vpow.pop %v620
      %v622 = vmul.f32 %v580, 1.442695
      %v623 = vpow.pop %v622
      %v624 = vmul.f32 %v581, 1.442695
      %v625 = vpow.pop %v624
      %v626 = vmul.f32 %v582, 1.442695
      %v627 = vpow.pop %v626
      %v628 = vmul.f32 %v583, 1.442695
      %v629 = vpow.pop %v628
      %v630 = vmul.f32 %v584, 1.442695
      %v631 = vpow.pop %v630
      %v632 = vmul.f32 %v585, 1.442695
      %v633 = vpow.pop %v632
      %v634 = vmul.f32 %v586, 1.442695
      %v635 = vpow.pop %v634
      %v636 = vmul.f32 %v587, 1.442695
      %v637 = vpow.pop %v636
      %v638 = vmul.f32 %v588, 1.442695
      %v639 = vpow.pop %v638
      %v640 = vmul.f32 %v589, 1.442695
      %v641 = vpow.pop %v640
      %v642 = vmul.f32 %v590, 1.442695
      %v643 = vpow.pop %v642
      %v644 = vmul.f32 %v591, 1.442695
      %v645 = vpow.pop %v644
      %v646 = vmul.f32 %v592, 1.442695
      %v647 = vpow.pop %v646
      %v648 = vmul.f32 %v593, 1.442695
      %v649 = vpow.pop %v648
      %v650 = vmul.f32 %v594, 1.442695
      %v651 = vpow.pop %v650
      %v652 = vmul.f32 %v595, 1.442695
      %v653 = vpow.pop %v652
      %v654 = vmul.f32 %v596, 1.442695
      %v655 = vpow.pop %v654
      %v656 = vmul.f32 %v597, 1.442695
      %v657 = vpow.pop %v656
      %v658 = vmul.f32 %v598, 1.442695
      %v659 = vpow.pop %v658
      %v660 = vmul.f32 %v599, 1.442695
      %v661 = vpow.pop %v660
      %v662 = vmul.f32 %v600, 1.442695
      %v663 = vpow.pop %v662
      %v664 = vmul.f32 %v601, 1.442695
      %v665 = vpow.pop %v664
      %v666 = vadd.f32 %v603, 1.0
      %v667 = vadd.f32 %v605, 1.0
      %v668 = vadd.f32 %v607, 1.0
      %v669 = vadd.f32 %v609, 1.0
      %v670 = vadd.f32 %v611, 1.0
      %v671 = vadd.f32 %v613, 1.0
      %v672 = vadd.f32 %v615, 1.0
      %v673 = vadd.f32 %v617, 1.0
      %v674 = vadd.f32 %v619, 1.0
      %v675 = vadd.f32 %v621, 1.0
      %v676 = vadd.f32 %v623, 1.0
      %v677 = vadd.f32 %v625, 1.0
      %v678 = vadd.f32 %v627, 1.0
      %v679 = vadd.f32 %v629, 1.0
      %v680 = vadd.f32 %v631, 1.0
      %v681 = vadd.f32 %v633, 1.0
      %v682 = vadd.f32 %v635, 1.0
      %v683 = vadd.f32 %v637, 1.0
      %v684 = vadd.f32 %v639, 1.0
      %v685 = vadd.f32 %v641, 1.0
      %v686 = vadd.f32 %v643, 1.0
      %v687 = vadd.f32 %v645, 1.0
      %v688 = vadd.f32 %v647, 1.0
      %v689 = vadd.f32 %v649, 1.0
      %v690 = vadd.f32 %v651, 1.0
      %v691 = vadd.f32 %v653, 1.0
      %v692 = vadd.f32 %v655, 1.0
      %v693 = vadd.f32 %v657, 1.0
      %v694 = vadd.f32 %v659, 1.0
      %v695 = vadd.f32 %v661, 1.0
      %v696 = vadd.f32 %v663, 1.0
      %v697 = vadd.f32 %v665, 1.0
      %v698 = vrcp.pop %v666
      %v699 = vmul.f32 1.0, %v698
      %v700 = vrcp.pop %v667
      %v701 = vmul.f32 1.0, %v700
      %v702 = vrcp.pop %v668
      %v703 = vmul.f32 1.0, %v702
      %v704 = vrcp.pop %v669
      %v705 = vmul.f32 1.0, %v704
      %v706 = vrcp.pop %v670
      %v707 = vmul.f32 1.0, %v706
      %v708 = vrcp.pop %v671
      %v709 = vmul.f32 1.0, %v708
      %v710 = vrcp.pop %v672
      %v711 = vmul.f32 1.0, %v710
      %v712 = vrcp.pop %v673
      %v713 = vmul.f32 1.0, %v712
      %v714 = vrcp.pop %v674
      %v715 = vmul.f32 1.0, %v714
      %v716 = vrcp.pop %v675
      %v717 = vmul.f32 1.0, %v716
      %v718 = vrcp.pop %v676
      %v719 = vmul.f32 1.0, %v718
      %v720 = vrcp.pop %v677
      %v721 = vmul.f32 1.0, %v720
      %v722 = vrcp.pop %v678
      %v723 = vmul.f32 1.0, %v722
      %v724 = vrcp.pop %v679
      %v725 = vmul.f32 1.0, %v724
      %v726 = vrcp.pop %v680
      %v727 = vmul.f32 1.0, %v726
      %v728 = vrcp.pop %v681
      %v729 = vmul.f32 1.0, %v728
      %v730 = vrcp.pop %v682
      %v731 = vmul.f32 1.0, %v730
      %v732 = vrcp.pop %v683
      %v733 = vmul.f32 1.0, %v732
      %v734 = vrcp.pop %v684
      %v735 = vmul.f32 1.0, %v734
      %v736 = vrcp.pop %v685
      %v737 = vmul.f32 1.0, %v736
      %v738 = vrcp.pop %v686
      %v739 = vmul.f32 1.0, %v738
      %v740 = vrcp.pop %v687
      %v741 = vmul.f32 1.0, %v740
      %v742 = vrcp.pop %v688
      %v743 = vmul.f32 1.0, %v742
      %v744 = vrcp.pop %v689
      %v745 = vmul.f32 1.0, %v744
      %v746 = vrcp.pop %v690
      %v747 = vmul.f32 1.0, %v746
      %v748 = vrcp.pop %v691
      %v749 = vmul.f32 1.0, %v748
      %v750 = vrcp.pop %v692
      %v751 = vmul.f32 1.0, %v750
      %v752 = vrcp.pop %v693
      %v753 = vmul.f32 1.0, %v752
      %v754 = vrcp.pop %v694
      %v755 = vmul.f32 1.0, %v754
      %v756 = vrcp.pop %v695
      %v757 = vmul.f32 1.0, %v756
      %v758 = vrcp.pop %v696
      %v759 = vmul.f32 1.0, %v758
      %v760 = vrcp.pop %v697
      %v761 = vmul.f32 1.0, %v760
      %v762 = vmul.f32 %v538, %v699
      %v763 = vmul.f32 %v539, %v701
      %v764 = vmul.f32 %v540, %v703
      %v765 = vmul.f32 %v541, %v705
      %v766 = vmul.f32 %v542, %v707
      %v767 = vmul.f32 %v543, %v709
      %v768 = vmul.f32 %v544, %v711
      %v769 = vmul.f32 %v545, %v713
      %v770 = vmul.f32 %v546, %v715
      %v771 = vmul.f32 %v547, %v717
      %v772 = vmul.f32 %v548, %v719
      %v773 = vmul.f32 %v549, %v721
      %v774 = vmul.f32 %v550, %v723
      %v775 = vmul.f32 %v551, %v725
      %v776 = vmul.f32 %v552, %v727
      %v777 = vmul.f32 %v553, %v729
      %v778 = vmul.f32 %v554, %v731
      %v779 = vmul.f32 %v555, %v733
      %v780 = vmul.f32 %v556, %v735
      %v781 = vmul.f32 %v557, %v737
      %v782 = vmul.f32 %v558, %v739
      %v783 = vmul.f32 %v559, %v741
      %v784 = vmul.f32 %v560, %v743
      %v785 = vmul.f32 %v561, %v745
      %v786 = vmul.f32 %v562, %v747
      %v787 = vmul.f32 %v563, %v749
      %v788 = vmul.f32 %v564, %v751
      %v789 = vmul.f32 %v565, %v753
      %v790 = vmul.f32 %v566, %v755
      %v791 = vmul.f32 %v567, %v757
      %v792 = vmul.f32 %v568, %v759
      %v793 = vmul.f32 %v569, %v761
      %v794 = vpack.c.bf16 %v778, %v762
      %v795 = vpack.c.bf16 %v779, %v763
      %v796 = vpack.c.bf16 %v780, %v764
      %v797 = vpack.c.bf16 %v781, %v765
      %v798 = vpack.c.bf16 %v782, %v766
      %v799 = vpack.c.bf16 %v783, %v767
      %v800 = vpack.c.bf16 %v784, %v768
      %v801 = vpack.c.bf16 %v785, %v769
      %v802 = vpack.c.bf16 %v786, %v770
      %v803 = vpack.c.bf16 %v787, %v771
      %v804 = vpack.c.bf16 %v788, %v772
      %v805 = vpack.c.bf16 %v789, %v773
      %v806 = vpack.c.bf16 %v790, %v774
      %v807 = vpack.c.bf16 %v791, %v775
      %v808 = vpack.c.bf16 %v792, %v776
      %v809 = vpack.c.bf16 %v793, %v777
      %v826 = vunpack.c.l.b16 %v794
      %v827 = vunpack.c.l.b16 %v795
      %v828 = vunpack.c.l.b16 %v796
      %v829 = vunpack.c.l.b16 %v797
      %v830 = vunpack.c.l.b16 %v798
      %v831 = vunpack.c.l.b16 %v799
      %v832 = vunpack.c.l.b16 %v800
      %v833 = vunpack.c.l.b16 %v801
      %v834 = vunpack.c.l.b16 %v802
      %v835 = vunpack.c.l.b16 %v803
      %v836 = vunpack.c.l.b16 %v804
      %v837 = vunpack.c.l.b16 %v805
      %v838 = vunpack.c.l.b16 %v806
      %v839 = vunpack.c.l.b16 %v807
      %v840 = vunpack.c.l.b16 %v808
      %v841 = vunpack.c.l.b16 %v809
      %v842 = vunpack.c.h.b16 %v794
      %v843 = vunpack.c.h.b16 %v795
      %v844 = vunpack.c.h.b16 %v796
      %v845 = vunpack.c.h.b16 %v797
      %v846 = vunpack.c.h.b16 %v798
      %v847 = vunpack.c.h.b16 %v799
      %v848 = vunpack.c.h.b16 %v800
      %v849 = vunpack.c.h.b16 %v801
      %v850 = vunpack.c.h.b16 %v802
      %v851 = vunpack.c.h.b16 %v803
      %v852 = vunpack.c.h.b16 %v804
      %v853 = vunpack.c.h.b16 %v805
      %v854 = vunpack.c.h.b16 %v806
      %v855 = vunpack.c.h.b16 %v807
      %v856 = vunpack.c.h.b16 %v808
      %v857 = vunpack.c.h.b16 %v809
      %v858 = vpack.c.b16 %v827, %v826
      %v859 = vpack.c.b16 %v829, %v828
      %v860 = vpack.c.b16 %v831, %v830
      %v861 = vpack.c.b16 %v833, %v832
      %v862 = vpack.c.b16 %v835, %v834
      %v863 = vpack.c.b16 %v837, %v836
      %v864 = vpack.c.b16 %v839, %v838
      %v865 = vpack.c.b16 %v841, %v840
      %v866 = vpack.c.b16 %v843, %v842
      %v867 = vpack.c.b16 %v845, %v844
      %v868 = vpack.c.b16 %v847, %v846
      %v869 = vpack.c.b16 %v849, %v848
      %v870 = vpack.c.b16 %v851, %v850
      %v871 = vpack.c.b16 %v853, %v852
      %v872 = vpack.c.b16 %v855, %v854
      %v873 = vpack.c.b16 %v857, %v856
      %890 = vst [vmem:[%s273] sm:$0xff] %v858
      %891 = vst [vmem:[%s273 + $0x8] sm:$0xff] %v859
      %892 = vst [vmem:[%s273 + $0x10] sm:$0xff] %v860
      %893 = vst [vmem:[%s273 + $0x18] sm:$0xff] %v861
      %894 = vst [vmem:[%s273 + $0x20] sm:$0xff] %v862
      %895 = vst [vmem:[%s273 + $0x28] sm:$0xff] %v863
      %896 = vst [vmem:[%s273 + $0x30] sm:$0xff] %v864
      %897 = vst [vmem:[%s273 + $0x38] sm:$0xff] %v865
      %898 = vst [vmem:[%s273 + $0x40] sm:$0xff] %v866
      %899 = vst [vmem:[%s273 + $0x48] sm:$0xff] %v867
      %900 = vst [vmem:[%s273 + $0x50] sm:$0xff] %v868
      %901 = vst [vmem:[%s273 + $0x58] sm:$0xff] %v869
      %902 = vst [vmem:[%s273 + $0x60] sm:$0xff] %v870
      %903 = vst [vmem:[%s273 + $0x68] sm:$0xff] %v871
      %904 = vst [vmem:[%s273 + $0x70] sm:$0xff] %v872
      %905 = vst [vmem:[%s273 + $0x78] sm:$0xff] %v873
      %906 = vst [vmem:[#allocation2] sm:$0xff] 4048220490
      %907 = vst [vmem:[#allocation2 + $0x8] sm:$0xff] 4048220490
      %908 = vst [vmem:[#allocation2 + $0x10] sm:$0xff] 4048220490
      %909 = vst [vmem:[#allocation2 + $0x18] sm:$0xff] 4048220490
      %910 = vst [vmem:[#allocation2 + $0x20] sm:$0xff] 4048220490
      %911 = vst [vmem:[#allocation2 + $0x28] sm:$0xff] 4048220490
      %912 = vst [vmem:[#allocation2 + $0x30] sm:$0xff] 4048220490
      %913 = vst [vmem:[#allocation2 + $0x38] sm:$0xff] 4048220490
      %914 = vst [vmem:[#allocation2 + $0x40] sm:$0xff] 4048220490
      %915 = vst [vmem:[#allocation2 + $0x48] sm:$0xff] 4048220490
      %916 = vst [vmem:[#allocation2 + $0x50] sm:$0xff] 4048220490
      %917 = vst [vmem:[#allocation2 + $0x58] sm:$0xff] 4048220490
      %918 = vst [vmem:[#allocation2 + $0x60] sm:$0xff] 4048220490
      %919 = vst [vmem:[#allocation2 + $0x68] sm:$0xff] 4048220490
      %920 = vst [vmem:[#allocation2 + $0x70] sm:$0xff] 4048220490
      %921 = vst [vmem:[#allocation2 + $0x78] sm:$0xff] 4048220490
      %922 = vst [vmem:[#allocation2 + $0x80] sm:$0xff] 4048220490
      %923 = vst [vmem:[#allocation2 + $0x88] sm:$0xff] 4048220490
      %924 = vst [vmem:[#allocation2 + $0x90] sm:$0xff] 4048220490
      %925 = vst [vmem:[#allocation2 + $0x98] sm:$0xff] 4048220490
      %926 = vst [vmem:[#allocation2 + $0xa0] sm:$0xff] 4048220490
      %927 = vst [vmem:[#allocation2 + $0xa8] sm:$0xff] 4048220490
      %928 = vst [vmem:[#allocation2 + $0xb0] sm:$0xff] 4048220490
      %929 = vst [vmem:[#allocation2 + $0xb8] sm:$0xff] 4048220490
      %930 = vst [vmem:[#allocation2 + $0xc0] sm:$0xff] 4048220490
      %931 = vst [vmem:[#allocation2 + $0xc8] sm:$0xff] 4048220490
      %932 = vst [vmem:[#allocation2 + $0xd0] sm:$0xff] 4048220490
      %933 = vst [vmem:[#allocation2 + $0xd8] sm:$0xff] 4048220490
      %934 = vst [vmem:[#allocation2 + $0xe0] sm:$0xff] 4048220490
      %935 = vst [vmem:[#allocation2 + $0xe8] sm:$0xff] 4048220490
      %936 = vst [vmem:[#allocation2 + $0xf0] sm:$0xff] 4048220490
      %937 = vst [vmem:[#allocation2 + $0xf8] sm:$0xff] 4048220490
      %938 = vst [vmem:[#allocation2 + $0x100] sm:$0xff] 4048220490
      %939 = vst [vmem:[#allocation2 + $0x108] sm:$0xff] 4048220490
      %940 = vst [vmem:[#allocation2 + $0x110] sm:$0xff] 4048220490
      %941 = vst [vmem:[#allocation2 + $0x118] sm:$0xff] 4048220490
      %942 = vst [vmem:[#allocation2 + $0x120] sm:$0xff] 4048220490
      %943 = vst [vmem:[#allocation2 + $0x128] sm:$0xff] 4048220490
      %944 = vst [vmem:[#allocation2 + $0x130] sm:$0xff] 4048220490
      %945 = vst [vmem:[#allocation2 + $0x138] sm:$0xff] 4048220490
      %946 = vst [vmem:[#allocation2 + $0x140] sm:$0xff] 4048220490
      %947 = vst [vmem:[#allocation2 + $0x148] sm:$0xff] 4048220490
      %948 = vst [vmem:[#allocation2 + $0x150] sm:$0x33] 4048220490
      %949 = vst [vmem:[#allocation2 + $0x158] sm:$0x33] 4048220490
      %950 = vst [vmem:[#allocation2 + $0x160] sm:$0x33] 4048220490
      %951 = vst [vmem:[#allocation2 + $0x168] sm:$0x33] 4048220490
      %952 = vst [vmem:[#allocation2 + $0x170] sm:$0x33] 4048220490
      %953 = vst [vmem:[#allocation2 + $0x178] sm:$0x33] 4048220490
      %954 = vst [vmem:[#allocation2 + $0x180] sm:$0x33] 4048220490
      %955 = vst [vmem:[#allocation2 + $0x188] sm:$0x33] 4048220490
      %956 = vst [vmem:[#allocation2 + $0x190] sm:$0x33] 4048220490
      %957 = vst [vmem:[#allocation2 + $0x198] sm:$0x33] 4048220490
      %958 = vst [vmem:[#allocation2 + $0x1a0] sm:$0x33] 4048220490
      %959 = vst [vmem:[#allocation2 + $0x1a8] sm:$0x33] 4048220490
      %960 = vst [vmem:[#allocation2 + $0x1b0] sm:$0x33] 4048220490
      %961 = vst [vmem:[#allocation2 + $0x1b8] sm:$0x33] 4048220490
      %vm962 = vcmask 1042432
      %vm963 = vcmask 1046532
      %vm964 = vmor %vm962, %vm963
      %v965 = vrot.slane %v858, 5
      %v966 = vrot.slane %v859, 5
      %v967 = vrot.slane %v860, 5
      %v968 = vrot.slane %v861, 5
      %v969 = vrot.slane %v862, 5
      %v970 = vrot.slane %v863, 5
      %v971 = vrot.slane %v864, 5
      %v972 = vrot.slane %v865, 5
      %v973 = vrot.slane %v965, 4
      %v974 = vrot.slane %v866, 5
      %v975 = vsel %vm964, %v973, %v974
      %v976 = vrot.slane %v966, 4
      %v977 = vrot.slane %v867, 5
      %v978 = vsel %vm964, %v976, %v977
      %v979 = vrot.slane %v967, 4
      %v980 = vrot.slane %v868, 5
      %v981 = vsel %vm964, %v979, %v980
      %v982 = vrot.slane %v968, 4
      %v983 = vrot.slane %v869, 5
      %v984 = vsel %vm964, %v982, %v983
      %v985 = vrot.slane %v969, 4
      %v986 = vrot.slane %v870, 5
      %v987 = vsel %vm964, %v985, %v986
      %v988 = vrot.slane %v970, 4
      %v989 = vrot.slane %v871, 5
      %v990 = vsel %vm964, %v988, %v989
      %v991 = vrot.slane %v971, 4
      %v992 = vrot.slane %v872, 5
      %v993 = vsel %vm964, %v991, %v992
      %v994 = vrot.slane %v972, 4
      %v995 = vrot.slane %v873, 5
      %v996 = vsel %vm964, %v994, %v995
      %v997 = vrot.slane %v974, 4
      %v998 = vrot.slane %v977, 4
      %v999 = vrot.slane %v980, 4
      %v1000 = vrot.slane %v983, 4
      %v1001 = vrot.slane %v986, 4
      %v1002 = vrot.slane %v989, 4
      %v1003 = vrot.slane %v992, 4
      %v1004 = vrot.slane %v995, 4
      %1029 = vst [vmem:[#allocation2 + $0x18] sm:$0x88] %v965
      %1030 = vst [vmem:[#allocation2 + $0x20] sm:$0x88] %v966
      %1031 = vst [vmem:[#allocation2 + $0x28] sm:$0x88] %v967
      %1032 = vst [vmem:[#allocation2 + $0x30] sm:$0x88] %v968
      %1033 = vst [vmem:[#allocation2 + $0x38] sm:$0x88] %v969
      %1034 = vst [vmem:[#allocation2 + $0x40] sm:$0x88] %v970
      %1035 = vst [vmem:[#allocation2 + $0x48] sm:$0x88] %v971
      %1036 = vst [vmem:[#allocation2 + $0x50] sm:$0x88] %v972
      %1037 = vst [vmem:[#allocation2 + $0x88] sm:$0xff] %v975
      %1038 = vst [vmem:[#allocation2 + $0x90] sm:$0xff] %v978
      %1039 = vst [vmem:[#allocation2 + $0x98] sm:$0xff] %v981
      %1040 = vst [vmem:[#allocation2 + $0xa0] sm:$0xff] %v984
      %1041 = vst [vmem:[#allocation2 + $0xa8] sm:$0xff] %v987
      %1042 = vst [vmem:[#allocation2 + $0xb0] sm:$0xff] %v990
      %1043 = vst [vmem:[#allocation2 + $0xb8] sm:$0xff] %v993
      %1044 = vst [vmem:[#allocation2 + $0xc0] sm:$0xff] %v996
      %1045 = vst [vmem:[#allocation2 + $0xf8] sm:$0x77] %v997
      %1046 = vst [vmem:[#allocation2 + $0x100] sm:$0x77] %v998
      %1047 = vst [vmem:[#allocation2 + $0x108] sm:$0x77] %v999
      %1048 = vst [vmem:[#allocation2 + $0x110] sm:$0x77] %v1000
      %1049 = vst [vmem:[#allocation2 + $0x118] sm:$0x77] %v1001
      %1050 = vst [vmem:[#allocation2 + $0x120] sm:$0x77] %v1002
      %1051 = vst [vmem:[#allocation2 + $0x128] sm:$0x77] %v1003
      %1052 = vst [vmem:[#allocation2 + $0x130] sm:$0x77] %v1004
      %v1053 = vld [vmem:[#allocation2] sm:$0xff]
      %v1054 = vld [vmem:[#allocation2 + $0x8] sm:$0xff]
      %v1055 = vld [vmem:[#allocation2 + $0x10] sm:$0xff]
      %v1056 = vld [vmem:[#allocation2 + $0x18] sm:$0xff]
      %v1057 = vld [vmem:[#allocation2 + $0x20] sm:$0xff]
      %v1058 = vld [vmem:[#allocation2 + $0x28] sm:$0xff]
      %v1059 = vld [vmem:[#allocation2 + $0x30] sm:$0xff]
      %v1060 = vld [vmem:[#allocation2 + $0x38] sm:$0xff]
      %v1061 = vld [vmem:[#allocation2 + $0x40] sm:$0xff]
      %v1062 = vld [vmem:[#allocation2 + $0x48] sm:$0xff]
      %v1063 = vld [vmem:[#allocation2 + $0x50] sm:$0xff]
      %v1064 = vld [vmem:[#allocation2 + $0x58] sm:$0xff]
      %v1065 = vld [vmem:[#allocation2 + $0x60] sm:$0xff]
      %v1066 = vld [vmem:[#allocation2 + $0x68] sm:$0xff]
      %v1067 = vld [vmem:[#allocation2 + $0x70] sm:$0xff]
      %v1068 = vld [vmem:[#allocation2 + $0x78] sm:$0xff]
      %v1069 = vld [vmem:[#allocation2 + $0x80] sm:$0xff]
      %v1070 = vld [vmem:[#allocation2 + $0x88] sm:$0xff]
      %v1071 = vld [vmem:[#allocation2 + $0x90] sm:$0xff]
      %v1072 = vld [vmem:[#allocation2 + $0x98] sm:$0xff]
      %v1073 = vld [vmem:[#allocation2 + $0xa0] sm:$0xff]
      %v1074 = vld [vmem:[#allocation2 + $0xa8] sm:$0xff]
      %v1075 = vld [vmem:[#allocation2 + $0xb0] sm:$0xff]
      %v1076 = vld [vmem:[#allocation2 + $0xb8] sm:$0xff]
      %v1077 = vld [vmem:[#allocation2 + $0xc0] sm:$0xff]
      %v1078 = vld [vmem:[#allocation2 + $0xc8] sm:$0xff]
      %v1079 = vld [vmem:[#allocation2 + $0xd0] sm:$0xff]
      %v1080 = vld [vmem:[#allocation2 + $0xd8] sm:$0xff]
      %v1081 = vld [vmem:[#allocation2 + $0xe0] sm:$0xff]
      %v1082 = vld [vmem:[#allocation2 + $0xe8] sm:$0xff]
      %v1083 = vld [vmem:[#allocation2 + $0xf0] sm:$0xff]
      %v1084 = vld [vmem:[#allocation2 + $0xf8] sm:$0xff]
      %v1085 = vld [vmem:[#allocation2 + $0x100] sm:$0xff]
      %v1086 = vld [vmem:[#allocation2 + $0x108] sm:$0xff]
      %v1087 = vld [vmem:[#allocation2 + $0x110] sm:$0xff]
      %v1088 = vld [vmem:[#allocation2 + $0x118] sm:$0xff]
      %v1089 = vld [vmem:[#allocation2 + $0x120] sm:$0xff]
      %v1090 = vld [vmem:[#allocation2 + $0x128] sm:$0xff]
      %v1091 = vld [vmem:[#allocation2 + $0x130] sm:$0xff]
      %v1092 = vld [vmem:[#allocation2 + $0x138] sm:$0xff]
      %v1093 = vld [vmem:[#allocation2 + $0x140] sm:$0xff]
      %v1094 = vld [vmem:[#allocation2 + $0x148] sm:$0xff]
      %v1095 = vld [vmem:[#allocation2 + $0x150] sm:$0x33]
      %v1096 = vld [vmem:[#allocation2 + $0x158] sm:$0x33]
      %v1097 = vld [vmem:[#allocation2 + $0x160] sm:$0x33]
      %v1098 = vld [vmem:[#allocation2 + $0x168] sm:$0x33]
      %v1099 = vld [vmem:[#allocation2 + $0x170] sm:$0x33]
      %v1100 = vld [vmem:[#allocation2 + $0x178] sm:$0x33]
      %v1101 = vld [vmem:[#allocation2 + $0x180] sm:$0x33]
      %v1102 = vld [vmem:[#allocation2 + $0x188] sm:$0x33]
      %v1103 = vld [vmem:[#allocation2 + $0x190] sm:$0x33]
      %v1104 = vld [vmem:[#allocation2 + $0x198] sm:$0x33]
      %v1105 = vld [vmem:[#allocation2 + $0x1a0] sm:$0x33]
      %v1106 = vld [vmem:[#allocation2 + $0x1a8] sm:$0x33]
      %v1107 = vld [vmem:[#allocation2 + $0x1b0] sm:$0x33]
      %v1108 = vld [vmem:[#allocation2 + $0x1b8] sm:$0x33]
      %v1161 = vrot.slane %v1053, 4
      %v1162 = vrot.slane %v1054, 4
      %v1163 = vrot.slane %v1055, 4
      %v1164 = vrot.slane %v1056, 4
      %v1165 = vrot.slane %v1057, 4
      %v1166 = vrot.slane %v1058, 4
      %v1167 = vrot.slane %v1059, 4
      %v1168 = vrot.slane %v1060, 4
      %v1169 = vrot.slane %v1061, 4
      %v1170 = vrot.slane %v1062, 4
      %v1171 = vrot.slane %v1063, 4
      %v1172 = vrot.slane %v1064, 4
      %v1173 = vrot.slane %v1065, 4
      %v1174 = vrot.slane %v1067, 4
      %v1175 = vrot.slane %v1068, 4
      %v1176 = vrot.slane %v1069, 4
      %v1177 = vrot.slane %v1070, 4
      %v1178 = vrot.slane %v1071, 4
      %v1179 = vrot.slane %v1072, 4
      %v1180 = vrot.slane %v1073, 4
      %v1181 = vrot.slane %v1074, 4
      %v1182 = vrot.slane %v1075, 4
      %v1183 = vrot.slane %v1076, 4
      %v1184 = vrot.slane %v1077, 4
      %v1185 = vrot.slane %v1078, 4
      %v1186 = vrot.slane %v1079, 4
      %v1187 = vrot.slane %v1081, 4
      %v1188 = vrot.slane %v1082, 4
      %v1189 = vrot.slane %v1083, 4
      %v1190 = vrot.slane %v1084, 4
      %v1191 = vrot.slane %v1085, 4
      %v1192 = vrot.slane %v1086, 4
      %v1193 = vrot.slane %v1087, 4
      %v1194 = vrot.slane %v1088, 4
      %v1195 = vrot.slane %v1089, 4
      %v1196 = vrot.slane %v1090, 4
      %v1197 = vrot.slane %v1091, 4
      %v1198 = vrot.slane %v1092, 4
      %v1199 = vrot.slane %v1093, 4
      %v1200 = vrot.slane %v1095, 4
      %v1201 = vrot.slane %v1096, 4
      %v1202 = vrot.slane %v1097, 4
      %v1203 = vrot.slane %v1098, 4
      %v1204 = vrot.slane %v1099, 4
      %v1205 = vrot.slane %v1100, 4
      %v1206 = vrot.slane %v1101, 4
      %v1207 = vrot.slane %v1102, 4
      %v1208 = vrot.slane %v1103, 4
      %v1209 = vrot.slane %v1104, 4
      %v1210 = vrot.slane %v1105, 4
      %v1211 = vrot.slane %v1106, 4
      %v1212 = vrot.slane %v1107, 4
      %vm1213 = vcmask 1043456
      %v1214 = vsel %vm1213, %v1161, %v1162
      %v1215 = vsel %vm1213, %v1162, %v1163
      %v1216 = vsel %vm1213, %v1163, %v1164
      %v1217 = vsel %vm1213, %v1164, %v1165
      %v1218 = vsel %vm1213, %v1165, %v1166
      %v1219 = vsel %vm1213, %v1166, %v1167
      %v1220 = vsel %vm1213, %v1167, %v1168
      %v1221 = vsel %vm1213, %v1168, %v1169
      %v1222 = vsel %vm1213, %v1169, %v1170
      %v1223 = vsel %vm1213, %v1170, %v1171
      %v1224 = vsel %vm1213, %v1171, %v1172
      %v1225 = vsel %vm1213, %v1172, %v1173
      %v1226 = vsel %vm1213, %v1174, %v1175
      %v1227 = vsel %vm1213, %v1175, %v1176
      %v1228 = vsel %vm1213, %v1176, %v1177
      %v1229 = vsel %vm1213, %v1177, %v1178
      %v1230 = vsel %vm1213, %v1178, %v1179
      %v1231 = vsel %vm1213, %v1179, %v1180
      %v1232 = vsel %vm1213, %v1180, %v1181
      %v1233 = vsel %vm1213, %v1181, %v1182
      %v1234 = vsel %vm1213, %v1182, %v1183
      %v1235 = vsel %vm1213, %v1183, %v1184
      %v1236 = vsel %vm1213, %v1184, %v1185
      %v1237 = vsel %vm1213, %v1185, %v1186
      %v1238 = vsel %vm1213, %v1187, %v1188
      %v1239 = vsel %vm1213, %v1188, %v1189
      %v1240 = vsel %vm1213, %v1189, %v1190
      %v1241 = vsel %vm1213, %v1190, %v1191
      %v1242 = vsel %vm1213, %v1191, %v1192
      %v1243 = vsel %vm1213, %v1192, %v1193
      %v1244 = vsel %vm1213, %v1193, %v1194
      %v1245 = vsel %vm1213, %v1194, %v1195
      %v1246 = vsel %vm1213, %v1195, %v1196
      %v1247 = vsel %vm1213, %v1196, %v1197
      %v1248 = vsel %vm1213, %v1197, %v1198
      %v1249 = vsel %vm1213, %v1198, %v1199
      %v1250 = vsel %vm1213, %v1200, %v1201
      %v1251 = vsel %vm1213, %v1201, %v1202
      %v1252 = vsel %vm1213, %v1202, %v1203
      %v1253 = vsel %vm1213, %v1203, %v1204
      %v1254 = vsel %vm1213, %v1204, %v1205
      %v1255 = vsel %vm1213, %v1205, %v1206
      %v1256 = vsel %vm1213, %v1206, %v1207
      %v1257 = vsel %vm1213, %v1207, %v1208
      %v1258 = vsel %vm1213, %v1208, %v1209
      %v1259 = vsel %vm1213, %v1209, %v1210
      %v1260 = vsel %vm1213, %v1210, %v1211
      %v1261 = vsel %vm1213, %v1211, %v1212
      %v1310 = vmax.bf16 %v1053, %v1214
      %v1311 = vmax.bf16 %v1054, %v1215
      %v1312 = vmax.bf16 %v1055, %v1216
      %v1313 = vmax.bf16 %v1056, %v1217
      %v1314 = vmax.bf16 %v1057, %v1218
      %v1315 = vmax.bf16 %v1058, %v1219
      %v1316 = vmax.bf16 %v1059, %v1220
      %v1317 = vmax.bf16 %v1060, %v1221
      %v1318 = vmax.bf16 %v1061, %v1222
      %v1319 = vmax.bf16 %v1062, %v1223
      %v1320 = vmax.bf16 %v1063, %v1224
      %v1321 = vmax.bf16 %v1064, %v1225
      %v1322 = vmax.bf16 %v1067, %v1226
      %v1323 = vmax.bf16 %v1068, %v1227
      %v1324 = vmax.bf16 %v1069, %v1228
      %v1325 = vmax.bf16 %v1070, %v1229
      %v1326 = vmax.bf16 %v1071, %v1230
      %v1327 = vmax.bf16 %v1072, %v1231
      %v1328 = vmax.bf16 %v1073, %v1232
      %v1329 = vmax.bf16 %v1074, %v1233
      %v1330 = vmax.bf16 %v1075, %v1234
      %v1331 = vmax.bf16 %v1076, %v1235
      %v1332 = vmax.bf16 %v1077, %v1236
      %v1333 = vmax.bf16 %v1078, %v1237
      %v1334 = vmax.bf16 %v1081, %v1238
      %v1335 = vmax.bf16 %v1082, %v1239
      %v1336 = vmax.bf16 %v1083, %v1240
      %v1337 = vmax.bf16 %v1084, %v1241
      %v1338 = vmax.bf16 %v1085, %v1242
      %v1339 = vmax.bf16 %v1086, %v1243
      %v1340 = vmax.bf16 %v1087, %v1244
      %v1341 = vmax.bf16 %v1088, %v1245
      %v1342 = vmax.bf16 %v1089, %v1246
      %v1343 = vmax.bf16 %v1090, %v1247
      %v1344 = vmax.bf16 %v1091, %v1248
      %v1345 = vmax.bf16 %v1092, %v1249
      %v1346 = vmax.bf16 %v1095, %v1250
      %v1347 = vmax.bf16 %v1096, %v1251
      %v1348 = vmax.bf16 %v1097, %v1252
      %v1349 = vmax.bf16 %v1098, %v1253
      %v1350 = vmax.bf16 %v1099, %v1254
      %v1351 = vmax.bf16 %v1100, %v1255
      %v1352 = vmax.bf16 %v1101, %v1256
      %v1353 = vmax.bf16 %v1102, %v1257
      %v1354 = vmax.bf16 %v1103, %v1258
      %v1355 = vmax.bf16 %v1104, %v1259
      %v1356 = vmax.bf16 %v1105, %v1260
      %v1357 = vmax.bf16 %v1106, %v1261
      %v1358 = vmax.bf16 %v1310, %v1054
      %v1359 = vmax.bf16 %v1311, %v1055
      %v1360 = vmax.bf16 %v1312, %v1056
      %v1361 = vmax.bf16 %v1313, %v1057
      %v1362 = vmax.bf16 %v1314, %v1058
      %v1363 = vmax.bf16 %v1315, %v1059
      %v1364 = vmax.bf16 %v1316, %v1060
      %v1365 = vmax.bf16 %v1317, %v1061
      %v1366 = vmax.bf16 %v1318, %v1062
      %v1367 = vmax.bf16 %v1319, %v1063
      %v1368 = vmax.bf16 %v1320, %v1064
      %v1369 = vmax.bf16 %v1321, %v1065
      %v1370 = vmax.bf16 %v1322, %v1068
      %v1371 = vmax.bf16 %v1323, %v1069
      %v1372 = vmax.bf16 %v1324, %v1070
      %v1373 = vmax.bf16 %v1325, %v1071
      %v1374 = vmax.bf16 %v1326, %v1072
      %v1375 = vmax.bf16 %v1327, %v1073
      %v1376 = vmax.bf16 %v1328, %v1074
      %v1377 = vmax.bf16 %v1329, %v1075
      %v1378 = vmax.bf16 %v1330, %v1076
      %v1379 = vmax.bf16 %v1331, %v1077
      %v1380 = vmax.bf16 %v1332, %v1078
      %v1381 = vmax.bf16 %v1333, %v1079
      %v1382 = vmax.bf16 %v1334, %v1082
      %v1383 = vmax.bf16 %v1335, %v1083
      %v1384 = vmax.bf16 %v1336, %v1084
      %v1385 = vmax.bf16 %v1337, %v1085
      %v1386 = vmax.bf16 %v1338, %v1086
      %v1387 = vmax.bf16 %v1339, %v1087
      %v1388 = vmax.bf16 %v1340, %v1088
      %v1389 = vmax.bf16 %v1341, %v1089
      %v1390 = vmax.bf16 %v1342, %v1090
      %v1391 = vmax.bf16 %v1343, %v1091
      %v1392 = vmax.bf16 %v1344, %v1092
      %v1393 = vmax.bf16 %v1345, %v1093
      %v1394 = vmax.bf16 %v1346, %v1096
      %v1395 = vmax.bf16 %v1347, %v1097
      %v1396 = vmax.bf16 %v1348, %v1098
      %v1397 = vmax.bf16 %v1349, %v1099
      %v1398 = vmax.bf16 %v1350, %v1100
      %v1399 = vmax.bf16 %v1351, %v1101
      %v1400 = vmax.bf16 %v1352, %v1102
      %v1401 = vmax.bf16 %v1353, %v1103
      %v1402 = vmax.bf16 %v1354, %v1104
      %v1403 = vmax.bf16 %v1355, %v1105
      %v1404 = vmax.bf16 %v1356, %v1106
      %v1405 = vmax.bf16 %v1357, %v1107
      %v1410 = vrot.slane %v1066, 4
      %v1411 = vrot.slane %v1080, 4
      %v1412 = vrot.slane %v1094, 4
      %v1413 = vrot.slane %v1108, 4
      %v1414 = vsel %vm1213, %v1173, %v1410
      %v1415 = vsel %vm1213, %v1186, %v1411
      %v1416 = vsel %vm1213, %v1199, %v1412
      %v1417 = vsel %vm1213, %v1212, %v1413
      %v1422 = vmax.bf16 %v1358, %v1215
      %v1423 = vmax.bf16 %v1359, %v1216
      %v1424 = vmax.bf16 %v1360, %v1217
      %v1425 = vmax.bf16 %v1361, %v1218
      %v1426 = vmax.bf16 %v1362, %v1219
      %v1427 = vmax.bf16 %v1363, %v1220
      %v1428 = vmax.bf16 %v1364, %v1221
      %v1429 = vmax.bf16 %v1365, %v1222
      %v1430 = vmax.bf16 %v1366, %v1223
      %v1431 = vmax.bf16 %v1367, %v1224
      %v1432 = vmax.bf16 %v1368, %v1225
      %v1433 = vmax.bf16 %v1369, %v1414
      %v1434 = vmax.bf16 %v1370, %v1227
      %v1435 = vmax.bf16 %v1371, %v1228
      %v1436 = vmax.bf16 %v1372, %v1229
      %v1437 = vmax.bf16 %v1373, %v1230
      %v1438 = vmax.bf16 %v1374, %v1231
      %v1439 = vmax.bf16 %v1375, %v1232
      %v1440 = vmax.bf16 %v1376, %v1233
      %v1441 = vmax.bf16 %v1377, %v1234
      %v1442 = vmax.bf16 %v1378, %v1235
      %v1443 = vmax.bf16 %v1379, %v1236
      %v1444 = vmax.bf16 %v1380, %v1237
      %v1445 = vmax.bf16 %v1381, %v1415
      %v1446 = vmax.bf16 %v1382, %v1239
      %v1447 = vmax.bf16 %v1383, %v1240
      %v1448 = vmax.bf16 %v1384, %v1241
      %v1449 = vmax.bf16 %v1385, %v1242
      %v1450 = vmax.bf16 %v1386, %v1243
      %v1451 = vmax.bf16 %v1387, %v1244
      %v1452 = vmax.bf16 %v1388, %v1245
      %v1453 = vmax.bf16 %v1389, %v1246
      %v1454 = vmax.bf16 %v1390, %v1247
      %v1455 = vmax.bf16 %v1391, %v1248
      %v1456 = vmax.bf16 %v1392, %v1249
      %v1457 = vmax.bf16 %v1393, %v1416
      %v1458 = vmax.bf16 %v1394, %v1251
      %v1459 = vmax.bf16 %v1395, %v1252
      %v1460 = vmax.bf16 %v1396, %v1253
      %v1461 = vmax.bf16 %v1397, %v1254
      %v1462 = vmax.bf16 %v1398, %v1255
      %v1463 = vmax.bf16 %v1399, %v1256
      %v1464 = vmax.bf16 %v1400, %v1257
      %v1465 = vmax.bf16 %v1401, %v1258
      %v1466 = vmax.bf16 %v1402, %v1259
      %v1467 = vmax.bf16 %v1403, %v1260
      %v1468 = vmax.bf16 %v1404, %v1261
      %v1469 = vmax.bf16 %v1405, %v1417
      %v1470 = vmax.bf16 %v1422, %v1055
      %v1471 = vmax.bf16 %v1423, %v1056
      %v1472 = vmax.bf16 %v1424, %v1057
      %v1473 = vmax.bf16 %v1425, %v1058
      %v1474 = vmax.bf16 %v1426, %v1059
      %v1475 = vmax.bf16 %v1427, %v1060
      %v1476 = vmax.bf16 %v1428, %v1061
      %v1477 = vmax.bf16 %v1429, %v1062
      %v1478 = vmax.bf16 %v1430, %v1063
      %v1479 = vmax.bf16 %v1431, %v1064
      %v1480 = vmax.bf16 %v1432, %v1065
      %v1481 = vmax.bf16 %v1433, %v1066
      %v1482 = vmax.bf16 %v1434, %v1069
      %v1483 = vmax.bf16 %v1435, %v1070
      %v1484 = vmax.bf16 %v1436, %v1071
      %v1485 = vmax.bf16 %v1437, %v1072
      %v1486 = vmax.bf16 %v1438, %v1073
      %v1487 = vmax.bf16 %v1439, %v1074
      %v1488 = vmax.bf16 %v1440, %v1075
      %v1489 = vmax.bf16 %v1441, %v1076
      %v1490 = vmax.bf16 %v1442, %v1077
      %v1491 = vmax.bf16 %v1443, %v1078
      %v1492 = vmax.bf16 %v1444, %v1079
      %v1493 = vmax.bf16 %v1445, %v1080
      %v1494 = vmax.bf16 %v1446, %v1083
      %v1495 = vmax.bf16 %v1447, %v1084
      %v1496 = vmax.bf16 %v1448, %v1085
      %v1497 = vmax.bf16 %v1449, %v1086
      %v1498 = vmax.bf16 %v1450, %v1087
      %v1499 = vmax.bf16 %v1451, %v1088
      %v1500 = vmax.bf16 %v1452, %v1089
      %v1501 = vmax.bf16 %v1453, %v1090
      %v1502 = vmax.bf16 %v1454, %v1091
      %v1503 = vmax.bf16 %v1455, %v1092
      %v1504 = vmax.bf16 %v1456, %v1093
      %v1505 = vmax.bf16 %v1457, %v1094
      %v1506 = vmax.bf16 %v1458, %v1097
      %v1507 = vmax.bf16 %v1459, %v1098
      %v1508 = vmax.bf16 %v1460, %v1099
      %v1509 = vmax.bf16 %v1461, %v1100
      %v1510 = vmax.bf16 %v1462, %v1101
      %v1511 = vmax.bf16 %v1463, %v1102
      %v1512 = vmax.bf16 %v1464, %v1103
      %v1513 = vmax.bf16 %v1465, %v1104
      %v1514 = vmax.bf16 %v1466, %v1105
      %v1515 = vmax.bf16 %v1467, %v1106
      %v1516 = vmax.bf16 %v1468, %v1107
      %v1517 = vmax.bf16 %v1469, %v1108
      %vm1518 = vsmask.f32 3328
      %vm1519 = vsmask.f32 7440
      %vm1520 = vmor %vm1518, %vm1519
      %v1522 = vshrl.u32 %v1470, 16
      %v1524 = vrot.slane %v1522, 4
      %v1525 = vshll.u32 %v1470, 16
      %v1527 = vrot.slane %v1525, 5
      %v1528 = vor.u32 %v1524, %v1527
      %v1529 = vrot.slane %v1528, 4
      %v1531 = vshll.u32 %v1482, 16
      %v1533 = vrot.slane %v1531, 5
      %v1534 = vsel %vm1520, %v1529, %v1533
      %v1536 = vshrl.u32 %v1471, 16
      %v1538 = vrot.slane %v1536, 4
      %v1539 = vshll.u32 %v1471, 16
      %v1541 = vrot.slane %v1539, 5
      %v1542 = vor.u32 %v1538, %v1541
      %v1543 = vrot.slane %v1542, 4
      %v1545 = vshll.u32 %v1483, 16
      %v1547 = vrot.slane %v1545, 5
      %v1548 = vsel %vm1520, %v1543, %v1547
      %v1550 = vshrl.u32 %v1472, 16
      %v1552 = vrot.slane %v1550, 4
      %v1553 = vshll.u32 %v1472, 16
      %v1555 = vrot.slane %v1553, 5
      %v1556 = vor.u32 %v1552, %v1555
      %v1557 = vrot.slane %v1556, 4
      %v1559 = vshll.u32 %v1484, 16
      %v1561 = vrot.slane %v1559, 5
      %v1562 = vsel %vm1520, %v1557, %v1561
      %v1564 = vshrl.u32 %v1473, 16
      %v1566 = vrot.slane %v1564, 4
      %v1567 = vshll.u32 %v1473, 16
      %v1569 = vrot.slane %v1567, 5
      %v1570 = vor.u32 %v1566, %v1569
      %v1571 = vrot.slane %v1570, 4
      %v1573 = vshll.u32 %v1485, 16
      %v1575 = vrot.slane %v1573, 5
      %v1576 = vsel %vm1520, %v1571, %v1575
      %v1578 = vshrl.u32 %v1474, 16
      %v1580 = vrot.slane %v1578, 4
      %v1581 = vshll.u32 %v1474, 16
      %v1583 = vrot.slane %v1581, 5
      %v1584 = vor.u32 %v1580, %v1583
      %v1585 = vrot.slane %v1584, 4
      %v1587 = vshll.u32 %v1486, 16
      %v1589 = vrot.slane %v1587, 5
      %v1590 = vsel %vm1520, %v1585, %v1589
      %v1592 = vshrl.u32 %v1475, 16
      %v1594 = vrot.slane %v1592, 4
      %v1595 = vshll.u32 %v1475, 16
      %v1597 = vrot.slane %v1595, 5
      %v1598 = vor.u32 %v1594, %v1597
      %v1599 = vrot.slane %v1598, 4
      %v1601 = vshll.u32 %v1487, 16
      %v1603 = vrot.slane %v1601, 5
      %v1604 = vsel %vm1520, %v1599, %v1603
      %v1606 = vshrl.u32 %v1476, 16
      %v1608 = vrot.slane %v1606, 4
      %v1609 = vshll.u32 %v1476, 16
      %v1611 = vrot.slane %v1609, 5
      %v1612 = vor.u32 %v1608, %v1611
      %v1613 = vrot.slane %v1612, 4
      %v1615 = vshll.u32 %v1488, 16
      %v1617 = vrot.slane %v1615, 5
      %v1618 = vsel %vm1520, %v1613, %v1617
      %v1620 = vshrl.u32 %v1477, 16
      %v1622 = vrot.slane %v1620, 4
      %v1623 = vshll.u32 %v1477, 16
      %v1625 = vrot.slane %v1623, 5
      %v1626 = vor.u32 %v1622, %v1625
      %v1627 = vrot.slane %v1626, 4
      %v1629 = vshll.u32 %v1489, 16
      %v1631 = vrot.slane %v1629, 5
      %v1632 = vsel %vm1520, %v1627, %v1631
      %v1634 = vshrl.u32 %v1478, 16
      %v1636 = vrot.slane %v1634, 4
      %v1637 = vshll.u32 %v1478, 16
      %v1639 = vrot.slane %v1637, 5
      %v1640 = vor.u32 %v1636, %v1639
      %v1641 = vrot.slane %v1640, 4
      %v1643 = vshll.u32 %v1490, 16
      %v1645 = vrot.slane %v1643, 5
      %v1646 = vsel %vm1520, %v1641, %v1645
      %v1648 = vshrl.u32 %v1479, 16
      %v1650 = vrot.slane %v1648, 4
      %v1651 = vshll.u32 %v1479, 16
      %v1653 = vrot.slane %v1651, 5
      %v1654 = vor.u32 %v1650, %v1653
      %v1655 = vrot.slane %v1654, 4
      %v1657 = vshll.u32 %v1491, 16
      %v1659 = vrot.slane %v1657, 5
      %v1660 = vsel %vm1520, %v1655, %v1659
      %v1662 = vshrl.u32 %v1480, 16
      %v1664 = vrot.slane %v1662, 4
      %v1665 = vshll.u32 %v1480, 16
      %v1667 = vrot.slane %v1665, 5
      %v1668 = vor.u32 %v1664, %v1667
      %v1669 = vrot.slane %v1668, 4
      %v1671 = vshll.u32 %v1492, 16
      %v1673 = vrot.slane %v1671, 5
      %v1674 = vsel %vm1520, %v1669, %v1673
      %v1676 = vshrl.u32 %v1481, 16
      %v1678 = vrot.slane %v1676, 4
      %v1679 = vshll.u32 %v1481, 16
      %v1681 = vrot.slane %v1679, 5
      %v1682 = vor.u32 %v1678, %v1681
      %v1683 = vrot.slane %v1682, 4
      %v1685 = vshll.u32 %v1493, 16
      %v1687 = vrot.slane %v1685, 5
      %v1688 = vsel %vm1520, %v1683, %v1687
      %v1689 = vshrl.u32 %v1482, 16
      %v1691 = vrot.slane %v1689, 4
      %v1692 = vor.u32 %v1691, %v1533
      %v1693 = vrot.slane %v1692, 4
      %v1695 = vshll.u32 %v1494, 16
      %v1697 = vrot.slane %v1695, 5
      %v1698 = vsel %vm1520, %v1693, %v1697
      %v1699 = vshrl.u32 %v1483, 16
      %v1701 = vrot.slane %v1699, 4
      %v1702 = vor.u32 %v1701, %v1547
      %v1703 = vrot.slane %v1702, 4
      %v1705 = vshll.u32 %v1495, 16
      %v1707 = vrot.slane %v1705, 5
      %v1708 = vsel %vm1520, %v1703, %v1707
      %v1709 = vshrl.u32 %v1484, 16
      %v1711 = vrot.slane %v1709, 4
      %v1712 = vor.u32 %v1711, %v1561
      %v1713 = vrot.slane %v1712, 4
      %v1715 = vshll.u32 %v1496, 16
      %v1717 = vrot.slane %v1715, 5
      %v1718 = vsel %vm1520, %v1713, %v1717
      %v1719 = vshrl.u32 %v1485, 16
      %v1721 = vrot.slane %v1719, 4
      %v1722 = vor.u32 %v1721, %v1575
      %v1723 = vrot.slane %v1722, 4
      %v1725 = vshll.u32 %v1497, 16
      %v1727 = vrot.slane %v1725, 5
      %v1728 = vsel %vm1520, %v1723, %v1727
      %v1729 = vshrl.u32 %v1486, 16
      %v1731 = vrot.slane %v1729, 4
      %v1732 = vor.u32 %v1731, %v1589
      %v1733 = vrot.slane %v1732, 4
      %v1735 = vshll.u32 %v1498, 16
      %v1737 = vrot.slane %v1735, 5
      %v1738 = vsel %vm1520, %v1733, %v1737
      %v1739 = vshrl.u32 %v1487, 16
      %v1741 = vrot.slane %v1739, 4
      %v1742 = vor.u32 %v1741, %v1603
      %v1743 = vrot.slane %v1742, 4
      %v1745 = vshll.u32 %v1499, 16
      %v1747 = vrot.slane %v1745, 5
      %v1748 = vsel %vm1520, %v1743, %v1747
      %v1749 = vshrl.u32 %v1488, 16
      %v1751 = vrot.slane %v1749, 4
      %v1752 = vor.u32 %v1751, %v1617
      %v1753 = vrot.slane %v1752, 4
      %v1755 = vshll.u32 %v1500, 16
      %v1757 = vrot.slane %v1755, 5
      %v1758 = vsel %vm1520, %v1753, %v1757
      %v1759 = vshrl.u32 %v1489, 16
      %v1761 = vrot.slane %v1759, 4
      %v1762 = vor.u32 %v1761, %v1631
      %v1763 = vrot.slane %v1762, 4
      %v1765 = vshll.u32 %v1501, 16
      %v1767 = vrot.slane %v1765, 5
      %v1768 = vsel %vm1520, %v1763, %v1767
      %v1769 = vshrl.u32 %v1490, 16
      %v1771 = vrot.slane %v1769, 4
      %v1772 = vor.u32 %v1771, %v1645
      %v1773 = vrot.slane %v1772, 4
      %v1775 = vshll.u32 %v1502, 16
      %v1777 = vrot.slane %v1775, 5
      %v1778 = vsel %vm1520, %v1773, %v1777
      %v1779 = vshrl.u32 %v1491, 16
      %v1781 = vrot.slane %v1779, 4
      %v1782 = vor.u32 %v1781, %v1659
      %v1783 = vrot.slane %v1782, 4
      %v1785 = vshll.u32 %v1503, 16
      %v1787 = vrot.slane %v1785, 5
      %v1788 = vsel %vm1520, %v1783, %v1787
      %v1789 = vshrl.u32 %v1492, 16
      %v1791 = vrot.slane %v1789, 4
      %v1792 = vor.u32 %v1791, %v1673
      %v1793 = vrot.slane %v1792, 4
      %v1795 = vshll.u32 %v1504, 16
      %v1797 = vrot.slane %v1795, 5
      %v1798 = vsel %vm1520, %v1793, %v1797
      %v1799 = vshrl.u32 %v1493, 16
      %v1801 = vrot.slane %v1799, 4
      %v1802 = vor.u32 %v1801, %v1687
      %v1803 = vrot.slane %v1802, 4
      %v1805 = vshll.u32 %v1505, 16
      %v1807 = vrot.slane %v1805, 5
      %v1808 = vsel %vm1520, %v1803, %v1807
      %v1809 = vshrl.u32 %v1494, 16
      %v1811 = vrot.slane %v1809, 4
      %v1812 = vor.u32 %v1811, %v1697
      %v1813 = vrot.slane %v1812, 4
      %v1815 = vshll.u32 %v1506, 16
      %v1817 = vrot.slane %v1815, 5
      %v1818 = vsel %vm1520, %v1813, %v1817
      %v1819 = vshrl.u32 %v1495, 16
      %v1821 = vrot.slane %v1819, 4
      %v1822 = vor.u32 %v1821, %v1707
      %v1823 = vrot.slane %v1822, 4
      %v1825 = vshll.u32 %v1507, 16
      %v1827 = vrot.slane %v1825, 5
      %v1828 = vsel %vm1520, %v1823, %v1827
      %v1829 = vshrl.u32 %v1496, 16
      %v1831 = vrot.slane %v1829, 4
      %v1832 = vor.u32 %v1831, %v1717
      %v1833 = vrot.slane %v1832, 4
      %v1835 = vshll.u32 %v1508, 16
      %v1837 = vrot.slane %v1835, 5
      %v1838 = vsel %vm1520, %v1833, %v1837
      %v1839 = vshrl.u32 %v1497, 16
      %v1841 = vrot.slane %v1839, 4
      %v1842 = vor.u32 %v1841, %v1727
      %v1843 = vrot.slane %v1842, 4
      %v1845 = vshll.u32 %v1509, 16
      %v1847 = vrot.slane %v1845, 5
      %v1848 = vsel %vm1520, %v1843, %v1847
      %v1849 = vshrl.u32 %v1498, 16
      %v1851 = vrot.slane %v1849, 4
      %v1852 = vor.u32 %v1851, %v1737
      %v1853 = vrot.slane %v1852, 4
      %v1855 = vshll.u32 %v1510, 16
      %v1857 = vrot.slane %v1855, 5
      %v1858 = vsel %vm1520, %v1853, %v1857
      %v1859 = vshrl.u32 %v1499, 16
      %v1861 = vrot.slane %v1859, 4
      %v1862 = vor.u32 %v1861, %v1747
      %v1863 = vrot.slane %v1862, 4
      %v1865 = vshll.u32 %v1511, 16
      %v1867 = vrot.slane %v1865, 5
      %v1868 = vsel %vm1520, %v1863, %v1867
      %v1869 = vshrl.u32 %v1500, 16
      %v1871 = vrot.slane %v1869, 4
      %v1872 = vor.u32 %v1871, %v1757
      %v1873 = vrot.slane %v1872, 4
      %v1875 = vshll.u32 %v1512, 16
      %v1877 = vrot.slane %v1875, 5
      %v1878 = vsel %vm1520, %v1873, %v1877
      %v1879 = vshrl.u32 %v1501, 16
      %v1881 = vrot.slane %v1879, 4
      %v1882 = vor.u32 %v1881, %v1767
      %v1883 = vrot.slane %v1882, 4
      %v1885 = vshll.u32 %v1513, 16
      %v1887 = vrot.slane %v1885, 5
      %v1888 = vsel %vm1520, %v1883, %v1887
      %v1889 = vshrl.u32 %v1502, 16
      %v1891 = vrot.slane %v1889, 4
      %v1892 = vor.u32 %v1891, %v1777
      %v1893 = vrot.slane %v1892, 4
      %v1895 = vshll.u32 %v1514, 16
      %v1897 = vrot.slane %v1895, 5
      %v1898 = vsel %vm1520, %v1893, %v1897
      %v1899 = vshrl.u32 %v1503, 16
      %v1901 = vrot.slane %v1899, 4
      %v1902 = vor.u32 %v1901, %v1787
      %v1903 = vrot.slane %v1902, 4
      %v1905 = vshll.u32 %v1515, 16
      %v1907 = vrot.slane %v1905, 5
      %v1908 = vsel %vm1520, %v1903, %v1907
      %v1909 = vshrl.u32 %v1504, 16
      %v1911 = vrot.slane %v1909, 4
      %v1912 = vor.u32 %v1911, %v1797
      %v1913 = vrot.slane %v1912, 4
      %v1915 = vshll.u32 %v1516, 16
      %v1917 = vrot.slane %v1915, 5
      %v1918 = vsel %vm1520, %v1913, %v1917
      %v1919 = vshrl.u32 %v1505, 16
      %v1921 = vrot.slane %v1919, 4
      %v1922 = vor.u32 %v1921, %v1807
      %v1923 = vrot.slane %v1922, 4
      %v1925 = vshll.u32 %v1517, 16
      %v1927 = vrot.slane %v1925, 5
      %v1928 = vsel %vm1520, %v1923, %v1927
      %v1965 = vmax.bf16 %v1470, %v1534
      %v1966 = vmax.bf16 %v1471, %v1548
      %v1967 = vmax.bf16 %v1472, %v1562
      %v1968 = vmax.bf16 %v1473, %v1576
      %v1969 = vmax.bf16 %v1474, %v1590
      %v1970 = vmax.bf16 %v1475, %v1604
      %v1971 = vmax.bf16 %v1476, %v1618
      %v1972 = vmax.bf16 %v1477, %v1632
      %v1973 = vmax.bf16 %v1478, %v1646
      %v1974 = vmax.bf16 %v1479, %v1660
      %v1975 = vmax.bf16 %v1480, %v1674
      %v1976 = vmax.bf16 %v1481, %v1688
      %v1977 = vmax.bf16 %v1482, %v1698
      %v1978 = vmax.bf16 %v1483, %v1708
      %v1979 = vmax.bf16 %v1484, %v1718
      %v1980 = vmax.bf16 %v1485, %v1728
      %v1981 = vmax.bf16 %v1486, %v1738
      %v1982 = vmax.bf16 %v1487, %v1748
      %v1983 = vmax.bf16 %v1488, %v1758
      %v1984 = vmax.bf16 %v1489, %v1768
      %v1985 = vmax.bf16 %v1490, %v1778
      %v1986 = vmax.bf16 %v1491, %v1788
      %v1987 = vmax.bf16 %v1492, %v1798
      %v1988 = vmax.bf16 %v1493, %v1808
      %v1989 = vmax.bf16 %v1494, %v1818
      %v1990 = vmax.bf16 %v1495, %v1828
      %v1991 = vmax.bf16 %v1496, %v1838
      %v1992 = vmax.bf16 %v1497, %v1848
      %v1993 = vmax.bf16 %v1498, %v1858
      %v1994 = vmax.bf16 %v1499, %v1868
      %v1995 = vmax.bf16 %v1500, %v1878
      %v1996 = vmax.bf16 %v1501, %v1888
      %v1997 = vmax.bf16 %v1502, %v1898
      %v1998 = vmax.bf16 %v1503, %v1908
      %v1999 = vmax.bf16 %v1504, %v1918
      %v2000 = vmax.bf16 %v1505, %v1928
      %v2049 = vrot.slane %v1470, 5
      %v2050 = vrot.slane %v2049, 4
      %v2051 = vrot.slane %v1482, 5
      %v2052 = vsel %vm964, %v2050, %v2051
      %v2053 = vrot.slane %v1471, 5
      %v2054 = vrot.slane %v2053, 4
      %v2055 = vrot.slane %v1483, 5
      %v2056 = vsel %vm964, %v2054, %v2055
      %v2057 = vrot.slane %v1472, 5
      %v2058 = vrot.slane %v2057, 4
      %v2059 = vrot.slane %v1484, 5
      %v2060 = vsel %vm964, %v2058, %v2059
      %v2061 = vrot.slane %v1473, 5
      %v2062 = vrot.slane %v2061, 4
      %v2063 = vrot.slane %v1485, 5
      %v2064 = vsel %vm964, %v2062, %v2063
      %v2065 = vrot.slane %v1474, 5
      %v2066 = vrot.slane %v2065, 4
      %v2067 = vrot.slane %v1486, 5
      %v2068 = vsel %vm964, %v2066, %v2067
      %v2069 = vrot.slane %v1475, 5
      %v2070 = vrot.slane %v2069, 4
      %v2071 = vrot.slane %v1487, 5
      %v2072 = vsel %vm964, %v2070, %v2071
      %v2073 = vrot.slane %v1476, 5
      %v2074 = vrot.slane %v2073, 4
      %v2075 = vrot.slane %v1488, 5
      %v2076 = vsel %vm964, %v2074, %v2075
      %v2077 = vrot.slane %v1477, 5
      %v2078 = vrot.slane %v2077, 4
      %v2079 = vrot.slane %v1489, 5
      %v2080 = vsel %vm964, %v2078, %v2079
      %v2081 = vrot.slane %v1478, 5
      %v2082 = vrot.slane %v2081, 4
      %v2083 = vrot.slane %v1490, 5
      %v2084 = vsel %vm964, %v2082, %v2083
      %v2085 = vrot.slane %v1479, 5
      %v2086 = vrot.slane %v2085, 4
      %v2087 = vrot.slane %v1491, 5
      %v2088 = vsel %vm964, %v2086, %v2087
      %v2089 = vrot.slane %v1480, 5
      %v2090 = vrot.slane %v2089, 4
      %v2091 = vrot.slane %v1492, 5
      %v2092 = vsel %vm964, %v2090, %v2091
      %v2093 = vrot.slane %v1481, 5
      %v2094 = vrot.slane %v2093, 4
      %v2095 = vrot.slane %v1493, 5
      %v2096 = vsel %vm964, %v2094, %v2095
      %v2097 = vrot.slane %v2051, 4
      %v2098 = vrot.slane %v1494, 5
      %v2099 = vsel %vm964, %v2097, %v2098
      %v2100 = vrot.slane %v2055, 4
      %v2101 = vrot.slane %v1495, 5
      %v2102 = vsel %vm964, %v2100, %v2101
      %v2103 = vrot.slane %v2059, 4
      %v2104 = vrot.slane %v1496, 5
      %v2105 = vsel %vm964, %v2103, %v2104
      %v2106 = vrot.slane %v2063, 4
      %v2107 = vrot.slane %v1497, 5
      %v2108 = vsel %vm964, %v2106, %v2107
      %v2109 = vrot.slane %v2067, 4
      %v2110 = vrot.slane %v1498, 5
      %v2111 = vsel %vm964, %v2109, %v2110
      %v2112 = vrot.slane %v2071, 4
      %v2113 = vrot.slane %v1499, 5
      %v2114 = vsel %vm964, %v2112, %v2113
      %v2115 = vrot.slane %v2075, 4
      %v2116 = vrot.slane %v1500, 5
      %v2117 = vsel %vm964, %v2115, %v2116
      %v2118 = vrot.slane %v2079, 4
      %v2119 = vrot.slane %v1501, 5
      %v2120 = vsel %vm964, %v2118, %v2119
      %v2121 = vrot.slane %v2083, 4
      %v2122 = vrot.slane %v1502, 5
      %v2123 = vsel %vm964, %v2121, %v2122
      %v2124 = vrot.slane %v2087, 4
      %v2125 = vrot.slane %v1503, 5
      %v2126 = vsel %vm964, %v2124, %v2125
      %v2127 = vrot.slane %v2091, 4
      %v2128 = vrot.slane %v1504, 5
      %v2129 = vsel %vm964, %v2127, %v2128
      %v2130 = vrot.slane %v2095, 4
      %v2131 = vrot.slane %v1505, 5
      %v2132 = vsel %vm964, %v2130, %v2131
      %v2133 = vrot.slane %v2098, 4
      %v2134 = vrot.slane %v1506, 5
      %v2135 = vsel %vm964, %v2133, %v2134
      %v2136 = vrot.slane %v2101, 4
      %v2137 = vrot.slane %v1507, 5
      %v2138 = vsel %vm964, %v2136, %v2137
      %v2139 = vrot.slane %v2104, 4
      %v2140 = vrot.slane %v1508, 5
      %v2141 = vsel %vm964, %v2139, %v2140
      %v2142 = vrot.slane %v2107, 4
      %v2143 = vrot.slane %v1509, 5
      %v2144 = vsel %vm964, %v2142, %v2143
      %v2145 = vrot.slane %v2110, 4
      %v2146 = vrot.slane %v1510, 5
      %v2147 = vsel %vm964, %v2145, %v2146
      %v2148 = vrot.slane %v2113, 4
      %v2149 = vrot.slane %v1511, 5
      %v2150 = vsel %vm964, %v2148, %v2149
      %v2151 = vrot.slane %v2116, 4
      %v2152 = vrot.slane %v1512, 5
      %v2153 = vsel %vm964, %v2151, %v2152
      %v2154 = vrot.slane %v2119, 4
      %v2155 = vrot.slane %v1513, 5
      %v2156 = vsel %vm964, %v2154, %v2155
      %v2157 = vrot.slane %v2122, 4
      %v2158 = vrot.slane %v1514, 5
      %v2159 = vsel %vm964, %v2157, %v2158
      %v2160 = vrot.slane %v2125, 4
      %v2161 = vrot.slane %v1515, 5
      %v2162 = vsel %vm964, %v2160, %v2161
      %v2163 = vrot.slane %v2128, 4
      %v2164 = vrot.slane %v1516, 5
      %v2165 = vsel %vm964, %v2163, %v2164
      %v2166 = vrot.slane %v2131, 4
      %v2167 = vrot.slane %v1517, 5
      %v2168 = vsel %vm964, %v2166, %v2167
      %v2205 = vmax.bf16 %v1965, %v2052
      %v2206 = vmax.bf16 %v1966, %v2056
      %v2207 = vmax.bf16 %v1967, %v2060
      %v2208 = vmax.bf16 %v1968, %v2064
      %v2209 = vmax.bf16 %v1969, %v2068
      %v2210 = vmax.bf16 %v1970, %v2072
      %v2211 = vmax.bf16 %v1971, %v2076
      %v2212 = vmax.bf16 %v1972, %v2080
      %v2213 = vmax.bf16 %v1973, %v2084
      %v2214 = vmax.bf16 %v1974, %v2088
      %v2215 = vmax.bf16 %v1975, %v2092
      %v2216 = vmax.bf16 %v1976, %v2096
      %v2217 = vmax.bf16 %v1977, %v2099
      %v2218 = vmax.bf16 %v1978, %v2102
      %v2219 = vmax.bf16 %v1979, %v2105
      %v2220 = vmax.bf16 %v1980, %v2108
      %v2221 = vmax.bf16 %v1981, %v2111
      %v2222 = vmax.bf16 %v1982, %v2114
      %v2223 = vmax.bf16 %v1983, %v2117
      %v2224 = vmax.bf16 %v1984, %v2120
      %v2225 = vmax.bf16 %v1985, %v2123
      %v2226 = vmax.bf16 %v1986, %v2126
      %v2227 = vmax.bf16 %v1987, %v2129
      %v2228 = vmax.bf16 %v1988, %v2132
      %v2229 = vmax.bf16 %v1989, %v2135
      %v2230 = vmax.bf16 %v1990, %v2138
      %v2231 = vmax.bf16 %v1991, %v2141
      %v2232 = vmax.bf16 %v1992, %v2144
      %v2233 = vmax.bf16 %v1993, %v2147
      %v2234 = vmax.bf16 %v1994, %v2150
      %v2235 = vmax.bf16 %v1995, %v2153
      %v2236 = vmax.bf16 %v1996, %v2156
      %v2237 = vmax.bf16 %v1997, %v2159
      %v2238 = vmax.bf16 %v1998, %v2162
      %v2239 = vmax.bf16 %v1999, %v2165
      %v2240 = vmax.bf16 %v2000, %v2168
      %vm2241 = vsmask.f32 2304
      %vm2242 = vsmask.f32 6416
      %vm2243 = vmor %vm2241, %vm2242
      %v2244 = vrot.slane %v1522, 5
      %v2245 = vrot.slane %v1525, 6
      %v2246 = vor.u32 %v2244, %v2245
      %v2247 = vrot.slane %v2246, 4
      %v2248 = vrot.slane %v1689, 5
      %v2249 = vrot.slane %v1531, 6
      %v2250 = vor.u32 %v2248, %v2249
      %v2251 = vsel %vm2243, %v2247, %v2250
      %v2252 = vrot.slane %v1536, 5
      %v2253 = vrot.slane %v1539, 6
      %v2254 = vor.u32 %v2252, %v2253
      %v2255 = vrot.slane %v2254, 4
      %v2256 = vrot.slane %v1699, 5
      %v2257 = vrot.slane %v1545, 6
      %v2258 = vor.u32 %v2256, %v2257
      %v2259 = vsel %vm2243, %v2255, %v2258
      %v2260 = vrot.slane %v1550, 5
      %v2261 = vrot.slane %v1553, 6
      %v2262 = vor.u32 %v2260, %v2261
      %v2263 = vrot.slane %v2262, 4
      %v2264 = vrot.slane %v1709, 5
      %v2265 = vrot.slane %v1559, 6
      %v2266 = vor.u32 %v2264, %v2265
      %v2267 = vsel %vm2243, %v2263, %v2266
      %v2268 = vrot.slane %v1564, 5
      %v2269 = vrot.slane %v1567, 6
      %v2270 = vor.u32 %v2268, %v2269
      %v2271 = vrot.slane %v2270, 4
      %v2272 = vrot.slane %v1719, 5
      %v2273 = vrot.slane %v1573, 6
      %v2274 = vor.u32 %v2272, %v2273
      %v2275 = vsel %vm2243, %v2271, %v2274
      %v2276 = vrot.slane %v1578, 5
      %v2277 = vrot.slane %v1581, 6
      %v2278 = vor.u32 %v2276, %v2277
      %v2279 = vrot.slane %v2278, 4
      %v2280 = vrot.slane %v1729, 5
      %v2281 = vrot.slane %v1587, 6
      %v2282 = vor.u32 %v2280, %v2281
      %v2283 = vsel %vm2243, %v2279, %v2282
      %v2284 = vrot.slane %v1592, 5
      %v2285 = vrot.slane %v1595, 6
      %v2286 = vor.u32 %v2284, %v2285
      %v2287 = vrot.slane %v2286, 4
      %v2288 = vrot.slane %v1739, 5
      %v2289 = vrot.slane %v1601, 6
      %v2290 = vor.u32 %v2288, %v2289
      %v2291 = vsel %vm2243, %v2287, %v2290
      %v2292 = vrot.slane %v1606, 5
      %v2293 = vrot.slane %v1609, 6
      %v2294 = vor.u32 %v2292, %v2293
      %v2295 = vrot.slane %v2294, 4
      %v2296 = vrot.slane %v1749, 5
      %v2297 = vrot.slane %v1615, 6
      %v2298 = vor.u32 %v2296, %v2297
      %v2299 = vsel %vm2243, %v2295, %v2298
      %v2300 = vrot.slane %v1620, 5
      %v2301 = vrot.slane %v1623, 6
      %v2302 = vor.u32 %v2300, %v2301
      %v2303 = vrot.slane %v2302, 4
      %v2304 = vrot.slane %v1759, 5
      %v2305 = vrot.slane %v1629, 6
      %v2306 = vor.u32 %v2304, %v2305
      %v2307 = vsel %vm2243, %v2303, %v2306
      %v2308 = vrot.slane %v1634, 5
      %v2309 = vrot.slane %v1637, 6
      %v2310 = vor.u32 %v2308, %v2309
      %v2311 = vrot.slane %v2310, 4
      %v2312 = vrot.slane %v1769, 5
      %v2313 = vrot.slane %v1643, 6
      %v2314 = vor.u32 %v2312, %v2313
      %v2315 = vsel %vm2243, %v2311, %v2314
      %v2316 = vrot.slane %v1648, 5
      %v2317 = vrot.slane %v1651, 6
      %v2318 = vor.u32 %v2316, %v2317
      %v2319 = vrot.slane %v2318, 4
      %v2320 = vrot.slane %v1779, 5
      %v2321 = vrot.slane %v1657, 6
      %v2322 = vor.u32 %v2320, %v2321
      %v2323 = vsel %vm2243, %v2319, %v2322
      %v2324 = vrot.slane %v1662, 5
      %v2325 = vrot.slane %v1665, 6
      %v2326 = vor.u32 %v2324, %v2325
      %v2327 = vrot.slane %v2326, 4
      %v2328 = vrot.slane %v1789, 5
      %v2329 = vrot.slane %v1671, 6
      %v2330 = vor.u32 %v2328, %v2329
      %v2331 = vsel %vm2243, %v2327, %v2330
      %v2332 = vrot.slane %v1676, 5
      %v2333 = vrot.slane %v1679, 6
      %v2334 = vor.u32 %v2332, %v2333
      %v2335 = vrot.slane %v2334, 4
      %v2336 = vrot.slane %v1799, 5
      %v2337 = vrot.slane %v1685, 6
      %v2338 = vor.u32 %v2336, %v2337
      %v2339 = vsel %vm2243, %v2335, %v2338
      %v2340 = vrot.slane %v2250, 4
      %v2341 = vrot.slane %v1809, 5
      %v2342 = vrot.slane %v1695, 6
      %v2343 = vor.u32 %v2341, %v2342
      %v2344 = vsel %vm2243, %v2340, %v2343
      %v2345 = vrot.slane %v2258, 4
      %v2346 = vrot.slane %v1819, 5
      %v2347 = vrot.slane %v1705, 6
      %v2348 = vor.u32 %v2346, %v2347
      %v2349 = vsel %vm2243, %v2345, %v2348
      %v2350 = vrot.slane %v2266, 4
      %v2351 = vrot.slane %v1829, 5
      %v2352 = vrot.slane %v1715, 6
      %v2353 = vor.u32 %v2351, %v2352
      %v2354 = vsel %vm2243, %v2350, %v2353
      %v2355 = vrot.slane %v2274, 4
      %v2356 = vrot.slane %v1839, 5
      %v2357 = vrot.slane %v1725, 6
      %v2358 = vor.u32 %v2356, %v2357
      %v2359 = vsel %vm2243, %v2355, %v2358
      %v2360 = vrot.slane %v2282, 4
      %v2361 = vrot.slane %v1849, 5
      %v2362 = vrot.slane %v1735, 6
      %v2363 = vor.u32 %v2361, %v2362
      %v2364 = vsel %vm2243, %v2360, %v2363
      %v2365 = vrot.slane %v2290, 4
      %v2366 = vrot.slane %v1859, 5
      %v2367 = vrot.slane %v1745, 6
      %v2368 = vor.u32 %v2366, %v2367
      %v2369 = vsel %vm2243, %v2365, %v2368
      %v2370 = vrot.slane %v2298, 4
      %v2371 = vrot.slane %v1869, 5
      %v2372 = vrot.slane %v1755, 6
      %v2373 = vor.u32 %v2371, %v2372
      %v2374 = vsel %vm2243, %v2370, %v2373
      %v2375 = vrot.slane %v2306, 4
      %v2376 = vrot.slane %v1879, 5
      %v2377 = vrot.slane %v1765, 6
      %v2378 = vor.u32 %v2376, %v2377
      %v2379 = vsel %vm2243, %v2375, %v2378
      %v2380 = vrot.slane %v2314, 4
      %v2381 = vrot.slane %v1889, 5
      %v2382 = vrot.slane %v1775, 6
      %v2383 = vor.u32 %v2381, %v2382
      %v2384 = vsel %vm2243, %v2380, %v2383
      %v2385 = vrot.slane %v2322, 4
      %v2386 = vrot.slane %v1899, 5
      %v2387 = vrot.slane %v1785, 6
      %v2388 = vor.u32 %v2386, %v2387
      %v2389 = vsel %vm2243, %v2385, %v2388
      %v2390 = vrot.slane %v2330, 4
      %v2391 = vrot.slane %v1909, 5
      %v2392 = vrot.slane %v1795, 6
      %v2393 = vor.u32 %v2391, %v2392
      %v2394 = vsel %vm2243, %v2390, %v2393
      %v2395 = vrot.slane %v2338, 4
      %v2396 = vrot.slane %v1919, 5
      %v2397 = vrot.slane %v1805, 6
      %v2398 = vor.u32 %v2396, %v2397
      %v2399 = vsel %vm2243, %v2395, %v2398
      %v2400 = vrot.slane %v2343, 4
      %v2401 = vshrl.u32 %v1506, 16
      %v2403 = vrot.slane %v2401, 5
      %v2404 = vrot.slane %v1815, 6
      %v2405 = vor.u32 %v2403, %v2404
      %v2406 = vsel %vm2243, %v2400, %v2405
      %v2407 = vrot.slane %v2348, 4
      %v2408 = vshrl.u32 %v1507, 16
      %v2410 = vrot.slane %v2408, 5
      %v2411 = vrot.slane %v1825, 6
      %v2412 = vor.u32 %v2410, %v2411
      %v2413 = vsel %vm2243, %v2407, %v2412
      %v2414 = vrot.slane %v2353, 4
      %v2415 = vshrl.u32 %v1508, 16
      %v2417 = vrot.slane %v2415, 5
      %v2418 = vrot.slane %v1835, 6
      %v2419 = vor.u32 %v2417, %v2418
      %v2420 = vsel %vm2243, %v2414, %v2419
      %v2421 = vrot.slane %v2358, 4
      %v2422 = vshrl.u32 %v1509, 16
      %v2424 = vrot.slane %v2422, 5
      %v2425 = vrot.slane %v1845, 6
      %v2426 = vor.u32 %v2424, %v2425
      %v2427 = vsel %vm2243, %v2421, %v2426
      %v2428 = vrot.slane %v2363, 4
      %v2429 = vshrl.u32 %v1510, 16
      %v2431 = vrot.slane %v2429, 5
      %v2432 = vrot.slane %v1855, 6
      %v2433 = vor.u32 %v2431, %v2432
      %v2434 = vsel %vm2243, %v2428, %v2433
      %v2435 = vrot.slane %v2368, 4
      %v2436 = vshrl.u32 %v1511, 16
      %v2438 = vrot.slane %v2436, 5
      %v2439 = vrot.slane %v1865, 6
      %v2440 = vor.u32 %v2438, %v2439
      %v2441 = vsel %vm2243, %v2435, %v2440
      %v2442 = vrot.slane %v2373, 4
      %v2443 = vshrl.u32 %v1512, 16
      %v2445 = vrot.slane %v2443, 5
      %v2446 = vrot.slane %v1875, 6
      %v2447 = vor.u32 %v2445, %v2446
      %v2448 = vsel %vm2243, %v2442, %v2447
      %v2449 = vrot.slane %v2378, 4
      %v2450 = vshrl.u32 %v1513, 16
      %v2452 = vrot.slane %v2450, 5
      %v2453 = vrot.slane %v1885, 6
      %v2454 = vor.u32 %v2452, %v2453
      %v2455 = vsel %vm2243, %v2449, %v2454
      %v2456 = vrot.slane %v2383, 4
      %v2457 = vshrl.u32 %v1514, 16
      %v2459 = vrot.slane %v2457, 5
      %v2460 = vrot.slane %v1895, 6
      %v2461 = vor.u32 %v2459, %v2460
      %v2462 = vsel %vm2243, %v2456, %v2461
      %v2463 = vrot.slane %v2388, 4
      %v2464 = vshrl.u32 %v1515, 16
      %v2466 = vrot.slane %v2464, 5
      %v2467 = vrot.slane %v1905, 6
      %v2468 = vor.u32 %v2466, %v2467
      %v2469 = vsel %vm2243, %v2463, %v2468
      %v2470 = vrot.slane %v2393, 4
      %v2471 = vshrl.u32 %v1516, 16
      %v2473 = vrot.slane %v2471, 5
      %v2474 = vrot.slane %v1915, 6
      %v2475 = vor.u32 %v2473, %v2474
      %v2476 = vsel %vm2243, %v2470, %v2475
      %v2477 = vrot.slane %v2398, 4
      %v2478 = vshrl.u32 %v1517, 16
      %v2480 = vrot.slane %v2478, 5
      %v2481 = vrot.slane %v1925, 6
      %v2482 = vor.u32 %v2480, %v2481
      %v2483 = vsel %vm2243, %v2477, %v2482
      %v2520 = vmax.bf16 %v2205, %v2251
      %v2521 = vmax.bf16 %v2206, %v2259
      %v2522 = vmax.bf16 %v2207, %v2267
      %v2523 = vmax.bf16 %v2208, %v2275
      %v2524 = vmax.bf16 %v2209, %v2283
      %v2525 = vmax.bf16 %v2210, %v2291
      %v2526 = vmax.bf16 %v2211, %v2299
      %v2527 = vmax.bf16 %v2212, %v2307
      %v2528 = vmax.bf16 %v2213, %v2315
      %v2529 = vmax.bf16 %v2214, %v2323
      %v2530 = vmax.bf16 %v2215, %v2331
      %v2531 = vmax.bf16 %v2216, %v2339
      %v2532 = vmax.bf16 %v2217, %v2344
      %v2533 = vmax.bf16 %v2218, %v2349
      %v2534 = vmax.bf16 %v2219, %v2354
      %v2535 = vmax.bf16 %v2220, %v2359
      %v2536 = vmax.bf16 %v2221, %v2364
      %v2537 = vmax.bf16 %v2222, %v2369
      %v2538 = vmax.bf16 %v2223, %v2374
      %v2539 = vmax.bf16 %v2224, %v2379
      %v2540 = vmax.bf16 %v2225, %v2384
      %v2541 = vmax.bf16 %v2226, %v2389
      %v2542 = vmax.bf16 %v2227, %v2394
      %v2543 = vmax.bf16 %v2228, %v2399
      %v2544 = vmax.bf16 %v2229, %v2406
      %v2545 = vmax.bf16 %v2230, %v2413
      %v2546 = vmax.bf16 %v2231, %v2420
      %v2547 = vmax.bf16 %v2232, %v2427
      %v2548 = vmax.bf16 %v2233, %v2434
      %v2549 = vmax.bf16 %v2234, %v2441
      %v2550 = vmax.bf16 %v2235, %v2448
      %v2551 = vmax.bf16 %v2236, %v2455
      %v2552 = vmax.bf16 %v2237, %v2462
      %v2553 = vmax.bf16 %v2238, %v2469
      %v2554 = vmax.bf16 %v2239, %v2476
      %v2555 = vmax.bf16 %v2240, %v2483
      %vm2556 = vcmask 1041408
      %vm2557 = vcmask 1045508
      %vm2558 = vmor %vm2556, %vm2557
      %v2559 = vrot.slane %v1470, 6
      %v2560 = vrot.slane %v2559, 4
      %v2561 = vrot.slane %v1482, 6
      %v2562 = vsel %vm2558, %v2560, %v2561
      %v2563 = vrot.slane %v1471, 6
      %v2564 = vrot.slane %v2563, 4
      %v2565 = vrot.slane %v1483, 6
      %v2566 = vsel %vm2558, %v2564, %v2565
      %v2567 = vrot.slane %v1472, 6
      %v2568 = vrot.slane %v2567, 4
      %v2569 = vrot.slane %v1484, 6
      %v2570 = vsel %vm2558, %v2568, %v2569
      %v2571 = vrot.slane %v1473, 6
      %v2572 = vrot.slane %v2571, 4
      %v2573 = vrot.slane %v1485, 6
      %v2574 = vsel %vm2558, %v2572, %v2573
      %v2575 = vrot.slane %v1474, 6
      %v2576 = vrot.slane %v2575, 4
      %v2577 = vrot.slane %v1486, 6
      %v2578 = vsel %vm2558, %v2576, %v2577
      %v2579 = vrot.slane %v1475, 6
      %v2580 = vrot.slane %v2579, 4
      %v2581 = vrot.slane %v1487, 6
      %v2582 = vsel %vm2558, %v2580, %v2581
      %v2583 = vrot.slane %v1476, 6
      %v2584 = vrot.slane %v2583, 4
      %v2585 = vrot.slane %v1488, 6
      %v2586 = vsel %vm2558, %v2584, %v2585
      %v2587 = vrot.slane %v1477, 6
      %v2588 = vrot.slane %v2587, 4
      %v2589 = vrot.slane %v1489, 6
      %v2590 = vsel %vm2558, %v2588, %v2589
      %v2591 = vrot.slane %v1478, 6
      %v2592 = vrot.slane %v2591, 4
      %v2593 = vrot.slane %v1490, 6
      %v2594 = vsel %vm2558, %v2592, %v2593
      %v2595 = vrot.slane %v1479, 6
      %v2596 = vrot.slane %v2595, 4
      %v2597 = vrot.slane %v1491, 6
      %v2598 = vsel %vm2558, %v2596, %v2597
      %v2599 = vrot.slane %v1480, 6
      %v2600 = vrot.slane %v2599, 4
      %v2601 = vrot.slane %v1492, 6
      %v2602 = vsel %vm2558, %v2600, %v2601
      %v2603 = vrot.slane %v1481, 6
      %v2604 = vrot.slane %v2603, 4
      %v2605 = vrot.slane %v1493, 6
      %v2606 = vsel %vm2558, %v2604, %v2605
      %v2607 = vrot.slane %v2561, 4
      %v2608 = vrot.slane %v1494, 6
      %v2609 = vsel %vm2558, %v2607, %v2608
      %v2610 = vrot.slane %v2565, 4
      %v2611 = vrot.slane %v1495, 6
      %v2612 = vsel %vm2558, %v2610, %v2611
      %v2613 = vrot.slane %v2569, 4
      %v2614 = vrot.slane %v1496, 6
      %v2615 = vsel %vm2558, %v2613, %v2614
      %v2616 = vrot.slane %v2573, 4
      %v2617 = vrot.slane %v1497, 6
      %v2618 = vsel %vm2558, %v2616, %v2617
      %v2619 = vrot.slane %v2577, 4
      %v2620 = vrot.slane %v1498, 6
      %v2621 = vsel %vm2558, %v2619, %v2620
      %v2622 = vrot.slane %v2581, 4
      %v2623 = vrot.slane %v1499, 6
      %v2624 = vsel %vm2558, %v2622, %v2623
      %v2625 = vrot.slane %v2585, 4
      %v2626 = vrot.slane %v1500, 6
      %v2627 = vsel %vm2558, %v2625, %v2626
      %v2628 = vrot.slane %v2589, 4
      %v2629 = vrot.slane %v1501, 6
      %v2630 = vsel %vm2558, %v2628, %v2629
      %v2631 = vrot.slane %v2593, 4
      %v2632 = vrot.slane %v1502, 6
      %v2633 = vsel %vm2558, %v2631, %v2632
      %v2634 = vrot.slane %v2597, 4
      %v2635 = vrot.slane %v1503, 6
      %v2636 = vsel %vm2558, %v2634, %v2635
      %v2637 = vrot.slane %v2601, 4
      %v2638 = vrot.slane %v1504, 6
      %v2639 = vsel %vm2558, %v2637, %v2638
      %v2640 = vrot.slane %v2605, 4
      %v2641 = vrot.slane %v1505, 6
      %v2642 = vsel %vm2558, %v2640, %v2641
      %v2643 = vrot.slane %v2608, 4
      %v2644 = vrot.slane %v1506, 6
      %v2645 = vsel %vm2558, %v2643, %v2644
      %v2646 = vrot.slane %v2611, 4
      %v2647 = vrot.slane %v1507, 6
      %v2648 = vsel %vm2558, %v2646, %v2647
      %v2649 = vrot.slane %v2614, 4
      %v2650 = vrot.slane %v1508, 6
      %v2651 = vsel %vm2558, %v2649, %v2650
      %v2652 = vrot.slane %v2617, 4
      %v2653 = vrot.slane %v1509, 6
      %v2654 = vsel %vm2558, %v2652, %v2653
      %v2655 = vrot.slane %v2620, 4
      %v2656 = vrot.slane %v1510, 6
      %v2657 = vsel %vm2558, %v2655, %v2656
      %v2658 = vrot.slane %v2623, 4
      %v2659 = vrot.slane %v1511, 6
      %v2660 = vsel %vm2558, %v2658, %v2659
      %v2661 = vrot.slane %v2626, 4
      %v2662 = vrot.slane %v1512, 6
      %v2663 = vsel %vm2558, %v2661, %v2662
      %v2664 = vrot.slane %v2629, 4
      %v2665 = vrot.slane %v1513, 6
      %v2666 = vsel %vm2558, %v2664, %v2665
      %v2667 = vrot.slane %v2632, 4
      %v2668 = vrot.slane %v1514, 6
      %v2669 = vsel %vm2558, %v2667, %v2668
      %v2670 = vrot.slane %v2635, 4
      %v2671 = vrot.slane %v1515, 6
      %v2672 = vsel %vm2558, %v2670, %v2671
      %v2673 = vrot.slane %v2638, 4
      %v2674 = vrot.slane %v1516, 6
      %v2675 = vsel %vm2558, %v2673, %v2674
      %v2676 = vrot.slane %v2641, 4
      %v2677 = vrot.slane %v1517, 6
      %v2678 = vsel %vm2558, %v2676, %v2677
      %v2715 = vmax.bf16 %v2520, %v2562
      %v2716 = vmax.bf16 %v2521, %v2566
      %v2717 = vmax.bf16 %v2522, %v2570
      %v2718 = vmax.bf16 %v2523, %v2574
      %v2719 = vmax.bf16 %v2524, %v2578
      %v2720 = vmax.bf16 %v2525, %v2582
      %v2721 = vmax.bf16 %v2526, %v2586
      %v2722 = vmax.bf16 %v2527, %v2590
      %v2723 = vmax.bf16 %v2528, %v2594
      %v2724 = vmax.bf16 %v2529, %v2598
      %v2725 = vmax.bf16 %v2530, %v2602
      %v2726 = vmax.bf16 %v2531, %v2606
      %v2727 = vmax.bf16 %v2532, %v2609
      %v2728 = vmax.bf16 %v2533, %v2612
      %v2729 = vmax.bf16 %v2534, %v2615
      %v2730 = vmax.bf16 %v2535, %v2618
      %v2731 = vmax.bf16 %v2536, %v2621
      %v2732 = vmax.bf16 %v2537, %v2624
      %v2733 = vmax.bf16 %v2538, %v2627
      %v2734 = vmax.bf16 %v2539, %v2630
      %v2735 = vmax.bf16 %v2540, %v2633
      %v2736 = vmax.bf16 %v2541, %v2636
      %v2737 = vmax.bf16 %v2542, %v2639
      %v2738 = vmax.bf16 %v2543, %v2642
      %v2739 = vmax.bf16 %v2544, %v2645
      %v2740 = vmax.bf16 %v2545, %v2648
      %v2741 = vmax.bf16 %v2546, %v2651
      %v2742 = vmax.bf16 %v2547, %v2654
      %v2743 = vmax.bf16 %v2548, %v2657
      %v2744 = vmax.bf16 %v2549, %v2660
      %v2745 = vmax.bf16 %v2550, %v2663
      %v2746 = vmax.bf16 %v2551, %v2666
      %v2747 = vmax.bf16 %v2552, %v2669
      %v2748 = vmax.bf16 %v2553, %v2672
      %v2749 = vmax.bf16 %v2554, %v2675
      %v2750 = vmax.bf16 %v2555, %v2678
      %v2784 = vrot.slane %v2715, 4
      %v2785 = vrot.slane %v2716, 4
      %v2786 = vrot.slane %v2717, 4
      %v2787 = vrot.slane %v2718, 4
      %v2788 = vrot.slane %v2719, 4
      %v2789 = vrot.slane %v2720, 4
      %v2790 = vrot.slane %v2721, 4
      %v2791 = vrot.slane %v2722, 4
      %v2792 = vrot.slane %v2723, 4
      %v2793 = vrot.slane %v2724, 4
      %v2794 = vrot.slane %v2725, 4
      %v2795 = vrot.slane %v2727, 4
      %v2796 = vrot.slane %v2728, 4
      %v2797 = vrot.slane %v2729, 4
      %v2798 = vrot.slane %v2730, 4
      %v2799 = vrot.slane %v2731, 4
      %v2800 = vrot.slane %v2732, 4
      %v2801 = vrot.slane %v2733, 4
      %v2802 = vrot.slane %v2734, 4
      %v2803 = vrot.slane %v2735, 4
      %v2804 = vrot.slane %v2736, 4
      %v2805 = vrot.slane %v2737, 4
      %v2806 = vrot.slane %v2739, 4
      %v2807 = vrot.slane %v2740, 4
      %v2808 = vrot.slane %v2741, 4
      %v2809 = vrot.slane %v2742, 4
      %v2810 = vrot.slane %v2743, 4
      %v2811 = vrot.slane %v2744, 4
      %v2812 = vrot.slane %v2745, 4
      %v2813 = vrot.slane %v2746, 4
      %v2814 = vrot.slane %v2747, 4
      %v2815 = vrot.slane %v2748, 4
      %v2816 = vrot.slane %v2749, 4
      %v2817 = vsel %vm1213, %v2784, %v2785
      %v2818 = vsel %vm1213, %v2785, %v2786
      %v2819 = vsel %vm1213, %v2786, %v2787
      %v2820 = vsel %vm1213, %v2787, %v2788
      %v2821 = vsel %vm1213, %v2788, %v2789
      %v2822 = vsel %vm1213, %v2789, %v2790
      %v2823 = vsel %vm1213, %v2790, %v2791
      %v2824 = vsel %vm1213, %v2791, %v2792
      %v2825 = vsel %vm1213, %v2792, %v2793
      %v2826 = vsel %vm1213, %v2793, %v2794
      %v2827 = vsel %vm1213, %v2795, %v2796
      %v2828 = vsel %vm1213, %v2796, %v2797
      %v2829 = vsel %vm1213, %v2797, %v2798
      %v2830 = vsel %vm1213, %v2798, %v2799
      %v2831 = vsel %vm1213, %v2799, %v2800
      %v2832 = vsel %vm1213, %v2800, %v2801
      %v2833 = vsel %vm1213, %v2801, %v2802
      %v2834 = vsel %vm1213, %v2802, %v2803
      %v2835 = vsel %vm1213, %v2803, %v2804
      %v2836 = vsel %vm1213, %v2804, %v2805
      %v2837 = vsel %vm1213, %v2806, %v2807
      %v2838 = vsel %vm1213, %v2807, %v2808
      %v2839 = vsel %vm1213, %v2808, %v2809
      %v2840 = vsel %vm1213, %v2809, %v2810
      %v2841 = vsel %vm1213, %v2810, %v2811
      %v2842 = vsel %vm1213, %v2811, %v2812
      %v2843 = vsel %vm1213, %v2812, %v2813
      %v2844 = vsel %vm1213, %v2813, %v2814
      %v2845 = vsel %vm1213, %v2814, %v2815
      %v2846 = vsel %vm1213, %v2815, %v2816
      %v2877 = vmax.bf16 %v2715, %v2817
      %v2878 = vmax.bf16 %v2716, %v2818
      %v2879 = vmax.bf16 %v2717, %v2819
      %v2880 = vmax.bf16 %v2718, %v2820
      %v2881 = vmax.bf16 %v2719, %v2821
      %v2882 = vmax.bf16 %v2720, %v2822
      %v2883 = vmax.bf16 %v2721, %v2823
      %v2884 = vmax.bf16 %v2722, %v2824
      %v2885 = vmax.bf16 %v2723, %v2825
      %v2886 = vmax.bf16 %v2724, %v2826
      %v2887 = vmax.bf16 %v2727, %v2827
      %v2888 = vmax.bf16 %v2728, %v2828
      %v2889 = vmax.bf16 %v2729, %v2829
      %v2890 = vmax.bf16 %v2730, %v2830
      %v2891 = vmax.bf16 %v2731, %v2831
      %v2892 = vmax.bf16 %v2732, %v2832
      %v2893 = vmax.bf16 %v2733, %v2833
      %v2894 = vmax.bf16 %v2734, %v2834
      %v2895 = vmax.bf16 %v2735, %v2835
      %v2896 = vmax.bf16 %v2736, %v2836
      %v2897 = vmax.bf16 %v2739, %v2837
      %v2898 = vmax.bf16 %v2740, %v2838
      %v2899 = vmax.bf16 %v2741, %v2839
      %v2900 = vmax.bf16 %v2742, %v2840
      %v2901 = vmax.bf16 %v2743, %v2841
      %v2902 = vmax.bf16 %v2744, %v2842
      %v2903 = vmax.bf16 %v2745, %v2843
      %v2904 = vmax.bf16 %v2746, %v2844
      %v2905 = vmax.bf16 %v2747, %v2845
      %v2906 = vmax.bf16 %v2748, %v2846
      %v2907 = vmax.bf16 %v2877, %v2716
      %v2908 = vmax.bf16 %v2878, %v2717
      %v2909 = vmax.bf16 %v2879, %v2718
      %v2910 = vmax.bf16 %v2880, %v2719
      %v2911 = vmax.bf16 %v2881, %v2720
      %v2912 = vmax.bf16 %v2882, %v2721
      %v2913 = vmax.bf16 %v2883, %v2722
      %v2914 = vmax.bf16 %v2884, %v2723
      %v2915 = vmax.bf16 %v2885, %v2724
      %v2916 = vmax.bf16 %v2886, %v2725
      %v2917 = vmax.bf16 %v2887, %v2728
      %v2918 = vmax.bf16 %v2888, %v2729
      %v2919 = vmax.bf16 %v2889, %v2730
      %v2920 = vmax.bf16 %v2890, %v2731
      %v2921 = vmax.bf16 %v2891, %v2732
      %v2922 = vmax.bf16 %v2892, %v2733
      %v2923 = vmax.bf16 %v2893, %v2734
      %v2924 = vmax.bf16 %v2894, %v2735
      %v2925 = vmax.bf16 %v2895, %v2736
      %v2926 = vmax.bf16 %v2896, %v2737
      %v2927 = vmax.bf16 %v2897, %v2740
      %v2928 = vmax.bf16 %v2898, %v2741
      %v2929 = vmax.bf16 %v2899, %v2742
      %v2930 = vmax.bf16 %v2900, %v2743
      %v2931 = vmax.bf16 %v2901, %v2744
      %v2932 = vmax.bf16 %v2902, %v2745
      %v2933 = vmax.bf16 %v2903, %v2746
      %v2934 = vmax.bf16 %v2904, %v2747
      %v2935 = vmax.bf16 %v2905, %v2748
      %v2936 = vmax.bf16 %v2906, %v2749
      %v2940 = vrot.slane %v2726, 4
      %v2941 = vrot.slane %v2738, 4
      %v2942 = vrot.slane %v2750, 4
      %v2943 = vsel %vm1213, %v2794, %v2940
      %v2944 = vsel %vm1213, %v2805, %v2941
      %v2945 = vsel %vm1213, %v2816, %v2942
      %v2949 = vmax.bf16 %v2907, %v2818
      %v2950 = vmax.bf16 %v2908, %v2819
      %v2951 = vmax.bf16 %v2909, %v2820
      %v2952 = vmax.bf16 %v2910, %v2821
      %v2953 = vmax.bf16 %v2911, %v2822
      %v2954 = vmax.bf16 %v2912, %v2823
      %v2955 = vmax.bf16 %v2913, %v2824
      %v2956 = vmax.bf16 %v2914, %v2825
      %v2957 = vmax.bf16 %v2915, %v2826
      %v2958 = vmax.bf16 %v2916, %v2943
      %v2959 = vmax.bf16 %v2917, %v2828
      %v2960 = vmax.bf16 %v2918, %v2829
      %v2961 = vmax.bf16 %v2919, %v2830
      %v2962 = vmax.bf16 %v2920, %v2831
      %v2963 = vmax.bf16 %v2921, %v2832
      %v2964 = vmax.bf16 %v2922, %v2833
      %v2965 = vmax.bf16 %v2923, %v2834
      %v2966 = vmax.bf16 %v2924, %v2835
      %v2967 = vmax.bf16 %v2925, %v2836
      %v2968 = vmax.bf16 %v2926, %v2944
      %v2969 = vmax.bf16 %v2927, %v2838
      %v2970 = vmax.bf16 %v2928, %v2839
      %v2971 = vmax.bf16 %v2929, %v2840
      %v2972 = vmax.bf16 %v2930, %v2841
      %v2973 = vmax.bf16 %v2931, %v2842
      %v2974 = vmax.bf16 %v2932, %v2843
      %v2975 = vmax.bf16 %v2933, %v2844
      %v2976 = vmax.bf16 %v2934, %v2845
      %v2977 = vmax.bf16 %v2935, %v2846
      %v2978 = vmax.bf16 %v2936, %v2945
      %v2979 = vmax.bf16 %v2949, %v2717
      %v2980 = vmax.bf16 %v2950, %v2718
      %v2981 = vmax.bf16 %v2951, %v2719
      %v2982 = vmax.bf16 %v2952, %v2720
      %v2983 = vmax.bf16 %v2953, %v2721
      %v2984 = vmax.bf16 %v2954, %v2722
      %v2985 = vmax.bf16 %v2955, %v2723
      %v2986 = vmax.bf16 %v2956, %v2724
      %v2987 = vmax.bf16 %v2957, %v2725
      %v2988 = vmax.bf16 %v2958, %v2726
      %v2989 = vmax.bf16 %v2959, %v2729
      %v2990 = vmax.bf16 %v2960, %v2730
      %v2991 = vmax.bf16 %v2961, %v2731
      %v2992 = vmax.bf16 %v2962, %v2732
      %v2993 = vmax.bf16 %v2963, %v2733
      %v2994 = vmax.bf16 %v2964, %v2734
      %v2995 = vmax.bf16 %v2965, %v2735
      %v2996 = vmax.bf16 %v2966, %v2736
      %v2997 = vmax.bf16 %v2967, %v2737
      %v2998 = vmax.bf16 %v2968, %v2738
      %v2999 = vmax.bf16 %v2969, %v2741
      %v3000 = vmax.bf16 %v2970, %v2742
      %v3001 = vmax.bf16 %v2971, %v2743
      %v3002 = vmax.bf16 %v2972, %v2744
      %v3003 = vmax.bf16 %v2973, %v2745
      %v3004 = vmax.bf16 %v2974, %v2746
      %v3005 = vmax.bf16 %v2975, %v2747
      %v3006 = vmax.bf16 %v2976, %v2748
      %v3007 = vmax.bf16 %v2977, %v2749
      %v3008 = vmax.bf16 %v2978, %v2750
      %v3010 = vshrl.u32 %v2979, 16
      %v3012 = vrot.slane %v3010, 4
      %v3013 = vshll.u32 %v2979, 16
      %v3015 = vrot.slane %v3013, 5
      %v3016 = vor.u32 %v3012, %v3015
      %v3017 = vrot.slane %v3016, 4
      %v3019 = vshll.u32 %v2989, 16
      %v3021 = vrot.slane %v3019, 5
      %v3022 = vsel %vm1520, %v3017, %v3021
      %v3024 = vshrl.u32 %v2980, 16
      %v3026 = vrot.slane %v3024, 4
      %v3027 = vshll.u32 %v2980, 16
      %v3029 = vrot.slane %v3027, 5
      %v3030 = vor.u32 %v3026, %v3029
      %v3031 = vrot.slane %v3030, 4
      %v3033 = vshll.u32 %v2990, 16
      %v3035 = vrot.slane %v3033, 5
      %v3036 = vsel %vm1520, %v3031, %v3035
      %v3038 = vshrl.u32 %v2981, 16
      %v3040 = vrot.slane %v3038, 4
      %v3041 = vshll.u32 %v2981, 16
      %v3043 = vrot.slane %v3041, 5
      %v3044 = vor.u32 %v3040, %v3043
      %v3045 = vrot.slane %v3044, 4
      %v3047 = vshll.u32 %v2991, 16
      %v3049 = vrot.slane %v3047, 5
      %v3050 = vsel %vm1520, %v3045, %v3049
      %v3052 = vshrl.u32 %v2982, 16
      %v3054 = vrot.slane %v3052, 4
      %v3055 = vshll.u32 %v2982, 16
      %v3057 = vrot.slane %v3055, 5
      %v3058 = vor.u32 %v3054, %v3057
      %v3059 = vrot.slane %v3058, 4
      %v3061 = vshll.u32 %v2992, 16
      %v3063 = vrot.slane %v3061, 5
      %v3064 = vsel %vm1520, %v3059, %v3063
      %v3066 = vshrl.u32 %v2983, 16
      %v3068 = vrot.slane %v3066, 4
      %v3069 = vshll.u32 %v2983, 16
      %v3071 = vrot.slane %v3069, 5
      %v3072 = vor.u32 %v3068, %v3071
      %v3073 = vrot.slane %v3072, 4
      %v3075 = vshll.u32 %v2993, 16
      %v3077 = vrot.slane %v3075, 5
      %v3078 = vsel %vm1520, %v3073, %v3077
      %v3080 = vshrl.u32 %v2984, 16
      %v3082 = vrot.slane %v3080, 4
      %v3083 = vshll.u32 %v2984, 16
      %v3085 = vrot.slane %v3083, 5
      %v3086 = vor.u32 %v3082, %v3085
      %v3087 = vrot.slane %v3086, 4
      %v3089 = vshll.u32 %v2994, 16
      %v3091 = vrot.slane %v3089, 5
      %v3092 = vsel %vm1520, %v3087, %v3091
      %v3094 = vshrl.u32 %v2985, 16
      %v3096 = vrot.slane %v3094, 4
      %v3097 = vshll.u32 %v2985, 16
      %v3099 = vrot.slane %v3097, 5
      %v3100 = vor.u32 %v3096, %v3099
      %v3101 = vrot.slane %v3100, 4
      %v3103 = vshll.u32 %v2995, 16
      %v3105 = vrot.slane %v3103, 5
      %v3106 = vsel %vm1520, %v3101, %v3105
      %v3108 = vshrl.u32 %v2986, 16
      %v3110 = vrot.slane %v3108, 4
      %v3111 = vshll.u32 %v2986, 16
      %v3113 = vrot.slane %v3111, 5
      %v3114 = vor.u32 %v3110, %v3113
      %v3115 = vrot.slane %v3114, 4
      %v3117 = vshll.u32 %v2996, 16
      %v3119 = vrot.slane %v3117, 5
      %v3120 = vsel %vm1520, %v3115, %v3119
      %v3122 = vshrl.u32 %v2987, 16
      %v3124 = vrot.slane %v3122, 4
      %v3125 = vshll.u32 %v2987, 16
      %v3127 = vrot.slane %v3125, 5
      %v3128 = vor.u32 %v3124, %v3127
      %v3129 = vrot.slane %v3128, 4
      %v3131 = vshll.u32 %v2997, 16
      %v3133 = vrot.slane %v3131, 5
      %v3134 = vsel %vm1520, %v3129, %v3133
      %v3136 = vshrl.u32 %v2988, 16
      %v3138 = vrot.slane %v3136, 4
      %v3139 = vshll.u32 %v2988, 16
      %v3141 = vrot.slane %v3139, 5
      %v3142 = vor.u32 %v3138, %v3141
      %v3143 = vrot.slane %v3142, 4
      %v3145 = vshll.u32 %v2998, 16
      %v3147 = vrot.slane %v3145, 5
      %v3148 = vsel %vm1520, %v3143, %v3147
      %v3149 = vshrl.u32 %v2989, 16
      %v3151 = vrot.slane %v3149, 4
      %v3152 = vor.u32 %v3151, %v3021
      %v3153 = vrot.slane %v3152, 4
      %v3155 = vshll.u32 %v2999, 16
      %v3157 = vrot.slane %v3155, 5
      %v3158 = vsel %vm1520, %v3153, %v3157
      %v3159 = vshrl.u32 %v2990, 16
      %v3161 = vrot.slane %v3159, 4
      %v3162 = vor.u32 %v3161, %v3035
      %v3163 = vrot.slane %v3162, 4
      %v3165 = vshll.u32 %v3000, 16
      %v3167 = vrot.slane %v3165, 5
      %v3168 = vsel %vm1520, %v3163, %v3167
      %v3169 = vshrl.u32 %v2991, 16
      %v3171 = vrot.slane %v3169, 4
      %v3172 = vor.u32 %v3171, %v3049
      %v3173 = vrot.slane %v3172, 4
      %v3175 = vshll.u32 %v3001, 16
      %v3177 = vrot.slane %v3175, 5
      %v3178 = vsel %vm1520, %v3173, %v3177
      %v3179 = vshrl.u32 %v2992, 16
      %v3181 = vrot.slane %v3179, 4
      %v3182 = vor.u32 %v3181, %v3063
      %v3183 = vrot.slane %v3182, 4
      %v3185 = vshll.u32 %v3002, 16
      %v3187 = vrot.slane %v3185, 5
      %v3188 = vsel %vm1520, %v3183, %v3187
      %v3189 = vshrl.u32 %v2993, 16
      %v3191 = vrot.slane %v3189, 4
      %v3192 = vor.u32 %v3191, %v3077
      %v3193 = vrot.slane %v3192, 4
      %v3195 = vshll.u32 %v3003, 16
      %v3197 = vrot.slane %v3195, 5
      %v3198 = vsel %vm1520, %v3193, %v3197
      %v3199 = vshrl.u32 %v2994, 16
      %v3201 = vrot.slane %v3199, 4
      %v3202 = vor.u32 %v3201, %v3091
      %v3203 = vrot.slane %v3202, 4
      %v3205 = vshll.u32 %v3004, 16
      %v3207 = vrot.slane %v3205, 5
      %v3208 = vsel %vm1520, %v3203, %v3207
      %v3209 = vshrl.u32 %v2995, 16
      %v3211 = vrot.slane %v3209, 4
      %v3212 = vor.u32 %v3211, %v3105
      %v3213 = vrot.slane %v3212, 4
      %v3215 = vshll.u32 %v3005, 16
      %v3217 = vrot.slane %v3215, 5
      %v3218 = vsel %vm1520, %v3213, %v3217
      %v3219 = vshrl.u32 %v2996, 16
      %v3221 = vrot.slane %v3219, 4
      %v3222 = vor.u32 %v3221, %v3119
      %v3223 = vrot.slane %v3222, 4
      %v3225 = vshll.u32 %v3006, 16
      %v3227 = vrot.slane %v3225, 5
      %v3228 = vsel %vm1520, %v3223, %v3227
      %v3229 = vshrl.u32 %v2997, 16
      %v3231 = vrot.slane %v3229, 4
      %v3232 = vor.u32 %v3231, %v3133
      %v3233 = vrot.slane %v3232, 4
      %v3235 = vshll.u32 %v3007, 16
      %v3237 = vrot.slane %v3235, 5
      %v3238 = vsel %vm1520, %v3233, %v3237
      %v3239 = vshrl.u32 %v2998, 16
      %v3241 = vrot.slane %v3239, 4
      %v3242 = vor.u32 %v3241, %v3147
      %v3243 = vrot.slane %v3242, 4
      %v3245 = vshll.u32 %v3008, 16
      %v3247 = vrot.slane %v3245, 5
      %v3248 = vsel %vm1520, %v3243, %v3247
      %v3249 = vshrl.u32 %v2999, 16
      %v3251 = vrot.slane %v3249, 4
      %v3252 = vor.u32 %v3251, %v3157
      %v3253 = vrot.slane %v3252, 4
      %v3254 = vshrl.u32 %v3000, 16
      %v3256 = vrot.slane %v3254, 4
      %v3257 = vor.u32 %v3256, %v3167
      %v3258 = vrot.slane %v3257, 4
      %v3259 = vshrl.u32 %v3001, 16
      %v3261 = vrot.slane %v3259, 4
      %v3262 = vor.u32 %v3261, %v3177
      %v3263 = vrot.slane %v3262, 4
      %v3264 = vshrl.u32 %v3002, 16
      %v3266 = vrot.slane %v3264, 4
      %v3267 = vor.u32 %v3266, %v3187
      %v3268 = vrot.slane %v3267, 4
      %v3269 = vshrl.u32 %v3003, 16
      %v3271 = vrot.slane %v3269, 4
      %v3272 = vor.u32 %v3271, %v3197
      %v3273 = vrot.slane %v3272, 4
      %v3274 = vshrl.u32 %v3004, 16
      %v3276 = vrot.slane %v3274, 4
      %v3277 = vor.u32 %v3276, %v3207
      %v3278 = vrot.slane %v3277, 4
      %v3279 = vshrl.u32 %v3005, 16
      %v3281 = vrot.slane %v3279, 4
      %v3282 = vor.u32 %v3281, %v3217
      %v3283 = vrot.slane %v3282, 4
      %v3284 = vshrl.u32 %v3006, 16
      %v3286 = vrot.slane %v3284, 4
      %v3287 = vor.u32 %v3286, %v3227
      %v3288 = vrot.slane %v3287, 4
      %v3289 = vshrl.u32 %v3007, 16
      %v3291 = vrot.slane %v3289, 4
      %v3292 = vor.u32 %v3291, %v3237
      %v3293 = vrot.slane %v3292, 4
      %v3294 = vshrl.u32 %v3008, 16
      %v3296 = vrot.slane %v3294, 4
      %v3297 = vor.u32 %v3296, %v3247
      %v3298 = vrot.slane %v3297, 4
      %v3329 = vmax.bf16 %v2979, %v3022
      %v3330 = vmax.bf16 %v2980, %v3036
      %v3331 = vmax.bf16 %v2981, %v3050
      %v3332 = vmax.bf16 %v2982, %v3064
      %v3333 = vmax.bf16 %v2983, %v3078
      %v3334 = vmax.bf16 %v2984, %v3092
      %v3335 = vmax.bf16 %v2985, %v3106
      %v3336 = vmax.bf16 %v2986, %v3120
      %v3337 = vmax.bf16 %v2987, %v3134
      %v3338 = vmax.bf16 %v2988, %v3148
      %v3339 = vmax.bf16 %v2989, %v3158
      %v3340 = vmax.bf16 %v2990, %v3168
      %v3341 = vmax.bf16 %v2991, %v3178
      %v3342 = vmax.bf16 %v2992, %v3188
      %v3343 = vmax.bf16 %v2993, %v3198
      %v3344 = vmax.bf16 %v2994, %v3208
      %v3345 = vmax.bf16 %v2995, %v3218
      %v3346 = vmax.bf16 %v2996, %v3228
      %v3347 = vmax.bf16 %v2997, %v3238
      %v3348 = vmax.bf16 %v2998, %v3248
      %v3349 = vmax.bf16 %v2999, %v3253
      %v3350 = vmax.bf16 %v3000, %v3258
      %v3351 = vmax.bf16 %v3001, %v3263
      %v3352 = vmax.bf16 %v3002, %v3268
      %v3353 = vmax.bf16 %v3003, %v3273
      %v3354 = vmax.bf16 %v3004, %v3278
      %v3355 = vmax.bf16 %v3005, %v3283
      %v3356 = vmax.bf16 %v3006, %v3288
      %v3357 = vmax.bf16 %v3007, %v3293
      %v3358 = vmax.bf16 %v3008, %v3298
      %v3389 = vrot.slane %v2979, 5
      %v3390 = vrot.slane %v3389, 4
      %v3391 = vrot.slane %v2989, 5
      %v3392 = vsel %vm964, %v3390, %v3391
      %v3393 = vrot.slane %v2980, 5
      %v3394 = vrot.slane %v3393, 4
      %v3395 = vrot.slane %v2990, 5
      %v3396 = vsel %vm964, %v3394, %v3395
      %v3397 = vrot.slane %v2981, 5
      %v3398 = vrot.slane %v3397, 4
      %v3399 = vrot.slane %v2991, 5
      %v3400 = vsel %vm964, %v3398, %v3399
      %v3401 = vrot.slane %v2982, 5
      %v3402 = vrot.slane %v3401, 4
      %v3403 = vrot.slane %v2992, 5
      %v3404 = vsel %vm964, %v3402, %v3403
      %v3405 = vrot.slane %v2983, 5
      %v3406 = vrot.slane %v3405, 4
      %v3407 = vrot.slane %v2993, 5
      %v3408 = vsel %vm964, %v3406, %v3407
      %v3409 = vrot.slane %v2984, 5
      %v3410 = vrot.slane %v3409, 4
      %v3411 = vrot.slane %v2994, 5
      %v3412 = vsel %vm964, %v3410, %v3411
      %v3413 = vrot.slane %v2985, 5
      %v3414 = vrot.slane %v3413, 4
      %v3415 = vrot.slane %v2995, 5
      %v3416 = vsel %vm964, %v3414, %v3415
      %v3417 = vrot.slane %v2986, 5
      %v3418 = vrot.slane %v3417, 4
      %v3419 = vrot.slane %v2996, 5
      %v3420 = vsel %vm964, %v3418, %v3419
      %v3421 = vrot.slane %v2987, 5
      %v3422 = vrot.slane %v3421, 4
      %v3423 = vrot.slane %v2997, 5
      %v3424 = vsel %vm964, %v3422, %v3423
      %v3425 = vrot.slane %v2988, 5
      %v3426 = vrot.slane %v3425, 4
      %v3427 = vrot.slane %v2998, 5
      %v3428 = vsel %vm964, %v3426, %v3427
      %v3429 = vrot.slane %v3391, 4
      %v3430 = vrot.slane %v2999, 5
      %v3431 = vsel %vm964, %v3429, %v3430
      %v3432 = vrot.slane %v3395, 4
      %v3433 = vrot.slane %v3000, 5
      %v3434 = vsel %vm964, %v3432, %v3433
      %v3435 = vrot.slane %v3399, 4
      %v3436 = vrot.slane %v3001, 5
      %v3437 = vsel %vm964, %v3435, %v3436
      %v3438 = vrot.slane %v3403, 4
      %v3439 = vrot.slane %v3002, 5
      %v3440 = vsel %vm964, %v3438, %v3439
      %v3441 = vrot.slane %v3407, 4
      %v3442 = vrot.slane %v3003, 5
      %v3443 = vsel %vm964, %v3441, %v3442
      %v3444 = vrot.slane %v3411, 4
      %v3445 = vrot.slane %v3004, 5
      %v3446 = vsel %vm964, %v3444, %v3445
      %v3447 = vrot.slane %v3415, 4
      %v3448 = vrot.slane %v3005, 5
      %v3449 = vsel %vm964, %v3447, %v3448
      %v3450 = vrot.slane %v3419, 4
      %v3451 = vrot.slane %v3006, 5
      %v3452 = vsel %vm964, %v3450, %v3451
      %v3453 = vrot.slane %v3423, 4
      %v3454 = vrot.slane %v3007, 5
      %v3455 = vsel %vm964, %v3453, %v3454
      %v3456 = vrot.slane %v3427, 4
      %v3457 = vrot.slane %v3008, 5
      %v3458 = vsel %vm964, %v3456, %v3457
      %v3459 = vrot.slane %v3430, 4
      %v3460 = vrot.slane %v3433, 4
      %v3461 = vrot.slane %v3436, 4
      %v3462 = vrot.slane %v3439, 4
      %v3463 = vrot.slane %v3442, 4
      %v3464 = vrot.slane %v3445, 4
      %v3465 = vrot.slane %v3448, 4
      %v3466 = vrot.slane %v3451, 4
      %v3467 = vrot.slane %v3454, 4
      %v3468 = vrot.slane %v3457, 4
      %v3499 = vmax.bf16 %v3329, %v3392
      %v3500 = vmax.bf16 %v3330, %v3396
      %v3501 = vmax.bf16 %v3331, %v3400
      %v3502 = vmax.bf16 %v3332, %v3404
      %v3503 = vmax.bf16 %v3333, %v3408
      %v3504 = vmax.bf16 %v3334, %v3412
      %v3505 = vmax.bf16 %v3335, %v3416
      %v3506 = vmax.bf16 %v3336, %v3420
      %v3507 = vmax.bf16 %v3337, %v3424
      %v3508 = vmax.bf16 %v3338, %v3428
      %v3509 = vmax.bf16 %v3339, %v3431
      %v3510 = vmax.bf16 %v3340, %v3434
      %v3511 = vmax.bf16 %v3341, %v3437
      %v3512 = vmax.bf16 %v3342, %v3440
      %v3513 = vmax.bf16 %v3343, %v3443
      %v3514 = vmax.bf16 %v3344, %v3446
      %v3515 = vmax.bf16 %v3345, %v3449
      %v3516 = vmax.bf16 %v3346, %v3452
      %v3517 = vmax.bf16 %v3347, %v3455
      %v3518 = vmax.bf16 %v3348, %v3458
      %v3519 = vmax.bf16 %v3349, %v3459
      %v3520 = vmax.bf16 %v3350, %v3460
      %v3521 = vmax.bf16 %v3351, %v3461
      %v3522 = vmax.bf16 %v3352, %v3462
      %v3523 = vmax.bf16 %v3353, %v3463
      %v3524 = vmax.bf16 %v3354, %v3464
      %v3525 = vmax.bf16 %v3355, %v3465
      %v3526 = vmax.bf16 %v3356, %v3466
      %v3527 = vmax.bf16 %v3357, %v3467
      %v3528 = vmax.bf16 %v3358, %v3468
      %v3529 = vrot.slane %v3010, 5
      %v3530 = vrot.slane %v3013, 6
      %v3531 = vor.u32 %v3529, %v3530
      %v3532 = vrot.slane %v3531, 4
      %v3533 = vrot.slane %v3149, 5
      %v3534 = vrot.slane %v3019, 6
      %v3535 = vor.u32 %v3533, %v3534
      %v3536 = vsel %vm2243, %v3532, %v3535
      %v3537 = vrot.slane %v3024, 5
      %v3538 = vrot.slane %v3027, 6
      %v3539 = vor.u32 %v3537, %v3538
      %v3540 = vrot.slane %v3539, 4
      %v3541 = vrot.slane %v3159, 5
      %v3542 = vrot.slane %v3033, 6
      %v3543 = vor.u32 %v3541, %v3542
      %v3544 = vsel %vm2243, %v3540, %v3543
      %v3545 = vrot.slane %v3038, 5
      %v3546 = vrot.slane %v3041, 6
      %v3547 = vor.u32 %v3545, %v3546
      %v3548 = vrot.slane %v3547, 4
      %v3549 = vrot.slane %v3169, 5
      %v3550 = vrot.slane %v3047, 6
      %v3551 = vor.u32 %v3549, %v3550
      %v3552 = vsel %vm2243, %v3548, %v3551
      %v3553 = vrot.slane %v3052, 5
      %v3554 = vrot.slane %v3055, 6
      %v3555 = vor.u32 %v3553, %v3554
      %v3556 = vrot.slane %v3555, 4
      %v3557 = vrot.slane %v3179, 5
      %v3558 = vrot.slane %v3061, 6
      %v3559 = vor.u32 %v3557, %v3558
      %v3560 = vsel %vm2243, %v3556, %v3559
      %v3561 = vrot.slane %v3066, 5
      %v3562 = vrot.slane %v3069, 6
      %v3563 = vor.u32 %v3561, %v3562
      %v3564 = vrot.slane %v3563, 4
      %v3565 = vrot.slane %v3189, 5
      %v3566 = vrot.slane %v3075, 6
      %v3567 = vor.u32 %v3565, %v3566
      %v3568 = vsel %vm2243, %v3564, %v3567
      %v3569 = vrot.slane %v3080, 5
      %v3570 = vrot.slane %v3083, 6
      %v3571 = vor.u32 %v3569, %v3570
      %v3572 = vrot.slane %v3571, 4
      %v3573 = vrot.slane %v3199, 5
      %v3574 = vrot.slane %v3089, 6
      %v3575 = vor.u32 %v3573, %v3574
      %v3576 = vsel %vm2243, %v3572, %v3575
      %v3577 = vrot.slane %v3094, 5
      %v3578 = vrot.slane %v3097, 6
      %v3579 = vor.u32 %v3577, %v3578
      %v3580 = vrot.slane %v3579, 4
      %v3581 = vrot.slane %v3209, 5
      %v3582 = vrot.slane %v3103, 6
      %v3583 = vor.u32 %v3581, %v3582
      %v3584 = vsel %vm2243, %v3580, %v3583
      %v3585 = vrot.slane %v3108, 5
      %v3586 = vrot.slane %v3111, 6
      %v3587 = vor.u32 %v3585, %v3586
      %v3588 = vrot.slane %v3587, 4
      %v3589 = vrot.slane %v3219, 5
      %v3590 = vrot.slane %v3117, 6
      %v3591 = vor.u32 %v3589, %v3590
      %v3592 = vsel %vm2243, %v3588, %v3591
      %v3593 = vrot.slane %v3122, 5
      %v3594 = vrot.slane %v3125, 6
      %v3595 = vor.u32 %v3593, %v3594
      %v3596 = vrot.slane %v3595, 4
      %v3597 = vrot.slane %v3229, 5
      %v3598 = vrot.slane %v3131, 6
      %v3599 = vor.u32 %v3597, %v3598
      %v3600 = vsel %vm2243, %v3596, %v3599
      %v3601 = vrot.slane %v3136, 5
      %v3602 = vrot.slane %v3139, 6
      %v3603 = vor.u32 %v3601, %v3602
      %v3604 = vrot.slane %v3603, 4
      %v3605 = vrot.slane %v3239, 5
      %v3606 = vrot.slane %v3145, 6
      %v3607 = vor.u32 %v3605, %v3606
      %v3608 = vsel %vm2243, %v3604, %v3607
      %v3609 = vrot.slane %v3535, 4
      %v3610 = vrot.slane %v3249, 5
      %v3611 = vrot.slane %v3155, 6
      %v3612 = vor.u32 %v3610, %v3611
      %v3613 = vsel %vm2243, %v3609, %v3612
      %v3614 = vrot.slane %v3543, 4
      %v3615 = vrot.slane %v3254, 5
      %v3616 = vrot.slane %v3165, 6
      %v3617 = vor.u32 %v3615, %v3616
      %v3618 = vsel %vm2243, %v3614, %v3617
      %v3619 = vrot.slane %v3551, 4
      %v3620 = vrot.slane %v3259, 5
      %v3621 = vrot.slane %v3175, 6
      %v3622 = vor.u32 %v3620, %v3621
      %v3623 = vsel %vm2243, %v3619, %v3622
      %v3624 = vrot.slane %v3559, 4
      %v3625 = vrot.slane %v3264, 5
      %v3626 = vrot.slane %v3185, 6
      %v3627 = vor.u32 %v3625, %v3626
      %v3628 = vsel %vm2243, %v3624, %v3627
      %v3629 = vrot.slane %v3567, 4
      %v3630 = vrot.slane %v3269, 5
      %v3631 = vrot.slane %v3195, 6
      %v3632 = vor.u32 %v3630, %v3631
      %v3633 = vsel %vm2243, %v3629, %v3632
      %v3634 = vrot.slane %v3575, 4
      %v3635 = vrot.slane %v3274, 5
      %v3636 = vrot.slane %v3205, 6
      %v3637 = vor.u32 %v3635, %v3636
      %v3638 = vsel %vm2243, %v3634, %v3637
      %v3639 = vrot.slane %v3583, 4
      %v3640 = vrot.slane %v3279, 5
      %v3641 = vrot.slane %v3215, 6
      %v3642 = vor.u32 %v3640, %v3641
      %v3643 = vsel %vm2243, %v3639, %v3642
      %v3644 = vrot.slane %v3591, 4
      %v3645 = vrot.slane %v3284, 5
      %v3646 = vrot.slane %v3225, 6
      %v3647 = vor.u32 %v3645, %v3646
      %v3648 = vsel %vm2243, %v3644, %v3647
      %v3649 = vrot.slane %v3599, 4
      %v3650 = vrot.slane %v3289, 5
      %v3651 = vrot.slane %v3235, 6
      %v3652 = vor.u32 %v3650, %v3651
      %v3653 = vsel %vm2243, %v3649, %v3652
      %v3654 = vrot.slane %v3607, 4
      %v3655 = vrot.slane %v3294, 5
      %v3656 = vrot.slane %v3245, 6
      %v3657 = vor.u32 %v3655, %v3656
      %v3658 = vsel %vm2243, %v3654, %v3657
      %v3659 = vrot.slane %v3612, 4
      %v3660 = vrot.slane %v3617, 4
      %v3661 = vrot.slane %v3622, 4
      %v3662 = vrot.slane %v3627, 4
      %v3663 = vrot.slane %v3632, 4
      %v3664 = vrot.slane %v3637, 4
      %v3665 = vrot.slane %v3642, 4
      %v3666 = vrot.slane %v3647, 4
      %v3667 = vrot.slane %v3652, 4
      %v3668 = vrot.slane %v3657, 4
      %v3699 = vmax.bf16 %v3499, %v3536
      %v3700 = vmax.bf16 %v3500, %v3544
      %v3701 = vmax.bf16 %v3501, %v3552
      %v3702 = vmax.bf16 %v3502, %v3560
      %v3703 = vmax.bf16 %v3503, %v3568
      %v3704 = vmax.bf16 %v3504, %v3576
      %v3705 = vmax.bf16 %v3505, %v3584
      %v3706 = vmax.bf16 %v3506, %v3592
      %v3707 = vmax.bf16 %v3507, %v3600
      %v3708 = vmax.bf16 %v3508, %v3608
      %v3709 = vmax.bf16 %v3509, %v3613
      %v3710 = vmax.bf16 %v3510, %v3618
      %v3711 = vmax.bf16 %v3511, %v3623
      %v3712 = vmax.bf16 %v3512, %v3628
      %v3713 = vmax.bf16 %v3513, %v3633
      %v3714 = vmax.bf16 %v3514, %v3638
      %v3715 = vmax.bf16 %v3515, %v3643
      %v3716 = vmax.bf16 %v3516, %v3648
      %v3717 = vmax.bf16 %v3517, %v3653
      %v3718 = vmax.bf16 %v3518, %v3658
      %v3719 = vmax.bf16 %v3519, %v3659
      %v3720 = vmax.bf16 %v3520, %v3660
      %v3721 = vmax.bf16 %v3521, %v3661
      %v3722 = vmax.bf16 %v3522, %v3662
      %v3723 = vmax.bf16 %v3523, %v3663
      %v3724 = vmax.bf16 %v3524, %v3664
      %v3725 = vmax.bf16 %v3525, %v3665
      %v3726 = vmax.bf16 %v3526, %v3666
      %v3727 = vmax.bf16 %v3527, %v3667
      %v3728 = vmax.bf16 %v3528, %v3668
      %v3729 = vrot.slane %v2979, 6
      %v3730 = vrot.slane %v3729, 4
      %v3731 = vrot.slane %v2989, 6
      %v3732 = vsel %vm2558, %v3730, %v3731
      %v3733 = vrot.slane %v2980, 6
      %v3734 = vrot.slane %v3733, 4
      %v3735 = vrot.slane %v2990, 6
      %v3736 = vsel %vm2558, %v3734, %v3735
      %v3737 = vrot.slane %v2981, 6
      %v3738 = vrot.slane %v3737, 4
      %v3739 = vrot.slane %v2991, 6
      %v3740 = vsel %vm2558, %v3738, %v3739
      %v3741 = vrot.slane %v2982, 6
      %v3742 = vrot.slane %v3741, 4
      %v3743 = vrot.slane %v2992, 6
      %v3744 = vsel %vm2558, %v3742, %v3743
      %v3745 = vrot.slane %v2983, 6
      %v3746 = vrot.slane %v3745, 4
      %v3747 = vrot.slane %v2993, 6
      %v3748 = vsel %vm2558, %v3746, %v3747
      %v3749 = vrot.slane %v2984, 6
      %v3750 = vrot.slane %v3749, 4
      %v3751 = vrot.slane %v2994, 6
      %v3752 = vsel %vm2558, %v3750, %v3751
      %v3753 = vrot.slane %v2985, 6
      %v3754 = vrot.slane %v3753, 4
      %v3755 = vrot.slane %v2995, 6
      %v3756 = vsel %vm2558, %v3754, %v3755
      %v3757 = vrot.slane %v2986, 6
      %v3758 = vrot.slane %v3757, 4
      %v3759 = vrot.slane %v2996, 6
      %v3760 = vsel %vm2558, %v3758, %v3759
      %v3761 = vrot.slane %v2987, 6
      %v3762 = vrot.slane %v3761, 4
      %v3763 = vrot.slane %v2997, 6
      %v3764 = vsel %vm2558, %v3762, %v3763
      %v3765 = vrot.slane %v2988, 6
      %v3766 = vrot.slane %v3765, 4
      %v3767 = vrot.slane %v2998, 6
      %v3768 = vsel %vm2558, %v3766, %v3767
      %v3769 = vrot.slane %v3731, 4
      %v3770 = vrot.slane %v2999, 6
      %v3771 = vsel %vm2558, %v3769, %v3770
      %v3772 = vrot.slane %v3735, 4
      %v3773 = vrot.slane %v3000, 6
      %v3774 = vsel %vm2558, %v3772, %v3773
      %v3775 = vrot.slane %v3739, 4
      %v3776 = vrot.slane %v3001, 6
      %v3777 = vsel %vm2558, %v3775, %v3776
      %v3778 = vrot.slane %v3743, 4
      %v3779 = vrot.slane %v3002, 6
      %v3780 = vsel %vm2558, %v3778, %v3779
      %v3781 = vrot.slane %v3747, 4
      %v3782 = vrot.slane %v3003, 6
      %v3783 = vsel %vm2558, %v3781, %v3782
      %v3784 = vrot.slane %v3751, 4
      %v3785 = vrot.slane %v3004, 6
      %v3786 = vsel %vm2558, %v3784, %v3785
      %v3787 = vrot.slane %v3755, 4
      %v3788 = vrot.slane %v3005, 6
      %v3789 = vsel %vm2558, %v3787, %v3788
      %v3790 = vrot.slane %v3759, 4
      %v3791 = vrot.slane %v3006, 6
      %v3792 = vsel %vm2558, %v3790, %v3791
      %v3793 = vrot.slane %v3763, 4
      %v3794 = vrot.slane %v3007, 6
      %v3795 = vsel %vm2558, %v3793, %v3794
      %v3796 = vrot.slane %v3767, 4
      %v3797 = vrot.slane %v3008, 6
      %v3798 = vsel %vm2558, %v3796, %v3797
      %v3799 = vrot.slane %v3770, 4
      %v3800 = vrot.slane %v3773, 4
      %v3801 = vrot.slane %v3776, 4
      %v3802 = vrot.slane %v3779, 4
      %v3803 = vrot.slane %v3782, 4
      %v3804 = vrot.slane %v3785, 4
      %v3805 = vrot.slane %v3788, 4
      %v3806 = vrot.slane %v3791, 4
      %v3807 = vrot.slane %v3794, 4
      %v3808 = vrot.slane %v3797, 4
      %v3839 = vmax.bf16 %v3699, %v3732
      %v3840 = vmax.bf16 %v3700, %v3736
      %v3841 = vmax.bf16 %v3701, %v3740
      %v3842 = vmax.bf16 %v3702, %v3744
      %v3843 = vmax.bf16 %v3703, %v3748
      %v3844 = vmax.bf16 %v3704, %v3752
      %v3845 = vmax.bf16 %v3705, %v3756
      %v3846 = vmax.bf16 %v3706, %v3760
      %v3847 = vmax.bf16 %v3707, %v3764
      %v3848 = vmax.bf16 %v3708, %v3768
      %v3849 = vmax.bf16 %v3709, %v3771
      %v3850 = vmax.bf16 %v3710, %v3774
      %v3851 = vmax.bf16 %v3711, %v3777
      %v3852 = vmax.bf16 %v3712, %v3780
      %v3853 = vmax.bf16 %v3713, %v3783
      %v3854 = vmax.bf16 %v3714, %v3786
      %v3855 = vmax.bf16 %v3715, %v3789
      %v3856 = vmax.bf16 %v3716, %v3792
      %v3857 = vmax.bf16 %v3717, %v3795
      %v3858 = vmax.bf16 %v3718, %v3798
      %v3859 = vmax.bf16 %v3719, %v3799
      %v3860 = vmax.bf16 %v3720, %v3800
      %v3861 = vmax.bf16 %v3721, %v3801
      %v3862 = vmax.bf16 %v3722, %v3802
      %v3863 = vmax.bf16 %v3723, %v3803
      %v3864 = vmax.bf16 %v3724, %v3804
      %v3865 = vmax.bf16 %v3725, %v3805
      %v3866 = vmax.bf16 %v3726, %v3806
      %v3867 = vmax.bf16 %v3727, %v3807
      %v3868 = vmax.bf16 %v3728, %v3808
      %v3896 = vrot.slane %v3839, 4
      %v3897 = vrot.slane %v3840, 4
      %v3898 = vrot.slane %v3841, 4
      %v3899 = vrot.slane %v3842, 4
      %v3900 = vrot.slane %v3843, 4
      %v3901 = vrot.slane %v3844, 4
      %v3902 = vrot.slane %v3845, 4
      %v3903 = vrot.slane %v3846, 4
      %v3904 = vrot.slane %v3847, 4
      %v3905 = vrot.slane %v3849, 4
      %v3906 = vrot.slane %v3850, 4
      %v3907 = vrot.slane %v3851, 4
      %v3908 = vrot.slane %v3852, 4
      %v3909 = vrot.slane %v3853, 4
      %v3910 = vrot.slane %v3854, 4
      %v3911 = vrot.slane %v3855, 4
      %v3912 = vrot.slane %v3856, 4
      %v3913 = vrot.slane %v3857, 4
      %v3914 = vrot.slane %v3859, 4
      %v3915 = vrot.slane %v3860, 4
      %v3916 = vrot.slane %v3861, 4
      %v3917 = vrot.slane %v3862, 4
      %v3918 = vrot.slane %v3863, 4
      %v3919 = vrot.slane %v3864, 4
      %v3920 = vrot.slane %v3865, 4
      %v3921 = vrot.slane %v3866, 4
      %v3922 = vrot.slane %v3867, 4
      %v3923 = vsel %vm1213, %v3896, %v3897
      %v3924 = vsel %vm1213, %v3897, %v3898
      %v3925 = vsel %vm1213, %v3898, %v3899
      %v3926 = vsel %vm1213, %v3899, %v3900
      %v3927 = vsel %vm1213, %v3900, %v3901
      %v3928 = vsel %vm1213, %v3901, %v3902
      %v3929 = vsel %vm1213, %v3902, %v3903
      %v3930 = vsel %vm1213, %v3903, %v3904
      %v3931 = vsel %vm1213, %v3905, %v3906
      %v3932 = vsel %vm1213, %v3906, %v3907
      %v3933 = vsel %vm1213, %v3907, %v3908
      %v3934 = vsel %vm1213, %v3908, %v3909
      %v3935 = vsel %vm1213, %v3909, %v3910
      %v3936 = vsel %vm1213, %v3910, %v3911
      %v3937 = vsel %vm1213, %v3911, %v3912
      %v3938 = vsel %vm1213, %v3912, %v3913
      %v3939 = vsel %vm1213, %v3914, %v3915
      %v3940 = vsel %vm1213, %v3915, %v3916
      %v3941 = vsel %vm1213, %v3916, %v3917
      %v3942 = vsel %vm1213, %v3917, %v3918
      %v3943 = vsel %vm1213, %v3918, %v3919
      %v3944 = vsel %vm1213, %v3919, %v3920
      %v3945 = vsel %vm1213, %v3920, %v3921
      %v3946 = vsel %vm1213, %v3921, %v3922
      %v3971 = vmax.bf16 %v3839, %v3923
      %v3972 = vmax.bf16 %v3840, %v3924
      %v3973 = vmax.bf16 %v3841, %v3925
      %v3974 = vmax.bf16 %v3842, %v3926
      %v3975 = vmax.bf16 %v3843, %v3927
      %v3976 = vmax.bf16 %v3844, %v3928
      %v3977 = vmax.bf16 %v3845, %v3929
      %v3978 = vmax.bf16 %v3846, %v3930
      %v3979 = vmax.bf16 %v3849, %v3931
      %v3980 = vmax.bf16 %v3850, %v3932
      %v3981 = vmax.bf16 %v3851, %v3933
      %v3982 = vmax.bf16 %v3852, %v3934
      %v3983 = vmax.bf16 %v3853, %v3935
      %v3984 = vmax.bf16 %v3854, %v3936
      %v3985 = vmax.bf16 %v3855, %v3937
      %v3986 = vmax.bf16 %v3856, %v3938
      %v3987 = vmax.bf16 %v3859, %v3939
      %v3988 = vmax.bf16 %v3860, %v3940
      %v3989 = vmax.bf16 %v3861, %v3941
      %v3990 = vmax.bf16 %v3862, %v3942
      %v3991 = vmax.bf16 %v3863, %v3943
      %v3992 = vmax.bf16 %v3864, %v3944
      %v3993 = vmax.bf16 %v3865, %v3945
      %v3994 = vmax.bf16 %v3866, %v3946
      %v3995 = vmax.bf16 %v3971, %v3840
      %v3996 = vmax.bf16 %v3972, %v3841
      %v3997 = vmax.bf16 %v3973, %v3842
      %v3998 = vmax.bf16 %v3974, %v3843
      %v3999 = vmax.bf16 %v3975, %v3844
      %v4000 = vmax.bf16 %v3976, %v3845
      %v4001 = vmax.bf16 %v3977, %v3846
      %v4002 = vmax.bf16 %v3978, %v3847
      %v4003 = vmax.bf16 %v3979, %v3850
      %v4004 = vmax.bf16 %v3980, %v3851
      %v4005 = vmax.bf16 %v3981, %v3852
      %v4006 = vmax.bf16 %v3982, %v3853
      %v4007 = vmax.bf16 %v3983, %v3854
      %v4008 = vmax.bf16 %v3984, %v3855
      %v4009 = vmax.bf16 %v3985, %v3856
      %v4010 = vmax.bf16 %v3986, %v3857
      %v4011 = vmax.bf16 %v3987, %v3860
      %v4012 = vmax.bf16 %v3988, %v3861
      %v4013 = vmax.bf16 %v3989, %v3862
      %v4014 = vmax.bf16 %v3990, %v3863
      %v4015 = vmax.bf16 %v3991, %v3864
      %v4016 = vmax.bf16 %v3992, %v3865
      %v4017 = vmax.bf16 %v3993, %v3866
      %v4018 = vmax.bf16 %v3994, %v3867
      %v4022 = vrot.slane %v3848, 4
      %v4023 = vrot.slane %v3858, 4
      %v4024 = vrot.slane %v3868, 4
      %v4025 = vsel %vm1213, %v3904, %v4022
      %v4026 = vsel %vm1213, %v3913, %v4023
      %v4027 = vsel %vm1213, %v3922, %v4024
      %v4031 = vmax.bf16 %v3995, %v3924
      %v4032 = vmax.bf16 %v3996, %v3925
      %v4033 = vmax.bf16 %v3997, %v3926
      %v4034 = vmax.bf16 %v3998, %v3927
      %v4035 = vmax.bf16 %v3999, %v3928
      %v4036 = vmax.bf16 %v4000, %v3929
      %v4037 = vmax.bf16 %v4001, %v3930
      %v4038 = vmax.bf16 %v4002, %v4025
      %v4039 = vmax.bf16 %v4003, %v3932
      %v4040 = vmax.bf16 %v4004, %v3933
      %v4041 = vmax.bf16 %v4005, %v3934
      %v4042 = vmax.bf16 %v4006, %v3935
      %v4043 = vmax.bf16 %v4007, %v3936
      %v4044 = vmax.bf16 %v4008, %v3937
      %v4045 = vmax.bf16 %v4009, %v3938
      %v4046 = vmax.bf16 %v4010, %v4026
      %v4047 = vmax.bf16 %v4011, %v3940
      %v4048 = vmax.bf16 %v4012, %v3941
      %v4049 = vmax.bf16 %v4013, %v3942
      %v4050 = vmax.bf16 %v4014, %v3943
      %v4051 = vmax.bf16 %v4015, %v3944
      %v4052 = vmax.bf16 %v4016, %v3945
      %v4053 = vmax.bf16 %v4017, %v3946
      %v4054 = vmax.bf16 %v4018, %v4027
      %v4055 = vmax.bf16 %v4031, %v3841
      %v4056 = vmax.bf16 %v4032, %v3842
      %v4057 = vmax.bf16 %v4033, %v3843
      %v4058 = vmax.bf16 %v4034, %v3844
      %v4059 = vmax.bf16 %v4035, %v3845
      %v4060 = vmax.bf16 %v4036, %v3846
      %v4061 = vmax.bf16 %v4037, %v3847
      %v4062 = vmax.bf16 %v4038, %v3848
      %v4063 = vmax.bf16 %v4039, %v3851
      %v4064 = vmax.bf16 %v4040, %v3852
      %v4065 = vmax.bf16 %v4041, %v3853
      %v4066 = vmax.bf16 %v4042, %v3854
      %v4067 = vmax.bf16 %v4043, %v3855
      %v4068 = vmax.bf16 %v4044, %v3856
      %v4069 = vmax.bf16 %v4045, %v3857
      %v4070 = vmax.bf16 %v4046, %v3858
      %v4071 = vmax.bf16 %v4047, %v3861
      %v4072 = vmax.bf16 %v4048, %v3862
      %v4073 = vmax.bf16 %v4049, %v3863
      %v4074 = vmax.bf16 %v4050, %v3864
      %v4075 = vmax.bf16 %v4051, %v3865
      %v4076 = vmax.bf16 %v4052, %v3866
      %v4077 = vmax.bf16 %v4053, %v3867
      %v4078 = vmax.bf16 %v4054, %v3868
      %v4080 = vshrl.u32 %v4055, 16
      %v4082 = vrot.slane %v4080, 4
      %v4083 = vshll.u32 %v4055, 16
      %v4085 = vrot.slane %v4083, 5
      %v4086 = vor.u32 %v4082, %v4085
      %v4087 = vrot.slane %v4086, 4
      %v4089 = vshll.u32 %v4063, 16
      %v4091 = vrot.slane %v4089, 5
      %v4092 = vsel %vm1520, %v4087, %v4091
      %v4094 = vshrl.u32 %v4056, 16
      %v4096 = vrot.slane %v4094, 4
      %v4097 = vshll.u32 %v4056, 16
      %v4099 = vrot.slane %v4097, 5
      %v4100 = vor.u32 %v4096, %v4099
      %v4101 = vrot.slane %v4100, 4
      %v4103 = vshll.u32 %v4064, 16
      %v4105 = vrot.slane %v4103, 5
      %v4106 = vsel %vm1520, %v4101, %v4105
      %v4108 = vshrl.u32 %v4057, 16
      %v4110 = vrot.slane %v4108, 4
      %v4111 = vshll.u32 %v4057, 16
      %v4113 = vrot.slane %v4111, 5
      %v4114 = vor.u32 %v4110, %v4113
      %v4115 = vrot.slane %v4114, 4
      %v4117 = vshll.u32 %v4065, 16
      %v4119 = vrot.slane %v4117, 5
      %v4120 = vsel %vm1520, %v4115, %v4119
      %v4122 = vshrl.u32 %v4058, 16
      %v4124 = vrot.slane %v4122, 4
      %v4125 = vshll.u32 %v4058, 16
      %v4127 = vrot.slane %v4125, 5
      %v4128 = vor.u32 %v4124, %v4127
      %v4129 = vrot.slane %v4128, 4
      %v4131 = vshll.u32 %v4066, 16
      %v4133 = vrot.slane %v4131, 5
      %v4134 = vsel %vm1520, %v4129, %v4133
      %v4136 = vshrl.u32 %v4059, 16
      %v4138 = vrot.slane %v4136, 4
      %v4139 = vshll.u32 %v4059, 16
      %v4141 = vrot.slane %v4139, 5
      %v4142 = vor.u32 %v4138, %v4141
      %v4143 = vrot.slane %v4142, 4
      %v4145 = vshll.u32 %v4067, 16
      %v4147 = vrot.slane %v4145, 5
      %v4148 = vsel %vm1520, %v4143, %v4147
      %v4150 = vshrl.u32 %v4060, 16
      %v4152 = vrot.slane %v4150, 4
      %v4153 = vshll.u32 %v4060, 16
      %v4155 = vrot.slane %v4153, 5
      %v4156 = vor.u32 %v4152, %v4155
      %v4157 = vrot.slane %v4156, 4
      %v4159 = vshll.u32 %v4068, 16
      %v4161 = vrot.slane %v4159, 5
      %v4162 = vsel %vm1520, %v4157, %v4161
      %v4164 = vshrl.u32 %v4061, 16
      %v4166 = vrot.slane %v4164, 4
      %v4167 = vshll.u32 %v4061, 16
      %v4169 = vrot.slane %v4167, 5
      %v4170 = vor.u32 %v4166, %v4169
      %v4171 = vrot.slane %v4170, 4
      %v4173 = vshll.u32 %v4069, 16
      %v4175 = vrot.slane %v4173, 5
      %v4176 = vsel %vm1520, %v4171, %v4175
      %v4178 = vshrl.u32 %v4062, 16
      %v4180 = vrot.slane %v4178, 4
      %v4181 = vshll.u32 %v4062, 16
      %v4183 = vrot.slane %v4181, 5
      %v4184 = vor.u32 %v4180, %v4183
      %v4185 = vrot.slane %v4184, 4
      %v4187 = vshll.u32 %v4070, 16
      %v4189 = vrot.slane %v4187, 5
      %v4190 = vsel %vm1520, %v4185, %v4189
      %v4191 = vshrl.u32 %v4063, 16
      %v4193 = vrot.slane %v4191, 4
      %v4194 = vor.u32 %v4193, %v4091
      %v4195 = vrot.slane %v4194, 4
      %v4197 = vshll.u32 %v4071, 16
      %v4199 = vrot.slane %v4197, 5
      %v4200 = vsel %vm1520, %v4195, %v4199
      %v4201 = vshrl.u32 %v4064, 16
      %v4203 = vrot.slane %v4201, 4
      %v4204 = vor.u32 %v4203, %v4105
      %v4205 = vrot.slane %v4204, 4
      %v4207 = vshll.u32 %v4072, 16
      %v4209 = vrot.slane %v4207, 5
      %v4210 = vsel %vm1520, %v4205, %v4209
      %v4211 = vshrl.u32 %v4065, 16
      %v4213 = vrot.slane %v4211, 4
      %v4214 = vor.u32 %v4213, %v4119
      %v4215 = vrot.slane %v4214, 4
      %v4217 = vshll.u32 %v4073, 16
      %v4219 = vrot.slane %v4217, 5
      %v4220 = vsel %vm1520, %v4215, %v4219
      %v4221 = vshrl.u32 %v4066, 16
      %v4223 = vrot.slane %v4221, 4
      %v4224 = vor.u32 %v4223, %v4133
      %v4225 = vrot.slane %v4224, 4
      %v4227 = vshll.u32 %v4074, 16
      %v4229 = vrot.slane %v4227, 5
      %v4230 = vsel %vm1520, %v4225, %v4229
      %v4231 = vshrl.u32 %v4067, 16
      %v4233 = vrot.slane %v4231, 4
      %v4234 = vor.u32 %v4233, %v4147
      %v4235 = vrot.slane %v4234, 4
      %v4237 = vshll.u32 %v4075, 16
      %v4239 = vrot.slane %v4237, 5
      %v4240 = vsel %vm1520, %v4235, %v4239
      %v4241 = vshrl.u32 %v4068, 16
      %v4243 = vrot.slane %v4241, 4
      %v4244 = vor.u32 %v4243, %v4161
      %v4245 = vrot.slane %v4244, 4
      %v4247 = vshll.u32 %v4076, 16
      %v4249 = vrot.slane %v4247, 5
      %v4250 = vsel %vm1520, %v4245, %v4249
      %v4251 = vshrl.u32 %v4069, 16
      %v4253 = vrot.slane %v4251, 4
      %v4254 = vor.u32 %v4253, %v4175
      %v4255 = vrot.slane %v4254, 4
      %v4257 = vshll.u32 %v4077, 16
      %v4259 = vrot.slane %v4257, 5
      %v4260 = vsel %vm1520, %v4255, %v4259
      %v4261 = vshrl.u32 %v4070, 16
      %v4263 = vrot.slane %v4261, 4
      %v4264 = vor.u32 %v4263, %v4189
      %v4265 = vrot.slane %v4264, 4
      %v4267 = vshll.u32 %v4078, 16
      %v4269 = vrot.slane %v4267, 5
      %v4270 = vsel %vm1520, %v4265, %v4269
      %v4287 = vmax.bf16 %v4055, %v4092
      %v4288 = vmax.bf16 %v4056, %v4106
      %v4289 = vmax.bf16 %v4057, %v4120
      %v4290 = vmax.bf16 %v4058, %v4134
      %v4291 = vmax.bf16 %v4059, %v4148
      %v4292 = vmax.bf16 %v4060, %v4162
      %v4293 = vmax.bf16 %v4061, %v4176
      %v4294 = vmax.bf16 %v4062, %v4190
      %v4295 = vmax.bf16 %v4063, %v4200
      %v4296 = vmax.bf16 %v4064, %v4210
      %v4297 = vmax.bf16 %v4065, %v4220
      %v4298 = vmax.bf16 %v4066, %v4230
      %v4299 = vmax.bf16 %v4067, %v4240
      %v4300 = vmax.bf16 %v4068, %v4250
      %v4301 = vmax.bf16 %v4069, %v4260
      %v4302 = vmax.bf16 %v4070, %v4270
      %v4327 = vrot.slane %v4055, 5
      %v4328 = vrot.slane %v4327, 4
      %v4329 = vrot.slane %v4063, 5
      %v4330 = vsel %vm964, %v4328, %v4329
      %v4331 = vrot.slane %v4056, 5
      %v4332 = vrot.slane %v4331, 4
      %v4333 = vrot.slane %v4064, 5
      %v4334 = vsel %vm964, %v4332, %v4333
      %v4335 = vrot.slane %v4057, 5
      %v4336 = vrot.slane %v4335, 4
      %v4337 = vrot.slane %v4065, 5
      %v4338 = vsel %vm964, %v4336, %v4337
      %v4339 = vrot.slane %v4058, 5
      %v4340 = vrot.slane %v4339, 4
      %v4341 = vrot.slane %v4066, 5
      %v4342 = vsel %vm964, %v4340, %v4341
      %v4343 = vrot.slane %v4059, 5
      %v4344 = vrot.slane %v4343, 4
      %v4345 = vrot.slane %v4067, 5
      %v4346 = vsel %vm964, %v4344, %v4345
      %v4347 = vrot.slane %v4060, 5
      %v4348 = vrot.slane %v4347, 4
      %v4349 = vrot.slane %v4068, 5
      %v4350 = vsel %vm964, %v4348, %v4349
      %v4351 = vrot.slane %v4061, 5
      %v4352 = vrot.slane %v4351, 4
      %v4353 = vrot.slane %v4069, 5
      %v4354 = vsel %vm964, %v4352, %v4353
      %v4355 = vrot.slane %v4062, 5
      %v4356 = vrot.slane %v4355, 4
      %v4357 = vrot.slane %v4070, 5
      %v4358 = vsel %vm964, %v4356, %v4357
      %v4359 = vrot.slane %v4329, 4
      %v4360 = vrot.slane %v4071, 5
      %v4361 = vsel %vm964, %v4359, %v4360
      %v4362 = vrot.slane %v4333, 4
      %v4363 = vrot.slane %v4072, 5
      %v4364 = vsel %vm964, %v4362, %v4363
      %v4365 = vrot.slane %v4337, 4
      %v4366 = vrot.slane %v4073, 5
      %v4367 = vsel %vm964, %v4365, %v4366
      %v4368 = vrot.slane %v4341, 4
      %v4369 = vrot.slane %v4074, 5
      %v4370 = vsel %vm964, %v4368, %v4369
      %v4371 = vrot.slane %v4345, 4
      %v4372 = vrot.slane %v4075, 5
      %v4373 = vsel %vm964, %v4371, %v4372
      %v4374 = vrot.slane %v4349, 4
      %v4375 = vrot.slane %v4076, 5
      %v4376 = vsel %vm964, %v4374, %v4375
      %v4377 = vrot.slane %v4353, 4
      %v4378 = vrot.slane %v4077, 5
      %v4379 = vsel %vm964, %v4377, %v4378
      %v4380 = vrot.slane %v4357, 4
      %v4381 = vrot.slane %v4078, 5
      %v4382 = vsel %vm964, %v4380, %v4381
      %v4399 = vmax.bf16 %v4287, %v4330
      %v4400 = vmax.bf16 %v4288, %v4334
      %v4401 = vmax.bf16 %v4289, %v4338
      %v4402 = vmax.bf16 %v4290, %v4342
      %v4403 = vmax.bf16 %v4291, %v4346
      %v4404 = vmax.bf16 %v4292, %v4350
      %v4405 = vmax.bf16 %v4293, %v4354
      %v4406 = vmax.bf16 %v4294, %v4358
      %v4407 = vmax.bf16 %v4295, %v4361
      %v4408 = vmax.bf16 %v4296, %v4364
      %v4409 = vmax.bf16 %v4297, %v4367
      %v4410 = vmax.bf16 %v4298, %v4370
      %v4411 = vmax.bf16 %v4299, %v4373
      %v4412 = vmax.bf16 %v4300, %v4376
      %v4413 = vmax.bf16 %v4301, %v4379
      %v4414 = vmax.bf16 %v4302, %v4382
      %v4415 = vrot.slane %v4080, 5
      %v4416 = vrot.slane %v4083, 6
      %v4417 = vor.u32 %v4415, %v4416
      %v4418 = vrot.slane %v4417, 4
      %v4419 = vrot.slane %v4191, 5
      %v4420 = vrot.slane %v4089, 6
      %v4421 = vor.u32 %v4419, %v4420
      %v4422 = vsel %vm2243, %v4418, %v4421
      %v4423 = vrot.slane %v4094, 5
      %v4424 = vrot.slane %v4097, 6
      %v4425 = vor.u32 %v4423, %v4424
      %v4426 = vrot.slane %v4425, 4
      %v4427 = vrot.slane %v4201, 5
      %v4428 = vrot.slane %v4103, 6
      %v4429 = vor.u32 %v4427, %v4428
      %v4430 = vsel %vm2243, %v4426, %v4429
      %v4431 = vrot.slane %v4108, 5
      %v4432 = vrot.slane %v4111, 6
      %v4433 = vor.u32 %v4431, %v4432
      %v4434 = vrot.slane %v4433, 4
      %v4435 = vrot.slane %v4211, 5
      %v4436 = vrot.slane %v4117, 6
      %v4437 = vor.u32 %v4435, %v4436
      %v4438 = vsel %vm2243, %v4434, %v4437
      %v4439 = vrot.slane %v4122, 5
      %v4440 = vrot.slane %v4125, 6
      %v4441 = vor.u32 %v4439, %v4440
      %v4442 = vrot.slane %v4441, 4
      %v4443 = vrot.slane %v4221, 5
      %v4444 = vrot.slane %v4131, 6
      %v4445 = vor.u32 %v4443, %v4444
      %v4446 = vsel %vm2243, %v4442, %v4445
      %v4447 = vrot.slane %v4136, 5
      %v4448 = vrot.slane %v4139, 6
      %v4449 = vor.u32 %v4447, %v4448
      %v4450 = vrot.slane %v4449, 4
      %v4451 = vrot.slane %v4231, 5
      %v4452 = vrot.slane %v4145, 6
      %v4453 = vor.u32 %v4451, %v4452
      %v4454 = vsel %vm2243, %v4450, %v4453
      %v4455 = vrot.slane %v4150, 5
      %v4456 = vrot.slane %v4153, 6
      %v4457 = vor.u32 %v4455, %v4456
      %v4458 = vrot.slane %v4457, 4
      %v4459 = vrot.slane %v4241, 5
      %v4460 = vrot.slane %v4159, 6
      %v4461 = vor.u32 %v4459, %v4460
      %v4462 = vsel %vm2243, %v4458, %v4461
      %v4463 = vrot.slane %v4164, 5
      %v4464 = vrot.slane %v4167, 6
      %v4465 = vor.u32 %v4463, %v4464
      %v4466 = vrot.slane %v4465, 4
      %v4467 = vrot.slane %v4251, 5
      %v4468 = vrot.slane %v4173, 6
      %v4469 = vor.u32 %v4467, %v4468
      %v4470 = vsel %vm2243, %v4466, %v4469
      %v4471 = vrot.slane %v4178, 5
      %v4472 = vrot.slane %v4181, 6
      %v4473 = vor.u32 %v4471, %v4472
      %v4474 = vrot.slane %v4473, 4
      %v4475 = vrot.slane %v4261, 5
      %v4476 = vrot.slane %v4187, 6
      %v4477 = vor.u32 %v4475, %v4476
      %v4478 = vsel %vm2243, %v4474, %v4477
      %v4479 = vrot.slane %v4421, 4
      %v4480 = vshrl.u32 %v4071, 16
      %v4482 = vrot.slane %v4480, 5
      %v4483 = vrot.slane %v4197, 6
      %v4484 = vor.u32 %v4482, %v4483
      %v4485 = vsel %vm2243, %v4479, %v4484
      %v4486 = vrot.slane %v4429, 4
      %v4487 = vshrl.u32 %v4072, 16
      %v4489 = vrot.slane %v4487, 5
      %v4490 = vrot.slane %v4207, 6
      %v4491 = vor.u32 %v4489, %v4490
      %v4492 = vsel %vm2243, %v4486, %v4491
      %v4493 = vrot.slane %v4437, 4
      %v4494 = vshrl.u32 %v4073, 16
      %v4496 = vrot.slane %v4494, 5
      %v4497 = vrot.slane %v4217, 6
      %v4498 = vor.u32 %v4496, %v4497
      %v4499 = vsel %vm2243, %v4493, %v4498
      %v4500 = vrot.slane %v4445, 4
      %v4501 = vshrl.u32 %v4074, 16
      %v4503 = vrot.slane %v4501, 5
      %v4504 = vrot.slane %v4227, 6
      %v4505 = vor.u32 %v4503, %v4504
      %v4506 = vsel %vm2243, %v4500, %v4505
      %v4507 = vrot.slane %v4453, 4
      %v4508 = vshrl.u32 %v4075, 16
      %v4510 = vrot.slane %v4508, 5
      %v4511 = vrot.slane %v4237, 6
      %v4512 = vor.u32 %v4510, %v4511
      %v4513 = vsel %vm2243, %v4507, %v4512
      %v4514 = vrot.slane %v4461, 4
      %v4515 = vshrl.u32 %v4076, 16
      %v4517 = vrot.slane %v4515, 5
      %v4518 = vrot.slane %v4247, 6
      %v4519 = vor.u32 %v4517, %v4518
      %v4520 = vsel %vm2243, %v4514, %v4519
      %v4521 = vrot.slane %v4469, 4
      %v4522 = vshrl.u32 %v4077, 16
      %v4524 = vrot.slane %v4522, 5
      %v4525 = vrot.slane %v4257, 6
      %v4526 = vor.u32 %v4524, %v4525
      %v4527 = vsel %vm2243, %v4521, %v4526
      %v4528 = vrot.slane %v4477, 4
      %v4529 = vshrl.u32 %v4078, 16
      %v4531 = vrot.slane %v4529, 5
      %v4532 = vrot.slane %v4267, 6
      %v4533 = vor.u32 %v4531, %v4532
      %v4534 = vsel %vm2243, %v4528, %v4533
      %v4551 = vmax.bf16 %v4399, %v4422
      %v4552 = vmax.bf16 %v4400, %v4430
      %v4553 = vmax.bf16 %v4401, %v4438
      %v4554 = vmax.bf16 %v4402, %v4446
      %v4555 = vmax.bf16 %v4403, %v4454
      %v4556 = vmax.bf16 %v4404, %v4462
      %v4557 = vmax.bf16 %v4405, %v4470
      %v4558 = vmax.bf16 %v4406, %v4478
      %v4559 = vmax.bf16 %v4407, %v4485
      %v4560 = vmax.bf16 %v4408, %v4492
      %v4561 = vmax.bf16 %v4409, %v4499
      %v4562 = vmax.bf16 %v4410, %v4506
      %v4563 = vmax.bf16 %v4411, %v4513
      %v4564 = vmax.bf16 %v4412, %v4520
      %v4565 = vmax.bf16 %v4413, %v4527
      %v4566 = vmax.bf16 %v4414, %v4534
      %v4567 = vrot.slane %v4055, 6
      %v4568 = vrot.slane %v4567, 4
      %v4569 = vrot.slane %v4063, 6
      %v4570 = vsel %vm2558, %v4568, %v4569
      %v4571 = vrot.slane %v4056, 6
      %v4572 = vrot.slane %v4571, 4
      %v4573 = vrot.slane %v4064, 6
      %v4574 = vsel %vm2558, %v4572, %v4573
      %v4575 = vrot.slane %v4057, 6
      %v4576 = vrot.slane %v4575, 4
      %v4577 = vrot.slane %v4065, 6
      %v4578 = vsel %vm2558, %v4576, %v4577
      %v4579 = vrot.slane %v4058, 6
      %v4580 = vrot.slane %v4579, 4
      %v4581 = vrot.slane %v4066, 6
      %v4582 = vsel %vm2558, %v4580, %v4581
      %v4583 = vrot.slane %v4059, 6
      %v4584 = vrot.slane %v4583, 4
      %v4585 = vrot.slane %v4067, 6
      %v4586 = vsel %vm2558, %v4584, %v4585
      %v4587 = vrot.slane %v4060, 6
      %v4588 = vrot.slane %v4587, 4
      %v4589 = vrot.slane %v4068, 6
      %v4590 = vsel %vm2558, %v4588, %v4589
      %v4591 = vrot.slane %v4061, 6
      %v4592 = vrot.slane %v4591, 4
      %v4593 = vrot.slane %v4069, 6
      %v4594 = vsel %vm2558, %v4592, %v4593
      %v4595 = vrot.slane %v4062, 6
      %v4596 = vrot.slane %v4595, 4
      %v4597 = vrot.slane %v4070, 6
      %v4598 = vsel %vm2558, %v4596, %v4597
      %v4599 = vrot.slane %v4569, 4
      %v4600 = vrot.slane %v4071, 6
      %v4601 = vsel %vm2558, %v4599, %v4600
      %v4602 = vrot.slane %v4573, 4
      %v4603 = vrot.slane %v4072, 6
      %v4604 = vsel %vm2558, %v4602, %v4603
      %v4605 = vrot.slane %v4577, 4
      %v4606 = vrot.slane %v4073, 6
      %v4607 = vsel %vm2558, %v4605, %v4606
      %v4608 = vrot.slane %v4581, 4
      %v4609 = vrot.slane %v4074, 6
      %v4610 = vsel %vm2558, %v4608, %v4609
      %v4611 = vrot.slane %v4585, 4
      %v4612 = vrot.slane %v4075, 6
      %v4613 = vsel %vm2558, %v4611, %v4612
      %v4614 = vrot.slane %v4589, 4
      %v4615 = vrot.slane %v4076, 6
      %v4616 = vsel %vm2558, %v4614, %v4615
      %v4617 = vrot.slane %v4593, 4
      %v4618 = vrot.slane %v4077, 6
      %v4619 = vsel %vm2558, %v4617, %v4618
      %v4620 = vrot.slane %v4597, 4
      %v4621 = vrot.slane %v4078, 6
      %v4622 = vsel %vm2558, %v4620, %v4621
      %v4639 = vmax.bf16 %v4551, %v4570
      %v4640 = vmax.bf16 %v4552, %v4574
      %v4641 = vmax.bf16 %v4553, %v4578
      %v4642 = vmax.bf16 %v4554, %v4582
      %v4643 = vmax.bf16 %v4555, %v4586
      %v4644 = vmax.bf16 %v4556, %v4590
      %v4645 = vmax.bf16 %v4557, %v4594
      %v4646 = vmax.bf16 %v4558, %v4598
      %v4647 = vmax.bf16 %v4559, %v4601
      %v4648 = vmax.bf16 %v4560, %v4604
      %v4649 = vmax.bf16 %v4561, %v4607
      %v4650 = vmax.bf16 %v4562, %v4610
      %v4651 = vmax.bf16 %v4563, %v4613
      %v4652 = vmax.bf16 %v4564, %v4616
      %v4653 = vmax.bf16 %v4565, %v4619
      %v4654 = vmax.bf16 %v4566, %v4622
      %v4655 = vrot.slane %v2717, 6
      %v4656 = vrot.slane %v4655, 4
      %v4657 = vrot.slane %v2729, 6
      %v4658 = vsel %vm2558, %v4656, %v4657
      %v4659 = vrot.slane %v2718, 6
      %v4660 = vrot.slane %v4659, 4
      %v4661 = vrot.slane %v2730, 6
      %v4662 = vsel %vm2558, %v4660, %v4661
      %v4663 = vrot.slane %v2719, 6
      %v4664 = vrot.slane %v4663, 4
      %v4665 = vrot.slane %v2731, 6
      %v4666 = vsel %vm2558, %v4664, %v4665
      %v4667 = vrot.slane %v2720, 6
      %v4668 = vrot.slane %v4667, 4
      %v4669 = vrot.slane %v2732, 6
      %v4670 = vsel %vm2558, %v4668, %v4669
      %v4671 = vrot.slane %v2721, 6
      %v4672 = vrot.slane %v4671, 4
      %v4673 = vrot.slane %v2733, 6
      %v4674 = vsel %vm2558, %v4672, %v4673
      %v4675 = vrot.slane %v2722, 6
      %v4676 = vrot.slane %v4675, 4
      %v4677 = vrot.slane %v2734, 6
      %v4678 = vsel %vm2558, %v4676, %v4677
      %v4679 = vrot.slane %v2723, 6
      %v4680 = vrot.slane %v4679, 4
      %v4681 = vrot.slane %v2735, 6
      %v4682 = vsel %vm2558, %v4680, %v4681
      %v4683 = vrot.slane %v2724, 6
      %v4684 = vrot.slane %v4683, 4
      %v4685 = vrot.slane %v2736, 6
      %v4686 = vsel %vm2558, %v4684, %v4685
      %v4687 = vrot.slane %v4657, 4
      %v4688 = vrot.slane %v2741, 6
      %v4689 = vsel %vm2558, %v4687, %v4688
      %v4690 = vrot.slane %v4661, 4
      %v4691 = vrot.slane %v2742, 6
      %v4692 = vsel %vm2558, %v4690, %v4691
      %v4693 = vrot.slane %v4665, 4
      %v4694 = vrot.slane %v2743, 6
      %v4695 = vsel %vm2558, %v4693, %v4694
      %v4696 = vrot.slane %v4669, 4
      %v4697 = vrot.slane %v2744, 6
      %v4698 = vsel %vm2558, %v4696, %v4697
      %v4699 = vrot.slane %v4673, 4
      %v4700 = vrot.slane %v2745, 6
      %v4701 = vsel %vm2558, %v4699, %v4700
      %v4702 = vrot.slane %v4677, 4
      %v4703 = vrot.slane %v2746, 6
      %v4704 = vsel %vm2558, %v4702, %v4703
      %v4705 = vrot.slane %v4681, 4
      %v4706 = vrot.slane %v2747, 6
      %v4707 = vsel %vm2558, %v4705, %v4706
      %v4708 = vrot.slane %v4685, 4
      %v4709 = vrot.slane %v2748, 6
      %v4710 = vsel %vm2558, %v4708, %v4709
      %4727 = vst [vmem:[%s278] sm:$0xff] %v4658
      %4728 = vst [vmem:[%s278 + $0x8] sm:$0xff] %v4662
      %4729 = vst [vmem:[%s278 + $0x10] sm:$0xff] %v4666
      %4730 = vst [vmem:[%s278 + $0x18] sm:$0xff] %v4670
      %4731 = vst [vmem:[%s278 + $0x20] sm:$0xff] %v4674
      %4732 = vst [vmem:[%s278 + $0x28] sm:$0xff] %v4678
      %4733 = vst [vmem:[%s278 + $0x30] sm:$0xff] %v4682
      %4734 = vst [vmem:[%s278 + $0x38] sm:$0xff] %v4686
      %4735 = vst [vmem:[%s278 + $0x40] sm:$0xff] %v4689
      %4736 = vst [vmem:[%s278 + $0x48] sm:$0xff] %v4692
      %4737 = vst [vmem:[%s278 + $0x50] sm:$0xff] %v4695
      %4738 = vst [vmem:[%s278 + $0x58] sm:$0xff] %v4698
      %4739 = vst [vmem:[%s278 + $0x60] sm:$0xff] %v4701
      %4740 = vst [vmem:[%s278 + $0x68] sm:$0xff] %v4704
      %4741 = vst [vmem:[%s278 + $0x70] sm:$0xff] %v4707
      %4742 = vst [vmem:[%s278 + $0x78] sm:$0xff] %v4710
      %v4743 = vrot.slane %v3840, 5
      %v4744 = vrot.slane %v4743, 4
      %v4745 = vrot.slane %v3850, 5
      %v4746 = vsel %vm964, %v4744, %v4745
      %v4747 = vrot.slane %v3841, 5
      %v4748 = vrot.slane %v4747, 4
      %v4749 = vrot.slane %v3851, 5
      %v4750 = vsel %vm964, %v4748, %v4749
      %v4751 = vrot.slane %v3842, 5
      %v4752 = vrot.slane %v4751, 4
      %v4753 = vrot.slane %v3852, 5
      %v4754 = vsel %vm964, %v4752, %v4753
      %v4755 = vrot.slane %v3843, 5
      %v4756 = vrot.slane %v4755, 4
      %v4757 = vrot.slane %v3853, 5
      %v4758 = vsel %vm964, %v4756, %v4757
      %v4759 = vrot.slane %v3844, 5
      %v4760 = vrot.slane %v4759, 4
      %v4761 = vrot.slane %v3854, 5
      %v4762 = vsel %vm964, %v4760, %v4761
      %v4763 = vrot.slane %v3845, 5
      %v4764 = vrot.slane %v4763, 4
      %v4765 = vrot.slane %v3855, 5
      %v4766 = vsel %vm964, %v4764, %v4765
      %v4767 = vrot.slane %v3846, 5
      %v4768 = vrot.slane %v4767, 4
      %v4769 = vrot.slane %v3856, 5
      %v4770 = vsel %vm964, %v4768, %v4769
      %v4771 = vrot.slane %v3847, 5
      %v4772 = vrot.slane %v4771, 4
      %v4773 = vrot.slane %v3857, 5
      %v4774 = vsel %vm964, %v4772, %v4773
      %v4775 = vrot.slane %v4745, 4
      %v4776 = vrot.slane %v3860, 5
      %v4777 = vsel %vm964, %v4775, %v4776
      %v4778 = vrot.slane %v4749, 4
      %v4779 = vrot.slane %v3861, 5
      %v4780 = vsel %vm964, %v4778, %v4779
      %v4781 = vrot.slane %v4753, 4
      %v4782 = vrot.slane %v3862, 5
      %v4783 = vsel %vm964, %v4781, %v4782
      %v4784 = vrot.slane %v4757, 4
      %v4785 = vrot.slane %v3863, 5
      %v4786 = vsel %vm964, %v4784, %v4785
      %v4787 = vrot.slane %v4761, 4
      %v4788 = vrot.slane %v3864, 5
      %v4789 = vsel %vm964, %v4787, %v4788
      %v4790 = vrot.slane %v4765, 4
      %v4791 = vrot.slane %v3865, 5
      %v4792 = vsel %vm964, %v4790, %v4791
      %v4793 = vrot.slane %v4769, 4
      %v4794 = vrot.slane %v3866, 5
      %v4795 = vsel %vm964, %v4793, %v4794
      %v4796 = vrot.slane %v4773, 4
      %v4797 = vrot.slane %v3867, 5
      %v4798 = vsel %vm964, %v4796, %v4797
      %4815 = vst [vmem:[%s283] sm:$0xff] %v4746
      %4816 = vst [vmem:[%s283 + $0x8] sm:$0xff] %v4750
      %4817 = vst [vmem:[%s283 + $0x10] sm:$0xff] %v4754
      %4818 = vst [vmem:[%s283 + $0x18] sm:$0xff] %v4758
      %4819 = vst [vmem:[%s283 + $0x20] sm:$0xff] %v4762
      %4820 = vst [vmem:[%s283 + $0x28] sm:$0xff] %v4766
      %4821 = vst [vmem:[%s283 + $0x30] sm:$0xff] %v4770
      %4822 = vst [vmem:[%s283 + $0x38] sm:$0xff] %v4774
      %4823 = vst [vmem:[%s283 + $0x40] sm:$0xff] %v4777
      %4824 = vst [vmem:[%s283 + $0x48] sm:$0xff] %v4780
      %4825 = vst [vmem:[%s283 + $0x50] sm:$0xff] %v4783
      %4826 = vst [vmem:[%s283 + $0x58] sm:$0xff] %v4786
      %4827 = vst [vmem:[%s283 + $0x60] sm:$0xff] %v4789
      %4828 = vst [vmem:[%s283 + $0x68] sm:$0xff] %v4792
      %4829 = vst [vmem:[%s283 + $0x70] sm:$0xff] %v4795
      %4830 = vst [vmem:[%s283 + $0x78] sm:$0xff] %v4798
      %4831 = vst [vmem:[%s288] sm:$0xff] %v4639
      %4832 = vst [vmem:[%s288 + $0x8] sm:$0xff] %v4640
      %4833 = vst [vmem:[%s288 + $0x10] sm:$0xff] %v4641
      %4834 = vst [vmem:[%s288 + $0x18] sm:$0xff] %v4642
      %4835 = vst [vmem:[%s288 + $0x20] sm:$0xff] %v4643
      %4836 = vst [vmem:[%s288 + $0x28] sm:$0xff] %v4644
      %4837 = vst [vmem:[%s288 + $0x30] sm:$0xff] %v4645
      %4838 = vst [vmem:[%s288 + $0x38] sm:$0xff] %v4646
      %4839 = vst [vmem:[%s288 + $0x40] sm:$0xff] %v4647
      %4840 = vst [vmem:[%s288 + $0x48] sm:$0xff] %v4648
      %4841 = vst [vmem:[%s288 + $0x50] sm:$0xff] %v4649
      %4842 = vst [vmem:[%s288 + $0x58] sm:$0xff] %v4650
      %4843 = vst [vmem:[%s288 + $0x60] sm:$0xff] %v4651
      %4844 = vst [vmem:[%s288 + $0x68] sm:$0xff] %v4652
      %4845 = vst [vmem:[%s288 + $0x70] sm:$0xff] %v4653
      %4846 = vst [vmem:[%s288 + $0x78] sm:$0xff] %v4654
      %p4847 = scmp.lt.s32.totalorder %s18, 1
      %s4848 = scalar_select %p4847, %s18, 1
      %s4849 = smul.addr %s4848, 32
      %s4850 = smul.addr %s4849, 4
      %s4851 = scalar_lea.vmem %s3, %s4850
      %p4852 = scmp.lt.s32.totalorder %s18, 1
      %s4853 = scalar_select %p4852, %s18, 1
      %s4854 = smul.addr %s4853, 32
      %s4855 = smul.addr %s4854, 4
      %s4856 = scalar_lea.vmem %s4, %s4855
      %p4857 = scmp.lt.s32.totalorder %s18, 1
      %s4858 = scalar_select %p4857, %s18, 1
      %s4859 = smul.addr %s4858, 32
      %s4860 = smul.addr %s4859, 4
      %s4861 = scalar_lea.vmem %s5, %s4860
      %p4862 = scmp.lt.s32.totalorder %s18, 1
      %s4863 = scalar_select %p4862, %s18, 1
      %s4864 = smul.addr %s4863, 32
      %s4865 = smul.addr %s4864, 4
      %s4866 = scalar_lea.vmem %s6, %s4865
      // Predicated region
      $region33: #{sppf_forward.5} parent=31 // pred_check
        %p4867 = pneg %p104
      $region34: #{sppf_forward.5} parent=31 // pred_check_branch
        %4869 = sbr.rel (%p4867) target = $region36
      $region35: #{sppf_forward.5} parent=31 // pred_region
        _
      $region36: #{sppf_forward.5} parent=31 // pred_fallthru
        _
      // Predicated region
      $region37: #{sppf_forward.5} parent=31 // pred_check
        %p4870 = pneg %p130
      $region38: #{sppf_forward.5} parent=31 // pred_check_branch
        %4872 = sbr.rel (%p4870) target = $region40
      $region39: #{sppf_forward.5} parent=31 // pred_region
        _
      $region40: #{sppf_forward.5} parent=31 // pred_fallthru
        _
      // Predicated region
      $region41: #{sppf_forward.5} parent=31 // pred_check
        %p4873 = pneg %p156
      $region42: #{sppf_forward.5} parent=31 // pred_check_branch
        %4875 = sbr.rel (%p4873) target = $region44
      $region43: #{sppf_forward.5} parent=31 // pred_region
        _
      $region44: #{sppf_forward.5} parent=31 // pred_fallthru
        _
      // Predicated region
      $region45: #{sppf_forward.5} parent=31 // pred_check
        %p4876 = pneg %p182
      $region46: #{sppf_forward.5} parent=31 // pred_check_branch
        %4878 = sbr.rel (%p4876) target = $region48
      $region47: #{sppf_forward.5} parent=31 // pred_region
        _
      $region48: #{sppf_forward.5} parent=31 // pred_fallthru
        _
    $region32: #{sppf_forward.5} parent=5 // pred_fallthru
      _
    %p4879 = scmp.le.s32.totalorder 2, %s13
    // Predicated region
    $region49: #{sppf_forward.5} parent=5 // pred_check
      %p4880 = pneg %p4879
    $region50: #{sppf_forward.5} parent=5 // pred_check_branch
      %4882 = sbr.rel (%p4880) target = $region52
    $region51: #{sppf_forward.5} parent=5 // pred_region
      %s4883 = ssub.s32 %s13, 2
      // Predicated region
      $region53: #{sppf_forward.5} parent=51 // pred_check
        %p4884 = pneg %p110
      $region54: #{sppf_forward.5} parent=51 // pred_check_branch
        %4886 = sbr.rel (%p4884) target = $region56
      $region55: #{sppf_forward.5} parent=51 // pred_region
        %p4887 = scmp.lt.s32.totalorder %s19, 1
        %s4888 = scalar_select %p4887, %s19, 1
        %s4889 = smul.addr %s4888, 32
        %s4890 = smul.addr %s4889, 4
        %s4891 = scalar_lea.vmem %s3, %s4890
      $region56: #{sppf_forward.5} parent=51 // pred_fallthru
        _
      // Predicated region
      $region57: #{sppf_forward.5} parent=51 // pred_check
        %p4892 = pneg %p136
      $region58: #{sppf_forward.5} parent=51 // pred_check_branch
        %4894 = sbr.rel (%p4892) target = $region60
      $region59: #{sppf_forward.5} parent=51 // pred_region
        %p4895 = scmp.lt.s32.totalorder %s19, 1
        %s4896 = scalar_select %p4895, %s19, 1
        %s4897 = smul.addr %s4896, 32
        %s4898 = smul.addr %s4897, 4
        %s4899 = scalar_lea.vmem %s4, %s4898
      $region60: #{sppf_forward.5} parent=51 // pred_fallthru
        _
      // Predicated region
      $region61: #{sppf_forward.5} parent=51 // pred_check
        %p4900 = pneg %p162
      $region62: #{sppf_forward.5} parent=51 // pred_check_branch
        %4902 = sbr.rel (%p4900) target = $region64
      $region63: #{sppf_forward.5} parent=51 // pred_region
        %p4903 = scmp.lt.s32.totalorder %s19, 1
        %s4904 = scalar_select %p4903, %s19, 1
        %s4905 = smul.addr %s4904, 32
        %s4906 = smul.addr %s4905, 4
        %s4907 = scalar_lea.vmem %s5, %s4906
      $region64: #{sppf_forward.5} parent=51 // pred_fallthru
        _
      // Predicated region
      $region65: #{sppf_forward.5} parent=51 // pred_check
        %p4908 = pneg %p188
      $region66: #{sppf_forward.5} parent=51 // pred_check_branch
        %4910 = sbr.rel (%p4908) target = $region68
      $region67: #{sppf_forward.5} parent=51 // pred_region
        %p4911 = scmp.lt.s32.totalorder %s19, 1
        %s4912 = scalar_select %p4911, %s19, 1
        %s4913 = smul.addr %s4912, 32
        %s4914 = smul.addr %s4913, 4
        %s4915 = scalar_lea.vmem %s6, %s4914
      $region68: #{sppf_forward.5} parent=51 // pred_fallthru
        _
    $region52: #{sppf_forward.5} parent=5 // pred_fallthru
      _
  $region6: #{sppf_forward.5} parent=0 // loop_footer
    %s17 = sadd.s32 1, %s13
  $region7: #{sppf_forward.5} parent=0 // loop_footer_branch
    %12 = sbr.rel target = $region3
  $region8: #{sppf_forward.5} parent=0 // loop_exit
    _

// kernel: sppf_forward.6
$region0: #{sppf_forward.6}
  #allocation0 [shape = 'u32[]', space=smem, size = 0x4, offset = 0x4, fixed_abs, tag = 'smem constant byte address 0x4 - core index']
  #allocation1 [shape = 'u32[144,128]{1,0:T(1,128)}', space=vmem, size = 0x12000, scoped, tag = 'internal scratch']
  %s0 = inlined_call_operand.vmem [shape: bf16[512,128], index: 0, kind: input, shape index: {}]
  %s1 = inlined_call_operand.vmem [shape: bf16[512,128], index: 1, kind: input, shape index: {}]
  %s2 = inlined_call_operand.vmem [shape: bf16[512,128], index: 2, kind: input, shape index: {}]
  %s3 = inlined_call_operand.vmem [shape: bf16[512,128], index: 3, kind: input, shape index: {}]
  %s4 = inlined_call_operand.vmem [shape: bf16[4,128,128], index: 4, kind: input, shape index: {}]
  %s5 = inlined_call_operand.vmem [shape: bf16[512,128], index: 5, kind: output, shape index: {0}]
  %s6 = inlined_call_operand.vmem [shape: f32[1,8,128], index: 6, kind: output, shape index: {1}]
  %s7 = inlined_call_operand.vmem [shape: f32[1,8,128], index: 7, kind: output, shape index: {2}]
  %8 = xla_tuple %s5, %s6, %s7
  %s9 = sld [smem:[#allocation0]]
  $region46: #{sppf_forward.6} parent=0
    _
  %s11 = ssub.s32 1, %s9
  %s12 = scalar_select 0, %s11, %s9
  // Predicated region
  $region2: #{sppf_forward.6} parent=0 // pred_check
    _
  $region3: #{sppf_forward.6} parent=0 // pred_check_branch
    %14 = sbr.rel (0) target = $region5
  $region4: #{sppf_forward.6} parent=0 // pred_region
    _
  $region5: #{sppf_forward.6} parent=0 // pred_fallthru
    _
  // Predicated region
  $region6: #{sppf_forward.6} parent=0 // pred_check
    _
  $region7: #{sppf_forward.6} parent=0 // pred_check_branch
    %16 = sbr.rel (0) target = $region9
  $region8: #{sppf_forward.6} parent=0 // pred_region
    _
  $region9: #{sppf_forward.6} parent=0 // pred_fallthru
    _
  // Predicated region
  $region10: #{sppf_forward.6} parent=0 // pred_check
    _
  $region11: #{sppf_forward.6} parent=0 // pred_check_branch
    %18 = sbr.rel (0) target = $region13
  $region12: #{sppf_forward.6} parent=0 // pred_region
    _
  $region13: #{sppf_forward.6} parent=0 // pred_fallthru
    _
  // Predicated region
  $region14: #{sppf_forward.6} parent=0 // pred_check
    _
  $region15: #{sppf_forward.6} parent=0 // pred_check_branch
    %20 = sbr.rel (0) target = $region17
  $region16: #{sppf_forward.6} parent=0 // pred_region
    _
  $region17: #{sppf_forward.6} parent=0 // pred_fallthru
    _
  // Predicated region
  $region18: #{sppf_forward.6} parent=0 // pred_check
    _
  $region19: #{sppf_forward.6} parent=0 // pred_check_branch
    %22 = sbr.rel (0) target = $region21
  $region20: #{sppf_forward.6} parent=0 // pred_region
    _
  $region21: #{sppf_forward.6} parent=0 // pred_fallthru
    _
  %v24 = vld [vmem:[%s0] sm:$0xf]
  %v25 = vld [vmem:[%s0 + $0x4] sm:$0xf]
  %v26 = vld [vmem:[%s0 + $0x8] sm:$0xf]
  %v27 = vld [vmem:[%s0 + $0xc] sm:$0xf]
  %v28 = vld [vmem:[%s0 + $0x10] sm:$0xf]
  %v29 = vld [vmem:[%s0 + $0x14] sm:$0xf]
  %v30 = vld [vmem:[%s0 + $0x18] sm:$0xf]
  %v31 = vld [vmem:[%s0 + $0x1c] sm:$0xf]
  %v32 = vld [vmem:[%s0 + $0x20] sm:$0xf]
  %v33 = vld [vmem:[%s0 + $0x24] sm:$0xf]
  %v34 = vld [vmem:[%s0 + $0x28] sm:$0xf]
  %v35 = vld [vmem:[%s0 + $0x2c] sm:$0xf]
  %v36 = vld [vmem:[%s0 + $0x30] sm:$0xf]
  %v37 = vld [vmem:[%s0 + $0x34] sm:$0xf]
  %v38 = vld [vmem:[%s0 + $0x38] sm:$0xf]
  %v39 = vld [vmem:[%s0 + $0x3c] sm:$0xf]
  %v40 = vld [vmem:[%s0 + $0x40] sm:$0xf]
  %v41 = vld [vmem:[%s0 + $0x44] sm:$0xf]
  %v42 = vld [vmem:[%s0 + $0x48] sm:$0xf]
  %v43 = vld [vmem:[%s0 + $0x4c] sm:$0xf]
  %v44 = vld [vmem:[%s0 + $0x50] sm:$0xf]
  %v45 = vld [vmem:[%s0 + $0x54] sm:$0xf]
  %v46 = vld [vmem:[%s0 + $0x58] sm:$0xf]
  %v47 = vld [vmem:[%s0 + $0x5c] sm:$0xf]
  %v48 = vld [vmem:[%s0 + $0x60] sm:$0xf]
  %v49 = vld [vmem:[%s0 + $0x64] sm:$0xf]
  %v50 = vld [vmem:[%s0 + $0x68] sm:$0xf]
  %v51 = vld [vmem:[%s0 + $0x6c] sm:$0xf]
  %v52 = vld [vmem:[%s0 + $0x70] sm:$0xf]
  %v53 = vld [vmem:[%s0 + $0x74] sm:$0xf]
  %v54 = vld [vmem:[%s0 + $0x78] sm:$0xf]
  %v55 = vld [vmem:[%s0 + $0x7c] sm:$0xf]
  %v56 = vld [vmem:[%s0 + $0x80] sm:$0xf]
  %v57 = vld [vmem:[%s0 + $0x84] sm:$0xf]
  %v58 = vld [vmem:[%s0 + $0x88] sm:$0xf]
  %v59 = vld [vmem:[%s0 + $0x8c] sm:$0xf]
  %v60 = vld [vmem:[%s0 + $0x90] sm:$0xf]
  %v61 = vld [vmem:[%s0 + $0x94] sm:$0xf]
  %v62 = vld [vmem:[%s0 + $0x98] sm:$0xf]
  %v63 = vld [vmem:[%s0 + $0x9c] sm:$0xf]
  %v64 = vld [vmem:[%s0 + $0xa0] sm:$0xf]
  %v65 = vld [vmem:[%s0 + $0xa4] sm:$0xf]
  %v66 = vld [vmem:[%s0 + $0xa8] sm:$0xf]
  %v67 = vld [vmem:[%s0 + $0xac] sm:$0xf]
  %v68 = vld [vmem:[%s0 + $0xb0] sm:$0xf]
  %v69 = vld [vmem:[%s0 + $0xb4] sm:$0xf]
  %v70 = vld [vmem:[%s0 + $0xb8] sm:$0xf]
  %v71 = vld [vmem:[%s0 + $0xbc] sm:$0xf]
  %v72 = vld [vmem:[%s0 + $0xc0] sm:$0xf]
  %v73 = vld [vmem:[%s0 + $0xc4] sm:$0xf]
  %v74 = vld [vmem:[%s0 + $0xc8] sm:$0xf]
  %v75 = vld [vmem:[%s0 + $0xcc] sm:$0xf]
  %v76 = vld [vmem:[%s0 + $0xd0] sm:$0xf]
  %v77 = vld [vmem:[%s0 + $0xd4] sm:$0xf]
  %v78 = vld [vmem:[%s0 + $0xd8] sm:$0xf]
  %v79 = vld [vmem:[%s0 + $0xdc] sm:$0xf]
  %v80 = vld [vmem:[%s0 + $0xe0] sm:$0xf]
  %v81 = vld [vmem:[%s0 + $0xe4] sm:$0xf]
  %v82 = vld [vmem:[%s0 + $0xe8] sm:$0xf]
  %v83 = vld [vmem:[%s0 + $0xec] sm:$0xf]
  %v84 = vld [vmem:[%s0 + $0xf0] sm:$0xf]
  %v85 = vld [vmem:[%s0 + $0xf4] sm:$0xf]
  %v86 = vld [vmem:[%s0 + $0xf8] sm:$0xf]
  %v87 = vld [vmem:[%s0 + $0xfc] sm:$0xf]
  %v88 = vld [vmem:[%s4] sm:$0xf]
  %v89 = vld [vmem:[%s4 + $0x4] sm:$0xf]
  %v90 = vld [vmem:[%s4 + $0x8] sm:$0xf]
  %v91 = vld [vmem:[%s4 + $0xc] sm:$0xf]
  %v92 = vld [vmem:[%s4 + $0x10] sm:$0xf]
  %v93 = vld [vmem:[%s4 + $0x14] sm:$0xf]
  %v94 = vld [vmem:[%s4 + $0x18] sm:$0xf]
  %v95 = vld [vmem:[%s4 + $0x1c] sm:$0xf]
  %v96 = vld [vmem:[%s4 + $0x20] sm:$0xf]
  %v97 = vld [vmem:[%s4 + $0x24] sm:$0xf]
  %v98 = vld [vmem:[%s4 + $0x28] sm:$0xf]
  %v99 = vld [vmem:[%s4 + $0x2c] sm:$0xf]
  %v100 = vld [vmem:[%s4 + $0x30] sm:$0xf]
  %v101 = vld [vmem:[%s4 + $0x34] sm:$0xf]
  %v102 = vld [vmem:[%s4 + $0x38] sm:$0xf]
  %v103 = vld [vmem:[%s4 + $0x3c] sm:$0xf]
  %v104 = vld [vmem:[%s1] sm:$0xf]
  %v105 = vld [vmem:[%s1 + $0x4] sm:$0xf]
  %v106 = vld [vmem:[%s1 + $0x8] sm:$0xf]
  %v107 = vld [vmem:[%s1 + $0xc] sm:$0xf]
  %v108 = vld [vmem:[%s1 + $0x10] sm:$0xf]
  %v109 = vld [vmem:[%s1 + $0x14] sm:$0xf]
  %v110 = vld [vmem:[%s1 + $0x18] sm:$0xf]
  %v111 = vld [vmem:[%s1 + $0x1c] sm:$0xf]
  %v112 = vld [vmem:[%s1 + $0x20] sm:$0xf]
  %v113 = vld [vmem:[%s1 + $0x24] sm:$0xf]
  %v114 = vld [vmem:[%s1 + $0x28] sm:$0xf]
  %v115 = vld [vmem:[%s1 + $0x2c] sm:$0xf]
  %v116 = vld [vmem:[%s1 + $0x30] sm:$0xf]
  %v117 = vld [vmem:[%s1 + $0x34] sm:$0xf]
  %v118 = vld [vmem:[%s1 + $0x38] sm:$0xf]
  %v119 = vld [vmem:[%s1 + $0x3c] sm:$0xf]
  %v120 = vld [vmem:[%s1 + $0x40] sm:$0xf]
  %v121 = vld [vmem:[%s1 + $0x44] sm:$0xf]
  %v122 = vld [vmem:[%s1 + $0x48] sm:$0xf]
  %v123 = vld [vmem:[%s1 + $0x4c] sm:$0xf]
  %v124 = vld [vmem:[%s1 + $0x50] sm:$0xf]
  %v125 = vld [vmem:[%s1 + $0x54] sm:$0xf]
  %v126 = vld [vmem:[%s1 + $0x58] sm:$0xf]
  %v127 = vld [vmem:[%s1 + $0x5c] sm:$0xf]
  %v128 = vld [vmem:[%s1 + $0x60] sm:$0xf]
  %v129 = vld [vmem:[%s1 + $0x64] sm:$0xf]
  %v130 = vld [vmem:[%s1 + $0x68] sm:$0xf]
  %v131 = vld [vmem:[%s1 + $0x6c] sm:$0xf]
  %v132 = vld [vmem:[%s1 + $0x70] sm:$0xf]
  %v133 = vld [vmem:[%s1 + $0x74] sm:$0xf]
  %v134 = vld [vmem:[%s1 + $0x78] sm:$0xf]
  %v135 = vld [vmem:[%s1 + $0x7c] sm:$0xf]
  %v136 = vld [vmem:[%s1 + $0x80] sm:$0xf]
  %v137 = vld [vmem:[%s1 + $0x84] sm:$0xf]
  %v138 = vld [vmem:[%s1 + $0x88] sm:$0xf]
  %v139 = vld [vmem:[%s1 + $0x8c] sm:$0xf]
  %v140 = vld [vmem:[%s1 + $0x90] sm:$0xf]
  %v141 = vld [vmem:[%s1 + $0x94] sm:$0xf]
  %v142 = vld [vmem:[%s1 + $0x98] sm:$0xf]
  %v143 = vld [vmem:[%s1 + $0x9c] sm:$0xf]
  %v144 = vld [vmem:[%s1 + $0xa0] sm:$0xf]
  %v145 = vld [vmem:[%s1 + $0xa4] sm:$0xf]
  %v146 = vld [vmem:[%s1 + $0xa8] sm:$0xf]
  %v147 = vld [vmem:[%s1 + $0xac] sm:$0xf]
  %v148 = vld [vmem:[%s1 + $0xb0] sm:$0xf]
  %v149 = vld [vmem:[%s1 + $0xb4] sm:$0xf]
  %v150 = vld [vmem:[%s1 + $0xb8] sm:$0xf]
  %v151 = vld [vmem:[%s1 + $0xbc] sm:$0xf]
  %v152 = vld [vmem:[%s1 + $0xc0] sm:$0xf]
  %v153 = vld [vmem:[%s1 + $0xc4] sm:$0xf]
  %v154 = vld [vmem:[%s1 + $0xc8] sm:$0xf]
  %v155 = vld [vmem:[%s1 + $0xcc] sm:$0xf]
  %v156 = vld [vmem:[%s1 + $0xd0] sm:$0xf]
  %v157 = vld [vmem:[%s1 + $0xd4] sm:$0xf]
  %v158 = vld [vmem:[%s1 + $0xd8] sm:$0xf]
  %v159 = vld [vmem:[%s1 + $0xdc] sm:$0xf]
  %v160 = vld [vmem:[%s1 + $0xe0] sm:$0xf]
  %v161 = vld [vmem:[%s1 + $0xe4] sm:$0xf]
  %v162 = vld [vmem:[%s1 + $0xe8] sm:$0xf]
  %v163 = vld [vmem:[%s1 + $0xec] sm:$0xf]
  %v164 = vld [vmem:[%s1 + $0xf0] sm:$0xf]
  %v165 = vld [vmem:[%s1 + $0xf4] sm:$0xf]
  %v166 = vld [vmem:[%s1 + $0xf8] sm:$0xf]
  %v167 = vld [vmem:[%s1 + $0xfc] sm:$0xf]
  %s168 = scalar_lea.vmem %s4, 64
  %v169 = vld [vmem:[%s168] sm:$0xf]
  %v170 = vld [vmem:[%s168 + $0x4] sm:$0xf]
  %v171 = vld [vmem:[%s168 + $0x8] sm:$0xf]
  %v172 = vld [vmem:[%s168 + $0xc] sm:$0xf]
  %v173 = vld [vmem:[%s168 + $0x10] sm:$0xf]
  %v174 = vld [vmem:[%s168 + $0x14] sm:$0xf]
  %v175 = vld [vmem:[%s168 + $0x18] sm:$0xf]
  %v176 = vld [vmem:[%s168 + $0x1c] sm:$0xf]
  %v177 = vld [vmem:[%s168 + $0x20] sm:$0xf]
  %v178 = vld [vmem:[%s168 + $0x24] sm:$0xf]
  %v179 = vld [vmem:[%s168 + $0x28] sm:$0xf]
  %v180 = vld [vmem:[%s168 + $0x2c] sm:$0xf]
  %v181 = vld [vmem:[%s168 + $0x30] sm:$0xf]
  %v182 = vld [vmem:[%s168 + $0x34] sm:$0xf]
  %v183 = vld [vmem:[%s168 + $0x38] sm:$0xf]
  %v184 = vld [vmem:[%s168 + $0x3c] sm:$0xf]
  %v249 = vunpack.c.l.b16 %v104
  %v250 = vunpack.c.l.b16 %v105
  %v251 = vunpack.c.l.b16 %v106
  %v252 = vunpack.c.l.b16 %v107
  %v253 = vunpack.c.l.b16 %v108
  %v254 = vunpack.c.l.b16 %v109
  %v255 = vunpack.c.l.b16 %v110
  %v256 = vunpack.c.l.b16 %v111
  %v257 = vunpack.c.l.b16 %v112
  %v258 = vunpack.c.l.b16 %v113
  %v259 = vunpack.c.l.b16 %v114
  %v260 = vunpack.c.l.b16 %v115
  %v261 = vunpack.c.l.b16 %v116
  %v262 = vunpack.c.l.b16 %v117
  %v263 = vunpack.c.l.b16 %v118
  %v264 = vunpack.c.l.b16 %v119
  %v265 = vunpack.c.l.b16 %v120
  %v266 = vunpack.c.l.b16 %v121
  %v267 = vunpack.c.l.b16 %v122
  %v268 = vunpack.c.l.b16 %v123
  %v269 = vunpack.c.l.b16 %v124
  %v270 = vunpack.c.l.b16 %v125
  %v271 = vunpack.c.l.b16 %v126
  %v272 = vunpack.c.l.b16 %v127
  %v273 = vunpack.c.l.b16 %v128
  %v274 = vunpack.c.l.b16 %v129
  %v275 = vunpack.c.l.b16 %v130
  %v276 = vunpack.c.l.b16 %v131
  %v277 = vunpack.c.l.b16 %v132
  %v278 = vunpack.c.l.b16 %v133
  %v279 = vunpack.c.l.b16 %v134
  %v280 = vunpack.c.l.b16 %v135
  %v281 = vunpack.c.l.b16 %v136
  %v282 = vunpack.c.l.b16 %v137
  %v283 = vunpack.c.l.b16 %v138
  %v284 = vunpack.c.l.b16 %v139
  %v285 = vunpack.c.l.b16 %v140
  %v286 = vunpack.c.l.b16 %v141
  %v287 = vunpack.c.l.b16 %v142
  %v288 = vunpack.c.l.b16 %v143
  %v289 = vunpack.c.l.b16 %v144
  %v290 = vunpack.c.l.b16 %v145
  %v291 = vunpack.c.l.b16 %v146
  %v292 = vunpack.c.l.b16 %v147
  %v293 = vunpack.c.l.b16 %v148
  %v294 = vunpack.c.l.b16 %v149
  %v295 = vunpack.c.l.b16 %v150
  %v296 = vunpack.c.l.b16 %v151
  %v297 = vunpack.c.l.b16 %v152
  %v298 = vunpack.c.l.b16 %v153
  %v299 = vunpack.c.l.b16 %v154
  %v300 = vunpack.c.l.b16 %v155
  %v301 = vunpack.c.l.b16 %v156
  %v302 = vunpack.c.l.b16 %v157
  %v303 = vunpack.c.l.b16 %v158
  %v304 = vunpack.c.l.b16 %v159
  %v305 = vunpack.c.l.b16 %v160
  %v306 = vunpack.c.l.b16 %v161
  %v307 = vunpack.c.l.b16 %v162
  %v308 = vunpack.c.l.b16 %v163
  %v309 = vunpack.c.l.b16 %v164
  %v310 = vunpack.c.l.b16 %v165
  %v311 = vunpack.c.l.b16 %v166
  %v312 = vunpack.c.l.b16 %v167
  %v313 = vpack.c.b16 %v250, %v249
  %v314 = vpack.c.b16 %v252, %v251
  %v315 = vpack.c.b16 %v254, %v253
  %v316 = vpack.c.b16 %v256, %v255
  %v317 = vpack.c.b16 %v258, %v257
  %v318 = vpack.c.b16 %v260, %v259
  %v319 = vpack.c.b16 %v262, %v261
  %v320 = vpack.c.b16 %v264, %v263
  %v321 = vpack.c.b16 %v266, %v265
  %v322 = vpack.c.b16 %v268, %v267
  %v323 = vpack.c.b16 %v270, %v269
  %v324 = vpack.c.b16 %v272, %v271
  %v325 = vpack.c.b16 %v274, %v273
  %v326 = vpack.c.b16 %v276, %v275
  %v327 = vpack.c.b16 %v278, %v277
  %v328 = vpack.c.b16 %v280, %v279
  %v329 = vpack.c.b16 %v282, %v281
  %v330 = vpack.c.b16 %v284, %v283
  %v331 = vpack.c.b16 %v286, %v285
  %v332 = vpack.c.b16 %v288, %v287
  %v333 = vpack.c.b16 %v290, %v289
  %v334 = vpack.c.b16 %v292, %v291
  %v335 = vpack.c.b16 %v294, %v293
  %v336 = vpack.c.b16 %v296, %v295
  %v337 = vpack.c.b16 %v298, %v297
  %v338 = vpack.c.b16 %v300, %v299
  %v339 = vpack.c.b16 %v302, %v301
  %v340 = vpack.c.b16 %v304, %v303
  %v341 = vpack.c.b16 %v306, %v305
  %v342 = vpack.c.b16 %v308, %v307
  %v343 = vpack.c.b16 %v310, %v309
  %v344 = vpack.c.b16 %v312, %v311
  %v393 = vunpack.c.l.b16 %v169
  %v394 = vunpack.c.l.b16 %v170
  %v395 = vunpack.c.l.b16 %v171
  %v396 = vunpack.c.l.b16 %v172
  %v397 = vunpack.c.l.b16 %v173
  %v398 = vunpack.c.l.b16 %v174
  %v399 = vunpack.c.l.b16 %v175
  %v400 = vunpack.c.l.b16 %v176
  %v401 = vunpack.c.l.b16 %v177
  %v402 = vunpack.c.l.b16 %v178
  %v403 = vunpack.c.l.b16 %v179
  %v404 = vunpack.c.l.b16 %v180
  %v405 = vunpack.c.l.b16 %v181
  %v406 = vunpack.c.l.b16 %v182
  %v407 = vunpack.c.l.b16 %v183
  %v408 = vunpack.c.l.b16 %v184
  %v409 = vpack.c.b16 %v394, %v393
  %v410 = vpack.c.b16 %v396, %v395
  %v411 = vpack.c.b16 %v398, %v397
  %v412 = vpack.c.b16 %v400, %v399
  %v413 = vpack.c.b16 %v402, %v401
  %v414 = vpack.c.b16 %v404, %v403
  %v415 = vpack.c.b16 %v406, %v405
  %v416 = vpack.c.b16 %v408, %v407
  %425 = vmatprep.subr.bf16.mxu0 0
  %426 = vmatpush1.bf16.msra.mxu0 %v409
  %427 = vmatprep.subr.bf16.mxu0 0
  %428 = vmatpush1.bf16.msra.mxu0 %v410
  %429 = vmatprep.subr.bf16.mxu0 0
  %430 = vmatpush1.bf16.msra.mxu0 %v411
  %431 = vmatprep.subr.bf16.mxu0 0
  %432 = vmatpush1.bf16.msra.mxu0 %v412
  %433 = vmatprep.subr.bf16.mxu0 0
  %434 = vmatpush1.bf16.msra.mxu0 %v413
  %435 = vmatprep.subr.bf16.mxu0 0
  %436 = vmatpush1.bf16.msra.mxu0 %v414
  %437 = vmatprep.subr.bf16.mxu0 0
  %438 = vmatpush1.bf16.msra.mxu0 %v415
  %439 = vmatprep.subr.bf16.mxu0 0
  %440 = vmatpush1.bf16.msra.mxu0 %v416
  %441 = vmatprep.subr.bf16.mxu0 0
  %442 = vmatpush1.bf16.msra.mxu0 0
  %443 = vmatprep.subr.bf16.mxu0 0
  %444 = vmatpush1.bf16.msra.mxu0 0
  %445 = vmatprep.subr.bf16.mxu0 0
  %446 = vmatpush1.bf16.msra.mxu0 0
  %447 = vmatprep.subr.bf16.mxu0 0
  %448 = vmatpush1.bf16.msra.mxu0 0
  %449 = vmatprep.subr.bf16.mxu0 0
  %450 = vmatpush1.bf16.msra.mxu0 0
  %451 = vmatprep.subr.bf16.mxu0 0
  %452 = vmatpush1.bf16.msra.mxu0 0
  %453 = vmatprep.subr.bf16.mxu0 0
  %454 = vmatpush1.bf16.msra.mxu0 0
  %455 = vmatprep.subr.bf16.mxu0 0
  %456 = vmatpush1.bf16.msra.mxu0 0
  %457 = vmatprep.mubr.bf16.mxu0 0
  %458 = vmatmul.mubr.bf16.gmra.mrb[0].mxu0 %v313
  %v459 = vpop.f32.mrb[0].mxu0
  %v460 = vadd.f32 0.0, %v459
  %v461 = vpop.f32.mrb[0].mxu0
  %v462 = vpop.f32.mrb[0].mxu0
  %v463 = vadd.f32 0.0, %v462
  %v464 = vpop.f32.mrb[0].mxu0
  %465 = vmatprep.mubr.bf16.mxu0 0
  %466 = vmatmul.mubr.bf16.gmra.mrb[0].mxu0 %v314
  %v467 = vpop.f32.mrb[0].mxu0
  %v468 = vadd.f32 0.0, %v467
  %v469 = vpop.f32.mrb[0].mxu0
  %v470 = vpop.f32.mrb[0].mxu0
  %v471 = vadd.f32 0.0, %v470
  %v472 = vpop.f32.mrb[0].mxu0
  %473 = vmatprep.mubr.bf16.mxu0 0
  %474 = vmatmul.mubr.bf16.gmra.mrb[0].mxu0 %v315
  %v475 = vpop.f32.mrb[0].mxu0
  %v476 = vadd.f32 0.0, %v475
  %v477 = vpop.f32.mrb[0].mxu0
  %v478 = vpop.f32.mrb[0].mxu0
  %v479 = vadd.f32 0.0, %v478
  %v480 = vpop.f32.mrb[0].mxu0
  %481 = vmatprep.mubr.bf16.mxu0 0
  %482 = vmatmul.mubr.bf16.gmra.mrb[0].mxu0 %v316
  %v483 = vpop.f32.mrb[0].mxu0
  %v484 = vadd.f32 0.0, %v483
  %v485 = vpop.f32.mrb[0].mxu0
  %v486 = vpop.f32.mrb[0].mxu0
  %v487 = vadd.f32 0.0, %v486
  %v488 = vpop.f32.mrb[0].mxu0
  %489 = vmatprep.mubr.bf16.mxu0 0
  %490 = vmatmul.mubr.bf16.gmra.mrb[0].mxu0 %v317
  %v491 = vpop.f32.mrb[0].mxu0
  %v492 = vadd.f32 0.0, %v491
  %v493 = vpop.f32.mrb[0].mxu0
  %v494 = vpop.f32.mrb[0].mxu0
  %v495 = vadd.f32 0.0, %v494
  %v496 = vpop.f32.mrb[0].mxu0
  %497 = vmatprep.mubr.bf16.mxu0 0
  %498 = vmatmul.mubr.bf16.gmra.mrb[0].mxu0 %v318
  %v499 = vpop.f32.mrb[0].mxu0
  %v500 = vadd.f32 0.0, %v499
  %v501 = vpop.f32.mrb[0].mxu0
  %v502 = vpop.f32.mrb[0].mxu0
  %v503 = vadd.f32 0.0, %v502
  %v504 = vpop.f32.mrb[0].mxu0
  %505 = vmatprep.mubr.bf16.mxu0 0
  %506 = vmatmul.mubr.bf16.gmra.mrb[0].mxu0 %v319
  %v507 = vpop.f32.mrb[0].mxu0
  %v508 = vadd.f32 0.0, %v507
  %v509 = vpop.f32.mrb[0].mxu0
  %v510 = vpop.f32.mrb[0].mxu0
  %v511 = vadd.f32 0.0, %v510
  %v512 = vpop.f32.mrb[0].mxu0
  %513 = vmatprep.mubr.bf16.mxu0 0
  %514 = vmatmul.mubr.bf16.gmra.mrb[0].mxu0 %v320
  %v515 = vpop.f32.mrb[0].mxu0
  %v516 = vadd.f32 0.0, %v515
  %v517 = vpop.f32.mrb[0].mxu0
  %v518 = vpop.f32.mrb[0].mxu0
  %v519 = vadd.f32 0.0, %v518
  %v520 = vpop.f32.mrb[0].mxu0
  %521 = vmatprep.mubr.bf16.mxu0 0
  %522 = vmatmul.mubr.bf16.gmra.mrb[0].mxu0 %v321
  %v523 = vpop.f32.mrb[0].mxu0
  %v524 = vadd.f32 0.0, %v523
  %v525 = vpop.f32.mrb[0].mxu0
  %v526 = vpop.f32.mrb[0].mxu0
  %v527 = vadd.f32 0.0, %v526
  %v528 = vpop.f32.mrb[0].mxu0
  %529 = vmatprep.mubr.bf16.mxu0 0
  %530 = vmatmul.mubr.bf16.gmra.mrb[0].mxu0 %v322
  %v531 = vpop.f32.mrb[0].mxu0
  %v532 = vadd.f32 0.0, %v531
  %v533 = vpop.f32.mrb[0].mxu0
  %v534 = vpop.f32.mrb[0].mxu0
  %v535 = vadd.f32 0.0, %v534
  %v536 = vpop.f32.mrb[0].mxu0
  %537 = vmatprep.mubr.bf16.mxu0 0
  %538 = vmatmul.mubr.bf16.gmra.mrb[0].mxu0 %v323
  %v539 = vpop.f32.mrb[0].mxu0
  %v540 = vadd.f32 0.0, %v539
  %v541 = vpop.f32.mrb[0].mxu0
  %v542 = vpop.f32.mrb[0].mxu0
  %v543 = vadd.f32 0.0, %v542
  %v544 = vpop.f32.mrb[0].mxu0
  %545 = vmatprep.mubr.bf16.mxu0 0
  %546 = vmatmul.mubr.bf16.gmra.mrb[0].mxu0 %v324
  %v547 = vpop.f32.mrb[0].mxu0
  %v548 = vadd.f32 0.0, %v547
  %v549 = vpop.f32.mrb[0].mxu0
  %v550 = vpop.f32.mrb[0].mxu0
  %v551 = vadd.f32 0.0, %v550
  %v552 = vpop.f32.mrb[0].mxu0
  %553 = vmatprep.mubr.bf16.mxu0 0
  %554 = vmatmul.mubr.bf16.gmra.mrb[0].mxu0 %v325
  %v555 = vpop.f32.mrb[0].mxu0
  %v556 = vadd.f32 0.0, %v555
  %v557 = vpop.f32.mrb[0].mxu0
  %v558 = vpop.f32.mrb[0].mxu0
  %v559 = vadd.f32 0.0, %v558
  %v560 = vpop.f32.mrb[0].mxu0
  %561 = vmatprep.mubr.bf16.mxu0 0
  %562 = vmatmul.mubr.bf16.gmra.mrb[0].mxu0 %v326
  %v563 = vpop.f32.mrb[0].mxu0
  %v564 = vadd.f32 0.0, %v563
  %v565 = vpop.f32.mrb[0].mxu0
  %v566 = vpop.f32.mrb[0].mxu0
  %v567 = vadd.f32 0.0, %v566
  %v568 = vpop.f32.mrb[0].mxu0
  %569 = vmatprep.mubr.bf16.mxu0 0
  %570 = vmatmul.mubr.bf16.gmra.mrb[0].mxu0 %v327
  %v571 = vpop.f32.mrb[0].mxu0
  %v572 = vadd.f32 0.0, %v571
  %v573 = vpop.f32.mrb[0].mxu0
  %v574 = vpop.f32.mrb[0].mxu0
  %v575 = vadd.f32 0.0, %v574
  %v576 = vpop.f32.mrb[0].mxu0
  %577 = vmatprep.mubr.bf16.mxu0 0
  %578 = vmatmul.mubr.bf16.gmra.mrb[0].mxu0 %v328
  %v579 = vpop.f32.mrb[0].mxu0
  %v580 = vadd.f32 0.0, %v579
  %v581 = vpop.f32.mrb[0].mxu0
  %v582 = vpop.f32.mrb[0].mxu0
  %v583 = vadd.f32 0.0, %v582
  %v584 = vpop.f32.mrb[0].mxu0
  %585 = vmatprep.mubr.bf16.mxu0 0
  %586 = vmatmul.mubr.bf16.gmra.mrb[0].mxu0 %v329
  %v587 = vpop.f32.mrb[0].mxu0
  %v588 = vadd.f32 0.0, %v587
  %v589 = vpop.f32.mrb[0].mxu0
  %v590 = vpop.f32.mrb[0].mxu0
  %v591 = vadd.f32 0.0, %v590
  %v592 = vpop.f32.mrb[0].mxu0
  %593 = vmatprep.mubr.bf16.mxu0 0
  %594 = vmatmul.mubr.bf16.gmra.mrb[0].mxu0 %v330
  %v595 = vpop.f32.mrb[0].mxu0
  %v596 = vadd.f32 0.0, %v595
  %v597 = vpop.f32.mrb[0].mxu0
  %v598 = vpop.f32.mrb[0].mxu0
  %v599 = vadd.f32 0.0, %v598
  %v600 = vpop.f32.mrb[0].mxu0
  %601 = vmatprep.mubr.bf16.mxu0 0
  %602 = vmatmul.mubr.bf16.gmra.mrb[0].mxu0 %v331
  %v603 = vpop.f32.mrb[0].mxu0
  %v604 = vadd.f32 0.0, %v603
  %v605 = vpop.f32.mrb[0].mxu0
  %v606 = vpop.f32.mrb[0].mxu0
  %v607 = vadd.f32 0.0, %v606
  %v608 = vpop.f32.mrb[0].mxu0
  %609 = vmatprep.mubr.bf16.mxu0 0
  %610 = vmatmul.mubr.bf16.gmra.mrb[0].mxu0 %v332
  %v611 = vpop.f32.mrb[0].mxu0
  %v612 = vadd.f32 0.0, %v611
  %v613 = vpop.f32.mrb[0].mxu0
  %v614 = vpop.f32.mrb[0].mxu0
  %v615 = vadd.f32 0.0, %v614
  %v616 = vpop.f32.mrb[0].mxu0
  %617 = vmatprep.mubr.bf16.mxu0 0
  %618 = vmatmul.mubr.bf16.gmra.mrb[0].mxu0 %v333
  %v619 = vpop.f32.mrb[0].mxu0
  %v620 = vadd.f32 0.0, %v619
  %v621 = vpop.f32.mrb[0].mxu0
  %v622 = vpop.f32.mrb[0].mxu0
  %v623 = vadd.f32 0.0, %v622
  %v624 = vpop.f32.mrb[0].mxu0
  %625 = vmatprep.mubr.bf16.mxu0 0
  %626 = vmatmul.mubr.bf16.gmra.mrb[0].mxu0 %v334
  %v627 = vpop.f32.mrb[0].mxu0
  %v628 = vadd.f32 0.0, %v627
  %v629 = vpop.f32.mrb[0].mxu0
  %v630 = vpop.f32.mrb[0].mxu0
  %v631 = vadd.f32 0.0, %v630
  %v632 = vpop.f32.mrb[0].mxu0
  %633 = vmatprep.mubr.bf16.mxu0 0
  %634 = vmatmul.mubr.bf16.gmra.mrb[0].mxu0 %v335
  %v635 = vpop.f32.mrb[0].mxu0
  %v636 = vadd.f32 0.0, %v635
  %v637 = vpop.f32.mrb[0].mxu0
  %v638 = vpop.f32.mrb[0].mxu0
  %v639 = vadd.f32 0.0, %v638
  %v640 = vpop.f32.mrb[0].mxu0
  %641 = vmatprep.mubr.bf16.mxu0 0
  %642 = vmatmul.mubr.bf16.gmra.mrb[0].mxu0 %v336
  %v643 = vpop.f32.mrb[0].mxu0
  %v644 = vadd.f32 0.0, %v643
  %v645 = vpop.f32.mrb[0].mxu0
  %v646 = vpop.f32.mrb[0].mxu0
  %v647 = vadd.f32 0.0, %v646
  %v648 = vpop.f32.mrb[0].mxu0
  %649 = vmatprep.mubr.bf16.mxu0 0
  %650 = vmatmul.mubr.bf16.gmra.mrb[0].mxu0 %v337
  %v651 = vpop.f32.mrb[0].mxu0
  %v652 = vadd.f32 0.0, %v651
  %v653 = vpop.f32.mrb[0].mxu0
  %v654 = vpop.f32.mrb[0].mxu0
  %v655 = vadd.f32 0.0, %v654
  %v656 = vpop.f32.mrb[0].mxu0
  %657 = vmatprep.mubr.bf16.mxu0 0
  %658 = vmatmul.mubr.bf16.gmra.mrb[0].mxu0 %v338
  %v659 = vpop.f32.mrb[0].mxu0
  %v660 = vadd.f32 0.0, %v659
  %v661 = vpop.f32.mrb[0].mxu0
  %v662 = vpop.f32.mrb[0].mxu0
  %v663 = vadd.f32 0.0, %v662
  %v664 = vpop.f32.mrb[0].mxu0
  %665 = vmatprep.mubr.bf16.mxu0 0
  %666 = vmatmul.mubr.bf16.gmra.mrb[0].mxu0 %v339
  %v667 = vpop.f32.mrb[0].mxu0
  %v668 = vadd.f32 0.0, %v667
  %v669 = vpop.f32.mrb[0].mxu0
  %v670 = vpop.f32.mrb[0].mxu0
  %v671 = vadd.f32 0.0, %v670
  %v672 = vpop.f32.mrb[0].mxu0
  %673 = vmatprep.mubr.bf16.mxu0 0
  %674 = vmatmul.mubr.bf16.gmra.mrb[0].mxu0 %v340
  %v675 = vpop.f32.mrb[0].mxu0
  %v676 = vadd.f32 0.0, %v675
  %v677 = vpop.f32.mrb[0].mxu0
  %v678 = vpop.f32.mrb[0].mxu0
  %v679 = vadd.f32 0.0, %v678
  %v680 = vpop.f32.mrb[0].mxu0
  %681 = vmatprep.mubr.bf16.mxu0 0
  %682 = vmatmul.mubr.bf16.gmra.mrb[0].mxu0 %v341
  %v683 = vpop.f32.mrb[0].mxu0
  %v684 = vadd.f32 0.0, %v683
  %v685 = vpop.f32.mrb[0].mxu0
  %v686 = vpop.f32.mrb[0].mxu0
  %v687 = vadd.f32 0.0, %v686
  %v688 = vpop.f32.mrb[0].mxu0
  %689 = vmatprep.mubr.bf16.mxu0 0
  %690 = vmatmul.mubr.bf16.gmra.mrb[0].mxu0 %v342
  %v691 = vpop.f32.mrb[0].mxu0
  %v692 = vadd.f32 0.0, %v691
  %v693 = vpop.f32.mrb[0].mxu0
  %v694 = vpop.f32.mrb[0].mxu0
  %v695 = vadd.f32 0.0, %v694
  %v696 = vpop.f32.mrb[0].mxu0
  %697 = vmatprep.mubr.bf16.mxu0 0
  %698 = vmatmul.mubr.bf16.gmra.mrb[0].mxu0 %v343
  %v699 = vpop.f32.mrb[0].mxu0
  %v700 = vadd.f32 0.0, %v699
  %v701 = vpop.f32.mrb[0].mxu0
  %v702 = vpop.f32.mrb[0].mxu0
  %v703 = vadd.f32 0.0, %v702
  %v704 = vpop.f32.mrb[0].mxu0
  %705 = vmatprep.mubr.bf16.mxu0 0
  %706 = vmatmul.mubr.bf16.gmra.mrb[0].mxu0 %v344
  %v707 = vpop.f32.mrb[0].mxu0
  %v708 = vadd.f32 0.0, %v707
  %v709 = vpop.f32.mrb[0].mxu0
  %v710 = vpop.f32.mrb[0].mxu0
  %v711 = vadd.f32 0.0, %v710
  %v712 = vpop.f32.mrb[0].mxu0
  %713 = vdwg.mxu0
  %v778 = vunpack.c.l.b16 %v24
  %v779 = vunpack.c.l.b16 %v25
  %v780 = vunpack.c.l.b16 %v26
  %v781 = vunpack.c.l.b16 %v27
  %v782 = vunpack.c.l.b16 %v28
  %v783 = vunpack.c.l.b16 %v29
  %v784 = vunpack.c.l.b16 %v30
  %v785 = vunpack.c.l.b16 %v31
  %v786 = vunpack.c.l.b16 %v32
  %v787 = vunpack.c.l.b16 %v33
  %v788 = vunpack.c.l.b16 %v34
  %v789 = vunpack.c.l.b16 %v35
  %v790 = vunpack.c.l.b16 %v36
  %v791 = vunpack.c.l.b16 %v37
  %v792 = vunpack.c.l.b16 %v38
  %v793 = vunpack.c.l.b16 %v39
  %v794 = vunpack.c.l.b16 %v40
  %v795 = vunpack.c.l.b16 %v41
  %v796 = vunpack.c.l.b16 %v42
  %v797 = vunpack.c.l.b16 %v43
  %v798 = vunpack.c.l.b16 %v44
  %v799 = vunpack.c.l.b16 %v45
  %v800 = vunpack.c.l.b16 %v46
  %v801 = vunpack.c.l.b16 %v47
  %v802 = vunpack.c.l.b16 %v48
  %v803 = vunpack.c.l.b16 %v49
  %v804 = vunpack.c.l.b16 %v50
  %v805 = vunpack.c.l.b16 %v51
  %v806 = vunpack.c.l.b16 %v52
  %v807 = vunpack.c.l.b16 %v53
  %v808 = vunpack.c.l.b16 %v54
  %v809 = vunpack.c.l.b16 %v55
  %v810 = vunpack.c.l.b16 %v56
  %v811 = vunpack.c.l.b16 %v57
  %v812 = vunpack.c.l.b16 %v58
  %v813 = vunpack.c.l.b16 %v59
  %v814 = vunpack.c.l.b16 %v60
  %v815 = vunpack.c.l.b16 %v61
  %v816 = vunpack.c.l.b16 %v62
  %v817 = vunpack.c.l.b16 %v63
  %v818 = vunpack.c.l.b16 %v64
  %v819 = vunpack.c.l.b16 %v65
  %v820 = vunpack.c.l.b16 %v66
  %v821 = vunpack.c.l.b16 %v67
  %v822 = vunpack.c.l.b16 %v68
  %v823 = vunpack.c.l.b16 %v69
  %v824 = vunpack.c.l.b16 %v70
  %v825 = vunpack.c.l.b16 %v71
  %v826 = vunpack.c.l.b16 %v72
  %v827 = vunpack.c.l.b16 %v73
  %v828 = vunpack.c.l.b16 %v74
  %v829 = vunpack.c.l.b16 %v75
  %v830 = vunpack.c.l.b16 %v76
  %v831 = vunpack.c.l.b16 %v77
  %v832 = vunpack.c.l.b16 %v78
  %v833 = vunpack.c.l.b16 %v79
  %v834 = vunpack.c.l.b16 %v80
  %v835 = vunpack.c.l.b16 %v81
  %v836 = vunpack.c.l.b16 %v82
  %v837 = vunpack.c.l.b16 %v83
  %v838 = vunpack.c.l.b16 %v84
  %v839 = vunpack.c.l.b16 %v85
  %v840 = vunpack.c.l.b16 %v86
  %v841 = vunpack.c.l.b16 %v87
  %v842 = vpack.c.b16 %v779, %v778
  %v843 = vpack.c.b16 %v781, %v780
  %v844 = vpack.c.b16 %v783, %v782
  %v845 = vpack.c.b16 %v785, %v784
  %v846 = vpack.c.b16 %v787, %v786
  %v847 = vpack.c.b16 %v789, %v788
  %v848 = vpack.c.b16 %v791, %v790
  %v849 = vpack.c.b16 %v793, %v792
  %v850 = vpack.c.b16 %v795, %v794
  %v851 = vpack.c.b16 %v797, %v796
  %v852 = vpack.c.b16 %v799, %v798
  %v853 = vpack.c.b16 %v801, %v800
  %v854 = vpack.c.b16 %v803, %v802
  %v855 = vpack.c.b16 %v805, %v804
  %v856 = vpack.c.b16 %v807, %v806
  %v857 = vpack.c.b16 %v809, %v808
  %v858 = vpack.c.b16 %v811, %v810
  %v859 = vpack.c.b16 %v813, %v812
  %v860 = vpack.c.b16 %v815, %v814
  %v861 = vpack.c.b16 %v817, %v816
  %v862 = vpack.c.b16 %v819, %v818
  %v863 = vpack.c.b16 %v821, %v820
  %v864 = vpack.c.b16 %v823, %v822
  %v865 = vpack.c.b16 %v825, %v824
  %v866 = vpack.c.b16 %v827, %v826
  %v867 = vpack.c.b16 %v829, %v828
  %v868 = vpack.c.b16 %v831, %v830
  %v869 = vpack.c.b16 %v833, %v832
  %v870 = vpack.c.b16 %v835, %v834
  %v871 = vpack.c.b16 %v837, %v836
  %v872 = vpack.c.b16 %v839, %v838
  %v873 = vpack.c.b16 %v841, %v840
  %v922 = vunpack.c.l.b16 %v88
  %v923 = vunpack.c.l.b16 %v89
  %v924 = vunpack.c.l.b16 %v90
  %v925 = vunpack.c.l.b16 %v91
  %v926 = vunpack.c.l.b16 %v92
  %v927 = vunpack.c.l.b16 %v93
  %v928 = vunpack.c.l.b16 %v94
  %v929 = vunpack.c.l.b16 %v95
  %v930 = vunpack.c.l.b16 %v96
  %v931 = vunpack.c.l.b16 %v97
  %v932 = vunpack.c.l.b16 %v98
  %v933 = vunpack.c.l.b16 %v99
  %v934 = vunpack.c.l.b16 %v100
  %v935 = vunpack.c.l.b16 %v101
  %v936 = vunpack.c.l.b16 %v102
  %v937 = vunpack.c.l.b16 %v103
  %v938 = vpack.c.b16 %v923, %v922
  %v939 = vpack.c.b16 %v925, %v924
  %v940 = vpack.c.b16 %v927, %v926
  %v941 = vpack.c.b16 %v929, %v928
  %v942 = vpack.c.b16 %v931, %v930
  %v943 = vpack.c.b16 %v933, %v932
  %v944 = vpack.c.b16 %v935, %v934
  %v945 = vpack.c.b16 %v937, %v936
  %954 = vmatprep.subr.bf16.mxu0 0
  %955 = vmatpush1.bf16.msra.mxu0 %v938
  %956 = vmatprep.subr.bf16.mxu0 0
  %957 = vmatpush1.bf16.msra.mxu0 %v939
  %958 = vmatprep.subr.bf16.mxu0 0
  %959 = vmatpush1.bf16.msra.mxu0 %v940
  %960 = vmatprep.subr.bf16.mxu0 0
  %961 = vmatpush1.bf16.msra.mxu0 %v941
  %962 = vmatprep.subr.bf16.mxu0 0
  %963 = vmatpush1.bf16.msra.mxu0 %v942
  %964 = vmatprep.subr.bf16.mxu0 0
  %965 = vmatpush1.bf16.msra.mxu0 %v943
  %966 = vmatprep.subr.bf16.mxu0 0
  %967 = vmatpush1.bf16.msra.mxu0 %v944
  %968 = vmatprep.subr.bf16.mxu0 0
  %969 = vmatpush1.bf16.msra.mxu0 %v945
  %970 = vmatprep.subr.bf16.mxu0 0
  %971 = vmatpush1.bf16.msra.mxu0 0
  %972 = vmatprep.subr.bf16.mxu0 0
  %973 = vmatpush1.bf16.msra.mxu0 0
  %974 = vmatprep.subr.bf16.mxu0 0
  %975 = vmatpush1.bf16.msra.mxu0 0
  %976 = vmatprep.subr.bf16.mxu0 0
  %977 = vmatpush1.bf16.msra.mxu0 0
  %978 = vmatprep.subr.bf16.mxu0 0
  %979 = vmatpush1.bf16.msra.mxu0 0
  %980 = vmatprep.subr.bf16.mxu0 0
  %981 = vmatpush1.bf16.msra.mxu0 0
  %982 = vmatprep.subr.bf16.mxu0 0
  %983 = vmatpush1.bf16.msra.mxu0 0
  %984 = vmatprep.subr.bf16.mxu0 0
  %985 = vmatpush1.bf16.msra.mxu0 0
  %986 = vmatprep.mubr.bf16.mxu0 0
  %987 = vmatmul.mubr.bf16.gmra.mrb[0].mxu0 %v842
  %v988 = vpop.f32.mrb[0].mxu0
  %v989 = vadd.f32 %v460, %v988
  %v990 = vpop.f32.mrb[0].mxu0
  %v991 = vpop.f32.mrb[0].mxu0
  %v992 = vadd.f32 %v463, %v991
  %v993 = vpop.f32.mrb[0].mxu0
  %994 = vmatprep.mubr.bf16.mxu0 0
  %995 = vmatmul.mubr.bf16.gmra.mrb[0].mxu0 %v843
  %v996 = vpop.f32.mrb[0].mxu0
  %v997 = vadd.f32 %v468, %v996
  %v998 = vpop.f32.mrb[0].mxu0
  %v999 = vpop.f32.mrb[0].mxu0
  %v1000 = vadd.f32 %v471, %v999
  %v1001 = vpop.f32.mrb[0].mxu0
  %1002 = vmatprep.mubr.bf16.mxu0 0
  %1003 = vmatmul.mubr.bf16.gmra.mrb[0].mxu0 %v844
  %v1004 = vpop.f32.mrb[0].mxu0
  %v1005 = vadd.f32 %v476, %v1004
  %v1006 = vpop.f32.mrb[0].mxu0
  %v1007 = vpop.f32.mrb[0].mxu0
  %v1008 = vadd.f32 %v479, %v1007
  %v1009 = vpop.f32.mrb[0].mxu0
  %1010 = vmatprep.mubr.bf16.mxu0 0
  %1011 = vmatmul.mubr.bf16.gmra.mrb[0].mxu0 %v845
  %v1012 = vpop.f32.mrb[0].mxu0
  %v1013 = vadd.f32 %v484, %v1012
  %v1014 = vpop.f32.mrb[0].mxu0
  %v1015 = vpop.f32.mrb[0].mxu0
  %v1016 = vadd.f32 %v487, %v1015
  %v1017 = vpop.f32.mrb[0].mxu0
  %1018 = vmatprep.mubr.bf16.mxu0 0
  %1019 = vmatmul.mubr.bf16.gmra.mrb[0].mxu0 %v846
  %v1020 = vpop.f32.mrb[0].mxu0
  %v1021 = vadd.f32 %v492, %v1020
  %v1022 = vpop.f32.mrb[0].mxu0
  %v1023 = vpop.f32.mrb[0].mxu0
  %v1024 = vadd.f32 %v495, %v1023
  %v1025 = vpop.f32.mrb[0].mxu0
  %1026 = vmatprep.mubr.bf16.mxu0 0
  %1027 = vmatmul.mubr.bf16.gmra.mrb[0].mxu0 %v847
  %v1028 = vpop.f32.mrb[0].mxu0
  %v1029 = vadd.f32 %v500, %v1028
  %v1030 = vpop.f32.mrb[0].mxu0
  %v1031 = vpop.f32.mrb[0].mxu0
  %v1032 = vadd.f32 %v503, %v1031
  %v1033 = vpop.f32.mrb[0].mxu0
  %1034 = vmatprep.mubr.bf16.mxu0 0
  %1035 = vmatmul.mubr.bf16.gmra.mrb[0].mxu0 %v848
  %v1036 = vpop.f32.mrb[0].mxu0
  %v1037 = vadd.f32 %v508, %v1036
  %v1038 = vpop.f32.mrb[0].mxu0
  %v1039 = vpop.f32.mrb[0].mxu0
  %v1040 = vadd.f32 %v511, %v1039
  %v1041 = vpop.f32.mrb[0].mxu0
  %1042 = vmatprep.mubr.bf16.mxu0 0
  %1043 = vmatmul.mubr.bf16.gmra.mrb[0].mxu0 %v849
  %v1044 = vpop.f32.mrb[0].mxu0
  %v1045 = vadd.f32 %v516, %v1044
  %v1046 = vpop.f32.mrb[0].mxu0
  %v1047 = vpop.f32.mrb[0].mxu0
  %v1048 = vadd.f32 %v519, %v1047
  %v1049 = vpop.f32.mrb[0].mxu0
  %1050 = vmatprep.mubr.bf16.mxu0 0
  %1051 = vmatmul.mubr.bf16.gmra.mrb[0].mxu0 %v850
  %v1052 = vpop.f32.mrb[0].mxu0
  %v1053 = vadd.f32 %v524, %v1052
  %v1054 = vpop.f32.mrb[0].mxu0
  %v1055 = vpop.f32.mrb[0].mxu0
  %v1056 = vadd.f32 %v527, %v1055
  %v1057 = vpop.f32.mrb[0].mxu0
  %1058 = vmatprep.mubr.bf16.mxu0 0
  %1059 = vmatmul.mubr.bf16.gmra.mrb[0].mxu0 %v851
  %v1060 = vpop.f32.mrb[0].mxu0
  %v1061 = vadd.f32 %v532, %v1060
  %v1062 = vpop.f32.mrb[0].mxu0
  %v1063 = vpop.f32.mrb[0].mxu0
  %v1064 = vadd.f32 %v535, %v1063
  %v1065 = vpop.f32.mrb[0].mxu0
  %1066 = vmatprep.mubr.bf16.mxu0 0
  %1067 = vmatmul.mubr.bf16.gmra.mrb[0].mxu0 %v852
  %v1068 = vpop.f32.mrb[0].mxu0
  %v1069 = vadd.f32 %v540, %v1068
  %v1070 = vpop.f32.mrb[0].mxu0
  %v1071 = vpop.f32.mrb[0].mxu0
  %v1072 = vadd.f32 %v543, %v1071
  %v1073 = vpop.f32.mrb[0].mxu0
  %1074 = vmatprep.mubr.bf16.mxu0 0
  %1075 = vmatmul.mubr.bf16.gmra.mrb[0].mxu0 %v853
  %v1076 = vpop.f32.mrb[0].mxu0
  %v1077 = vadd.f32 %v548, %v1076
  %v1078 = vpop.f32.mrb[0].mxu0
  %v1079 = vpop.f32.mrb[0].mxu0
  %v1080 = vadd.f32 %v551, %v1079
  %v1081 = vpop.f32.mrb[0].mxu0
  %1082 = vmatprep.mubr.bf16.mxu0 0
  %1083 = vmatmul.mubr.bf16.gmra.mrb[0].mxu0 %v854
  %v1084 = vpop.f32.mrb[0].mxu0
  %v1085 = vadd.f32 %v556, %v1084
  %v1086 = vpop.f32.mrb[0].mxu0
  %v1087 = vpop.f32.mrb[0].mxu0
  %v1088 = vadd.f32 %v559, %v1087
  %v1089 = vpop.f32.mrb[0].mxu0
  %1090 = vmatprep.mubr.bf16.mxu0 0
  %1091 = vmatmul.mubr.bf16.gmra.mrb[0].mxu0 %v855
  %v1092 = vpop.f32.mrb[0].mxu0
  %v1093 = vadd.f32 %v564, %v1092
  %v1094 = vpop.f32.mrb[0].mxu0
  %v1095 = vpop.f32.mrb[0].mxu0
  %v1096 = vadd.f32 %v567, %v1095
  %v1097 = vpop.f32.mrb[0].mxu0
  %1098 = vmatprep.mubr.bf16.mxu0 0
  %1099 = vmatmul.mubr.bf16.gmra.mrb[0].mxu0 %v856
  %v1100 = vpop.f32.mrb[0].mxu0
  %v1101 = vadd.f32 %v572, %v1100
  %v1102 = vpop.f32.mrb[0].mxu0
  %v1103 = vpop.f32.mrb[0].mxu0
  %v1104 = vadd.f32 %v575, %v1103
  %v1105 = vpop.f32.mrb[0].mxu0
  %1106 = vmatprep.mubr.bf16.mxu0 0
  %1107 = vmatmul.mubr.bf16.gmra.mrb[0].mxu0 %v857
  %v1108 = vpop.f32.mrb[0].mxu0
  %v1109 = vadd.f32 %v580, %v1108
  %v1110 = vpop.f32.mrb[0].mxu0
  %v1111 = vpop.f32.mrb[0].mxu0
  %v1112 = vadd.f32 %v583, %v1111
  %v1113 = vpop.f32.mrb[0].mxu0
  %1114 = vmatprep.mubr.bf16.mxu0 0
  %1115 = vmatmul.mubr.bf16.gmra.mrb[0].mxu0 %v858
  %v1116 = vpop.f32.mrb[0].mxu0
  %v1117 = vadd.f32 %v588, %v1116
  %v1118 = vpop.f32.mrb[0].mxu0
  %v1119 = vpop.f32.mrb[0].mxu0
  %v1120 = vadd.f32 %v591, %v1119
  %v1121 = vpop.f32.mrb[0].mxu0
  %1122 = vmatprep.mubr.bf16.mxu0 0
  %1123 = vmatmul.mubr.bf16.gmra.mrb[0].mxu0 %v859
  %v1124 = vpop.f32.mrb[0].mxu0
  %v1125 = vadd.f32 %v596, %v1124
  %v1126 = vpop.f32.mrb[0].mxu0
  %v1127 = vpop.f32.mrb[0].mxu0
  %v1128 = vadd.f32 %v599, %v1127
  %v1129 = vpop.f32.mrb[0].mxu0
  %1130 = vmatprep.mubr.bf16.mxu0 0
  %1131 = vmatmul.mubr.bf16.gmra.mrb[0].mxu0 %v860
  %v1132 = vpop.f32.mrb[0].mxu0
  %v1133 = vadd.f32 %v604, %v1132
  %v1134 = vpop.f32.mrb[0].mxu0
  %v1135 = vpop.f32.mrb[0].mxu0
  %v1136 = vadd.f32 %v607, %v1135
  %v1137 = vpop.f32.mrb[0].mxu0
  %1138 = vmatprep.mubr.bf16.mxu0 0
  %1139 = vmatmul.mubr.bf16.gmra.mrb[0].mxu0 %v861
  %v1140 = vpop.f32.mrb[0].mxu0
  %v1141 = vadd.f32 %v612, %v1140
  %v1142 = vpop.f32.mrb[0].mxu0
  %v1143 = vpop.f32.mrb[0].mxu0
  %v1144 = vadd.f32 %v615, %v1143
  %v1145 = vpop.f32.mrb[0].mxu0
  %1146 = vmatprep.mubr.bf16.mxu0 0
  %1147 = vmatmul.mubr.bf16.gmra.mrb[0].mxu0 %v862
  %v1148 = vpop.f32.mrb[0].mxu0
  %v1149 = vadd.f32 %v620, %v1148
  %v1150 = vpop.f32.mrb[0].mxu0
  %v1151 = vpop.f32.mrb[0].mxu0
  %v1152 = vadd.f32 %v623, %v1151
  %v1153 = vpop.f32.mrb[0].mxu0
  %1154 = vmatprep.mubr.bf16.mxu0 0
  %1155 = vmatmul.mubr.bf16.gmra.mrb[0].mxu0 %v863
  %v1156 = vpop.f32.mrb[0].mxu0
  %v1157 = vadd.f32 %v628, %v1156
  %v1158 = vpop.f32.mrb[0].mxu0
  %v1159 = vpop.f32.mrb[0].mxu0
  %v1160 = vadd.f32 %v631, %v1159
  %v1161 = vpop.f32.mrb[0].mxu0
  %1162 = vmatprep.mubr.bf16.mxu0 0
  %1163 = vmatmul.mubr.bf16.gmra.mrb[0].mxu0 %v864
  %v1164 = vpop.f32.mrb[0].mxu0
  %v1165 = vadd.f32 %v636, %v1164
  %v1166 = vpop.f32.mrb[0].mxu0
  %v1167 = vpop.f32.mrb[0].mxu0
  %v1168 = vadd.f32 %v639, %v1167
  %v1169 = vpop.f32.mrb[0].mxu0
  %1170 = vmatprep.mubr.bf16.mxu0 0
  %1171 = vmatmul.mubr.bf16.gmra.mrb[0].mxu0 %v865
  %v1172 = vpop.f32.mrb[0].mxu0
  %v1173 = vadd.f32 %v644, %v1172
  %v1174 = vpop.f32.mrb[0].mxu0
  %v1175 = vpop.f32.mrb[0].mxu0
  %v1176 = vadd.f32 %v647, %v1175
  %v1177 = vpop.f32.mrb[0].mxu0
  %1178 = vmatprep.mubr.bf16.mxu0 0
  %1179 = vmatmul.mubr.bf16.gmra.mrb[0].mxu0 %v866
  %v1180 = vpop.f32.mrb[0].mxu0
  %v1181 = vadd.f32 %v652, %v1180
  %v1182 = vpop.f32.mrb[0].mxu0
  %v1183 = vpop.f32.mrb[0].mxu0
  %v1184 = vadd.f32 %v655, %v1183
  %v1185 = vpop.f32.mrb[0].mxu0
  %1186 = vmatprep.mubr.bf16.mxu0 0
  %1187 = vmatmul.mubr.bf16.gmra.mrb[0].mxu0 %v867
  %v1188 = vpop.f32.mrb[0].mxu0
  %v1189 = vadd.f32 %v660, %v1188
  %v1190 = vpop.f32.mrb[0].mxu0
  %v1191 = vpop.f32.mrb[0].mxu0
  %v1192 = vadd.f32 %v663, %v1191
  %v1193 = vpop.f32.mrb[0].mxu0
  %1194 = vmatprep.mubr.bf16.mxu0 0
  %1195 = vmatmul.mubr.bf16.gmra.mrb[0].mxu0 %v868
  %v1196 = vpop.f32.mrb[0].mxu0
  %v1197 = vadd.f32 %v668, %v1196
  %v1198 = vpop.f32.mrb[0].mxu0
  %v1199 = vpop.f32.mrb[0].mxu0
  %v1200 = vadd.f32 %v671, %v1199
  %v1201 = vpop.f32.mrb[0].mxu0
  %1202 = vmatprep.mubr.bf16.mxu0 0
  %1203 = vmatmul.mubr.bf16.gmra.mrb[0].mxu0 %v869
  %v1204 = vpop.f32.mrb[0].mxu0
  %v1205 = vadd.f32 %v676, %v1204
  %v1206 = vpop.f32.mrb[0].mxu0
  %v1207 = vpop.f32.mrb[0].mxu0
  %v1208 = vadd.f32 %v679, %v1207
  %v1209 = vpop.f32.mrb[0].mxu0
  %1210 = vmatprep.mubr.bf16.mxu0 0
  %1211 = vmatmul.mubr.bf16.gmra.mrb[0].mxu0 %v870
  %v1212 = vpop.f32.mrb[0].mxu0
  %v1213 = vadd.f32 %v684, %v1212
  %v1214 = vpop.f32.mrb[0].mxu0
  %v1215 = vpop.f32.mrb[0].mxu0
  %v1216 = vadd.f32 %v687, %v1215
  %v1217 = vpop.f32.mrb[0].mxu0
  %1218 = vmatprep.mubr.bf16.mxu0 0
  %1219 = vmatmul.mubr.bf16.gmra.mrb[0].mxu0 %v871
  %v1220 = vpop.f32.mrb[0].mxu0
  %v1221 = vadd.f32 %v692, %v1220
  %v1222 = vpop.f32.mrb[0].mxu0
  %v1223 = vpop.f32.mrb[0].mxu0
  %v1224 = vadd.f32 %v695, %v1223
  %v1225 = vpop.f32.mrb[0].mxu0
  %1226 = vmatprep.mubr.bf16.mxu0 0
  %1227 = vmatmul.mubr.bf16.gmra.mrb[0].mxu0 %v872
  %v1228 = vpop.f32.mrb[0].mxu0
  %v1229 = vadd.f32 %v700, %v1228
  %v1230 = vpop.f32.mrb[0].mxu0
  %v1231 = vpop.f32.mrb[0].mxu0
  %v1232 = vadd.f32 %v703, %v1231
  %v1233 = vpop.f32.mrb[0].mxu0
  %1234 = vmatprep.mubr.bf16.mxu0 0
  %1235 = vmatmul.mubr.bf16.gmra.mrb[0].mxu0 %v873
  %v1236 = vpop.f32.mrb[0].mxu0
  %v1237 = vadd.f32 %v708, %v1236
  %v1238 = vpop.f32.mrb[0].mxu0
  %v1239 = vpop.f32.mrb[0].mxu0
  %v1240 = vadd.f32 %v711, %v1239
  %v1241 = vpop.f32.mrb[0].mxu0
  %1242 = vdwg.mxu0
  %v1243 = vld [vmem:[%s2] sm:$0xf]
  %v1244 = vld [vmem:[%s2 + $0x4] sm:$0xf]
  %v1245 = vld [vmem:[%s2 + $0x8] sm:$0xf]
  %v1246 = vld [vmem:[%s2 + $0xc] sm:$0xf]
  %v1247 = vld [vmem:[%s2 + $0x10] sm:$0xf]
  %v1248 = vld [vmem:[%s2 + $0x14] sm:$0xf]
  %v1249 = vld [vmem:[%s2 + $0x18] sm:$0xf]
  %v1250 = vld [vmem:[%s2 + $0x1c] sm:$0xf]
  %v1251 = vld [vmem:[%s2 + $0x20] sm:$0xf]
  %v1252 = vld [vmem:[%s2 + $0x24] sm:$0xf]
  %v1253 = vld [vmem:[%s2 + $0x28] sm:$0xf]
  %v1254 = vld [vmem:[%s2 + $0x2c] sm:$0xf]
  %v1255 = vld [vmem:[%s2 + $0x30] sm:$0xf]
  %v1256 = vld [vmem:[%s2 + $0x34] sm:$0xf]
  %v1257 = vld [vmem:[%s2 + $0x38] sm:$0xf]
  %v1258 = vld [vmem:[%s2 + $0x3c] sm:$0xf]
  %v1259 = vld [vmem:[%s2 + $0x40] sm:$0xf]
  %v1260 = vld [vmem:[%s2 + $0x44] sm:$0xf]
  %v1261 = vld [vmem:[%s2 + $0x48] sm:$0xf]
  %v1262 = vld [vmem:[%s2 + $0x4c] sm:$0xf]
  %v1263 = vld [vmem:[%s2 + $0x50] sm:$0xf]
  %v1264 = vld [vmem:[%s2 + $0x54] sm:$0xf]
  %v1265 = vld [vmem:[%s2 + $0x58] sm:$0xf]
  %v1266 = vld [vmem:[%s2 + $0x5c] sm:$0xf]
  %v1267 = vld [vmem:[%s2 + $0x60] sm:$0xf]
  %v1268 = vld [vmem:[%s2 + $0x64] sm:$0xf]
  %v1269 = vld [vmem:[%s2 + $0x68] sm:$0xf]
  %v1270 = vld [vmem:[%s2 + $0x6c] sm:$0xf]
  %v1271 = vld [vmem:[%s2 + $0x70] sm:$0xf]
  %v1272 = vld [vmem:[%s2 + $0x74] sm:$0xf]
  %v1273 = vld [vmem:[%s2 + $0x78] sm:$0xf]
  %v1274 = vld [vmem:[%s2 + $0x7c] sm:$0xf]
  %v1275 = vld [vmem:[%s2 + $0x80] sm:$0xf]
  %v1276 = vld [vmem:[%s2 + $0x84] sm:$0xf]
  %v1277 = vld [vmem:[%s2 + $0x88] sm:$0xf]
  %v1278 = vld [vmem:[%s2 + $0x8c] sm:$0xf]
  %v1279 = vld [vmem:[%s2 + $0x90] sm:$0xf]
  %v1280 = vld [vmem:[%s2 + $0x94] sm:$0xf]
  %v1281 = vld [vmem:[%s2 + $0x98] sm:$0xf]
  %v1282 = vld [vmem:[%s2 + $0x9c] sm:$0xf]
  %v1283 = vld [vmem:[%s2 + $0xa0] sm:$0xf]
  %v1284 = vld [vmem:[%s2 + $0xa4] sm:$0xf]
  %v1285 = vld [vmem:[%s2 + $0xa8] sm:$0xf]
  %v1286 = vld [vmem:[%s2 + $0xac] sm:$0xf]
  %v1287 = vld [vmem:[%s2 + $0xb0] sm:$0xf]
  %v1288 = vld [vmem:[%s2 + $0xb4] sm:$0xf]
  %v1289 = vld [vmem:[%s2 + $0xb8] sm:$0xf]
  %v1290 = vld [vmem:[%s2 + $0xbc] sm:$0xf]
  %v1291 = vld [vmem:[%s2 + $0xc0] sm:$0xf]
  %v1292 = vld [vmem:[%s2 + $0xc4] sm:$0xf]
  %v1293 = vld [vmem:[%s2 + $0xc8] sm:$0xf]
  %v1294 = vld [vmem:[%s2 + $0xcc] sm:$0xf]
  %v1295 = vld [vmem:[%s2 + $0xd0] sm:$0xf]
  %v1296 = vld [vmem:[%s2 + $0xd4] sm:$0xf]
  %v1297 = vld [vmem:[%s2 + $0xd8] sm:$0xf]
  %v1298 = vld [vmem:[%s2 + $0xdc] sm:$0xf]
  %v1299 = vld [vmem:[%s2 + $0xe0] sm:$0xf]
  %v1300 = vld [vmem:[%s2 + $0xe4] sm:$0xf]
  %v1301 = vld [vmem:[%s2 + $0xe8] sm:$0xf]
  %v1302 = vld [vmem:[%s2 + $0xec] sm:$0xf]
  %v1303 = vld [vmem:[%s2 + $0xf0] sm:$0xf]
  %v1304 = vld [vmem:[%s2 + $0xf4] sm:$0xf]
  %v1305 = vld [vmem:[%s2 + $0xf8] sm:$0xf]
  %v1306 = vld [vmem:[%s2 + $0xfc] sm:$0xf]
  %s1307 = scalar_lea.vmem %s4, 128
  %v1308 = vld [vmem:[%s1307] sm:$0xf]
  %v1309 = vld [vmem:[%s1307 + $0x4] sm:$0xf]
  %v1310 = vld [vmem:[%s1307 + $0x8] sm:$0xf]
  %v1311 = vld [vmem:[%s1307 + $0xc] sm:$0xf]
  %v1312 = vld [vmem:[%s1307 + $0x10] sm:$0xf]
  %v1313 = vld [vmem:[%s1307 + $0x14] sm:$0xf]
  %v1314 = vld [vmem:[%s1307 + $0x18] sm:$0xf]
  %v1315 = vld [vmem:[%s1307 + $0x1c] sm:$0xf]
  %v1316 = vld [vmem:[%s1307 + $0x20] sm:$0xf]
  %v1317 = vld [vmem:[%s1307 + $0x24] sm:$0xf]
  %v1318 = vld [vmem:[%s1307 + $0x28] sm:$0xf]
  %v1319 = vld [vmem:[%s1307 + $0x2c] sm:$0xf]
  %v1320 = vld [vmem:[%s1307 + $0x30] sm:$0xf]
  %v1321 = vld [vmem:[%s1307 + $0x34] sm:$0xf]
  %v1322 = vld [vmem:[%s1307 + $0x38] sm:$0xf]
  %v1323 = vld [vmem:[%s1307 + $0x3c] sm:$0xf]
  %v1388 = vunpack.c.l.b16 %v1243
  %v1389 = vunpack.c.l.b16 %v1244
  %v1390 = vunpack.c.l.b16 %v1245
  %v1391 = vunpack.c.l.b16 %v1246
  %v1392 = vunpack.c.l.b16 %v1247
  %v1393 = vunpack.c.l.b16 %v1248
  %v1394 = vunpack.c.l.b16 %v1249
  %v1395 = vunpack.c.l.b16 %v1250
  %v1396 = vunpack.c.l.b16 %v1251
  %v1397 = vunpack.c.l.b16 %v1252
  %v1398 = vunpack.c.l.b16 %v1253
  %v1399 = vunpack.c.l.b16 %v1254
  %v1400 = vunpack.c.l.b16 %v1255
  %v1401 = vunpack.c.l.b16 %v1256
  %v1402 = vunpack.c.l.b16 %v1257
  %v1403 = vunpack.c.l.b16 %v1258
  %v1404 = vunpack.c.l.b16 %v1259
  %v1405 = vunpack.c.l.b16 %v1260
  %v1406 = vunpack.c.l.b16 %v1261
  %v1407 = vunpack.c.l.b16 %v1262
  %v1408 = vunpack.c.l.b16 %v1263
  %v1409 = vunpack.c.l.b16 %v1264
  %v1410 = vunpack.c.l.b16 %v1265
  %v1411 = vunpack.c.l.b16 %v1266
  %v1412 = vunpack.c.l.b16 %v1267
  %v1413 = vunpack.c.l.b16 %v1268
  %v1414 = vunpack.c.l.b16 %v1269
  %v1415 = vunpack.c.l.b16 %v1270
  %v1416 = vunpack.c.l.b16 %v1271
  %v1417 = vunpack.c.l.b16 %v1272
  %v1418 = vunpack.c.l.b16 %v1273
  %v1419 = vunpack.c.l.b16 %v1274
  %v1420 = vunpack.c.l.b16 %v1275
  %v1421 = vunpack.c.l.b16 %v1276
  %v1422 = vunpack.c.l.b16 %v1277
  %v1423 = vunpack.c.l.b16 %v1278
  %v1424 = vunpack.c.l.b16 %v1279
  %v1425 = vunpack.c.l.b16 %v1280
  %v1426 = vunpack.c.l.b16 %v1281
  %v1427 = vunpack.c.l.b16 %v1282
  %v1428 = vunpack.c.l.b16 %v1283
  %v1429 = vunpack.c.l.b16 %v1284
  %v1430 = vunpack.c.l.b16 %v1285
  %v1431 = vunpack.c.l.b16 %v1286
  %v1432 = vunpack.c.l.b16 %v1287
  %v1433 = vunpack.c.l.b16 %v1288
  %v1434 = vunpack.c.l.b16 %v1289
  %v1435 = vunpack.c.l.b16 %v1290
  %v1436 = vunpack.c.l.b16 %v1291
  %v1437 = vunpack.c.l.b16 %v1292
  %v1438 = vunpack.c.l.b16 %v1293
  %v1439 = vunpack.c.l.b16 %v1294
  %v1440 = vunpack.c.l.b16 %v1295
  %v1441 = vunpack.c.l.b16 %v1296
  %v1442 = vunpack.c.l.b16 %v1297
  %v1443 = vunpack.c.l.b16 %v1298
  %v1444 = vunpack.c.l.b16 %v1299
  %v1445 = vunpack.c.l.b16 %v1300
  %v1446 = vunpack.c.l.b16 %v1301
  %v1447 = vunpack.c.l.b16 %v1302
  %v1448 = vunpack.c.l.b16 %v1303
  %v1449 = vunpack.c.l.b16 %v1304
  %v1450 = vunpack.c.l.b16 %v1305
  %v1451 = vunpack.c.l.b16 %v1306
  %v1452 = vpack.c.b16 %v1389, %v1388
  %v1453 = vpack.c.b16 %v1391, %v1390
  %v1454 = vpack.c.b16 %v1393, %v1392
  %v1455 = vpack.c.b16 %v1395, %v1394
  %v1456 = vpack.c.b16 %v1397, %v1396
  %v1457 = vpack.c.b16 %v1399, %v1398
  %v1458 = vpack.c.b16 %v1401, %v1400
  %v1459 = vpack.c.b16 %v1403, %v1402
  %v1460 = vpack.c.b16 %v1405, %v1404
  %v1461 = vpack.c.b16 %v1407, %v1406
  %v1462 = vpack.c.b16 %v1409, %v1408
  %v1463 = vpack.c.b16 %v1411, %v1410
  %v1464 = vpack.c.b16 %v1413, %v1412
  %v1465 = vpack.c.b16 %v1415, %v1414
  %v1466 = vpack.c.b16 %v1417, %v1416
  %v1467 = vpack.c.b16 %v1419, %v1418
  %v1468 = vpack.c.b16 %v1421, %v1420
  %v1469 = vpack.c.b16 %v1423, %v1422
  %v1470 = vpack.c.b16 %v1425, %v1424
  %v1471 = vpack.c.b16 %v1427, %v1426
  %v1472 = vpack.c.b16 %v1429, %v1428
  %v1473 = vpack.c.b16 %v1431, %v1430
  %v1474 = vpack.c.b16 %v1433, %v1432
  %v1475 = vpack.c.b16 %v1435, %v1434
  %v1476 = vpack.c.b16 %v1437, %v1436
  %v1477 = vpack.c.b16 %v1439, %v1438
  %v1478 = vpack.c.b16 %v1441, %v1440
  %v1479 = vpack.c.b16 %v1443, %v1442
  %v1480 = vpack.c.b16 %v1445, %v1444
  %v1481 = vpack.c.b16 %v1447, %v1446
  %v1482 = vpack.c.b16 %v1449, %v1448
  %v1483 = vpack.c.b16 %v1451, %v1450
  %v1532 = vunpack.c.l.b16 %v1308
  %v1533 = vunpack.c.l.b16 %v1309
  %v1534 = vunpack.c.l.b16 %v1310
  %v1535 = vunpack.c.l.b16 %v1311
  %v1536 = vunpack.c.l.b16 %v1312
  %v1537 = vunpack.c.l.b16 %v1313
  %v1538 = vunpack.c.l.b16 %v1314
  %v1539 = vunpack.c.l.b16 %v1315
  %v1540 = vunpack.c.l.b16 %v1316
  %v1541 = vunpack.c.l.b16 %v1317
  %v1542 = vunpack.c.l.b16 %v1318
  %v1543 = vunpack.c.l.b16 %v1319
  %v1544 = vunpack.c.l.b16 %v1320
  %v1545 = vunpack.c.l.b16 %v1321
  %v1546 = vunpack.c.l.b16 %v1322
  %v1547 = vunpack.c.l.b16 %v1323
  %v1548 = vpack.c.b16 %v1533, %v1532
  %v1549 = vpack.c.b16 %v1535, %v1534
  %v1550 = vpack.c.b16 %v1537, %v1536
  %v1551 = vpack.c.b16 %v1539, %v1538
  %v1552 = vpack.c.b16 %v1541, %v1540
  %v1553 = vpack.c.b16 %v1543, %v1542
  %v1554 = vpack.c.b16 %v1545, %v1544
  %v1555 = vpack.c.b16 %v1547, %v1546
  %1564 = vmatprep.subr.bf16.mxu0 0
  %1565 = vmatpush1.bf16.msra.mxu0 %v1548
  %1566 = vmatprep.subr.bf16.mxu0 0
  %1567 = vmatpush1.bf16.msra.mxu0 %v1549
  %1568 = vmatprep.subr.bf16.mxu0 0
  %1569 = vmatpush1.bf16.msra.mxu0 %v1550
  %1570 = vmatprep.subr.bf16.mxu0 0
  %1571 = vmatpush1.bf16.msra.mxu0 %v1551
  %1572 = vmatprep.subr.bf16.mxu0 0
  %1573 = vmatpush1.bf16.msra.mxu0 %v1552
  %1574 = vmatprep.subr.bf16.mxu0 0
  %1575 = vmatpush1.bf16.msra.mxu0 %v1553
  %1576 = vmatprep.subr.bf16.mxu0 0
  %1577 = vmatpush1.bf16.msra.mxu0 %v1554
  %1578 = vmatprep.subr.bf16.mxu0 0
  %1579 = vmatpush1.bf16.msra.mxu0 %v1555
  %1580 = vmatprep.subr.bf16.mxu0 0
  %1581 = vmatpush1.bf16.msra.mxu0 0
  %1582 = vmatprep.subr.bf16.mxu0 0
  %1583 = vmatpush1.bf16.msra.mxu0 0
  %1584 = vmatprep.subr.bf16.mxu0 0
  %1585 = vmatpush1.bf16.msra.mxu0 0
  %1586 = vmatprep.subr.bf16.mxu0 0
  %1587 = vmatpush1.bf16.msra.mxu0 0
  %1588 = vmatprep.subr.bf16.mxu0 0
  %1589 = vmatpush1.bf16.msra.mxu0 0
  %1590 = vmatprep.subr.bf16.mxu0 0
  %1591 = vmatpush1.bf16.msra.mxu0 0
  %1592 = vmatprep.subr.bf16.mxu0 0
  %1593 = vmatpush1.bf16.msra.mxu0 0
  %1594 = vmatprep.subr.bf16.mxu0 0
  %1595 = vmatpush1.bf16.msra.mxu0 0
  %1596 = vmatprep.mubr.bf16.mxu0 0
  %1597 = vmatmul.mubr.bf16.gmra.mrb[0].mxu0 %v1452
  %v1598 = vpop.f32.mrb[0].mxu0
  %v1599 = vadd.f32 0.0, %v1598
  %v1600 = vpop.f32.mrb[0].mxu0
  %v1601 = vpop.f32.mrb[0].mxu0
  %v1602 = vadd.f32 0.0, %v1601
  %v1603 = vpop.f32.mrb[0].mxu0
  %1604 = vmatprep.mubr.bf16.mxu0 0
  %1605 = vmatmul.mubr.bf16.gmra.mrb[0].mxu0 %v1453
  %v1606 = vpop.f32.mrb[0].mxu0
  %v1607 = vadd.f32 0.0, %v1606
  %v1608 = vpop.f32.mrb[0].mxu0
  %v1609 = vpop.f32.mrb[0].mxu0
  %v1610 = vadd.f32 0.0, %v1609
  %v1611 = vpop.f32.mrb[0].mxu0
  %1612 = vmatprep.mubr.bf16.mxu0 0
  %1613 = vmatmul.mubr.bf16.gmra.mrb[0].mxu0 %v1454
  %v1614 = vpop.f32.mrb[0].mxu0
  %v1615 = vadd.f32 0.0, %v1614
  %v1616 = vpop.f32.mrb[0].mxu0
  %v1617 = vpop.f32.mrb[0].mxu0
  %v1618 = vadd.f32 0.0, %v1617
  %v1619 = vpop.f32.mrb[0].mxu0
  %1620 = vmatprep.mubr.bf16.mxu0 0
  %1621 = vmatmul.mubr.bf16.gmra.mrb[0].mxu0 %v1455
  %v1622 = vpop.f32.mrb[0].mxu0
  %v1623 = vadd.f32 0.0, %v1622
  %v1624 = vpop.f32.mrb[0].mxu0
  %v1625 = vpop.f32.mrb[0].mxu0
  %v1626 = vadd.f32 0.0, %v1625
  %v1627 = vpop.f32.mrb[0].mxu0
  %1628 = vmatprep.mubr.bf16.mxu0 0
  %1629 = vmatmul.mubr.bf16.gmra.mrb[0].mxu0 %v1456
  %v1630 = vpop.f32.mrb[0].mxu0
  %v1631 = vadd.f32 0.0, %v1630
  %v1632 = vpop.f32.mrb[0].mxu0
  %v1633 = vpop.f32.mrb[0].mxu0
  %v1634 = vadd.f32 0.0, %v1633
  %v1635 = vpop.f32.mrb[0].mxu0
  %1636 = vmatprep.mubr.bf16.mxu0 0
  %1637 = vmatmul.mubr.bf16.gmra.mrb[0].mxu0 %v1457
  %v1638 = vpop.f32.mrb[0].mxu0
  %v1639 = vadd.f32 0.0, %v1638
  %v1640 = vpop.f32.mrb[0].mxu0
  %v1641 = vpop.f32.mrb[0].mxu0
  %v1642 = vadd.f32 0.0, %v1641
  %v1643 = vpop.f32.mrb[0].mxu0
  %1644 = vmatprep.mubr.bf16.mxu0 0
  %1645 = vmatmul.mubr.bf16.gmra.mrb[0].mxu0 %v1458
  %v1646 = vpop.f32.mrb[0].mxu0
  %v1647 = vadd.f32 0.0, %v1646
  %v1648 = vpop.f32.mrb[0].mxu0
  %v1649 = vpop.f32.mrb[0].mxu0
  %v1650 = vadd.f32 0.0, %v1649
  %v1651 = vpop.f32.mrb[0].mxu0
  %1652 = vmatprep.mubr.bf16.mxu0 0
  %1653 = vmatmul.mubr.bf16.gmra.mrb[0].mxu0 %v1459
  %v1654 = vpop.f32.mrb[0].mxu0
  %v1655 = vadd.f32 0.0, %v1654
  %v1656 = vpop.f32.mrb[0].mxu0
  %v1657 = vpop.f32.mrb[0].mxu0
  %v1658 = vadd.f32 0.0, %v1657
  %v1659 = vpop.f32.mrb[0].mxu0
  %1660 = vmatprep.mubr.bf16.mxu0 0
  %1661 = vmatmul.mubr.bf16.gmra.mrb[0].mxu0 %v1460
  %v1662 = vpop.f32.mrb[0].mxu0
  %v1663 = vadd.f32 0.0, %v1662
  %v1664 = vpop.f32.mrb[0].mxu0
  %v1665 = vpop.f32.mrb[0].mxu0
  %v1666 = vadd.f32 0.0, %v1665
  %v1667 = vpop.f32.mrb[0].mxu0
  %1668 = vmatprep.mubr.bf16.mxu0 0
  %1669 = vmatmul.mubr.bf16.gmra.mrb[0].mxu0 %v1461
  %v1670 = vpop.f32.mrb[0].mxu0
  %v1671 = vadd.f32 0.0, %v1670
  %v1672 = vpop.f32.mrb[0].mxu0
  %v1673 = vpop.f32.mrb[0].mxu0
  %v1674 = vadd.f32 0.0, %v1673
  %v1675 = vpop.f32.mrb[0].mxu0
  %1676 = vmatprep.mubr.bf16.mxu0 0
  %1677 = vmatmul.mubr.bf16.gmra.mrb[0].mxu0 %v1462
  %v1678 = vpop.f32.mrb[0].mxu0
  %v1679 = vadd.f32 0.0, %v1678
  %v1680 = vpop.f32.mrb[0].mxu0
  %v1681 = vpop.f32.mrb[0].mxu0
  %v1682 = vadd.f32 0.0, %v1681
  %v1683 = vpop.f32.mrb[0].mxu0
  %1684 = vmatprep.mubr.bf16.mxu0 0
  %1685 = vmatmul.mubr.bf16.gmra.mrb[0].mxu0 %v1463
  %v1686 = vpop.f32.mrb[0].mxu0
  %v1687 = vadd.f32 0.0, %v1686
  %v1688 = vpop.f32.mrb[0].mxu0
  %v1689 = vpop.f32.mrb[0].mxu0
  %v1690 = vadd.f32 0.0, %v1689
  %v1691 = vpop.f32.mrb[0].mxu0
  %1692 = vmatprep.mubr.bf16.mxu0 0
  %1693 = vmatmul.mubr.bf16.gmra.mrb[0].mxu0 %v1464
  %v1694 = vpop.f32.mrb[0].mxu0
  %v1695 = vadd.f32 0.0, %v1694
  %v1696 = vpop.f32.mrb[0].mxu0
  %v1697 = vpop.f32.mrb[0].mxu0
  %v1698 = vadd.f32 0.0, %v1697
  %v1699 = vpop.f32.mrb[0].mxu0
  %1700 = vmatprep.mubr.bf16.mxu0 0
  %1701 = vmatmul.mubr.bf16.gmra.mrb[0].mxu0 %v1465
  %v1702 = vpop.f32.mrb[0].mxu0
  %v1703 = vadd.f32 0.0, %v1702
  %v1704 = vpop.f32.mrb[0].mxu0
  %v1705 = vpop.f32.mrb[0].mxu0
  %v1706 = vadd.f32 0.0, %v1705
  %v1707 = vpop.f32.mrb[0].mxu0
  %1708 = vmatprep.mubr.bf16.mxu0 0
  %1709 = vmatmul.mubr.bf16.gmra.mrb[0].mxu0 %v1466
  %v1710 = vpop.f32.mrb[0].mxu0
  %v1711 = vadd.f32 0.0, %v1710
  %v1712 = vpop.f32.mrb[0].mxu0
  %v1713 = vpop.f32.mrb[0].mxu0
  %v1714 = vadd.f32 0.0, %v1713
  %v1715 = vpop.f32.mrb[0].mxu0
  %1716 = vmatprep.mubr.bf16.mxu0 0
  %1717 = vmatmul.mubr.bf16.gmra.mrb[0].mxu0 %v1467
  %v1718 = vpop.f32.mrb[0].mxu0
  %v1719 = vadd.f32 0.0, %v1718
  %v1720 = vpop.f32.mrb[0].mxu0
  %v1721 = vpop.f32.mrb[0].mxu0
  %v1722 = vadd.f32 0.0, %v1721
  %v1723 = vpop.f32.mrb[0].mxu0
  %1724 = vmatprep.mubr.bf16.mxu0 0
  %1725 = vmatmul.mubr.bf16.gmra.mrb[0].mxu0 %v1468
  %v1726 = vpop.f32.mrb[0].mxu0
  %v1727 = vadd.f32 0.0, %v1726
  %v1728 = vpop.f32.mrb[0].mxu0
  %v1729 = vpop.f32.mrb[0].mxu0
  %v1730 = vadd.f32 0.0, %v1729
  %v1731 = vpop.f32.mrb[0].mxu0
  %1732 = vmatprep.mubr.bf16.mxu0 0
  %1733 = vmatmul.mubr.bf16.gmra.mrb[0].mxu0 %v1469
  %v1734 = vpop.f32.mrb[0].mxu0
  %v1735 = vadd.f32 0.0, %v1734
  %v1736 = vpop.f32.mrb[0].mxu0
  %v1737 = vpop.f32.mrb[0].mxu0
  %v1738 = vadd.f32 0.0, %v1737
  %v1739 = vpop.f32.mrb[0].mxu0
  %1740 = vmatprep.mubr.bf16.mxu0 0
  %1741 = vmatmul.mubr.bf16.gmra.mrb[0].mxu0 %v1470
  %v1742 = vpop.f32.mrb[0].mxu0
  %v1743 = vadd.f32 0.0, %v1742
  %v1744 = vpop.f32.mrb[0].mxu0
  %v1745 = vpop.f32.mrb[0].mxu0
  %v1746 = vadd.f32 0.0, %v1745
  %v1747 = vpop.f32.mrb[0].mxu0
  %1748 = vmatprep.mubr.bf16.mxu0 0
  %1749 = vmatmul.mubr.bf16.gmra.mrb[0].mxu0 %v1471
  %v1750 = vpop.f32.mrb[0].mxu0
  %v1751 = vadd.f32 0.0, %v1750
  %v1752 = vpop.f32.mrb[0].mxu0
  %v1753 = vpop.f32.mrb[0].mxu0
  %v1754 = vadd.f32 0.0, %v1753
  %v1755 = vpop.f32.mrb[0].mxu0
  %1756 = vmatprep.mubr.bf16.mxu0 0
  %1757 = vmatmul.mubr.bf16.gmra.mrb[0].mxu0 %v1472
  %v1758 = vpop.f32.mrb[0].mxu0
  %v1759 = vadd.f32 0.0, %v1758
  %v1760 = vpop.f32.mrb[0].mxu0
  %v1761 = vpop.f32.mrb[0].mxu0
  %v1762 = vadd.f32 0.0, %v1761
  %v1763 = vpop.f32.mrb[0].mxu0
  %1764 = vmatprep.mubr.bf16.mxu0 0
  %1765 = vmatmul.mubr.bf16.gmra.mrb[0].mxu0 %v1473
  %v1766 = vpop.f32.mrb[0].mxu0
  %v1767 = vadd.f32 0.0, %v1766
  %v1768 = vpop.f32.mrb[0].mxu0
  %v1769 = vpop.f32.mrb[0].mxu0
  %v1770 = vadd.f32 0.0, %v1769
  %v1771 = vpop.f32.mrb[0].mxu0
  %1772 = vmatprep.mubr.bf16.mxu0 0
  %1773 = vmatmul.mubr.bf16.gmra.mrb[0].mxu0 %v1474
  %v1774 = vpop.f32.mrb[0].mxu0
  %v1775 = vadd.f32 0.0, %v1774
  %v1776 = vpop.f32.mrb[0].mxu0
  %v1777 = vpop.f32.mrb[0].mxu0
  %v1778 = vadd.f32 0.0, %v1777
  %v1779 = vpop.f32.mrb[0].mxu0
  %1780 = vmatprep.mubr.bf16.mxu0 0
  %1781 = vmatmul.mubr.bf16.gmra.mrb[0].mxu0 %v1475
  %v1782 = vpop.f32.mrb[0].mxu0
  %v1783 = vadd.f32 0.0, %v1782
  %v1784 = vpop.f32.mrb[0].mxu0
  %v1785 = vpop.f32.mrb[0].mxu0
  %v1786 = vadd.f32 0.0, %v1785
  %v1787 = vpop.f32.mrb[0].mxu0
  %1788 = vmatprep.mubr.bf16.mxu0 0
  %1789 = vmatmul.mubr.bf16.gmra.mrb[0].mxu0 %v1476
  %v1790 = vpop.f32.mrb[0].mxu0
  %v1791 = vadd.f32 0.0, %v1790
  %v1792 = vpop.f32.mrb[0].mxu0
  %v1793 = vpop.f32.mrb[0].mxu0
  %v1794 = vadd.f32 0.0, %v1793
  %v1795 = vpop.f32.mrb[0].mxu0
  %1796 = vmatprep.mubr.bf16.mxu0 0
  %1797 = vmatmul.mubr.bf16.gmra.mrb[0].mxu0 %v1477
  %v1798 = vpop.f32.mrb[0].mxu0
  %v1799 = vadd.f32 0.0, %v1798
  %v1800 = vpop.f32.mrb[0].mxu0
  %v1801 = vpop.f32.mrb[0].mxu0
  %v1802 = vadd.f32 0.0, %v1801
  %v1803 = vpop.f32.mrb[0].mxu0
  %1804 = vmatprep.mubr.bf16.mxu0 0
  %1805 = vmatmul.mubr.bf16.gmra.mrb[0].mxu0 %v1478
  %v1806 = vpop.f32.mrb[0].mxu0
  %v1807 = vadd.f32 0.0, %v1806
  %v1808 = vpop.f32.mrb[0].mxu0
  %v1809 = vpop.f32.mrb[0].mxu0
  %v1810 = vadd.f32 0.0, %v1809
  %v1811 = vpop.f32.mrb[0].mxu0
  %1812 = vmatprep.mubr.bf16.mxu0 0
  %1813 = vmatmul.mubr.bf16.gmra.mrb[0].mxu0 %v1479
  %v1814 = vpop.f32.mrb[0].mxu0
  %v1815 = vadd.f32 0.0, %v1814
  %v1816 = vpop.f32.mrb[0].mxu0
  %v1817 = vpop.f32.mrb[0].mxu0
  %v1818 = vadd.f32 0.0, %v1817
  %v1819 = vpop.f32.mrb[0].mxu0
  %1820 = vmatprep.mubr.bf16.mxu0 0
  %1821 = vmatmul.mubr.bf16.gmra.mrb[0].mxu0 %v1480
  %v1822 = vpop.f32.mrb[0].mxu0
  %v1823 = vadd.f32 0.0, %v1822
  %v1824 = vpop.f32.mrb[0].mxu0
  %v1825 = vpop.f32.mrb[0].mxu0
  %v1826 = vadd.f32 0.0, %v1825
  %v1827 = vpop.f32.mrb[0].mxu0
  %1828 = vmatprep.mubr.bf16.mxu0 0
  %1829 = vmatmul.mubr.bf16.gmra.mrb[0].mxu0 %v1481
  %v1830 = vpop.f32.mrb[0].mxu0
  %v1831 = vadd.f32 0.0, %v1830
  %v1832 = vpop.f32.mrb[0].mxu0
  %v1833 = vpop.f32.mrb[0].mxu0
  %v1834 = vadd.f32 0.0, %v1833
  %v1835 = vpop.f32.mrb[0].mxu0
  %1836 = vmatprep.mubr.bf16.mxu0 0
  %1837 = vmatmul.mubr.bf16.gmra.mrb[0].mxu0 %v1482
  %v1838 = vpop.f32.mrb[0].mxu0
  %v1839 = vadd.f32 0.0, %v1838
  %v1840 = vpop.f32.mrb[0].mxu0
  %v1841 = vpop.f32.mrb[0].mxu0
  %v1842 = vadd.f32 0.0, %v1841
  %v1843 = vpop.f32.mrb[0].mxu0
  %1844 = vmatprep.mubr.bf16.mxu0 0
  %1845 = vmatmul.mubr.bf16.gmra.mrb[0].mxu0 %v1483
  %v1846 = vpop.f32.mrb[0].mxu0
  %v1847 = vadd.f32 0.0, %v1846
  %v1848 = vpop.f32.mrb[0].mxu0
  %v1849 = vpop.f32.mrb[0].mxu0
  %v1850 = vadd.f32 0.0, %v1849
  %v1851 = vpop.f32.mrb[0].mxu0
  %1852 = vdwg.mxu0
  %v1853 = vadd.f32 %v989, %v1599
  %v1854 = vadd.f32 %v992, %v1602
  %v1855 = vadd.f32 %v997, %v1607
  %v1856 = vadd.f32 %v1000, %v1610
  %v1857 = vadd.f32 %v1005, %v1615
  %v1858 = vadd.f32 %v1008, %v1618
  %v1859 = vadd.f32 %v1013, %v1623
  %v1860 = vadd.f32 %v1016, %v1626
  %v1861 = vadd.f32 %v1021, %v1631
  %v1862 = vadd.f32 %v1024, %v1634
  %v1863 = vadd.f32 %v1029, %v1639
  %v1864 = vadd.f32 %v1032, %v1642
  %v1865 = vadd.f32 %v1037, %v1647
  %v1866 = vadd.f32 %v1040, %v1650
  %v1867 = vadd.f32 %v1045, %v1655
  %v1868 = vadd.f32 %v1048, %v1658
  %v1869 = vadd.f32 %v1053, %v1663
  %v1870 = vadd.f32 %v1056, %v1666
  %v1871 = vadd.f32 %v1061, %v1671
  %v1872 = vadd.f32 %v1064, %v1674
  %v1873 = vadd.f32 %v1069, %v1679
  %v1874 = vadd.f32 %v1072, %v1682
  %v1875 = vadd.f32 %v1077, %v1687
  %v1876 = vadd.f32 %v1080, %v1690
  %v1877 = vadd.f32 %v1085, %v1695
  %v1878 = vadd.f32 %v1088, %v1698
  %v1879 = vadd.f32 %v1093, %v1703
  %v1880 = vadd.f32 %v1096, %v1706
  %v1881 = vadd.f32 %v1101, %v1711
  %v1882 = vadd.f32 %v1104, %v1714
  %v1883 = vadd.f32 %v1109, %v1719
  %v1884 = vadd.f32 %v1112, %v1722
  %v1885 = vadd.f32 %v1117, %v1727
  %v1886 = vadd.f32 %v1120, %v1730
  %v1887 = vadd.f32 %v1125, %v1735
  %v1888 = vadd.f32 %v1128, %v1738
  %v1889 = vadd.f32 %v1133, %v1743
  %v1890 = vadd.f32 %v1136, %v1746
  %v1891 = vadd.f32 %v1141, %v1751
  %v1892 = vadd.f32 %v1144, %v1754
  %v1893 = vadd.f32 %v1149, %v1759
  %v1894 = vadd.f32 %v1152, %v1762
  %v1895 = vadd.f32 %v1157, %v1767
  %v1896 = vadd.f32 %v1160, %v1770
  %v1897 = vadd.f32 %v1165, %v1775
  %v1898 = vadd.f32 %v1168, %v1778
  %v1899 = vadd.f32 %v1173, %v1783
  %v1900 = vadd.f32 %v1176, %v1786
  %v1901 = vadd.f32 %v1181, %v1791
  %v1902 = vadd.f32 %v1184, %v1794
  %v1903 = vadd.f32 %v1189, %v1799
  %v1904 = vadd.f32 %v1192, %v1802
  %v1905 = vadd.f32 %v1197, %v1807
  %v1906 = vadd.f32 %v1200, %v1810
  %v1907 = vadd.f32 %v1205, %v1815
  %v1908 = vadd.f32 %v1208, %v1818
  %v1909 = vadd.f32 %v1213, %v1823
  %v1910 = vadd.f32 %v1216, %v1826
  %v1911 = vadd.f32 %v1221, %v1831
  %v1912 = vadd.f32 %v1224, %v1834
  %v1913 = vadd.f32 %v1229, %v1839
  %v1914 = vadd.f32 %v1232, %v1842
  %v1915 = vadd.f32 %v1237, %v1847
  %v1916 = vadd.f32 %v1240, %v1850
  %v1917 = vld [vmem:[%s3] sm:$0xf]
  %v1918 = vld [vmem:[%s3 + $0x4] sm:$0xf]
  %v1919 = vld [vmem:[%s3 + $0x8] sm:$0xf]
  %v1920 = vld [vmem:[%s3 + $0xc] sm:$0xf]
  %v1921 = vld [vmem:[%s3 + $0x10] sm:$0xf]
  %v1922 = vld [vmem:[%s3 + $0x14] sm:$0xf]
  %v1923 = vld [vmem:[%s3 + $0x18] sm:$0xf]
  %v1924 = vld [vmem:[%s3 + $0x1c] sm:$0xf]
  %v1925 = vld [vmem:[%s3 + $0x20] sm:$0xf]
  %v1926 = vld [vmem:[%s3 + $0x24] sm:$0xf]
  %v1927 = vld [vmem:[%s3 + $0x28] sm:$0xf]
  %v1928 = vld [vmem:[%s3 + $0x2c] sm:$0xf]
  %v1929 = vld [vmem:[%s3 + $0x30] sm:$0xf]
  %v1930 = vld [vmem:[%s3 + $0x34] sm:$0xf]
  %v1931 = vld [vmem:[%s3 + $0x38] sm:$0xf]
  %v1932 = vld [vmem:[%s3 + $0x3c] sm:$0xf]
  %v1933 = vld [vmem:[%s3 + $0x40] sm:$0xf]
  %v1934 = vld [vmem:[%s3 + $0x44] sm:$0xf]
  %v1935 = vld [vmem:[%s3 + $0x48] sm:$0xf]
  %v1936 = vld [vmem:[%s3 + $0x4c] sm:$0xf]
  %v1937 = vld [vmem:[%s3 + $0x50] sm:$0xf]
  %v1938 = vld [vmem:[%s3 + $0x54] sm:$0xf]
  %v1939 = vld [vmem:[%s3 + $0x58] sm:$0xf]
  %v1940 = vld [vmem:[%s3 + $0x5c] sm:$0xf]
  %v1941 = vld [vmem:[%s3 + $0x60] sm:$0xf]
  %v1942 = vld [vmem:[%s3 + $0x64] sm:$0xf]
  %v1943 = vld [vmem:[%s3 + $0x68] sm:$0xf]
  %v1944 = vld [vmem:[%s3 + $0x6c] sm:$0xf]
  %v1945 = vld [vmem:[%s3 + $0x70] sm:$0xf]
  %v1946 = vld [vmem:[%s3 + $0x74] sm:$0xf]
  %v1947 = vld [vmem:[%s3 + $0x78] sm:$0xf]
  %v1948 = vld [vmem:[%s3 + $0x7c] sm:$0xf]
  %v1949 = vld [vmem:[%s3 + $0x80] sm:$0xf]
  %v1950 = vld [vmem:[%s3 + $0x84] sm:$0xf]
  %v1951 = vld [vmem:[%s3 + $0x88] sm:$0xf]
  %v1952 = vld [vmem:[%s3 + $0x8c] sm:$0xf]
  %v1953 = vld [vmem:[%s3 + $0x90] sm:$0xf]
  %v1954 = vld [vmem:[%s3 + $0x94] sm:$0xf]
  %v1955 = vld [vmem:[%s3 + $0x98] sm:$0xf]
  %v1956 = vld [vmem:[%s3 + $0x9c] sm:$0xf]
  %v1957 = vld [vmem:[%s3 + $0xa0] sm:$0xf]
  %v1958 = vld [vmem:[%s3 + $0xa4] sm:$0xf]
  %v1959 = vld [vmem:[%s3 + $0xa8] sm:$0xf]
  %v1960 = vld [vmem:[%s3 + $0xac] sm:$0xf]
  %v1961 = vld [vmem:[%s3 + $0xb0] sm:$0xf]
  %v1962 = vld [vmem:[%s3 + $0xb4] sm:$0xf]
  %v1963 = vld [vmem:[%s3 + $0xb8] sm:$0xf]
  %v1964 = vld [vmem:[%s3 + $0xbc] sm:$0xf]
  %v1965 = vld [vmem:[%s3 + $0xc0] sm:$0xf]
  %v1966 = vld [vmem:[%s3 + $0xc4] sm:$0xf]
  %v1967 = vld [vmem:[%s3 + $0xc8] sm:$0xf]
  %v1968 = vld [vmem:[%s3 + $0xcc] sm:$0xf]
  %v1969 = vld [vmem:[%s3 + $0xd0] sm:$0xf]
  %v1970 = vld [vmem:[%s3 + $0xd4] sm:$0xf]
  %v1971 = vld [vmem:[%s3 + $0xd8] sm:$0xf]
  %v1972 = vld [vmem:[%s3 + $0xdc] sm:$0xf]
  %v1973 = vld [vmem:[%s3 + $0xe0] sm:$0xf]
  %v1974 = vld [vmem:[%s3 + $0xe4] sm:$0xf]
  %v1975 = vld [vmem:[%s3 + $0xe8] sm:$0xf]
  %v1976 = vld [vmem:[%s3 + $0xec] sm:$0xf]
  %v1977 = vld [vmem:[%s3 + $0xf0] sm:$0xf]
  %v1978 = vld [vmem:[%s3 + $0xf4] sm:$0xf]
  %v1979 = vld [vmem:[%s3 + $0xf8] sm:$0xf]
  %v1980 = vld [vmem:[%s3 + $0xfc] sm:$0xf]
  %s1981 = scalar_lea.vmem %s4, 192
  %v1982 = vld [vmem:[%s1981] sm:$0xf]
  %v1983 = vld [vmem:[%s1981 + $0x4] sm:$0xf]
  %v1984 = vld [vmem:[%s1981 + $0x8] sm:$0xf]
  %v1985 = vld [vmem:[%s1981 + $0xc] sm:$0xf]
  %v1986 = vld [vmem:[%s1981 + $0x10] sm:$0xf]
  %v1987 = vld [vmem:[%s1981 + $0x14] sm:$0xf]
  %v1988 = vld [vmem:[%s1981 + $0x18] sm:$0xf]
  %v1989 = vld [vmem:[%s1981 + $0x1c] sm:$0xf]
  %v1990 = vld [vmem:[%s1981 + $0x20] sm:$0xf]
  %v1991 = vld [vmem:[%s1981 + $0x24] sm:$0xf]
  %v1992 = vld [vmem:[%s1981 + $0x28] sm:$0xf]
  %v1993 = vld [vmem:[%s1981 + $0x2c] sm:$0xf]
  %v1994 = vld [vmem:[%s1981 + $0x30] sm:$0xf]
  %v1995 = vld [vmem:[%s1981 + $0x34] sm:$0xf]
  %v1996 = vld [vmem:[%s1981 + $0x38] sm:$0xf]
  %v1997 = vld [vmem:[%s1981 + $0x3c] sm:$0xf]
  %v2062 = vunpack.c.l.b16 %v1917
  %v2063 = vunpack.c.l.b16 %v1918
  %v2064 = vunpack.c.l.b16 %v1919
  %v2065 = vunpack.c.l.b16 %v1920
  %v2066 = vunpack.c.l.b16 %v1921
  %v2067 = vunpack.c.l.b16 %v1922
  %v2068 = vunpack.c.l.b16 %v1923
  %v2069 = vunpack.c.l.b16 %v1924
  %v2070 = vunpack.c.l.b16 %v1925
  %v2071 = vunpack.c.l.b16 %v1926
  %v2072 = vunpack.c.l.b16 %v1927
  %v2073 = vunpack.c.l.b16 %v1928
  %v2074 = vunpack.c.l.b16 %v1929
  %v2075 = vunpack.c.l.b16 %v1930
  %v2076 = vunpack.c.l.b16 %v1931
  %v2077 = vunpack.c.l.b16 %v1932
  %v2078 = vunpack.c.l.b16 %v1933
  %v2079 = vunpack.c.l.b16 %v1934
  %v2080 = vunpack.c.l.b16 %v1935
  %v2081 = vunpack.c.l.b16 %v1936
  %v2082 = vunpack.c.l.b16 %v1937
  %v2083 = vunpack.c.l.b16 %v1938
  %v2084 = vunpack.c.l.b16 %v1939
  %v2085 = vunpack.c.l.b16 %v1940
  %v2086 = vunpack.c.l.b16 %v1941
  %v2087 = vunpack.c.l.b16 %v1942
  %v2088 = vunpack.c.l.b16 %v1943
  %v2089 = vunpack.c.l.b16 %v1944
  %v2090 = vunpack.c.l.b16 %v1945
  %v2091 = vunpack.c.l.b16 %v1946
  %v2092 = vunpack.c.l.b16 %v1947
  %v2093 = vunpack.c.l.b16 %v1948
  %v2094 = vunpack.c.l.b16 %v1949
  %v2095 = vunpack.c.l.b16 %v1950
  %v2096 = vunpack.c.l.b16 %v1951
  %v2097 = vunpack.c.l.b16 %v1952
  %v2098 = vunpack.c.l.b16 %v1953
  %v2099 = vunpack.c.l.b16 %v1954
  %v2100 = vunpack.c.l.b16 %v1955
  %v2101 = vunpack.c.l.b16 %v1956
  %v2102 = vunpack.c.l.b16 %v1957
  %v2103 = vunpack.c.l.b16 %v1958
  %v2104 = vunpack.c.l.b16 %v1959
  %v2105 = vunpack.c.l.b16 %v1960
  %v2106 = vunpack.c.l.b16 %v1961
  %v2107 = vunpack.c.l.b16 %v1962
  %v2108 = vunpack.c.l.b16 %v1963
  %v2109 = vunpack.c.l.b16 %v1964
  %v2110 = vunpack.c.l.b16 %v1965
  %v2111 = vunpack.c.l.b16 %v1966
  %v2112 = vunpack.c.l.b16 %v1967
  %v2113 = vunpack.c.l.b16 %v1968
  %v2114 = vunpack.c.l.b16 %v1969
  %v2115 = vunpack.c.l.b16 %v1970
  %v2116 = vunpack.c.l.b16 %v1971
  %v2117 = vunpack.c.l.b16 %v1972
  %v2118 = vunpack.c.l.b16 %v1973
  %v2119 = vunpack.c.l.b16 %v1974
  %v2120 = vunpack.c.l.b16 %v1975
  %v2121 = vunpack.c.l.b16 %v1976
  %v2122 = vunpack.c.l.b16 %v1977
  %v2123 = vunpack.c.l.b16 %v1978
  %v2124 = vunpack.c.l.b16 %v1979
  %v2125 = vunpack.c.l.b16 %v1980
  %v2126 = vpack.c.b16 %v2063, %v2062
  %v2127 = vpack.c.b16 %v2065, %v2064
  %v2128 = vpack.c.b16 %v2067, %v2066
  %v2129 = vpack.c.b16 %v2069, %v2068
  %v2130 = vpack.c.b16 %v2071, %v2070
  %v2131 = vpack.c.b16 %v2073, %v2072
  %v2132 = vpack.c.b16 %v2075, %v2074
  %v2133 = vpack.c.b16 %v2077, %v2076
  %v2134 = vpack.c.b16 %v2079, %v2078
  %v2135 = vpack.c.b16 %v2081, %v2080
  %v2136 = vpack.c.b16 %v2083, %v2082
  %v2137 = vpack.c.b16 %v2085, %v2084
  %v2138 = vpack.c.b16 %v2087, %v2086
  %v2139 = vpack.c.b16 %v2089, %v2088
  %v2140 = vpack.c.b16 %v2091, %v2090
  %v2141 = vpack.c.b16 %v2093, %v2092
  %v2142 = vpack.c.b16 %v2095, %v2094
  %v2143 = vpack.c.b16 %v2097, %v2096
  %v2144 = vpack.c.b16 %v2099, %v2098
  %v2145 = vpack.c.b16 %v2101, %v2100
  %v2146 = vpack.c.b16 %v2103, %v2102
  %v2147 = vpack.c.b16 %v2105, %v2104
  %v2148 = vpack.c.b16 %v2107, %v2106
  %v2149 = vpack.c.b16 %v2109, %v2108
  %v2150 = vpack.c.b16 %v2111, %v2110
  %v2151 = vpack.c.b16 %v2113, %v2112
  %v2152 = vpack.c.b16 %v2115, %v2114
  %v2153 = vpack.c.b16 %v2117, %v2116
  %v2154 = vpack.c.b16 %v2119, %v2118
  %v2155 = vpack.c.b16 %v2121, %v2120
  %v2156 = vpack.c.b16 %v2123, %v2122
  %v2157 = vpack.c.b16 %v2125, %v2124
  %v2206 = vunpack.c.l.b16 %v1982
  %v2207 = vunpack.c.l.b16 %v1983
  %v2208 = vunpack.c.l.b16 %v1984
  %v2209 = vunpack.c.l.b16 %v1985
  %v2210 = vunpack.c.l.b16 %v1986
  %v2211 = vunpack.c.l.b16 %v1987
  %v2212 = vunpack.c.l.b16 %v1988
  %v2213 = vunpack.c.l.b16 %v1989
  %v2214 = vunpack.c.l.b16 %v1990
  %v2215 = vunpack.c.l.b16 %v1991
  %v2216 = vunpack.c.l.b16 %v1992
  %v2217 = vunpack.c.l.b16 %v1993
  %v2218 = vunpack.c.l.b16 %v1994
  %v2219 = vunpack.c.l.b16 %v1995
  %v2220 = vunpack.c.l.b16 %v1996
  %v2221 = vunpack.c.l.b16 %v1997
  %v2222 = vpack.c.b16 %v2207, %v2206
  %v2223 = vpack.c.b16 %v2209, %v2208
  %v2224 = vpack.c.b16 %v2211, %v2210
  %v2225 = vpack.c.b16 %v2213, %v2212
  %v2226 = vpack.c.b16 %v2215, %v2214
  %v2227 = vpack.c.b16 %v2217, %v2216
  %v2228 = vpack.c.b16 %v2219, %v2218
  %v2229 = vpack.c.b16 %v2221, %v2220
  %2238 = vmatprep.subr.bf16.mxu0 0
  %2239 = vmatpush1.bf16.msra.mxu0 %v2222
  %2240 = vmatprep.subr.bf16.mxu0 0
  %2241 = vmatpush1.bf16.msra.mxu0 %v2223
  %2242 = vmatprep.subr.bf16.mxu0 0
  %2243 = vmatpush1.bf16.msra.mxu0 %v2224
  %2244 = vmatprep.subr.bf16.mxu0 0
  %2245 = vmatpush1.bf16.msra.mxu0 %v2225
  %2246 = vmatprep.subr.bf16.mxu0 0
  %2247 = vmatpush1.bf16.msra.mxu0 %v2226
  %2248 = vmatprep.subr.bf16.mxu0 0
  %2249 = vmatpush1.bf16.msra.mxu0 %v2227
  %2250 = vmatprep.subr.bf16.mxu0 0
  %2251 = vmatpush1.bf16.msra.mxu0 %v2228
  %2252 = vmatprep.subr.bf16.mxu0 0
  %2253 = vmatpush1.bf16.msra.mxu0 %v2229
  %2254 = vmatprep.subr.bf16.mxu0 0
  %2255 = vmatpush1.bf16.msra.mxu0 0
  %2256 = vmatprep.subr.bf16.mxu0 0
  %2257 = vmatpush1.bf16.msra.mxu0 0
  %2258 = vmatprep.subr.bf16.mxu0 0
  %2259 = vmatpush1.bf16.msra.mxu0 0
  %2260 = vmatprep.subr.bf16.mxu0 0
  %2261 = vmatpush1.bf16.msra.mxu0 0
  %2262 = vmatprep.subr.bf16.mxu0 0
  %2263 = vmatpush1.bf16.msra.mxu0 0
  %2264 = vmatprep.subr.bf16.mxu0 0
  %2265 = vmatpush1.bf16.msra.mxu0 0
  %2266 = vmatprep.subr.bf16.mxu0 0
  %2267 = vmatpush1.bf16.msra.mxu0 0
  %2268 = vmatprep.subr.bf16.mxu0 0
  %2269 = vmatpush1.bf16.msra.mxu0 0
  %2270 = vmatprep.mubr.bf16.mxu0 0
  %2271 = vmatmul.mubr.bf16.gmra.mrb[0].mxu0 %v2126
  %v2272 = vpop.f32.mrb[0].mxu0
  %v2273 = vadd.f32 0.0, %v2272
  %v2274 = vpop.f32.mrb[0].mxu0
  %v2275 = vpop.f32.mrb[0].mxu0
  %v2276 = vadd.f32 0.0, %v2275
  %v2277 = vpop.f32.mrb[0].mxu0
  %2278 = vmatprep.mubr.bf16.mxu0 0
  %2279 = vmatmul.mubr.bf16.gmra.mrb[0].mxu0 %v2127
  %v2280 = vpop.f32.mrb[0].mxu0
  %v2281 = vadd.f32 0.0, %v2280
  %v2282 = vpop.f32.mrb[0].mxu0
  %v2283 = vpop.f32.mrb[0].mxu0
  %v2284 = vadd.f32 0.0, %v2283
  %v2285 = vpop.f32.mrb[0].mxu0
  %2286 = vmatprep.mubr.bf16.mxu0 0
  %2287 = vmatmul.mubr.bf16.gmra.mrb[0].mxu0 %v2128
  %v2288 = vpop.f32.mrb[0].mxu0
  %v2289 = vadd.f32 0.0, %v2288
  %v2290 = vpop.f32.mrb[0].mxu0
  %v2291 = vpop.f32.mrb[0].mxu0
  %v2292 = vadd.f32 0.0, %v2291
  %v2293 = vpop.f32.mrb[0].mxu0
  %2294 = vmatprep.mubr.bf16.mxu0 0
  %2295 = vmatmul.mubr.bf16.gmra.mrb[0].mxu0 %v2129
  %v2296 = vpop.f32.mrb[0].mxu0
  %v2297 = vadd.f32 0.0, %v2296
  %v2298 = vpop.f32.mrb[0].mxu0
  %v2299 = vpop.f32.mrb[0].mxu0
  %v2300 = vadd.f32 0.0, %v2299
  %v2301 = vpop.f32.mrb[0].mxu0
  %2302 = vmatprep.mubr.bf16.mxu0 0
  %2303 = vmatmul.mubr.bf16.gmra.mrb[0].mxu0 %v2130
  %v2304 = vpop.f32.mrb[0].mxu0
  %v2305 = vadd.f32 0.0, %v2304
  %v2306 = vpop.f32.mrb[0].mxu0
  %v2307 = vpop.f32.mrb[0].mxu0
  %v2308 = vadd.f32 0.0, %v2307
  %v2309 = vpop.f32.mrb[0].mxu0
  %2310 = vmatprep.mubr.bf16.mxu0 0
  %2311 = vmatmul.mubr.bf16.gmra.mrb[0].mxu0 %v2131
  %v2312 = vpop.f32.mrb[0].mxu0
  %v2313 = vadd.f32 0.0, %v2312
  %v2314 = vpop.f32.mrb[0].mxu0
  %v2315 = vpop.f32.mrb[0].mxu0
  %v2316 = vadd.f32 0.0, %v2315
  %v2317 = vpop.f32.mrb[0].mxu0
  %2318 = vmatprep.mubr.bf16.mxu0 0
  %2319 = vmatmul.mubr.bf16.gmra.mrb[0].mxu0 %v2132
  %v2320 = vpop.f32.mrb[0].mxu0
  %v2321 = vadd.f32 0.0, %v2320
  %v2322 = vpop.f32.mrb[0].mxu0
  %v2323 = vpop.f32.mrb[0].mxu0
  %v2324 = vadd.f32 0.0, %v2323
  %v2325 = vpop.f32.mrb[0].mxu0
  %2326 = vmatprep.mubr.bf16.mxu0 0
  %2327 = vmatmul.mubr.bf16.gmra.mrb[0].mxu0 %v2133
  %v2328 = vpop.f32.mrb[0].mxu0
  %v2329 = vadd.f32 0.0, %v2328
  %v2330 = vpop.f32.mrb[0].mxu0
  %v2331 = vpop.f32.mrb[0].mxu0
  %v2332 = vadd.f32 0.0, %v2331
  %v2333 = vpop.f32.mrb[0].mxu0
  %2334 = vmatprep.mubr.bf16.mxu0 0
  %2335 = vmatmul.mubr.bf16.gmra.mrb[0].mxu0 %v2134
  %v2336 = vpop.f32.mrb[0].mxu0
  %v2337 = vadd.f32 0.0, %v2336
  %v2338 = vpop.f32.mrb[0].mxu0
  %v2339 = vpop.f32.mrb[0].mxu0
  %v2340 = vadd.f32 0.0, %v2339
  %v2341 = vpop.f32.mrb[0].mxu0
  %2342 = vmatprep.mubr.bf16.mxu0 0
  %2343 = vmatmul.mubr.bf16.gmra.mrb[0].mxu0 %v2135
  %v2344 = vpop.f32.mrb[0].mxu0
  %v2345 = vadd.f32 0.0, %v2344
  %v2346 = vpop.f32.mrb[0].mxu0
  %v2347 = vpop.f32.mrb[0].mxu0
  %v2348 = vadd.f32 0.0, %v2347
  %v2349 = vpop.f32.mrb[0].mxu0
  %2350 = vmatprep.mubr.bf16.mxu0 0
  %2351 = vmatmul.mubr.bf16.gmra.mrb[0].mxu0 %v2136
  %v2352 = vpop.f32.mrb[0].mxu0
  %v2353 = vadd.f32 0.0, %v2352
  %v2354 = vpop.f32.mrb[0].mxu0
  %v2355 = vpop.f32.mrb[0].mxu0
  %v2356 = vadd.f32 0.0, %v2355
  %v2357 = vpop.f32.mrb[0].mxu0
  %2358 = vmatprep.mubr.bf16.mxu0 0
  %2359 = vmatmul.mubr.bf16.gmra.mrb[0].mxu0 %v2137
  %v2360 = vpop.f32.mrb[0].mxu0
  %v2361 = vadd.f32 0.0, %v2360
  %v2362 = vpop.f32.mrb[0].mxu0
  %v2363 = vpop.f32.mrb[0].mxu0
  %v2364 = vadd.f32 0.0, %v2363
  %v2365 = vpop.f32.mrb[0].mxu0
  %2366 = vmatprep.mubr.bf16.mxu0 0
  %2367 = vmatmul.mubr.bf16.gmra.mrb[0].mxu0 %v2138
  %v2368 = vpop.f32.mrb[0].mxu0
  %v2369 = vadd.f32 0.0, %v2368
  %v2370 = vpop.f32.mrb[0].mxu0
  %v2371 = vpop.f32.mrb[0].mxu0
  %v2372 = vadd.f32 0.0, %v2371
  %v2373 = vpop.f32.mrb[0].mxu0
  %2374 = vmatprep.mubr.bf16.mxu0 0
  %2375 = vmatmul.mubr.bf16.gmra.mrb[0].mxu0 %v2139
  %v2376 = vpop.f32.mrb[0].mxu0
  %v2377 = vadd.f32 0.0, %v2376
  %v2378 = vpop.f32.mrb[0].mxu0
  %v2379 = vpop.f32.mrb[0].mxu0
  %v2380 = vadd.f32 0.0, %v2379
  %v2381 = vpop.f32.mrb[0].mxu0
  %2382 = vmatprep.mubr.bf16.mxu0 0
  %2383 = vmatmul.mubr.bf16.gmra.mrb[0].mxu0 %v2140
  %v2384 = vpop.f32.mrb[0].mxu0
  %v2385 = vadd.f32 0.0, %v2384
  %v2386 = vpop.f32.mrb[0].mxu0
  %v2387 = vpop.f32.mrb[0].mxu0
  %v2388 = vadd.f32 0.0, %v2387
  %v2389 = vpop.f32.mrb[0].mxu0
  %2390 = vmatprep.mubr.bf16.mxu0 0
  %2391 = vmatmul.mubr.bf16.gmra.mrb[0].mxu0 %v2141
  %v2392 = vpop.f32.mrb[0].mxu0
  %v2393 = vadd.f32 0.0, %v2392
  %v2394 = vpop.f32.mrb[0].mxu0
  %v2395 = vpop.f32.mrb[0].mxu0
  %v2396 = vadd.f32 0.0, %v2395
  %v2397 = vpop.f32.mrb[0].mxu0
  %2398 = vmatprep.mubr.bf16.mxu0 0
  %2399 = vmatmul.mubr.bf16.gmra.mrb[0].mxu0 %v2142
  %v2400 = vpop.f32.mrb[0].mxu0
  %v2401 = vadd.f32 0.0, %v2400
  %v2402 = vpop.f32.mrb[0].mxu0
  %v2403 = vpop.f32.mrb[0].mxu0
  %v2404 = vadd.f32 0.0, %v2403
  %v2405 = vpop.f32.mrb[0].mxu0
  %2406 = vmatprep.mubr.bf16.mxu0 0
  %2407 = vmatmul.mubr.bf16.gmra.mrb[0].mxu0 %v2143
  %v2408 = vpop.f32.mrb[0].mxu0
  %v2409 = vadd.f32 0.0, %v2408
  %v2410 = vpop.f32.mrb[0].mxu0
  %v2411 = vpop.f32.mrb[0].mxu0
  %v2412 = vadd.f32 0.0, %v2411
  %v2413 = vpop.f32.mrb[0].mxu0
  %2414 = vmatprep.mubr.bf16.mxu0 0
  %2415 = vmatmul.mubr.bf16.gmra.mrb[0].mxu0 %v2144
  %v2416 = vpop.f32.mrb[0].mxu0
  %v2417 = vadd.f32 0.0, %v2416
  %v2418 = vpop.f32.mrb[0].mxu0
  %v2419 = vpop.f32.mrb[0].mxu0
  %v2420 = vadd.f32 0.0, %v2419
  %v2421 = vpop.f32.mrb[0].mxu0
  %2422 = vmatprep.mubr.bf16.mxu0 0
  %2423 = vmatmul.mubr.bf16.gmra.mrb[0].mxu0 %v2145
  %v2424 = vpop.f32.mrb[0].mxu0
  %v2425 = vadd.f32 0.0, %v2424
  %v2426 = vpop.f32.mrb[0].mxu0
  %v2427 = vpop.f32.mrb[0].mxu0
  %v2428 = vadd.f32 0.0, %v2427
  %v2429 = vpop.f32.mrb[0].mxu0
  %2430 = vmatprep.mubr.bf16.mxu0 0
  %2431 = vmatmul.mubr.bf16.gmra.mrb[0].mxu0 %v2146
  %v2432 = vpop.f32.mrb[0].mxu0
  %v2433 = vadd.f32 0.0, %v2432
  %v2434 = vpop.f32.mrb[0].mxu0
  %v2435 = vpop.f32.mrb[0].mxu0
  %v2436 = vadd.f32 0.0, %v2435
  %v2437 = vpop.f32.mrb[0].mxu0
  %2438 = vmatprep.mubr.bf16.mxu0 0
  %2439 = vmatmul.mubr.bf16.gmra.mrb[0].mxu0 %v2147
  %v2440 = vpop.f32.mrb[0].mxu0
  %v2441 = vadd.f32 0.0, %v2440
  %v2442 = vpop.f32.mrb[0].mxu0
  %v2443 = vpop.f32.mrb[0].mxu0
  %v2444 = vadd.f32 0.0, %v2443
  %v2445 = vpop.f32.mrb[0].mxu0
  %2446 = vmatprep.mubr.bf16.mxu0 0
  %2447 = vmatmul.mubr.bf16.gmra.mrb[0].mxu0 %v2148
  %v2448 = vpop.f32.mrb[0].mxu0
  %v2449 = vadd.f32 0.0, %v2448
  %v2450 = vpop.f32.mrb[0].mxu0
  %v2451 = vpop.f32.mrb[0].mxu0
  %v2452 = vadd.f32 0.0, %v2451
  %v2453 = vpop.f32.mrb[0].mxu0
  %2454 = vmatprep.mubr.bf16.mxu0 0
  %2455 = vmatmul.mubr.bf16.gmra.mrb[0].mxu0 %v2149
  %v2456 = vpop.f32.mrb[0].mxu0
  %v2457 = vadd.f32 0.0, %v2456
  %v2458 = vpop.f32.mrb[0].mxu0
  %v2459 = vpop.f32.mrb[0].mxu0
  %v2460 = vadd.f32 0.0, %v2459
  %v2461 = vpop.f32.mrb[0].mxu0
  %2462 = vmatprep.mubr.bf16.mxu0 0
  %2463 = vmatmul.mubr.bf16.gmra.mrb[0].mxu0 %v2150
  %v2464 = vpop.f32.mrb[0].mxu0
  %v2465 = vadd.f32 0.0, %v2464
  %v2466 = vpop.f32.mrb[0].mxu0
  %v2467 = vpop.f32.mrb[0].mxu0
  %v2468 = vadd.f32 0.0, %v2467
  %v2469 = vpop.f32.mrb[0].mxu0
  %2470 = vmatprep.mubr.bf16.mxu0 0
  %2471 = vmatmul.mubr.bf16.gmra.mrb[0].mxu0 %v2151
  %v2472 = vpop.f32.mrb[0].mxu0
  %v2473 = vadd.f32 0.0, %v2472
  %v2474 = vpop.f32.mrb[0].mxu0
  %v2475 = vpop.f32.mrb[0].mxu0
  %v2476 = vadd.f32 0.0, %v2475
  %v2477 = vpop.f32.mrb[0].mxu0
  %2478 = vmatprep.mubr.bf16.mxu0 0
  %2479 = vmatmul.mubr.bf16.gmra.mrb[0].mxu0 %v2152
  %v2480 = vpop.f32.mrb[0].mxu0
  %v2481 = vadd.f32 0.0, %v2480
  %v2482 = vpop.f32.mrb[0].mxu0
  %v2483 = vpop.f32.mrb[0].mxu0
  %v2484 = vadd.f32 0.0, %v2483
  %v2485 = vpop.f32.mrb[0].mxu0
  %2486 = vmatprep.mubr.bf16.mxu0 0
  %2487 = vmatmul.mubr.bf16.gmra.mrb[0].mxu0 %v2153
  %v2488 = vpop.f32.mrb[0].mxu0
  %v2489 = vadd.f32 0.0, %v2488
  %v2490 = vpop.f32.mrb[0].mxu0
  %v2491 = vpop.f32.mrb[0].mxu0
  %v2492 = vadd.f32 0.0, %v2491
  %v2493 = vpop.f32.mrb[0].mxu0
  %2494 = vmatprep.mubr.bf16.mxu0 0
  %2495 = vmatmul.mubr.bf16.gmra.mrb[0].mxu0 %v2154
  %v2496 = vpop.f32.mrb[0].mxu0
  %v2497 = vadd.f32 0.0, %v2496
  %v2498 = vpop.f32.mrb[0].mxu0
  %v2499 = vpop.f32.mrb[0].mxu0
  %v2500 = vadd.f32 0.0, %v2499
  %v2501 = vpop.f32.mrb[0].mxu0
  %2502 = vmatprep.mubr.bf16.mxu0 0
  %2503 = vmatmul.mubr.bf16.gmra.mrb[0].mxu0 %v2155
  %v2504 = vpop.f32.mrb[0].mxu0
  %v2505 = vadd.f32 0.0, %v2504
  %v2506 = vpop.f32.mrb[0].mxu0
  %v2507 = vpop.f32.mrb[0].mxu0
  %v2508 = vadd.f32 0.0, %v2507
  %v2509 = vpop.f32.mrb[0].mxu0
  %2510 = vmatprep.mubr.bf16.mxu0 0
  %2511 = vmatmul.mubr.bf16.gmra.mrb[0].mxu0 %v2156
  %v2512 = vpop.f32.mrb[0].mxu0
  %v2513 = vadd.f32 0.0, %v2512
  %v2514 = vpop.f32.mrb[0].mxu0
  %v2515 = vpop.f32.mrb[0].mxu0
  %v2516 = vadd.f32 0.0, %v2515
  %v2517 = vpop.f32.mrb[0].mxu0
  %2518 = vmatprep.mubr.bf16.mxu0 0
  %2519 = vmatmul.mubr.bf16.gmra.mrb[0].mxu0 %v2157
  %v2520 = vpop.f32.mrb[0].mxu0
  %v2521 = vadd.f32 0.0, %v2520
  %v2522 = vpop.f32.mrb[0].mxu0
  %v2523 = vpop.f32.mrb[0].mxu0
  %v2524 = vadd.f32 0.0, %v2523
  %v2525 = vpop.f32.mrb[0].mxu0
  %2526 = vdwg.mxu0
  %v2527 = vadd.f32 %v1853, %v2273
  %v2528 = vadd.f32 %v1854, %v2276
  %v2529 = vadd.f32 %v1855, %v2281
  %v2530 = vadd.f32 %v1856, %v2284
  %v2531 = vadd.f32 %v1857, %v2289
  %v2532 = vadd.f32 %v1858, %v2292
  %v2533 = vadd.f32 %v1859, %v2297
  %v2534 = vadd.f32 %v1860, %v2300
  %v2535 = vadd.f32 %v1861, %v2305
  %v2536 = vadd.f32 %v1862, %v2308
  %v2537 = vadd.f32 %v1863, %v2313
  %v2538 = vadd.f32 %v1864, %v2316
  %v2539 = vadd.f32 %v1865, %v2321
  %v2540 = vadd.f32 %v1866, %v2324
  %v2541 = vadd.f32 %v1867, %v2329
  %v2542 = vadd.f32 %v1868, %v2332
  %v2543 = vadd.f32 %v1869, %v2337
  %v2544 = vadd.f32 %v1870, %v2340
  %v2545 = vadd.f32 %v1871, %v2345
  %v2546 = vadd.f32 %v1872, %v2348
  %v2547 = vadd.f32 %v1873, %v2353
  %v2548 = vadd.f32 %v1874, %v2356
  %v2549 = vadd.f32 %v1875, %v2361
  %v2550 = vadd.f32 %v1876, %v2364
  %v2551 = vadd.f32 %v1877, %v2369
  %v2552 = vadd.f32 %v1878, %v2372
  %v2553 = vadd.f32 %v1879, %v2377
  %v2554 = vadd.f32 %v1880, %v2380
  %v2555 = vadd.f32 %v1881, %v2385
  %v2556 = vadd.f32 %v1882, %v2388
  %v2557 = vadd.f32 %v1883, %v2393
  %v2558 = vadd.f32 %v1884, %v2396
  %v2559 = vadd.f32 %v1885, %v2401
  %v2560 = vadd.f32 %v1886, %v2404
  %v2561 = vadd.f32 %v1887, %v2409
  %v2562 = vadd.f32 %v1888, %v2412
  %v2563 = vadd.f32 %v1889, %v2417
  %v2564 = vadd.f32 %v1890, %v2420
  %v2565 = vadd.f32 %v1891, %v2425
  %v2566 = vadd.f32 %v1892, %v2428
  %v2567 = vadd.f32 %v1893, %v2433
  %v2568 = vadd.f32 %v1894, %v2436
  %v2569 = vadd.f32 %v1895, %v2441
  %v2570 = vadd.f32 %v1896, %v2444
  %v2571 = vadd.f32 %v1897, %v2449
  %v2572 = vadd.f32 %v1898, %v2452
  %v2573 = vadd.f32 %v1899, %v2457
  %v2574 = vadd.f32 %v1900, %v2460
  %v2575 = vadd.f32 %v1901, %v2465
  %v2576 = vadd.f32 %v1902, %v2468
  %v2577 = vadd.f32 %v1903, %v2473
  %v2578 = vadd.f32 %v1904, %v2476
  %v2579 = vadd.f32 %v1905, %v2481
  %v2580 = vadd.f32 %v1906, %v2484
  %v2581 = vadd.f32 %v1907, %v2489
  %v2582 = vadd.f32 %v1908, %v2492
  %v2583 = vadd.f32 %v1909, %v2497
  %v2584 = vadd.f32 %v1910, %v2500
  %v2585 = vadd.f32 %v1911, %v2505
  %v2586 = vadd.f32 %v1912, %v2508
  %v2587 = vadd.f32 %v1913, %v2513
  %v2588 = vadd.f32 %v1914, %v2516
  %v2589 = vadd.f32 %v1915, %v2521
  %v2590 = vadd.f32 %v1916, %v2524
  %v2591 = vpack.c.bf16 %v2528, %v2527
  %v2592 = vpack.c.bf16 %v2530, %v2529
  %v2593 = vpack.c.bf16 %v2532, %v2531
  %v2594 = vpack.c.bf16 %v2534, %v2533
  %v2595 = vpack.c.bf16 %v2536, %v2535
  %v2596 = vpack.c.bf16 %v2538, %v2537
  %v2597 = vpack.c.bf16 %v2540, %v2539
  %v2598 = vpack.c.bf16 %v2542, %v2541
  %v2599 = vpack.c.bf16 %v2544, %v2543
  %v2600 = vpack.c.bf16 %v2546, %v2545
  %v2601 = vpack.c.bf16 %v2548, %v2547
  %v2602 = vpack.c.bf16 %v2550, %v2549
  %v2603 = vpack.c.bf16 %v2552, %v2551
  %v2604 = vpack.c.bf16 %v2554, %v2553
  %v2605 = vpack.c.bf16 %v2556, %v2555
  %v2606 = vpack.c.bf16 %v2558, %v2557
  %v2607 = vpack.c.bf16 %v2560, %v2559
  %v2608 = vpack.c.bf16 %v2562, %v2561
  %v2609 = vpack.c.bf16 %v2564, %v2563
  %v2610 = vpack.c.bf16 %v2566, %v2565
  %v2611 = vpack.c.bf16 %v2568, %v2567
  %v2612 = vpack.c.bf16 %v2570, %v2569
  %v2613 = vpack.c.bf16 %v2572, %v2571
  %v2614 = vpack.c.bf16 %v2574, %v2573
  %v2615 = vpack.c.bf16 %v2576, %v2575
  %v2616 = vpack.c.bf16 %v2578, %v2577
  %v2617 = vpack.c.bf16 %v2580, %v2579
  %v2618 = vpack.c.bf16 %v2582, %v2581
  %v2619 = vpack.c.bf16 %v2584, %v2583
  %v2620 = vpack.c.bf16 %v2586, %v2585
  %v2621 = vpack.c.bf16 %v2588, %v2587
  %v2622 = vpack.c.bf16 %v2590, %v2589
  %v2655 = vunpack.c.l.b16 %v2591
  %v2656 = vunpack.c.h.b16 %v2591
  %v2657 = vunpack.c.l.b16 %v2592
  %v2658 = vunpack.c.h.b16 %v2592
  %v2659 = vunpack.c.l.b16 %v2593
  %v2660 = vunpack.c.h.b16 %v2593
  %v2661 = vunpack.c.l.b16 %v2594
  %v2662 = vunpack.c.h.b16 %v2594
  %v2663 = vunpack.c.l.b16 %v2595
  %v2664 = vunpack.c.h.b16 %v2595
  %v2665 = vunpack.c.l.b16 %v2596
  %v2666 = vunpack.c.h.b16 %v2596
  %v2667 = vunpack.c.l.b16 %v2597
  %v2668 = vunpack.c.h.b16 %v2597
  %v2669 = vunpack.c.l.b16 %v2598
  %v2670 = vunpack.c.h.b16 %v2598
  %v2671 = vunpack.c.l.b16 %v2599
  %v2672 = vunpack.c.h.b16 %v2599
  %v2673 = vunpack.c.l.b16 %v2600
  %v2674 = vunpack.c.h.b16 %v2600
  %v2675 = vunpack.c.l.b16 %v2601
  %v2676 = vunpack.c.h.b16 %v2601
  %v2677 = vunpack.c.l.b16 %v2602
  %v2678 = vunpack.c.h.b16 %v2602
  %v2679 = vunpack.c.l.b16 %v2603
  %v2680 = vunpack.c.h.b16 %v2603
  %v2681 = vunpack.c.l.b16 %v2604
  %v2682 = vunpack.c.h.b16 %v2604
  %v2683 = vunpack.c.l.b16 %v2605
  %v2684 = vunpack.c.h.b16 %v2605
  %v2685 = vunpack.c.l.b16 %v2606
  %v2686 = vunpack.c.h.b16 %v2606
  %v2687 = vunpack.c.l.b16 %v2607
  %v2688 = vunpack.c.h.b16 %v2607
  %v2689 = vunpack.c.l.b16 %v2608
  %v2690 = vunpack.c.h.b16 %v2608
  %v2691 = vunpack.c.l.b16 %v2609
  %v2692 = vunpack.c.h.b16 %v2609
  %v2693 = vunpack.c.l.b16 %v2610
  %v2694 = vunpack.c.h.b16 %v2610
  %v2695 = vunpack.c.l.b16 %v2611
  %v2696 = vunpack.c.h.b16 %v2611
  %v2697 = vunpack.c.l.b16 %v2612
  %v2698 = vunpack.c.h.b16 %v2612
  %v2699 = vunpack.c.l.b16 %v2613
  %v2700 = vunpack.c.h.b16 %v2613
  %v2701 = vunpack.c.l.b16 %v2614
  %v2702 = vunpack.c.h.b16 %v2614
  %v2703 = vunpack.c.l.b16 %v2615
  %v2704 = vunpack.c.h.b16 %v2615
  %v2705 = vunpack.c.l.b16 %v2616
  %v2706 = vunpack.c.h.b16 %v2616
  %v2707 = vunpack.c.l.b16 %v2617
  %v2708 = vunpack.c.h.b16 %v2617
  %v2709 = vunpack.c.l.b16 %v2618
  %v2710 = vunpack.c.h.b16 %v2618
  %v2711 = vunpack.c.l.b16 %v2619
  %v2712 = vunpack.c.h.b16 %v2619
  %v2713 = vunpack.c.l.b16 %v2620
  %v2714 = vunpack.c.h.b16 %v2620
  %v2715 = vunpack.c.l.b16 %v2621
  %v2716 = vunpack.c.h.b16 %v2621
  %v2717 = vunpack.c.l.b16 %v2622
  %v2718 = vunpack.c.h.b16 %v2622
  %v2719 = vpack.c.b16 %v2655, %v2655
  %v2720 = vpack.c.b16 %v2656, %v2656
  %v2721 = vpack.c.b16 %v2657, %v2657
  %v2722 = vpack.c.b16 %v2658, %v2658
  %v2723 = vpack.c.b16 %v2659, %v2659
  %v2724 = vpack.c.b16 %v2660, %v2660
  %v2725 = vpack.c.b16 %v2661, %v2661
  %v2726 = vpack.c.b16 %v2662, %v2662
  %v2727 = vpack.c.b16 %v2663, %v2663
  %v2728 = vpack.c.b16 %v2664, %v2664
  %v2729 = vpack.c.b16 %v2665, %v2665
  %v2730 = vpack.c.b16 %v2666, %v2666
  %v2731 = vpack.c.b16 %v2667, %v2667
  %v2732 = vpack.c.b16 %v2668, %v2668
  %v2733 = vpack.c.b16 %v2669, %v2669
  %v2734 = vpack.c.b16 %v2670, %v2670
  %v2735 = vpack.c.b16 %v2671, %v2671
  %v2736 = vpack.c.b16 %v2672, %v2672
  %v2737 = vpack.c.b16 %v2673, %v2673
  %v2738 = vpack.c.b16 %v2674, %v2674
  %v2739 = vpack.c.b16 %v2675, %v2675
  %v2740 = vpack.c.b16 %v2676, %v2676
  %v2741 = vpack.c.b16 %v2677, %v2677
  %v2742 = vpack.c.b16 %v2678, %v2678
  %v2743 = vpack.c.b16 %v2679, %v2679
  %v2744 = vpack.c.b16 %v2680, %v2680
  %v2745 = vpack.c.b16 %v2681, %v2681
  %v2746 = vpack.c.b16 %v2682, %v2682
  %v2747 = vpack.c.b16 %v2683, %v2683
  %v2748 = vpack.c.b16 %v2684, %v2684
  %v2749 = vpack.c.b16 %v2685, %v2685
  %v2750 = vpack.c.b16 %v2686, %v2686
  %v2751 = vpack.c.b16 %v2687, %v2687
  %v2752 = vpack.c.b16 %v2688, %v2688
  %v2753 = vpack.c.b16 %v2689, %v2689
  %v2754 = vpack.c.b16 %v2690, %v2690
  %v2755 = vpack.c.b16 %v2691, %v2691
  %v2756 = vpack.c.b16 %v2692, %v2692
  %v2757 = vpack.c.b16 %v2693, %v2693
  %v2758 = vpack.c.b16 %v2694, %v2694
  %v2759 = vpack.c.b16 %v2695, %v2695
  %v2760 = vpack.c.b16 %v2696, %v2696
  %v2761 = vpack.c.b16 %v2697, %v2697
  %v2762 = vpack.c.b16 %v2698, %v2698
  %v2763 = vpack.c.b16 %v2699, %v2699
  %v2764 = vpack.c.b16 %v2700, %v2700
  %v2765 = vpack.c.b16 %v2701, %v2701
  %v2766 = vpack.c.b16 %v2702, %v2702
  %v2767 = vpack.c.b16 %v2703, %v2703
  %v2768 = vpack.c.b16 %v2704, %v2704
  %v2769 = vpack.c.b16 %v2705, %v2705
  %v2770 = vpack.c.b16 %v2706, %v2706
  %v2771 = vpack.c.b16 %v2707, %v2707
  %v2772 = vpack.c.b16 %v2708, %v2708
  %v2773 = vpack.c.b16 %v2709, %v2709
  %v2774 = vpack.c.b16 %v2710, %v2710
  %v2775 = vpack.c.b16 %v2711, %v2711
  %v2776 = vpack.c.b16 %v2712, %v2712
  %v2777 = vpack.c.b16 %v2713, %v2713
  %v2778 = vpack.c.b16 %v2714, %v2714
  %v2779 = vpack.c.b16 %v2715, %v2715
  %v2780 = vpack.c.b16 %v2716, %v2716
  %v2781 = vpack.c.b16 %v2717, %v2717
  %v2782 = vpack.c.b16 %v2718, %v2718
  %2847 = vst [vmem:[%s5] sm:$0xf] %v2719
  %2848 = vst [vmem:[%s5 + $0x4] sm:$0xf] %v2720
  %2849 = vst [vmem:[%s5 + $0x8] sm:$0xf] %v2721
  %2850 = vst [vmem:[%s5 + $0xc] sm:$0xf] %v2722
  %2851 = vst [vmem:[%s5 + $0x10] sm:$0xf] %v2723
  %2852 = vst [vmem:[%s5 + $0x14] sm:$0xf] %v2724
  %2853 = vst [vmem:[%s5 + $0x18] sm:$0xf] %v2725
  %2854 = vst [vmem:[%s5 + $0x1c] sm:$0xf] %v2726
  %2855 = vst [vmem:[%s5 + $0x20] sm:$0xf] %v2727
  %2856 = vst [vmem:[%s5 + $0x24] sm:$0xf] %v2728
  %2857 = vst [vmem:[%s5 + $0x28] sm:$0xf] %v2729
  %2858 = vst [vmem:[%s5 + $0x2c] sm:$0xf] %v2730
  %2859 = vst [vmem:[%s5 + $0x30] sm:$0xf] %v2731
  %2860 = vst [vmem:[%s5 + $0x34] sm:$0xf] %v2732
  %2861 = vst [vmem:[%s5 + $0x38] sm:$0xf] %v2733
  %2862 = vst [vmem:[%s5 + $0x3c] sm:$0xf] %v2734
  %2863 = vst [vmem:[%s5 + $0x40] sm:$0xf] %v2735
  %2864 = vst [vmem:[%s5 + $0x44] sm:$0xf] %v2736
  %2865 = vst [vmem:[%s5 + $0x48] sm:$0xf] %v2737
  %2866 = vst [vmem:[%s5 + $0x4c] sm:$0xf] %v2738
  %2867 = vst [vmem:[%s5 + $0x50] sm:$0xf] %v2739
  %2868 = vst [vmem:[%s5 + $0x54] sm:$0xf] %v2740
  %2869 = vst [vmem:[%s5 + $0x58] sm:$0xf] %v2741
  %2870 = vst [vmem:[%s5 + $0x5c] sm:$0xf] %v2742
  %2871 = vst [vmem:[%s5 + $0x60] sm:$0xf] %v2743
  %2872 = vst [vmem:[%s5 + $0x64] sm:$0xf] %v2744
  %2873 = vst [vmem:[%s5 + $0x68] sm:$0xf] %v2745
  %2874 = vst [vmem:[%s5 + $0x6c] sm:$0xf] %v2746
  %2875 = vst [vmem:[%s5 + $0x70] sm:$0xf] %v2747
  %2876 = vst [vmem:[%s5 + $0x74] sm:$0xf] %v2748
  %2877 = vst [vmem:[%s5 + $0x78] sm:$0xf] %v2749
  %2878 = vst [vmem:[%s5 + $0x7c] sm:$0xf] %v2750
  %2879 = vst [vmem:[%s5 + $0x80] sm:$0xf] %v2751
  %2880 = vst [vmem:[%s5 + $0x84] sm:$0xf] %v2752
  %2881 = vst [vmem:[%s5 + $0x88] sm:$0xf] %v2753
  %2882 = vst [vmem:[%s5 + $0x8c] sm:$0xf] %v2754
  %2883 = vst [vmem:[%s5 + $0x90] sm:$0xf] %v2755
  %2884 = vst [vmem:[%s5 + $0x94] sm:$0xf] %v2756
  %2885 = vst [vmem:[%s5 + $0x98] sm:$0xf] %v2757
  %2886 = vst [vmem:[%s5 + $0x9c] sm:$0xf] %v2758
  %2887 = vst [vmem:[%s5 + $0xa0] sm:$0xf] %v2759
  %2888 = vst [vmem:[%s5 + $0xa4] sm:$0xf] %v2760
  %2889 = vst [vmem:[%s5 + $0xa8] sm:$0xf] %v2761
  %2890 = vst [vmem:[%s5 + $0xac] sm:$0xf] %v2762
  %2891 = vst [vmem:[%s5 + $0xb0] sm:$0xf] %v2763
  %2892 = vst [vmem:[%s5 + $0xb4] sm:$0xf] %v2764
  %2893 = vst [vmem:[%s5 + $0xb8] sm:$0xf] %v2765
  %2894 = vst [vmem:[%s5 + $0xbc] sm:$0xf] %v2766
  %2895 = vst [vmem:[%s5 + $0xc0] sm:$0xf] %v2767
  %2896 = vst [vmem:[%s5 + $0xc4] sm:$0xf] %v2768
  %2897 = vst [vmem:[%s5 + $0xc8] sm:$0xf] %v2769
  %2898 = vst [vmem:[%s5 + $0xcc] sm:$0xf] %v2770
  %2899 = vst [vmem:[%s5 + $0xd0] sm:$0xf] %v2771
  %2900 = vst [vmem:[%s5 + $0xd4] sm:$0xf] %v2772
  %2901 = vst [vmem:[%s5 + $0xd8] sm:$0xf] %v2773
  %2902 = vst [vmem:[%s5 + $0xdc] sm:$0xf] %v2774
  %2903 = vst [vmem:[%s5 + $0xe0] sm:$0xf] %v2775
  %2904 = vst [vmem:[%s5 + $0xe4] sm:$0xf] %v2776
  %2905 = vst [vmem:[%s5 + $0xe8] sm:$0xf] %v2777
  %2906 = vst [vmem:[%s5 + $0xec] sm:$0xf] %v2778
  %2907 = vst [vmem:[%s5 + $0xf0] sm:$0xf] %v2779
  %2908 = vst [vmem:[%s5 + $0xf4] sm:$0xf] %v2780
  %2909 = vst [vmem:[%s5 + $0xf8] sm:$0xf] %v2781
  %2910 = vst [vmem:[%s5 + $0xfc] sm:$0xf] %v2782
  %s2911 = smul.u32 0, 512
  %v2912 = vlaneseq
  %v2913 = vshrl.u32 %v2912, 7
  %v2914 = vadd.s32 %v2913, 8
  %v2915 = vadd.s32 %v2913, 16
  %v2916 = vadd.s32 %v2913, 24
  %v2917 = vadd.s32 %v2913, 32
  %v2918 = vadd.s32 %v2913, 40
  %v2919 = vadd.s32 %v2913, 48
  %v2920 = vadd.s32 %v2913, 56
  %v2921 = vadd.s32 %v2913, 64
  %v2922 = vadd.s32 %v2913, 72
  %v2923 = vadd.s32 %v2913, 80
  %v2924 = vadd.s32 %v2913, 88
  %v2925 = vadd.s32 %v2913, 96
  %v2926 = vadd.s32 %v2913, 104
  %v2927 = vadd.s32 %v2913, 112
  %v2928 = vadd.s32 %v2913, 120
  %v2929 = vadd.s32 %v2913, 128
  %v2930 = vadd.s32 %v2913, 136
  %v2931 = vadd.s32 %v2913, 144
  %v2932 = vadd.s32 %v2913, 152
  %v2933 = vadd.s32 %v2913, 160
  %v2934 = vadd.s32 %v2913, 168
  %v2935 = vadd.s32 %v2913, 176
  %v2936 = vadd.s32 %v2913, 184
  %v2937 = vadd.s32 %v2913, 192
  %v2938 = vadd.s32 %v2913, 200
  %v2939 = vadd.s32 %v2913, 208
  %v2940 = vadd.s32 %v2913, 216
  %v2941 = vadd.s32 %v2913, 224
  %v2942 = vadd.s32 %v2913, 232
  %v2943 = vadd.s32 %v2913, 240
  %v2944 = vadd.s32 %v2913, 248
  %v2945 = vadd.s32 %v2913, 256
  %v2946 = vadd.s32 %v2913, 264
  %v2947 = vadd.s32 %v2913, 272
  %v2948 = vadd.s32 %v2913, 280
  %v2949 = vadd.s32 %v2913, 288
  %v2950 = vadd.s32 %v2913, 296
  %v2951 = vadd.s32 %v2913, 304
  %v2952 = vadd.s32 %v2913, 312
  %v2953 = vadd.s32 %v2913, 320
  %v2954 = vadd.s32 %v2913, 328
  %v2955 = vadd.s32 %v2913, 336
  %v2956 = vadd.s32 %v2913, 344
  %v2957 = vadd.s32 %v2913, 352
  %v2958 = vadd.s32 %v2913, 360
  %v2959 = vadd.s32 %v2913, 368
  %v2960 = vadd.s32 %v2913, 376
  %v2961 = vadd.s32 %v2913, 384
  %v2962 = vadd.s32 %v2913, 392
  %v2963 = vadd.s32 %v2913, 400
  %v2964 = vadd.s32 %v2913, 408
  %v2965 = vadd.s32 %v2913, 416
  %v2966 = vadd.s32 %v2913, 424
  %v2967 = vadd.s32 %v2913, 432
  %v2968 = vadd.s32 %v2913, 440
  %v2969 = vadd.s32 %v2913, 448
  %v2970 = vadd.s32 %v2913, 456
  %v2971 = vadd.s32 %v2913, 464
  %v2972 = vadd.s32 %v2913, 472
  %v2973 = vadd.s32 %v2913, 480
  %v2974 = vadd.s32 %v2913, 488
  %v2975 = vadd.s32 %v2913, 496
  %v2976 = vadd.s32 %v2913, 504
  %v2977 = vstv %s2911
  %v2978 = vadd.s32 %v2977, %v2913
  %v2979 = vadd.s32 %v2977, %v2914
  %v2980 = vadd.s32 %v2977, %v2915
  %v2981 = vadd.s32 %v2977, %v2916
  %v2982 = vadd.s32 %v2977, %v2917
  %v2983 = vadd.s32 %v2977, %v2918
  %v2984 = vadd.s32 %v2977, %v2919
  %v2985 = vadd.s32 %v2977, %v2920
  %v2986 = vadd.s32 %v2977, %v2921
  %v2987 = vadd.s32 %v2977, %v2922
  %v2988 = vadd.s32 %v2977, %v2923
  %v2989 = vadd.s32 %v2977, %v2924
  %v2990 = vadd.s32 %v2977, %v2925
  %v2991 = vadd.s32 %v2977, %v2926
  %v2992 = vadd.s32 %v2977, %v2927
  %v2993 = vadd.s32 %v2977, %v2928
  %v2994 = vadd.s32 %v2977, %v2929
  %v2995 = vadd.s32 %v2977, %v2930
  %v2996 = vadd.s32 %v2977, %v2931
  %v2997 = vadd.s32 %v2977, %v2932
  %v2998 = vadd.s32 %v2977, %v2933
  %v2999 = vadd.s32 %v2977, %v2934
  %v3000 = vadd.s32 %v2977, %v2935
  %v3001 = vadd.s32 %v2977, %v2936
  %v3002 = vadd.s32 %v2977, %v2937
  %v3003 = vadd.s32 %v2977, %v2938
  %v3004 = vadd.s32 %v2977, %v2939
  %v3005 = vadd.s32 %v2977, %v2940
  %v3006 = vadd.s32 %v2977, %v2941
  %v3007 = vadd.s32 %v2977, %v2942
  %v3008 = vadd.s32 %v2977, %v2943
  %v3009 = vadd.s32 %v2977, %v2944
  %v3010 = vadd.s32 %v2977, %v2945
  %v3011 = vadd.s32 %v2977, %v2946
  %v3012 = vadd.s32 %v2977, %v2947
  %v3013 = vadd.s32 %v2977, %v2948
  %v3014 = vadd.s32 %v2977, %v2949
  %v3015 = vadd.s32 %v2977, %v2950
  %v3016 = vadd.s32 %v2977, %v2951
  %v3017 = vadd.s32 %v2977, %v2952
  %v3018 = vadd.s32 %v2977, %v2953
  %v3019 = vadd.s32 %v2977, %v2954
  %v3020 = vadd.s32 %v2977, %v2955
  %v3021 = vadd.s32 %v2977, %v2956
  %v3022 = vadd.s32 %v2977, %v2957
  %v3023 = vadd.s32 %v2977, %v2958
  %v3024 = vadd.s32 %v2977, %v2959
  %v3025 = vadd.s32 %v2977, %v2960
  %v3026 = vadd.s32 %v2977, %v2961
  %v3027 = vadd.s32 %v2977, %v2962
  %v3028 = vadd.s32 %v2977, %v2963
  %v3029 = vadd.s32 %v2977, %v2964
  %v3030 = vadd.s32 %v2977, %v2965
  %v3031 = vadd.s32 %v2977, %v2966
  %v3032 = vadd.s32 %v2977, %v2967
  %v3033 = vadd.s32 %v2977, %v2968
  %v3034 = vadd.s32 %v2977, %v2969
  %v3035 = vadd.s32 %v2977, %v2970
  %v3036 = vadd.s32 %v2977, %v2971
  %v3037 = vadd.s32 %v2977, %v2972
  %v3038 = vadd.s32 %v2977, %v2973
  %v3039 = vadd.s32 %v2977, %v2974
  %v3040 = vadd.s32 %v2977, %v2975
  %v3041 = vadd.s32 %v2977, %v2976
  %vm3042 = vcmp.lt.s32.totalorder %v2978, 512
  %vm3043 = vcmp.lt.s32.totalorder %v2979, 512
  %vm3044 = vcmp.lt.s32.totalorder %v2980, 512
  %vm3045 = vcmp.lt.s32.totalorder %v2981, 512
  %vm3046 = vcmp.lt.s32.totalorder %v2982, 512
  %vm3047 = vcmp.lt.s32.totalorder %v2983, 512
  %vm3048 = vcmp.lt.s32.totalorder %v2984, 512
  %vm3049 = vcmp.lt.s32.totalorder %v2985, 512
  %vm3050 = vcmp.lt.s32.totalorder %v2986, 512
  %vm3051 = vcmp.lt.s32.totalorder %v2987, 512
  %vm3052 = vcmp.lt.s32.totalorder %v2988, 512
  %vm3053 = vcmp.lt.s32.totalorder %v2989, 512
  %vm3054 = vcmp.lt.s32.totalorder %v2990, 512
  %vm3055 = vcmp.lt.s32.totalorder %v2991, 512
  %vm3056 = vcmp.lt.s32.totalorder %v2992, 512
  %vm3057 = vcmp.lt.s32.totalorder %v2993, 512
  %vm3058 = vcmp.lt.s32.totalorder %v2994, 512
  %vm3059 = vcmp.lt.s32.totalorder %v2995, 512
  %vm3060 = vcmp.lt.s32.totalorder %v2996, 512
  %vm3061 = vcmp.lt.s32.totalorder %v2997, 512
  %vm3062 = vcmp.lt.s32.totalorder %v2998, 512
  %vm3063 = vcmp.lt.s32.totalorder %v2999, 512
  %vm3064 = vcmp.lt.s32.totalorder %v3000, 512
  %vm3065 = vcmp.lt.s32.totalorder %v3001, 512
  %vm3066 = vcmp.lt.s32.totalorder %v3002, 512
  %vm3067 = vcmp.lt.s32.totalorder %v3003, 512
  %vm3068 = vcmp.lt.s32.totalorder %v3004, 512
  %vm3069 = vcmp.lt.s32.totalorder %v3005, 512
  %vm3070 = vcmp.lt.s32.totalorder %v3006, 512
  %vm3071 = vcmp.lt.s32.totalorder %v3007, 512
  %vm3072 = vcmp.lt.s32.totalorder %v3008, 512
  %vm3073 = vcmp.lt.s32.totalorder %v3009, 512
  %vm3074 = vcmp.lt.s32.totalorder %v3010, 512
  %vm3075 = vcmp.lt.s32.totalorder %v3011, 512
  %vm3076 = vcmp.lt.s32.totalorder %v3012, 512
  %vm3077 = vcmp.lt.s32.totalorder %v3013, 512
  %vm3078 = vcmp.lt.s32.totalorder %v3014, 512
  %vm3079 = vcmp.lt.s32.totalorder %v3015, 512
  %vm3080 = vcmp.lt.s32.totalorder %v3016, 512
  %vm3081 = vcmp.lt.s32.totalorder %v3017, 512
  %vm3082 = vcmp.lt.s32.totalorder %v3018, 512
  %vm3083 = vcmp.lt.s32.totalorder %v3019, 512
  %vm3084 = vcmp.lt.s32.totalorder %v3020, 512
  %vm3085 = vcmp.lt.s32.totalorder %v3021, 512
  %vm3086 = vcmp.lt.s32.totalorder %v3022, 512
  %vm3087 = vcmp.lt.s32.totalorder %v3023, 512
  %vm3088 = vcmp.lt.s32.totalorder %v3024, 512
  %vm3089 = vcmp.lt.s32.totalorder %v3025, 512
  %vm3090 = vcmp.lt.s32.totalorder %v3026, 512
  %vm3091 = vcmp.lt.s32.totalorder %v3027, 512
  %vm3092 = vcmp.lt.s32.totalorder %v3028, 512
  %vm3093 = vcmp.lt.s32.totalorder %v3029, 512
  %vm3094 = vcmp.lt.s32.totalorder %v3030, 512
  %vm3095 = vcmp.lt.s32.totalorder %v3031, 512
  %vm3096 = vcmp.lt.s32.totalorder %v3032, 512
  %vm3097 = vcmp.lt.s32.totalorder %v3033, 512
  %vm3098 = vcmp.lt.s32.totalorder %v3034, 512
  %vm3099 = vcmp.lt.s32.totalorder %v3035, 512
  %vm3100 = vcmp.lt.s32.totalorder %v3036, 512
  %vm3101 = vcmp.lt.s32.totalorder %v3037, 512
  %vm3102 = vcmp.lt.s32.totalorder %v3038, 512
  %vm3103 = vcmp.lt.s32.totalorder %v3039, 512
  %vm3104 = vcmp.lt.s32.totalorder %v3040, 512
  %vm3105 = vcmp.lt.s32.totalorder %v3041, 512
  %v3106 = vsel %vm3042, 1, 0
  %v3107 = vsel %vm3043, 1, 0
  %v3108 = vsel %vm3044, 1, 0
  %v3109 = vsel %vm3045, 1, 0
  %v3110 = vsel %vm3046, 1, 0
  %v3111 = vsel %vm3047, 1, 0
  %v3112 = vsel %vm3048, 1, 0
  %v3113 = vsel %vm3049, 1, 0
  %v3114 = vsel %vm3050, 1, 0
  %v3115 = vsel %vm3051, 1, 0
  %v3116 = vsel %vm3052, 1, 0
  %v3117 = vsel %vm3053, 1, 0
  %v3118 = vsel %vm3054, 1, 0
  %v3119 = vsel %vm3055, 1, 0
  %v3120 = vsel %vm3056, 1, 0
  %v3121 = vsel %vm3057, 1, 0
  %v3122 = vsel %vm3058, 1, 0
  %v3123 = vsel %vm3059, 1, 0
  %v3124 = vsel %vm3060, 1, 0
  %v3125 = vsel %vm3061, 1, 0
  %v3126 = vsel %vm3062, 1, 0
  %v3127 = vsel %vm3063, 1, 0
  %v3128 = vsel %vm3064, 1, 0
  %v3129 = vsel %vm3065, 1, 0
  %v3130 = vsel %vm3066, 1, 0
  %v3131 = vsel %vm3067, 1, 0
  %v3132 = vsel %vm3068, 1, 0
  %v3133 = vsel %vm3069, 1, 0
  %v3134 = vsel %vm3070, 1, 0
  %v3135 = vsel %vm3071, 1, 0
  %v3136 = vsel %vm3072, 1, 0
  %v3137 = vsel %vm3073, 1, 0
  %v3138 = vsel %vm3074, 1, 0
  %v3139 = vsel %vm3075, 1, 0
  %v3140 = vsel %vm3076, 1, 0
  %v3141 = vsel %vm3077, 1, 0
  %v3142 = vsel %vm3078, 1, 0
  %v3143 = vsel %vm3079, 1, 0
  %v3144 = vsel %vm3080, 1, 0
  %v3145 = vsel %vm3081, 1, 0
  %v3146 = vsel %vm3082, 1, 0
  %v3147 = vsel %vm3083, 1, 0
  %v3148 = vsel %vm3084, 1, 0
  %v3149 = vsel %vm3085, 1, 0
  %v3150 = vsel %vm3086, 1, 0
  %v3151 = vsel %vm3087, 1, 0
  %v3152 = vsel %vm3088, 1, 0
  %v3153 = vsel %vm3089, 1, 0
  %v3154 = vsel %vm3090, 1, 0
  %v3155 = vsel %vm3091, 1, 0
  %v3156 = vsel %vm3092, 1, 0
  %v3157 = vsel %vm3093, 1, 0
  %v3158 = vsel %vm3094, 1, 0
  %v3159 = vsel %vm3095, 1, 0
  %v3160 = vsel %vm3096, 1, 0
  %v3161 = vsel %vm3097, 1, 0
  %v3162 = vsel %vm3098, 1, 0
  %v3163 = vsel %vm3099, 1, 0
  %v3164 = vsel %vm3100, 1, 0
  %v3165 = vsel %vm3101, 1, 0
  %v3166 = vsel %vm3102, 1, 0
  %v3167 = vsel %vm3103, 1, 0
  %v3168 = vsel %vm3104, 1, 0
  %v3169 = vsel %vm3105, 1, 0
  %vm3170 = vcmp.eq.s32.totalorder %v3106, 1
  %vm3171 = vcmp.eq.s32.totalorder %v3107, 1
  %vm3172 = vcmp.eq.s32.totalorder %v3108, 1
  %vm3173 = vcmp.eq.s32.totalorder %v3109, 1
  %vm3174 = vcmp.eq.s32.totalorder %v3110, 1
  %vm3175 = vcmp.eq.s32.totalorder %v3111, 1
  %vm3176 = vcmp.eq.s32.totalorder %v3112, 1
  %vm3177 = vcmp.eq.s32.totalorder %v3113, 1
  %vm3178 = vcmp.eq.s32.totalorder %v3114, 1
  %vm3179 = vcmp.eq.s32.totalorder %v3115, 1
  %vm3180 = vcmp.eq.s32.totalorder %v3116, 1
  %vm3181 = vcmp.eq.s32.totalorder %v3117, 1
  %vm3182 = vcmp.eq.s32.totalorder %v3118, 1
  %vm3183 = vcmp.eq.s32.totalorder %v3119, 1
  %vm3184 = vcmp.eq.s32.totalorder %v3120, 1
  %vm3185 = vcmp.eq.s32.totalorder %v3121, 1
  %vm3186 = vcmp.eq.s32.totalorder %v3122, 1
  %vm3187 = vcmp.eq.s32.totalorder %v3123, 1
  %vm3188 = vcmp.eq.s32.totalorder %v3124, 1
  %vm3189 = vcmp.eq.s32.totalorder %v3125, 1
  %vm3190 = vcmp.eq.s32.totalorder %v3126, 1
  %vm3191 = vcmp.eq.s32.totalorder %v3127, 1
  %vm3192 = vcmp.eq.s32.totalorder %v3128, 1
  %vm3193 = vcmp.eq.s32.totalorder %v3129, 1
  %vm3194 = vcmp.eq.s32.totalorder %v3130, 1
  %vm3195 = vcmp.eq.s32.totalorder %v3131, 1
  %vm3196 = vcmp.eq.s32.totalorder %v3132, 1
  %vm3197 = vcmp.eq.s32.totalorder %v3133, 1
  %vm3198 = vcmp.eq.s32.totalorder %v3134, 1
  %vm3199 = vcmp.eq.s32.totalorder %v3135, 1
  %vm3200 = vcmp.eq.s32.totalorder %v3136, 1
  %vm3201 = vcmp.eq.s32.totalorder %v3137, 1
  %vm3202 = vcmp.eq.s32.totalorder %v3138, 1
  %vm3203 = vcmp.eq.s32.totalorder %v3139, 1
  %vm3204 = vcmp.eq.s32.totalorder %v3140, 1
  %vm3205 = vcmp.eq.s32.totalorder %v3141, 1
  %vm3206 = vcmp.eq.s32.totalorder %v3142, 1
  %vm3207 = vcmp.eq.s32.totalorder %v3143, 1
  %vm3208 = vcmp.eq.s32.totalorder %v3144, 1
  %vm3209 = vcmp.eq.s32.totalorder %v3145, 1
  %vm3210 = vcmp.eq.s32.totalorder %v3146, 1
  %vm3211 = vcmp.eq.s32.totalorder %v3147, 1
  %vm3212 = vcmp.eq.s32.totalorder %v3148, 1
  %vm3213 = vcmp.eq.s32.totalorder %v3149, 1
  %vm3214 = vcmp.eq.s32.totalorder %v3150, 1
  %vm3215 = vcmp.eq.s32.totalorder %v3151, 1
  %vm3216 = vcmp.eq.s32.totalorder %v3152, 1
  %vm3217 = vcmp.eq.s32.totalorder %v3153, 1
  %vm3218 = vcmp.eq.s32.totalorder %v3154, 1
  %vm3219 = vcmp.eq.s32.totalorder %v3155, 1
  %vm3220 = vcmp.eq.s32.totalorder %v3156, 1
  %vm3221 = vcmp.eq.s32.totalorder %v3157, 1
  %vm3222 = vcmp.eq.s32.totalorder %v3158, 1
  %vm3223 = vcmp.eq.s32.totalorder %v3159, 1
  %vm3224 = vcmp.eq.s32.totalorder %v3160, 1
  %vm3225 = vcmp.eq.s32.totalorder %v3161, 1
  %vm3226 = vcmp.eq.s32.totalorder %v3162, 1
  %vm3227 = vcmp.eq.s32.totalorder %v3163, 1
  %vm3228 = vcmp.eq.s32.totalorder %v3164, 1
  %vm3229 = vcmp.eq.s32.totalorder %v3165, 1
  %vm3230 = vcmp.eq.s32.totalorder %v3166, 1
  %vm3231 = vcmp.eq.s32.totalorder %v3167, 1
  %vm3232 = vcmp.eq.s32.totalorder %v3168, 1
  %vm3233 = vcmp.eq.s32.totalorder %v3169, 1
  %v3234 = vsel %vm3170, %v2527, 0.0
  %v3235 = vsel %vm3171, %v2528, 0.0
  %v3236 = vsel %vm3172, %v2529, 0.0
  %v3237 = vsel %vm3173, %v2530, 0.0
  %v3238 = vsel %vm3174, %v2531, 0.0
  %v3239 = vsel %vm3175, %v2532, 0.0
  %v3240 = vsel %vm3176, %v2533, 0.0
  %v3241 = vsel %vm3177, %v2534, 0.0
  %v3242 = vsel %vm3178, %v2535, 0.0
  %v3243 = vsel %vm3179, %v2536, 0.0
  %v3244 = vsel %vm3180, %v2537, 0.0
  %v3245 = vsel %vm3181, %v2538, 0.0
  %v3246 = vsel %vm3182, %v2539, 0.0
  %v3247 = vsel %vm3183, %v2540, 0.0
  %v3248 = vsel %vm3184, %v2541, 0.0
  %v3249 = vsel %vm3185, %v2542, 0.0
  %v3250 = vsel %vm3186, %v2543, 0.0
  %v3251 = vsel %vm3187, %v2544, 0.0
  %v3252 = vsel %vm3188, %v2545, 0.0
  %v3253 = vsel %vm3189, %v2546, 0.0
  %v3254 = vsel %vm3190, %v2547, 0.0
  %v3255 = vsel %vm3191, %v2548, 0.0
  %v3256 = vsel %vm3192, %v2549, 0.0
  %v3257 = vsel %vm3193, %v2550, 0.0
  %v3258 = vsel %vm3194, %v2551, 0.0
  %v3259 = vsel %vm3195, %v2552, 0.0
  %v3260 = vsel %vm3196, %v2553, 0.0
  %v3261 = vsel %vm3197, %v2554, 0.0
  %v3262 = vsel %vm3198, %v2555, 0.0
  %v3263 = vsel %vm3199, %v2556, 0.0
  %v3264 = vsel %vm3200, %v2557, 0.0
  %v3265 = vsel %vm3201, %v2558, 0.0
  %v3266 = vsel %vm3202, %v2559, 0.0
  %v3267 = vsel %vm3203, %v2560, 0.0
  %v3268 = vsel %vm3204, %v2561, 0.0
  %v3269 = vsel %vm3205, %v2562, 0.0
  %v3270 = vsel %vm3206, %v2563, 0.0
  %v3271 = vsel %vm3207, %v2564, 0.0
  %v3272 = vsel %vm3208, %v2565, 0.0
  %v3273 = vsel %vm3209, %v2566, 0.0
  %v3274 = vsel %vm3210, %v2567, 0.0
  %v3275 = vsel %vm3211, %v2568, 0.0
  %v3276 = vsel %vm3212, %v2569, 0.0
  %v3277 = vsel %vm3213, %v2570, 0.0
  %v3278 = vsel %vm3214, %v2571, 0.0
  %v3279 = vsel %vm3215, %v2572, 0.0
  %v3280 = vsel %vm3216, %v2573, 0.0
  %v3281 = vsel %vm3217, %v2574, 0.0
  %v3282 = vsel %vm3218, %v2575, 0.0
  %v3283 = vsel %vm3219, %v2576, 0.0
  %v3284 = vsel %vm3220, %v2577, 0.0
  %v3285 = vsel %vm3221, %v2578, 0.0
  %v3286 = vsel %vm3222, %v2579, 0.0
  %v3287 = vsel %vm3223, %v2580, 0.0
  %v3288 = vsel %vm3224, %v2581, 0.0
  %v3289 = vsel %vm3225, %v2582, 0.0
  %v3290 = vsel %vm3226, %v2583, 0.0
  %v3291 = vsel %vm3227, %v2584, 0.0
  %v3292 = vsel %vm3228, %v2585, 0.0
  %v3293 = vsel %vm3229, %v2586, 0.0
  %v3294 = vsel %vm3230, %v2587, 0.0
  %v3295 = vsel %vm3231, %v2588, 0.0
  %v3296 = vsel %vm3232, %v2589, 0.0
  %v3297 = vsel %vm3233, %v2590, 0.0
  %v3298 = vadd.f32 %v3234, %v3235
  %v3299 = vadd.f32 %v3298, %v3236
  %v3300 = vadd.f32 %v3299, %v3237
  %v3301 = vadd.f32 %v3300, %v3238
  %v3302 = vadd.f32 %v3301, %v3239
  %v3303 = vadd.f32 %v3302, %v3240
  %v3304 = vadd.f32 %v3303, %v3241
  %v3305 = vadd.f32 %v3304, %v3242
  %v3306 = vadd.f32 %v3305, %v3243
  %v3307 = vadd.f32 %v3306, %v3244
  %v3308 = vadd.f32 %v3307, %v3245
  %v3309 = vadd.f32 %v3308, %v3246
  %v3310 = vadd.f32 %v3309, %v3247
  %v3311 = vadd.f32 %v3310, %v3248
  %v3312 = vadd.f32 %v3311, %v3249
  %v3313 = vadd.f32 %v3312, %v3250
  %v3314 = vadd.f32 %v3313, %v3251
  %v3315 = vadd.f32 %v3314, %v3252
  %v3316 = vadd.f32 %v3315, %v3253
  %v3317 = vadd.f32 %v3316, %v3254
  %v3318 = vadd.f32 %v3317, %v3255
  %v3319 = vadd.f32 %v3318, %v3256
  %v3320 = vadd.f32 %v3319, %v3257
  %v3321 = vadd.f32 %v3320, %v3258
  %v3322 = vadd.f32 %v3321, %v3259
  %v3323 = vadd.f32 %v3322, %v3260
  %v3324 = vadd.f32 %v3323, %v3261
  %v3325 = vadd.f32 %v3324, %v3262
  %v3326 = vadd.f32 %v3325, %v3263
  %v3327 = vadd.f32 %v3326, %v3264
  %v3328 = vadd.f32 %v3327, %v3265
  %v3329 = vadd.f32 %v3328, %v3266
  %v3330 = vadd.f32 %v3329, %v3267
  %v3331 = vadd.f32 %v3330, %v3268
  %v3332 = vadd.f32 %v3331, %v3269
  %v3333 = vadd.f32 %v3332, %v3270
  %v3334 = vadd.f32 %v3333, %v3271
  %v3335 = vadd.f32 %v3334, %v3272
  %v3336 = vadd.f32 %v3335, %v3273
  %v3337 = vadd.f32 %v3336, %v3274
  %v3338 = vadd.f32 %v3337, %v3275
  %v3339 = vadd.f32 %v3338, %v3276
  %v3340 = vadd.f32 %v3339, %v3277
  %v3341 = vadd.f32 %v3340, %v3278
  %v3342 = vadd.f32 %v3341, %v3279
  %v3343 = vadd.f32 %v3342, %v3280
  %v3344 = vadd.f32 %v3343, %v3281
  %v3345 = vadd.f32 %v3344, %v3282
  %v3346 = vadd.f32 %v3345, %v3283
  %v3347 = vadd.f32 %v3346, %v3284
  %v3348 = vadd.f32 %v3347, %v3285
  %v3349 = vadd.f32 %v3348, %v3286
  %v3350 = vadd.f32 %v3349, %v3287
  %v3351 = vadd.f32 %v3350, %v3288
  %v3352 = vadd.f32 %v3351, %v3289
  %v3353 = vadd.f32 %v3352, %v3290
  %v3354 = vadd.f32 %v3353, %v3291
  %v3355 = vadd.f32 %v3354, %v3292
  %v3356 = vadd.f32 %v3355, %v3293
  %v3357 = vadd.f32 %v3356, %v3294
  %v3358 = vadd.f32 %v3357, %v3295
  %v3359 = vadd.f32 %v3358, %v3296
  %v3360 = vadd.f32 %v3359, %v3297
  %v3361 = vrot.slane %v3360, 4
  %v3362 = vadd.f32 %v3360, %v3361
  %v3363 = vrot.slane %v3362, 2
  %v3364 = vadd.f32 %v3362, %v3363
  %v3365 = vrot.slane %v3364, 1
  %v3366 = vadd.f32 %v3364, %v3365
  %v3367 = vmul.f32 %v3234, %v3234
  %v3368 = vmul.f32 %v3235, %v3235
  %v3369 = vmul.f32 %v3236, %v3236
  %v3370 = vmul.f32 %v3237, %v3237
  %v3371 = vmul.f32 %v3238, %v3238
  %v3372 = vmul.f32 %v3239, %v3239
  %v3373 = vmul.f32 %v3240, %v3240
  %v3374 = vmul.f32 %v3241, %v3241
  %v3375 = vmul.f32 %v3242, %v3242
  %v3376 = vmul.f32 %v3243, %v3243
  %v3377 = vmul.f32 %v3244, %v3244
  %v3378 = vmul.f32 %v3245, %v3245
  %v3379 = vmul.f32 %v3246, %v3246
  %v3380 = vmul.f32 %v3247, %v3247
  %v3381 = vmul.f32 %v3248, %v3248
  %v3382 = vmul.f32 %v3249, %v3249
  %v3383 = vmul.f32 %v3250, %v3250
  %v3384 = vmul.f32 %v3251, %v3251
  %v3385 = vmul.f32 %v3252, %v3252
  %v3386 = vmul.f32 %v3253, %v3253
  %v3387 = vmul.f32 %v3254, %v3254
  %v3388 = vmul.f32 %v3255, %v3255
  %v3389 = vmul.f32 %v3256, %v3256
  %v3390 = vmul.f32 %v3257, %v3257
  %v3391 = vmul.f32 %v3258, %v3258
  %v3392 = vmul.f32 %v3259, %v3259
  %v3393 = vmul.f32 %v3260, %v3260
  %v3394 = vmul.f32 %v3261, %v3261
  %v3395 = vmul.f32 %v3262, %v3262
  %v3396 = vmul.f32 %v3263, %v3263
  %v3397 = vmul.f32 %v3264, %v3264
  %v3398 = vmul.f32 %v3265, %v3265
  %v3399 = vmul.f32 %v3266, %v3266
  %v3400 = vmul.f32 %v3267, %v3267
  %v3401 = vmul.f32 %v3268, %v3268
  %v3402 = vmul.f32 %v3269, %v3269
  %v3403 = vmul.f32 %v3270, %v3270
  %v3404 = vmul.f32 %v3271, %v3271
  %v3405 = vmul.f32 %v3272, %v3272
  %v3406 = vmul.f32 %v3273, %v3273
  %v3407 = vmul.f32 %v3274, %v3274
  %v3408 = vmul.f32 %v3275, %v3275
  %v3409 = vmul.f32 %v3276, %v3276
  %v3410 = vmul.f32 %v3277, %v3277
  %v3411 = vmul.f32 %v3278, %v3278
  %v3412 = vmul.f32 %v3279, %v3279
  %v3413 = vmul.f32 %v3280, %v3280
  %v3414 = vmul.f32 %v3281, %v3281
  %v3415 = vmul.f32 %v3282, %v3282
  %v3416 = vmul.f32 %v3283, %v3283
  %v3417 = vmul.f32 %v3284, %v3284
  %v3418 = vmul.f32 %v3285, %v3285
  %v3419 = vmul.f32 %v3286, %v3286
  %v3420 = vmul.f32 %v3287, %v3287
  %v3421 = vmul.f32 %v3288, %v3288
  %v3422 = vmul.f32 %v3289, %v3289
  %v3423 = vmul.f32 %v3290, %v3290
  %v3424 = vmul.f32 %v3291, %v3291
  %v3425 = vmul.f32 %v3292, %v3292
  %v3426 = vmul.f32 %v3293, %v3293
  %v3427 = vmul.f32 %v3294, %v3294
  %v3428 = vmul.f32 %v3295, %v3295
  %v3429 = vmul.f32 %v3296, %v3296
  %v3430 = vmul.f32 %v3297, %v3297
  %v3431 = vadd.f32 %v3367, %v3368
  %v3432 = vadd.f32 %v3431, %v3369
  %v3433 = vadd.f32 %v3432, %v3370
  %v3434 = vadd.f32 %v3433, %v3371
  %v3435 = vadd.f32 %v3434, %v3372
  %v3436 = vadd.f32 %v3435, %v3373
  %v3437 = vadd.f32 %v3436, %v3374
  %v3438 = vadd.f32 %v3437, %v3375
  %v3439 = vadd.f32 %v3438, %v3376
  %v3440 = vadd.f32 %v3439, %v3377
  %v3441 = vadd.f32 %v3440, %v3378
  %v3442 = vadd.f32 %v3441, %v3379
  %v3443 = vadd.f32 %v3442, %v3380
  %v3444 = vadd.f32 %v3443, %v3381
  %v3445 = vadd.f32 %v3444, %v3382
  %v3446 = vadd.f32 %v3445, %v3383
  %v3447 = vadd.f32 %v3446, %v3384
  %v3448 = vadd.f32 %v3447, %v3385
  %v3449 = vadd.f32 %v3448, %v3386
  %v3450 = vadd.f32 %v3449, %v3387
  %v3451 = vadd.f32 %v3450, %v3388
  %v3452 = vadd.f32 %v3451, %v3389
  %v3453 = vadd.f32 %v3452, %v3390
  %v3454 = vadd.f32 %v3453, %v3391
  %v3455 = vadd.f32 %v3454, %v3392
  %v3456 = vadd.f32 %v3455, %v3393
  %v3457 = vadd.f32 %v3456, %v3394
  %v3458 = vadd.f32 %v3457, %v3395
  %v3459 = vadd.f32 %v3458, %v3396
  %v3460 = vadd.f32 %v3459, %v3397
  %v3461 = vadd.f32 %v3460, %v3398
  %v3462 = vadd.f32 %v3461, %v3399
  %v3463 = vadd.f32 %v3462, %v3400
  %v3464 = vadd.f32 %v3463, %v3401
  %v3465 = vadd.f32 %v3464, %v3402
  %v3466 = vadd.f32 %v3465, %v3403
  %v3467 = vadd.f32 %v3466, %v3404
  %v3468 = vadd.f32 %v3467, %v3405
  %v3469 = vadd.f32 %v3468, %v3406
  %v3470 = vadd.f32 %v3469, %v3407
  %v3471 = vadd.f32 %v3470, %v3408
  %v3472 = vadd.f32 %v3471, %v3409
  %v3473 = vadd.f32 %v3472, %v3410
  %v3474 = vadd.f32 %v3473, %v3411
  %v3475 = vadd.f32 %v3474, %v3412
  %v3476 = vadd.f32 %v3475, %v3413
  %v3477 = vadd.f32 %v3476, %v3414
  %v3478 = vadd.f32 %v3477, %v3415
  %v3479 = vadd.f32 %v3478, %v3416
  %v3480 = vadd.f32 %v3479, %v3417
  %v3481 = vadd.f32 %v3480, %v3418
  %v3482 = vadd.f32 %v3481, %v3419
  %v3483 = vadd.f32 %v3482, %v3420
  %v3484 = vadd.f32 %v3483, %v3421
  %v3485 = vadd.f32 %v3484, %v3422
  %v3486 = vadd.f32 %v3485, %v3423
  %v3487 = vadd.f32 %v3486, %v3424
  %v3488 = vadd.f32 %v3487, %v3425
  %v3489 = vadd.f32 %v3488, %v3426
  %v3490 = vadd.f32 %v3489, %v3427
  %v3491 = vadd.f32 %v3490, %v3428
  %v3492 = vadd.f32 %v3491, %v3429
  %v3493 = vadd.f32 %v3492, %v3430
  %v3494 = vrot.slane %v3493, 4
  %v3495 = vadd.f32 %v3493, %v3494
  %v3496 = vrot.slane %v3495, 2
  %v3497 = vadd.f32 %v3495, %v3496
  %v3498 = vrot.slane %v3497, 1
  %v3499 = vadd.f32 %v3497, %v3498
  %3500 = vst [vmem:[%s6] sm:$0xff] 0.0
  %3501 = vst [vmem:[%s7] sm:$0xff] 0.0
  %3502 = vst [vmem:[%s6] sm:$0x1] %v3366
  %3503 = vst [vmem:[%s7] sm:$0x1] %v3499
  // Predicated region
  $region22: #{sppf_forward.6} parent=0 // pred_check
    _
  $region23: #{sppf_forward.6} parent=0 // pred_check_branch
    %3505 = sbr.rel (0) target = $region25
  $region24: #{sppf_forward.6} parent=0 // pred_region
    _
  $region25: #{sppf_forward.6} parent=0 // pred_fallthru
    _
  // Predicated region
  $region26: #{sppf_forward.6} parent=0 // pred_check
    _
  $region27: #{sppf_forward.6} parent=0 // pred_check_branch
    %3507 = sbr.rel (0) target = $region29
  $region28: #{sppf_forward.6} parent=0 // pred_region
    _
  $region29: #{sppf_forward.6} parent=0 // pred_fallthru
    _
  // Predicated region
  $region30: #{sppf_forward.6} parent=0 // pred_check
    _
  $region31: #{sppf_forward.6} parent=0 // pred_check_branch
    %3509 = sbr.rel (0) target = $region33
  $region32: #{sppf_forward.6} parent=0 // pred_region
    _
  $region33: #{sppf_forward.6} parent=0 // pred_fallthru
    _
  // Predicated region
  $region34: #{sppf_forward.6} parent=0 // pred_check
    _
  $region35: #{sppf_forward.6} parent=0 // pred_check_branch
    %3511 = sbr.rel (0) target = $region37
  $region36: #{sppf_forward.6} parent=0 // pred_region
    _
  $region37: #{sppf_forward.6} parent=0 // pred_fallthru
    _
  // Predicated region
  $region38: #{sppf_forward.6} parent=0 // pred_check
    _
  $region39: #{sppf_forward.6} parent=0 // pred_check_branch
    %3513 = sbr.rel (0) target = $region41
  $region40: #{sppf_forward.6} parent=0 // pred_region
    _
  $region41: #{sppf_forward.6} parent=0 // pred_fallthru
    _
  // Predicated region
  $region42: #{sppf_forward.6} parent=0 // pred_check
    _
  $region43: #{sppf_forward.6} parent=0 // pred_check_branch
    %3515 = sbr.rel (0) target = $region45
  $region44: #{sppf_forward.6} parent=0 // pred_region
    _
  $region45: #{sppf_forward.6} parent=0 // pred_fallthru
    _

</llo_original>
